<compile_context>
chip_gen: v5e
topology: v5e:2x2
jax: 0.10.0
libtpu: 0.0.40
codegen_flags: <defaults>
</compile_context>

<pallas_src>
import math

import jax
import jax.numpy as jnp
from jax.experimental import pallas as pl
from jax.experimental.pallas import tpu as pltpu

NUM_HEADS = 4
NUM_LAYERS = 2
DFF = 2048          # PyTorch TransformerEncoderLayer default dim_feedforward
LN_EPS = 1e-5       # PyTorch default layer_norm_eps


# ----------------------------- helpers -------------------------------------

def _full_spec(shape):
    """Full-array block (block_shape == array shape) for a grid=(1,) kernel."""
    n = len(shape)
    return pl.BlockSpec(shape, lambda i: (0,) * n)


def _mm(a, w):
    """bf16 MXU matmul with f32 accumulation."""
    return jnp.dot(a.astype(jnp.bfloat16), w.astype(jnp.bfloat16),
                   preferred_element_type=jnp.float32)


def _layer_norm(v, g, b):
    mean = jnp.mean(v, axis=-1, keepdims=True)
    c = v - mean
    var = jnp.mean(c * c, axis=-1, keepdims=True)   # biased var, like torch LN
    return c * jax.lax.rsqrt(var + LN_EPS) * g + b


# ----------------------------- fused kernel --------------------------------

def _ctts_kernel(x_ref, c1w_ref, c1b_ref, c2w_ref, c2b_ref,
                 pw_ref, pb_ref, pe_ref,
                 wq_ref, wk_ref, wv_ref, bq_ref, bk_ref, bv_ref,
                 wo_ref, bo_ref, ln1g_ref, ln1b_ref,
                 w1_ref, b1_ref, w2_ref, b2_ref, ln2g_ref, ln2b_ref,
                 fcw_ref, fcb_ref,
                 o_ref,
                 pad1, pad2):
    B, S, _ = x_ref.shape
    L, nh, _, hd = wq_ref.shape
    scale = 1.0 / math.sqrt(hd)

    def conv3_relu(pad_ref, w_ref, bias):
        # Conv1d(kernel_size=3, padding=1) as 3 shifted MXU matmuls against a
        # zero-padded (S+2, Cin) VMEM scratch; fused ReLU.
        acc = (_mm(pad_ref[pl.ds(0, S), :], w_ref[0]) +
               _mm(pad_ref[pl.ds(1, S), :], w_ref[1]) +
               _mm(pad_ref[pl.ds(2, S), :], w_ref[2]) + bias)
        return jnp.maximum(acc, 0.0)

    # Zero the padding scratches once (rows 1..S are overwritten per batch;
    # rows 0 and S+1 stay zero = the conv padding).
    pad1[...] = jnp.zeros(pad1.shape, pad1.dtype)
    pad2[...] = jnp.zeros(pad2.shape, pad2.dtype)

    # ---- CNNFeatureExtractor: two Conv1d(k=3,p=1)+ReLU per batch (tiny),
    #      results stacked into a batch-flattened (B*S, H) activation ----------
    h_rows = []
    for b in range(B):                              # static unroll (B tiny)
        pad1[pl.ds(1, S), :] = x_ref[b]
        h1 = conv3_relu(pad1, c1w_ref, c1b_ref[...])          # (S, H)
        pad2[pl.ds(1, S), :] = h1
        h_rows.append(conv3_relu(pad2, c2w_ref, c2b_ref[...]))  # (S, H)
    h = jnp.concatenate(h_rows, axis=0)                        # (B*S, H)

    # ---- projection Linear(H,H) + positional encoding (PE broadcasts over B) ----
    pe = jnp.concatenate([pe_ref[...]] * B, axis=0)            # (B*S, H)
    z = _mm(h, pw_ref[...]) + pb_ref[...] + pe                 # (B*S, H) f32

    # ---- TransformerEncoder: post-LN layers (dropout = identity at eval) ----
    for l in range(L):                              # static unroll over layers
        sa = bo_ref[l]                              # (1, H), broadcasts
        for hh in range(nh):                        # static unroll over heads
            # QKV over ALL batch rows at once (one MXU push each).
            q = (_mm(z, wq_ref[l, hh]) + bq_ref[l, hh]) * scale   # (B*S, hd)
            k = _mm(z, wk_ref[l, hh]) + bk_ref[l, hh]
            v = _mm(z, wv_ref[l, hh]) + bv_ref[l, hh]

            o_parts = []
            for b in range(B):                      # scores must not mix batches
                qb = q[b * S:(b + 1) * S, :]
                kb = k[b * S:(b + 1) * S, :]
                vb = v[b * S:(b + 1) * S, :]
                s = jax.lax.dot_general(
                    qb.astype(jnp.bfloat16), kb.astype(jnp.bfloat16),
                    (((1,), (1,)), ((), ())),
                    preferred_element_type=jnp.float32)           # (S, S)
                s = s - jnp.max(s, axis=-1, keepdims=True)
                p = jnp.exp(s)
                inv = pl.reciprocal(jnp.sum(p, axis=-1, keepdims=True),
                                    approx=True)
                o_parts.append(_mm(p, vb) * inv)                  # (S, hd)
            o = jnp.concatenate(o_parts, axis=0)                  # (B*S, hd)
            sa = sa + _mm(o, wo_ref[l, hh])         # per-head slice of out-proj

        x1 = _layer_norm(z + sa, ln1g_ref[l], ln1b_ref[l])

        ff = jnp.maximum(_mm(x1, w1_ref[l]) + b1_ref[l], 0.0)     # (B*S, DFF)
        ff = _mm(ff, w2_ref[l]) + b2_ref[l]                       # (B*S, H)
        z = _layer_norm(x1 + ff, ln2g_ref[l], ln2b_ref[l])

    # ---- fc_out applied to the last time step of every batch element ----
    last = jnp.concatenate(
        [z[b * S + S - 1: b * S + S, :] for b in range(B)], axis=0)   # (B, H)
    o_ref[...] = _mm(last, fcw_ref[...]) + fcb_ref[...]               # (B, OUT)


# ----------------------------- model forward -------------------------------

def ctts_forward(x_bcs, params):
    """x_bcs: (batch, channels, sequence_length) -> (batch, output_size)."""
    B, C, S = x_bcs.shape
    H = params["conv1_b"].shape[1]
    OUT = params["fc_b"].shape[1]

    x_bsc = jnp.transpose(x_bcs, (0, 2, 1)).astype(jnp.float32)  # (B, S, C)
    pe_s = params["pe"][:S]                                      # (S, H)

    args = (
        x_bsc,
        params["conv1_w"], params["conv1_b"],
        params["conv2_w"], params["conv2_b"],
        params["proj_w"], params["proj_b"], pe_s,
        params["wq"], params["wk"], params["wv"],
        params["bq"], params["bk"], params["bv"],
        params["wo"], params["bo"], params["ln1_g"], params["ln1_b"],
        params["w1"], params["b1"], params["w2"], params["b2"],
        params["ln2_g"], params["ln2_b"],
        params["fc_w"], params["fc_b"],
    )

    return pl.pallas_call(
        _ctts_kernel,
        grid=(1,),
        in_specs=[_full_spec(a.shape) for a in args],
        out_specs=_full_spec((B, OUT)),
        out_shape=jax.ShapeDtypeStruct((B, OUT), jnp.float32),
        scratch_shapes=[
            pltpu.VMEM((S + 2, C), jnp.float32),   # conv1 zero-padded input
            pltpu.VMEM((S + 2, H), jnp.float32),   # conv2 zero-padded input
        ],
        compiler_params=pltpu.CompilerParams(
            dimension_semantics=("arbitrary",)),
    )(*args)


# ----------------------------- parameter init ------------------------------

def init_params(key, input_channels, hidden, output_size, max_len=5000):
    H, C, OUT = hidden, input_channels, output_size
    nh, hd, L = NUM_HEADS, hidden // NUM_HEADS, NUM_LAYERS
    keys = iter(jax.random.split(key, 64))

    def w(shape, scale=0.1):
        return (scale * jax.random.normal(next(keys), shape)).astype(jnp.float32)

    def wb(shape, scale=0.1):                 # matmul weights live in bf16
        return w(shape, scale).astype(jnp.bfloat16)

    params = dict(
        # conv weights: (kernel_tap, Cin, Cout); linears: (in, out) — transposed
        # w.r.t. PyTorch's storage, consistent with the kernel's layout.
        conv1_w=wb((3, C, H)), conv1_b=w((1, H)),
        conv2_w=wb((3, H, H)), conv2_b=w((1, H)),
        proj_w=wb((H, H)), proj_b=w((1, H)),
        fc_w=wb((H, OUT)), fc_b=w((1, OUT)),
        # attention weights pre-split per head so the kernel never slices lanes
        wq=wb((L, nh, H, hd)), wk=wb((L, nh, H, hd)), wv=wb((L, nh, H, hd)),
        bq=w((L, nh, 1, hd)), bk=w((L, nh, 1, hd)), bv=w((L, nh, 1, hd)),
        wo=wb((L, nh, hd, H)), bo=w((L, 1, H)),
        ln1_g=jnp.ones((L, 1, H), jnp.float32),
        ln1_b=jnp.zeros((L, 1, H), jnp.float32),
        w1=wb((L, H, DFF), 0.05), b1=w((L, 1, DFF)),
        w2=wb((L, DFF, H), 0.05), b2=w((L, 1, H)),
        ln2_g=jnp.ones((L, 1, H), jnp.float32),
        ln2_b=jnp.zeros((L, 1, H), jnp.float32),
    )

    # sinusoidal positional-encoding buffer: (max_len, H)
    pos = jnp.arange(max_len, dtype=jnp.float32)[:, None]
    div = jnp.exp(jnp.arange(0, H, 2, dtype=jnp.float32) * (-math.log(10000.0) / H))
    pe = jnp.zeros((max_len, H), jnp.float32)
    pe = pe.at[:, 0::2].set(jnp.sin(pos * div))
    pe = pe.at[:, 1::2].set(jnp.cos(pos * div))
    params["pe"] = pe
    return params


# --------------------------------- main -------------------------------------

if __name__ == "__main__":
    B, C, S, H, OUT = 2, 4, 16, 32, 1
    kx, kp = jax.random.split(jax.random.PRNGKey(0))
    x = jax.random.normal(kx, (B, C, S), dtype=jnp.float32)
    params = init_params(kp, input_channels=C, hidden=H, output_size=OUT)

    fwd = jax.jit(ctts_forward)
    out = jax.block_until_ready(fwd(x, params))
    assert out.shape == (B, OUT), out.shape
    assert bool(jnp.all(jnp.isfinite(out)))
    print("KERNEL_OK")
</pallas_src>

<mosaic_0001>
module attributes {stable_mosaic.version = 11 : i64} {
  func.func @_ctts_kernel(%arg0: i32, %arg1: memref<2x16x4xf32, #tpu.memory_space<vmem>>, %arg2: memref<3x4x32xbf16, #tpu.memory_space<vmem>>, %arg3: memref<1x32xf32, #tpu.memory_space<vmem>>, %arg4: memref<3x32x32xbf16, #tpu.memory_space<vmem>>, %arg5: memref<1x32xf32, #tpu.memory_space<vmem>>, %arg6: memref<32x32xbf16, #tpu.memory_space<vmem>>, %arg7: memref<1x32xf32, #tpu.memory_space<vmem>>, %arg8: memref<16x32xf32, #tpu.memory_space<vmem>>, %arg9: memref<2x4x32x8xbf16, #tpu.memory_space<vmem>>, %arg10: memref<2x4x32x8xbf16, #tpu.memory_space<vmem>>, %arg11: memref<2x4x32x8xbf16, #tpu.memory_space<vmem>>, %arg12: memref<2x4x1x8xf32, #tpu.memory_space<vmem>>, %arg13: memref<2x4x1x8xf32, #tpu.memory_space<vmem>>, %arg14: memref<2x4x1x8xf32, #tpu.memory_space<vmem>>, %arg15: memref<2x4x8x32xbf16, #tpu.memory_space<vmem>>, %arg16: memref<2x1x32xf32, #tpu.memory_space<vmem>>, %arg17: memref<2x1x32xf32, #tpu.memory_space<vmem>>, %arg18: memref<2x1x32xf32, #tpu.memory_space<vmem>>, %arg19: memref<2x32x2048xbf16, #tpu.memory_space<vmem>>, %arg20: memref<2x1x2048xf32, #tpu.memory_space<vmem>>, %arg21: memref<2x2048x32xbf16, #tpu.memory_space<vmem>>, %arg22: memref<2x1x32xf32, #tpu.memory_space<vmem>>, %arg23: memref<2x1x32xf32, #tpu.memory_space<vmem>>, %arg24: memref<2x1x32xf32, #tpu.memory_space<vmem>>, %arg25: memref<32x1xbf16, #tpu.memory_space<vmem>>, %arg26: memref<1x1xf32, #tpu.memory_space<vmem>>, %arg27: memref<2x1xf32, #tpu.memory_space<vmem>>, %arg28: memref<18x4xf32, #tpu.memory_space<vmem>>, %arg29: memref<18x32xf32, #tpu.memory_space<vmem>>) attributes {dimension_semantics = [#tpu.dimension_semantics<arbitrary>], iteration_bounds = array<i64: 1>, scalar_prefetch = 0 : i64, scratch_operands = 2 : i64, tpu.core_type = #tpu.core_type<tc>, window_params = [{pipeline_mode = #tpu.pipeline_mode<synchronous>, transform_indices = @transform_0, window_bounds = array<i64: 2, 16, 4>}, {pipeline_mode = #tpu.pipeline_mode<synchronous>, transform_indices = @transform_1, window_bounds = array<i64: 3, 4, 32>}, {pipeline_mode = #tpu.pipeline_mode<synchronous>, transform_indices = @transform_2, window_bounds = array<i64: 1, 32>}, {pipeline_mode = #tpu.pipeline_mode<synchronous>, transform_indices = @transform_3, window_bounds = array<i64: 3, 32, 32>}, {pipeline_mode = #tpu.pipeline_mode<synchronous>, transform_indices = @transform_4, window_bounds = array<i64: 1, 32>}, {pipeline_mode = #tpu.pipeline_mode<synchronous>, transform_indices = @transform_5, window_bounds = array<i64: 32, 32>}, {pipeline_mode = #tpu.pipeline_mode<synchronous>, transform_indices = @transform_6, window_bounds = array<i64: 1, 32>}, {pipeline_mode = #tpu.pipeline_mode<synchronous>, transform_indices = @transform_7, window_bounds = array<i64: 16, 32>}, {pipeline_mode = #tpu.pipeline_mode<synchronous>, transform_indices = @transform_8, window_bounds = array<i64: 2, 4, 32, 8>}, {pipeline_mode = #tpu.pipeline_mode<synchronous>, transform_indices = @transform_9, window_bounds = array<i64: 2, 4, 32, 8>}, {pipeline_mode = #tpu.pipeline_mode<synchronous>, transform_indices = @transform_10, window_bounds = array<i64: 2, 4, 32, 8>}, {pipeline_mode = #tpu.pipeline_mode<synchronous>, transform_indices = @transform_11, window_bounds = array<i64: 2, 4, 1, 8>}, {pipeline_mode = #tpu.pipeline_mode<synchronous>, transform_indices = @transform_12, window_bounds = array<i64: 2, 4, 1, 8>}, {pipeline_mode = #tpu.pipeline_mode<synchronous>, transform_indices = @transform_13, window_bounds = array<i64: 2, 4, 1, 8>}, {pipeline_mode = #tpu.pipeline_mode<synchronous>, transform_indices = @transform_14, window_bounds = array<i64: 2, 4, 8, 32>}, {pipeline_mode = #tpu.pipeline_mode<synchronous>, transform_indices = @transform_15, window_bounds = array<i64: 2, 1, 32>}, {pipeline_mode = #tpu.pipeline_mode<synchronous>, transform_indices = @transform_16, window_bounds = array<i64: 2, 1, 32>}, {pipeline_mode = #tpu.pipeline_mode<synchronous>, transform_indices = @transform_17, window_bounds = array<i64: 2, 1, 32>}, {pipeline_mode = #tpu.pipeline_mode<synchronous>, transform_indices = @transform_18, window_bounds = array<i64: 2, 32, 2048>}, {pipeline_mode = #tpu.pipeline_mode<synchronous>, transform_indices = @transform_19, window_bounds = array<i64: 2, 1, 2048>}, {pipeline_mode = #tpu.pipeline_mode<synchronous>, transform_indices = @transform_20, window_bounds = array<i64: 2, 2048, 32>}, {pipeline_mode = #tpu.pipeline_mode<synchronous>, transform_indices = @transform_21, window_bounds = array<i64: 2, 1, 32>}, {pipeline_mode = #tpu.pipeline_mode<synchronous>, transform_indices = @transform_22, window_bounds = array<i64: 2, 1, 32>}, {pipeline_mode = #tpu.pipeline_mode<synchronous>, transform_indices = @transform_23, window_bounds = array<i64: 2, 1, 32>}, {pipeline_mode = #tpu.pipeline_mode<synchronous>, transform_indices = @transform_24, window_bounds = array<i64: 32, 1>}, {pipeline_mode = #tpu.pipeline_mode<synchronous>, transform_indices = @transform_25, window_bounds = array<i64: 1, 1>}, {pipeline_mode = #tpu.pipeline_mode<synchronous>, transform_indices = @transform_26, window_bounds = array<i64: 2, 1>}]} {
    %cst = arith.constant 0.000000e+00 : f32
    %0 = vector.broadcast %cst : f32 to vector<18x4xf32>
    %c0 = arith.constant 0 : index
    %c0_0 = arith.constant 0 : index
    %1 = vector.load %arg28[%c0, %c0_0] : memref<18x4xf32, #tpu.memory_space<vmem>>, vector<18x4xf32>
    tpu.vector_store %arg28[%c0, %c0_0], %0 {strides = array<i32>} : memref<18x4xf32, #tpu.memory_space<vmem>>, vector<18x4xf32>,
    %cst_1 = arith.constant 0.000000e+00 : f32
    %2 = vector.broadcast %cst_1 : f32 to vector<18x32xf32>
    %c0_2 = arith.constant 0 : index
    %c0_3 = arith.constant 0 : index
    %3 = vector.load %arg29[%c0_2, %c0_3] : memref<18x32xf32, #tpu.memory_space<vmem>>, vector<18x32xf32>
    tpu.vector_store %arg29[%c0_2, %c0_3], %2 {strides = array<i32>} : memref<18x32xf32, #tpu.memory_space<vmem>>, vector<18x32xf32>,
    %c0_4 = arith.constant 0 : index
    %c0_5 = arith.constant 0 : index
    %c0_6 = arith.constant 0 : index
    %4 = vector.load %arg1[%c0_4, %c0_5, %c0_6] : memref<2x16x4xf32, #tpu.memory_space<vmem>>, vector<1x16x4xf32>
    %5 = vector.shape_cast %4 : vector<1x16x4xf32> to vector<16x4xf32>
    %c1 = arith.constant 1 : index
    %c0_7 = arith.constant 0 : index
    %6 = vector.load %arg28[%c1, %c0_7] : memref<18x4xf32, #tpu.memory_space<vmem>>, vector<16x4xf32>
    tpu.vector_store %arg28[%c1, %c0_7], %5 {strides = array<i32>} : memref<18x4xf32, #tpu.memory_space<vmem>>, vector<16x4xf32>,
    %c0_8 = arith.constant 0 : index
    %c0_9 = arith.constant 0 : index
    %7 = vector.load %arg3[%c0_8, %c0_9] : memref<1x32xf32, #tpu.memory_space<vmem>>, vector<1x32xf32>
    %c0_10 = arith.constant 0 : index
    %c0_11 = arith.constant 0 : index
    %8 = vector.load %arg28[%c0_10, %c0_11] : memref<18x4xf32, #tpu.memory_space<vmem>>, vector<16x4xf32>
    %c0_12 = arith.constant 0 : index
    %c0_13 = arith.constant 0 : index
    %c0_14 = arith.constant 0 : index
    %9 = vector.load %arg2[%c0_12, %c0_13, %c0_14] : memref<3x4x32xbf16, #tpu.memory_space<vmem>>, vector<1x4x32xbf16>
    %10 = vector.shape_cast %9 : vector<1x4x32xbf16> to vector<4x32xbf16>
    %11 = arith.truncf %8 : vector<16x4xf32> to vector<16x4xbf16>
    %cst_15 = arith.constant dense<0.000000e+00> : vector<16x32xf32>
    %12 = tpu.matmul %11, %10, %cst_15 {dimension_numbers = #tpu.dot_dimension_numbers<[1], [0], [0], [1], [0, 0, 1, 1], [], []>} : vector<16x4xbf16>, vector<4x32xbf16>, vector<16x32xf32> -> vector<16x32xf32>
    %c1_16 = arith.constant 1 : index
    %c0_17 = arith.constant 0 : index
    %13 = vector.load %arg28[%c1_16, %c0_17] : memref<18x4xf32, #tpu.memory_space<vmem>>, vector<16x4xf32>
    %c1_18 = arith.constant 1 : index
    %c0_19 = arith.constant 0 : index
    %c0_20 = arith.constant 0 : index
    %14 = vector.load %arg2[%c1_18, %c0_19, %c0_20] : memref<3x4x32xbf16, #tpu.memory_space<vmem>>, vector<1x4x32xbf16>
    %15 = vector.shape_cast %14 : vector<1x4x32xbf16> to vector<4x32xbf16>
    %16 = arith.truncf %13 : vector<16x4xf32> to vector<16x4xbf16>
    %cst_21 = arith.constant dense<0.000000e+00> : vector<16x32xf32>
    %17 = tpu.matmul %16, %15, %cst_21 {dimension_numbers = #tpu.dot_dimension_numbers<[1], [0], [0], [1], [0, 0, 1, 1], [], []>} : vector<16x4xbf16>, vector<4x32xbf16>, vector<16x32xf32> -> vector<16x32xf32>
    %18 = arith.addf %12, %17 : vector<16x32xf32>
    %c2 = arith.constant 2 : index
    %c0_22 = arith.constant 0 : index
    %19 = vector.load %arg28[%c2, %c0_22] : memref<18x4xf32, #tpu.memory_space<vmem>>, vector<16x4xf32>
    %c2_23 = arith.constant 2 : index
    %c0_24 = arith.constant 0 : index
    %c0_25 = arith.constant 0 : index
    %20 = vector.load %arg2[%c2_23, %c0_24, %c0_25] : memref<3x4x32xbf16, #tpu.memory_space<vmem>>, vector<1x4x32xbf16>
    %21 = vector.shape_cast %20 : vector<1x4x32xbf16> to vector<4x32xbf16>
    %22 = arith.truncf %19 : vector<16x4xf32> to vector<16x4xbf16>
    %cst_26 = arith.constant dense<0.000000e+00> : vector<16x32xf32>
    %23 = tpu.matmul %22, %21, %cst_26 {dimension_numbers = #tpu.dot_dimension_numbers<[1], [0], [0], [1], [0, 0, 1, 1], [], []>} : vector<16x4xbf16>, vector<4x32xbf16>, vector<16x32xf32> -> vector<16x32xf32>
    %24 = arith.addf %18, %23 : vector<16x32xf32>
    %25 = vector.broadcast %7 : vector<1x32xf32> to vector<16x32xf32>
    %26 = arith.addf %24, %25 : vector<16x32xf32>
    %cst_27 = arith.constant 0.000000e+00 : f32
    %27 = vector.broadcast %cst_27 : f32 to vector<16x32xf32>
    %28 = arith.maximumf %26, %27 : vector<16x32xf32>
    %c1_28 = arith.constant 1 : index
    %c0_29 = arith.constant 0 : index
    %29 = vector.load %arg29[%c1_28, %c0_29] : memref<18x32xf32, #tpu.memory_space<vmem>>, vector<16x32xf32>
    tpu.vector_store %arg29[%c1_28, %c0_29], %28 {strides = array<i32>} : memref<18x32xf32, #tpu.memory_space<vmem>>, vector<16x32xf32>,
    %c0_30 = arith.constant 0 : index
    %c0_31 = arith.constant 0 : index
    %30 = vector.load %arg5[%c0_30, %c0_31] : memref<1x32xf32, #tpu.memory_space<vmem>>, vector<1x32xf32>
    %c0_32 = arith.constant 0 : index
    %c0_33 = arith.constant 0 : index
    %31 = vector.load %arg29[%c0_32, %c0_33] : memref<18x32xf32, #tpu.memory_space<vmem>>, vector<16x32xf32>
    %c0_34 = arith.constant 0 : index
    %c0_35 = arith.constant 0 : index
    %c0_36 = arith.constant 0 : index
    %32 = vector.load %arg4[%c0_34, %c0_35, %c0_36] : memref<3x32x32xbf16, #tpu.memory_space<vmem>>, vector<1x32x32xbf16>
    %33 = vector.shape_cast %32 : vector<1x32x32xbf16> to vector<32x32xbf16>
    %34 = arith.truncf %31 : vector<16x32xf32> to vector<16x32xbf16>
    %cst_37 = arith.constant dense<0.000000e+00> : vector<16x32xf32>
    %35 = tpu.matmul %34, %33, %cst_37 {dimension_numbers = #tpu.dot_dimension_numbers<[1], [0], [0], [1], [0, 0, 1, 1], [], []>} : vector<16x32xbf16>, vector<32x32xbf16>, vector<16x32xf32> -> vector<16x32xf32>
    %c1_38 = arith.constant 1 : index
    %c0_39 = arith.constant 0 : index
    %36 = vector.load %arg29[%c1_38, %c0_39] : memref<18x32xf32, #tpu.memory_space<vmem>>, vector<16x32xf32>
    %c1_40 = arith.constant 1 : index
    %c0_41 = arith.constant 0 : index
    %c0_42 = arith.constant 0 : index
    %37 = vector.load %arg4[%c1_40, %c0_41, %c0_42] : memref<3x32x32xbf16, #tpu.memory_space<vmem>>, vector<1x32x32xbf16>
    %38 = vector.shape_cast %37 : vector<1x32x32xbf16> to vector<32x32xbf16>
    %39 = arith.truncf %36 : vector<16x32xf32> to vector<16x32xbf16>
    %cst_43 = arith.constant dense<0.000000e+00> : vector<16x32xf32>
    %40 = tpu.matmul %39, %38, %cst_43 {dimension_numbers = #tpu.dot_dimension_numbers<[1], [0], [0], [1], [0, 0, 1, 1], [], []>} : vector<16x32xbf16>, vector<32x32xbf16>, vector<16x32xf32> -> vector<16x32xf32>
    %41 = arith.addf %35, %40 : vector<16x32xf32>
    %c2_44 = arith.constant 2 : index
    %c0_45 = arith.constant 0 : index
    %42 = vector.load %arg29[%c2_44, %c0_45] : memref<18x32xf32, #tpu.memory_space<vmem>>, vector<16x32xf32>
    %c2_46 = arith.constant 2 : index
    %c0_47 = arith.constant 0 : index
    %c0_48 = arith.constant 0 : index
    %43 = vector.load %arg4[%c2_46, %c0_47, %c0_48] : memref<3x32x32xbf16, #tpu.memory_space<vmem>>, vector<1x32x32xbf16>
    %44 = vector.shape_cast %43 : vector<1x32x32xbf16> to vector<32x32xbf16>
    %45 = arith.truncf %42 : vector<16x32xf32> to vector<16x32xbf16>
    %cst_49 = arith.constant dense<0.000000e+00> : vector<16x32xf32>
    %46 = tpu.matmul %45, %44, %cst_49 {dimension_numbers = #tpu.dot_dimension_numbers<[1], [0], [0], [1], [0, 0, 1, 1], [], []>} : vector<16x32xbf16>, vector<32x32xbf16>, vector<16x32xf32> -> vector<16x32xf32>
    %47 = arith.addf %41, %46 : vector<16x32xf32>
    %48 = vector.broadcast %30 : vector<1x32xf32> to vector<16x32xf32>
    %49 = arith.addf %47, %48 : vector<16x32xf32>
    %cst_50 = arith.constant 0.000000e+00 : f32
    %50 = vector.broadcast %cst_50 : f32 to vector<16x32xf32>
    %51 = arith.maximumf %49, %50 : vector<16x32xf32>
    %c1_51 = arith.constant 1 : index
    %c0_52 = arith.constant 0 : index
    %c0_53 = arith.constant 0 : index
    %52 = vector.load %arg1[%c1_51, %c0_52, %c0_53] : memref<2x16x4xf32, #tpu.memory_space<vmem>>, vector<1x16x4xf32>
    %53 = vector.shape_cast %52 : vector<1x16x4xf32> to vector<16x4xf32>
    %c1_54 = arith.constant 1 : index
    %c0_55 = arith.constant 0 : index
    %54 = vector.load %arg28[%c1_54, %c0_55] : memref<18x4xf32, #tpu.memory_space<vmem>>, vector<16x4xf32>
    tpu.vector_store %arg28[%c1_54, %c0_55], %53 {strides = array<i32>} : memref<18x4xf32, #tpu.memory_space<vmem>>, vector<16x4xf32>,
    %c0_56 = arith.constant 0 : index
    %c0_57 = arith.constant 0 : index
    %55 = vector.load %arg3[%c0_56, %c0_57] : memref<1x32xf32, #tpu.memory_space<vmem>>, vector<1x32xf32>
    %c0_58 = arith.constant 0 : index
    %c0_59 = arith.constant 0 : index
    %56 = vector.load %arg28[%c0_58, %c0_59] : memref<18x4xf32, #tpu.memory_space<vmem>>, vector<16x4xf32>
    %c0_60 = arith.constant 0 : index
    %c0_61 = arith.constant 0 : index
    %c0_62 = arith.constant 0 : index
    %57 = vector.load %arg2[%c0_60, %c0_61, %c0_62] : memref<3x4x32xbf16, #tpu.memory_space<vmem>>, vector<1x4x32xbf16>
    %58 = vector.shape_cast %57 : vector<1x4x32xbf16> to vector<4x32xbf16>
    %59 = arith.truncf %56 : vector<16x4xf32> to vector<16x4xbf16>
    %cst_63 = arith.constant dense<0.000000e+00> : vector<16x32xf32>
    %60 = tpu.matmul %59, %58, %cst_63 {dimension_numbers = #tpu.dot_dimension_numbers<[1], [0], [0], [1], [0, 0, 1, 1], [], []>} : vector<16x4xbf16>, vector<4x32xbf16>, vector<16x32xf32> -> vector<16x32xf32>
    %c1_64 = arith.constant 1 : index
    %c0_65 = arith.constant 0 : index
    %61 = vector.load %arg28[%c1_64, %c0_65] : memref<18x4xf32, #tpu.memory_space<vmem>>, vector<16x4xf32>
    %c1_66 = arith.constant 1 : index
    %c0_67 = arith.constant 0 : index
    %c0_68 = arith.constant 0 : index
    %62 = vector.load %arg2[%c1_66, %c0_67, %c0_68] : memref<3x4x32xbf16, #tpu.memory_space<vmem>>, vector<1x4x32xbf16>
    %63 = vector.shape_cast %62 : vector<1x4x32xbf16> to vector<4x32xbf16>
    %64 = arith.truncf %61 : vector<16x4xf32> to vector<16x4xbf16>
    %cst_69 = arith.constant dense<0.000000e+00> : vector<16x32xf32>
    %65 = tpu.matmul %64, %63, %cst_69 {dimension_numbers = #tpu.dot_dimension_numbers<[1], [0], [0], [1], [0, 0, 1, 1], [], []>} : vector<16x4xbf16>, vector<4x32xbf16>, vector<16x32xf32> -> vector<16x32xf32>
    %66 = arith.addf %60, %65 : vector<16x32xf32>
    %c2_70 = arith.constant 2 : index
    %c0_71 = arith.constant 0 : index
    %67 = vector.load %arg28[%c2_70, %c0_71] : memref<18x4xf32, #tpu.memory_space<vmem>>, vector<16x4xf32>
    %c2_72 = arith.constant 2 : index
    %c0_73 = arith.constant 0 : index
    %c0_74 = arith.constant 0 : index
    %68 = vector.load %arg2[%c2_72, %c0_73, %c0_74] : memref<3x4x32xbf16, #tpu.memory_space<vmem>>, vector<1x4x32xbf16>
    %69 = vector.shape_cast %68 : vector<1x4x32xbf16> to vector<4x32xbf16>
    %70 = arith.truncf %67 : vector<16x4xf32> to vector<16x4xbf16>
    %cst_75 = arith.constant dense<0.000000e+00> : vector<16x32xf32>
    %71 = tpu.matmul %70, %69, %cst_75 {dimension_numbers = #tpu.dot_dimension_numbers<[1], [0], [0], [1], [0, 0, 1, 1], [], []>} : vector<16x4xbf16>, vector<4x32xbf16>, vector<16x32xf32> -> vector<16x32xf32>
    %72 = arith.addf %66, %71 : vector<16x32xf32>
    %73 = vector.broadcast %55 : vector<1x32xf32> to vector<16x32xf32>
    %74 = arith.addf %72, %73 : vector<16x32xf32>
    %cst_76 = arith.constant 0.000000e+00 : f32
    %75 = vector.broadcast %cst_76 : f32 to vector<16x32xf32>
    %76 = arith.maximumf %74, %75 : vector<16x32xf32>
    %c1_77 = arith.constant 1 : index
    %c0_78 = arith.constant 0 : index
    %77 = vector.load %arg29[%c1_77, %c0_78] : memref<18x32xf32, #tpu.memory_space<vmem>>, vector<16x32xf32>
    tpu.vector_store %arg29[%c1_77, %c0_78], %76 {strides = array<i32>} : memref<18x32xf32, #tpu.memory_space<vmem>>, vector<16x32xf32>,
    %c0_79 = arith.constant 0 : index
    %c0_80 = arith.constant 0 : index
    %78 = vector.load %arg5[%c0_79, %c0_80] : memref<1x32xf32, #tpu.memory_space<vmem>>, vector<1x32xf32>
    %c0_81 = arith.constant 0 : index
    %c0_82 = arith.constant 0 : index
    %79 = vector.load %arg29[%c0_81, %c0_82] : memref<18x32xf32, #tpu.memory_space<vmem>>, vector<16x32xf32>
    %c0_83 = arith.constant 0 : index
    %c0_84 = arith.constant 0 : index
    %c0_85 = arith.constant 0 : index
    %80 = vector.load %arg4[%c0_83, %c0_84, %c0_85] : memref<3x32x32xbf16, #tpu.memory_space<vmem>>, vector<1x32x32xbf16>
    %81 = vector.shape_cast %80 : vector<1x32x32xbf16> to vector<32x32xbf16>
    %82 = arith.truncf %79 : vector<16x32xf32> to vector<16x32xbf16>
    %cst_86 = arith.constant dense<0.000000e+00> : vector<16x32xf32>
    %83 = tpu.matmul %82, %81, %cst_86 {dimension_numbers = #tpu.dot_dimension_numbers<[1], [0], [0], [1], [0, 0, 1, 1], [], []>} : vector<16x32xbf16>, vector<32x32xbf16>, vector<16x32xf32> -> vector<16x32xf32>
    %c1_87 = arith.constant 1 : index
    %c0_88 = arith.constant 0 : index
    %84 = vector.load %arg29[%c1_87, %c0_88] : memref<18x32xf32, #tpu.memory_space<vmem>>, vector<16x32xf32>
    %c1_89 = arith.constant 1 : index
    %c0_90 = arith.constant 0 : index
    %c0_91 = arith.constant 0 : index
    %85 = vector.load %arg4[%c1_89, %c0_90, %c0_91] : memref<3x32x32xbf16, #tpu.memory_space<vmem>>, vector<1x32x32xbf16>
    %86 = vector.shape_cast %85 : vector<1x32x32xbf16> to vector<32x32xbf16>
    %87 = arith.truncf %84 : vector<16x32xf32> to vector<16x32xbf16>
    %cst_92 = arith.constant dense<0.000000e+00> : vector<16x32xf32>
    %88 = tpu.matmul %87, %86, %cst_92 {dimension_numbers = #tpu.dot_dimension_numbers<[1], [0], [0], [1], [0, 0, 1, 1], [], []>} : vector<16x32xbf16>, vector<32x32xbf16>, vector<16x32xf32> -> vector<16x32xf32>
    %89 = arith.addf %83, %88 : vector<16x32xf32>
    %c2_93 = arith.constant 2 : index
    %c0_94 = arith.constant 0 : index
    %90 = vector.load %arg29[%c2_93, %c0_94] : memref<18x32xf32, #tpu.memory_space<vmem>>, vector<16x32xf32>
    %c2_95 = arith.constant 2 : index
    %c0_96 = arith.constant 0 : index
    %c0_97 = arith.constant 0 : index
    %91 = vector.load %arg4[%c2_95, %c0_96, %c0_97] : memref<3x32x32xbf16, #tpu.memory_space<vmem>>, vector<1x32x32xbf16>
    %92 = vector.shape_cast %91 : vector<1x32x32xbf16> to vector<32x32xbf16>
    %93 = arith.truncf %90 : vector<16x32xf32> to vector<16x32xbf16>
    %cst_98 = arith.constant dense<0.000000e+00> : vector<16x32xf32>
    %94 = tpu.matmul %93, %92, %cst_98 {dimension_numbers = #tpu.dot_dimension_numbers<[1], [0], [0], [1], [0, 0, 1, 1], [], []>} : vector<16x32xbf16>, vector<32x32xbf16>, vector<16x32xf32> -> vector<16x32xf32>
    %95 = arith.addf %89, %94 : vector<16x32xf32>
    %96 = vector.broadcast %78 : vector<1x32xf32> to vector<16x32xf32>
    %97 = arith.addf %95, %96 : vector<16x32xf32>
    %cst_99 = arith.constant 0.000000e+00 : f32
    %98 = vector.broadcast %cst_99 : f32 to vector<16x32xf32>
    %99 = arith.maximumf %97, %98 : vector<16x32xf32>
    %100 = tpu.concatenate %51, %99 in 0 : vector<16x32xf32>, vector<16x32xf32> -> vector<32x32xf32>
    %c0_100 = arith.constant 0 : index
    %c0_101 = arith.constant 0 : index
    %101 = vector.load %arg8[%c0_100, %c0_101] : memref<16x32xf32, #tpu.memory_space<vmem>>, vector<16x32xf32>
    %102 = tpu.concatenate %101, %101 in 0 : vector<16x32xf32>, vector<16x32xf32> -> vector<32x32xf32>
    %c0_102 = arith.constant 0 : index
    %c0_103 = arith.constant 0 : index
    %103 = vector.load %arg6[%c0_102, %c0_103] : memref<32x32xbf16, #tpu.memory_space<vmem>>, vector<32x32xbf16>
    %104 = arith.truncf %100 : vector<32x32xf32> to vector<32x32xbf16>
    %cst_104 = arith.constant dense<0.000000e+00> : vector<32x32xf32>
    %105 = tpu.matmul %104, %103, %cst_104 {dimension_numbers = #tpu.dot_dimension_numbers<[1], [0], [0], [1], [0, 0, 1, 1], [], []>} : vector<32x32xbf16>, vector<32x32xbf16>, vector<32x32xf32> -> vector<32x32xf32>
    %c0_105 = arith.constant 0 : index
    %c0_106 = arith.constant 0 : index
    %106 = vector.load %arg7[%c0_105, %c0_106] : memref<1x32xf32, #tpu.memory_space<vmem>>, vector<1x32xf32>
    %107 = vector.broadcast %106 : vector<1x32xf32> to vector<32x32xf32>
    %108 = arith.addf %105, %107 : vector<32x32xf32>
    %109 = arith.addf %108, %102 : vector<32x32xf32>
    %c0_107 = arith.constant 0 : index
    %c0_108 = arith.constant 0 : index
    %c0_109 = arith.constant 0 : index
    %110 = vector.load %arg16[%c0_107, %c0_108, %c0_109] : memref<2x1x32xf32, #tpu.memory_space<vmem>>, vector<1x1x32xf32>
    %111 = vector.shape_cast %110 : vector<1x1x32xf32> to vector<1x32xf32>
    %c0_110 = arith.constant 0 : index
    %c0_111 = arith.constant 0 : index
    %c0_112 = arith.constant 0 : index
    %c0_113 = arith.constant 0 : index
    %112 = vector.load %arg9[%c0_110, %c0_111, %c0_112, %c0_113] : memref<2x4x32x8xbf16, #tpu.memory_space<vmem>>, vector<1x1x32x8xbf16>
    %113 = vector.shape_cast %112 : vector<1x1x32x8xbf16> to vector<32x8xbf16>
    %114 = arith.truncf %109 : vector<32x32xf32> to vector<32x32xbf16>
    %cst_114 = arith.constant dense<0.000000e+00> : vector<32x8xf32>
    %115 = tpu.matmul %114, %113, %cst_114 {dimension_numbers = #tpu.dot_dimension_numbers<[1], [0], [0], [1], [0, 0, 1, 1], [], []>} : vector<32x32xbf16>, vector<32x8xbf16>, vector<32x8xf32> -> vector<32x8xf32>
    %c0_115 = arith.constant 0 : index
    %c0_116 = arith.constant 0 : index
    %c0_117 = arith.constant 0 : index
    %c0_118 = arith.constant 0 : index
    %116 = vector.load %arg12[%c0_115, %c0_116, %c0_117, %c0_118] : memref<2x4x1x8xf32, #tpu.memory_space<vmem>>, vector<1x1x1x8xf32>
    %117 = vector.shape_cast %116 : vector<1x1x1x8xf32> to vector<1x8xf32>
    %118 = vector.broadcast %117 : vector<1x8xf32> to vector<32x8xf32>
    %119 = arith.addf %115, %118 : vector<32x8xf32>
    %cst_119 = arith.constant 0.353553385 : f32
    %120 = vector.broadcast %cst_119 : f32 to vector<32x8xf32>
    %121 = arith.mulf %119, %120 : vector<32x8xf32>
    %c0_120 = arith.constant 0 : index
    %c0_121 = arith.constant 0 : index
    %c0_122 = arith.constant 0 : index
    %c0_123 = arith.constant 0 : index
    %122 = vector.load %arg10[%c0_120, %c0_121, %c0_122, %c0_123] : memref<2x4x32x8xbf16, #tpu.memory_space<vmem>>, vector<1x1x32x8xbf16>
    %123 = vector.shape_cast %122 : vector<1x1x32x8xbf16> to vector<32x8xbf16>
    %124 = arith.truncf %109 : vector<32x32xf32> to vector<32x32xbf16>
    %cst_124 = arith.constant dense<0.000000e+00> : vector<32x8xf32>
    %125 = tpu.matmul %124, %123, %cst_124 {dimension_numbers = #tpu.dot_dimension_numbers<[1], [0], [0], [1], [0, 0, 1, 1], [], []>} : vector<32x32xbf16>, vector<32x8xbf16>, vector<32x8xf32> -> vector<32x8xf32>
    %c0_125 = arith.constant 0 : index
    %c0_126 = arith.constant 0 : index
    %c0_127 = arith.constant 0 : index
    %c0_128 = arith.constant 0 : index
    %126 = vector.load %arg13[%c0_125, %c0_126, %c0_127, %c0_128] : memref<2x4x1x8xf32, #tpu.memory_space<vmem>>, vector<1x1x1x8xf32>
    %127 = vector.shape_cast %126 : vector<1x1x1x8xf32> to vector<1x8xf32>
    %128 = vector.broadcast %127 : vector<1x8xf32> to vector<32x8xf32>
    %129 = arith.addf %125, %128 : vector<32x8xf32>
    %c0_129 = arith.constant 0 : index
    %c0_130 = arith.constant 0 : index
    %c0_131 = arith.constant 0 : index
    %c0_132 = arith.constant 0 : index
    %130 = vector.load %arg11[%c0_129, %c0_130, %c0_131, %c0_132] : memref<2x4x32x8xbf16, #tpu.memory_space<vmem>>, vector<1x1x32x8xbf16>
    %131 = vector.shape_cast %130 : vector<1x1x32x8xbf16> to vector<32x8xbf16>
    %132 = arith.truncf %109 : vector<32x32xf32> to vector<32x32xbf16>
    %cst_133 = arith.constant dense<0.000000e+00> : vector<32x8xf32>
    %133 = tpu.matmul %132, %131, %cst_133 {dimension_numbers = #tpu.dot_dimension_numbers<[1], [0], [0], [1], [0, 0, 1, 1], [], []>} : vector<32x32xbf16>, vector<32x8xbf16>, vector<32x8xf32> -> vector<32x8xf32>
    %c0_134 = arith.constant 0 : index
    %c0_135 = arith.constant 0 : index
    %c0_136 = arith.constant 0 : index
    %c0_137 = arith.constant 0 : index
    %134 = vector.load %arg14[%c0_134, %c0_135, %c0_136, %c0_137] : memref<2x4x1x8xf32, #tpu.memory_space<vmem>>, vector<1x1x1x8xf32>
    %135 = vector.shape_cast %134 : vector<1x1x1x8xf32> to vector<1x8xf32>
    %136 = vector.broadcast %135 : vector<1x8xf32> to vector<32x8xf32>
    %137 = arith.addf %133, %136 : vector<32x8xf32>
    %138 = vector.extract_strided_slice %121 {offsets = [0, 0], sizes = [16, 8], strides = [1, 1]} : vector<32x8xf32> to vector<16x8xf32>
    %139 = vector.extract_strided_slice %129 {offsets = [0, 0], sizes = [16, 8], strides = [1, 1]} : vector<32x8xf32> to vector<16x8xf32>
    %140 = vector.extract_strided_slice %137 {offsets = [0, 0], sizes = [16, 8], strides = [1, 1]} : vector<32x8xf32> to vector<16x8xf32>
    %141 = arith.truncf %138 : vector<16x8xf32> to vector<16x8xbf16>
    %142 = arith.truncf %139 : vector<16x8xf32> to vector<16x8xbf16>
    %cst_138 = arith.constant dense<0.000000e+00> : vector<16x16xf32>
    %143 = tpu.matmul %141, %142, %cst_138 {dimension_numbers = #tpu.dot_dimension_numbers<[1], [1], [0], [0], [0, 0, 1, 0], [], []>} : vector<16x8xbf16>, vector<16x8xbf16>, vector<16x16xf32> -> vector<16x16xf32>
    %cst_139 = arith.constant dense<0xFF800000> : vector<16xf32>
    %144 = vector.multi_reduction <maximumf>, %143, %cst_139 [1] : vector<16x16xf32> to vector<16xf32>
    %145 = vector.shape_cast %144 : vector<16xf32> to vector<16x1xf32>
    %146 = vector.broadcast %145 : vector<16x1xf32> to vector<16x16xf32>
    %147 = arith.subf %143, %146 : vector<16x16xf32>
    %148 = math.exp %147 : vector<16x16xf32>
    %cst_140 = arith.constant dense<0.000000e+00> : vector<16xf32>
    %149 = vector.multi_reduction <add>, %148, %cst_140 [1] : vector<16x16xf32> to vector<16xf32>
    %150 = vector.shape_cast %149 : vector<16xf32> to vector<16x1xf32>
    %151 = tpu.reciprocal %150 {approx = true} : vector<16x1xf32> -> vector<16x1xf32>
    %152 = arith.truncf %148 : vector<16x16xf32> to vector<16x16xbf16>
    %153 = arith.truncf %140 : vector<16x8xf32> to vector<16x8xbf16>
    %cst_141 = arith.constant dense<0.000000e+00> : vector<16x8xf32>
    %154 = tpu.matmul %152, %153, %cst_141 {dimension_numbers = #tpu.dot_dimension_numbers<[1], [0], [0], [1], [0, 0, 1, 1], [], []>} : vector<16x16xbf16>, vector<16x8xbf16>, vector<16x8xf32> -> vector<16x8xf32>
    %155 = vector.broadcast %151 : vector<16x1xf32> to vector<16x8xf32>
    %156 = arith.mulf %154, %155 : vector<16x8xf32>
    %157 = vector.extract_strided_slice %121 {offsets = [16, 0], sizes = [16, 8], strides = [1, 1]} : vector<32x8xf32> to vector<16x8xf32>
    %158 = vector.extract_strided_slice %129 {offsets = [16, 0], sizes = [16, 8], strides = [1, 1]} : vector<32x8xf32> to vector<16x8xf32>
    %159 = vector.extract_strided_slice %137 {offsets = [16, 0], sizes = [16, 8], strides = [1, 1]} : vector<32x8xf32> to vector<16x8xf32>
    %160 = arith.truncf %157 : vector<16x8xf32> to vector<16x8xbf16>
    %161 = arith.truncf %158 : vector<16x8xf32> to vector<16x8xbf16>
    %cst_142 = arith.constant dense<0.000000e+00> : vector<16x16xf32>
    %162 = tpu.matmul %160, %161, %cst_142 {dimension_numbers = #tpu.dot_dimension_numbers<[1], [1], [0], [0], [0, 0, 1, 0], [], []>} : vector<16x8xbf16>, vector<16x8xbf16>, vector<16x16xf32> -> vector<16x16xf32>
    %cst_143 = arith.constant dense<0xFF800000> : vector<16xf32>
    %163 = vector.multi_reduction <maximumf>, %162, %cst_143 [1] : vector<16x16xf32> to vector<16xf32>
    %164 = vector.shape_cast %163 : vector<16xf32> to vector<16x1xf32>
    %165 = vector.broadcast %164 : vector<16x1xf32> to vector<16x16xf32>
    %166 = arith.subf %162, %165 : vector<16x16xf32>
    %167 = math.exp %166 : vector<16x16xf32>
    %cst_144 = arith.constant dense<0.000000e+00> : vector<16xf32>
    %168 = vector.multi_reduction <add>, %167, %cst_144 [1] : vector<16x16xf32> to vector<16xf32>
    %169 = vector.shape_cast %168 : vector<16xf32> to vector<16x1xf32>
    %170 = tpu.reciprocal %169 {approx = true} : vector<16x1xf32> -> vector<16x1xf32>
    %171 = arith.truncf %167 : vector<16x16xf32> to vector<16x16xbf16>
    %172 = arith.truncf %159 : vector<16x8xf32> to vector<16x8xbf16>
    %cst_145 = arith.constant dense<0.000000e+00> : vector<16x8xf32>
    %173 = tpu.matmul %171, %172, %cst_145 {dimension_numbers = #tpu.dot_dimension_numbers<[1], [0], [0], [1], [0, 0, 1, 1], [], []>} : vector<16x16xbf16>, vector<16x8xbf16>, vector<16x8xf32> -> vector<16x8xf32>
    %174 = vector.broadcast %170 : vector<16x1xf32> to vector<16x8xf32>
    %175 = arith.mulf %173, %174 : vector<16x8xf32>
    %176 = tpu.concatenate %156, %175 in 0 : vector<16x8xf32>, vector<16x8xf32> -> vector<32x8xf32>
    %c0_146 = arith.constant 0 : index
    %c0_147 = arith.constant 0 : index
    %c0_148 = arith.constant 0 : index
    %c0_149 = arith.constant 0 : index
    %177 = vector.load %arg15[%c0_146, %c0_147, %c0_148, %c0_149] : memref<2x4x8x32xbf16, #tpu.memory_space<vmem>>, vector<1x1x8x32xbf16>
    %178 = vector.shape_cast %177 : vector<1x1x8x32xbf16> to vector<8x32xbf16>
    %179 = arith.truncf %176 : vector<32x8xf32> to vector<32x8xbf16>
    %cst_150 = arith.constant dense<0.000000e+00> : vector<32x32xf32>
    %180 = tpu.matmul %179, %178, %cst_150 {dimension_numbers = #tpu.dot_dimension_numbers<[1], [0], [0], [1], [0, 0, 1, 1], [], []>} : vector<32x8xbf16>, vector<8x32xbf16>, vector<32x32xf32> -> vector<32x32xf32>
    %181 = vector.broadcast %111 : vector<1x32xf32> to vector<32x32xf32>
    %182 = arith.addf %181, %180 : vector<32x32xf32>
    %c0_151 = arith.constant 0 : index
    %c1_152 = arith.constant 1 : index
    %c0_153 = arith.constant 0 : index
    %c0_154 = arith.constant 0 : index
    %183 = vector.load %arg9[%c0_151, %c1_152, %c0_153, %c0_154] : memref<2x4x32x8xbf16, #tpu.memory_space<vmem>>, vector<1x1x32x8xbf16>
    %184 = vector.shape_cast %183 : vector<1x1x32x8xbf16> to vector<32x8xbf16>
    %185 = arith.truncf %109 : vector<32x32xf32> to vector<32x32xbf16>
    %cst_155 = arith.constant dense<0.000000e+00> : vector<32x8xf32>
    %186 = tpu.matmul %185, %184, %cst_155 {dimension_numbers = #tpu.dot_dimension_numbers<[1], [0], [0], [1], [0, 0, 1, 1], [], []>} : vector<32x32xbf16>, vector<32x8xbf16>, vector<32x8xf32> -> vector<32x8xf32>
    %c0_156 = arith.constant 0 : index
    %c1_157 = arith.constant 1 : index
    %c0_158 = arith.constant 0 : index
    %c0_159 = arith.constant 0 : index
    %187 = vector.load %arg12[%c0_156, %c1_157, %c0_158, %c0_159] : memref<2x4x1x8xf32, #tpu.memory_space<vmem>>, vector<1x1x1x8xf32>
    %188 = vector.shape_cast %187 : vector<1x1x1x8xf32> to vector<1x8xf32>
    %189 = vector.broadcast %188 : vector<1x8xf32> to vector<32x8xf32>
    %190 = arith.addf %186, %189 : vector<32x8xf32>
    %cst_160 = arith.constant 0.353553385 : f32
    %191 = vector.broadcast %cst_160 : f32 to vector<32x8xf32>
    %192 = arith.mulf %190, %191 : vector<32x8xf32>
    %c0_161 = arith.constant 0 : index
    %c1_162 = arith.constant 1 : index
    %c0_163 = arith.constant 0 : index
    %c0_164 = arith.constant 0 : index
    %193 = vector.load %arg10[%c0_161, %c1_162, %c0_163, %c0_164] : memref<2x4x32x8xbf16, #tpu.memory_space<vmem>>, vector<1x1x32x8xbf16>
    %194 = vector.shape_cast %193 : vector<1x1x32x8xbf16> to vector<32x8xbf16>
    %195 = arith.truncf %109 : vector<32x32xf32> to vector<32x32xbf16>
    %cst_165 = arith.constant dense<0.000000e+00> : vector<32x8xf32>
    %196 = tpu.matmul %195, %194, %cst_165 {dimension_numbers = #tpu.dot_dimension_numbers<[1], [0], [0], [1], [0, 0, 1, 1], [], []>} : vector<32x32xbf16>, vector<32x8xbf16>, vector<32x8xf32> -> vector<32x8xf32>
    %c0_166 = arith.constant 0 : index
    %c1_167 = arith.constant 1 : index
    %c0_168 = arith.constant 0 : index
    %c0_169 = arith.constant 0 : index
    %197 = vector.load %arg13[%c0_166, %c1_167, %c0_168, %c0_169] : memref<2x4x1x8xf32, #tpu.memory_space<vmem>>, vector<1x1x1x8xf32>
    %198 = vector.shape_cast %197 : vector<1x1x1x8xf32> to vector<1x8xf32>
    %199 = vector.broadcast %198 : vector<1x8xf32> to vector<32x8xf32>
    %200 = arith.addf %196, %199 : vector<32x8xf32>
    %c0_170 = arith.constant 0 : index
    %c1_171 = arith.constant 1 : index
    %c0_172 = arith.constant 0 : index
    %c0_173 = arith.constant 0 : index
    %201 = vector.load %arg11[%c0_170, %c1_171, %c0_172, %c0_173] : memref<2x4x32x8xbf16, #tpu.memory_space<vmem>>, vector<1x1x32x8xbf16>
    %202 = vector.shape_cast %201 : vector<1x1x32x8xbf16> to vector<32x8xbf16>
    %203 = arith.truncf %109 : vector<32x32xf32> to vector<32x32xbf16>
    %cst_174 = arith.constant dense<0.000000e+00> : vector<32x8xf32>
    %204 = tpu.matmul %203, %202, %cst_174 {dimension_numbers = #tpu.dot_dimension_numbers<[1], [0], [0], [1], [0, 0, 1, 1], [], []>} : vector<32x32xbf16>, vector<32x8xbf16>, vector<32x8xf32> -> vector<32x8xf32>
    %c0_175 = arith.constant 0 : index
    %c1_176 = arith.constant 1 : index
    %c0_177 = arith.constant 0 : index
    %c0_178 = arith.constant 0 : index
    %205 = vector.load %arg14[%c0_175, %c1_176, %c0_177, %c0_178] : memref<2x4x1x8xf32, #tpu.memory_space<vmem>>, vector<1x1x1x8xf32>
    %206 = vector.shape_cast %205 : vector<1x1x1x8xf32> to vector<1x8xf32>
    %207 = vector.broadcast %206 : vector<1x8xf32> to vector<32x8xf32>
    %208 = arith.addf %204, %207 : vector<32x8xf32>
    %209 = vector.extract_strided_slice %192 {offsets = [0, 0], sizes = [16, 8], strides = [1, 1]} : vector<32x8xf32> to vector<16x8xf32>
    %210 = vector.extract_strided_slice %200 {offsets = [0, 0], sizes = [16, 8], strides = [1, 1]} : vector<32x8xf32> to vector<16x8xf32>
    %211 = vector.extract_strided_slice %208 {offsets = [0, 0], sizes = [16, 8], strides = [1, 1]} : vector<32x8xf32> to vector<16x8xf32>
    %212 = arith.truncf %209 : vector<16x8xf32> to vector<16x8xbf16>
    %213 = arith.truncf %210 : vector<16x8xf32> to vector<16x8xbf16>
    %cst_179 = arith.constant dense<0.000000e+00> : vector<16x16xf32>
    %214 = tpu.matmul %212, %213, %cst_179 {dimension_numbers = #tpu.dot_dimension_numbers<[1], [1], [0], [0], [0, 0, 1, 0], [], []>} : vector<16x8xbf16>, vector<16x8xbf16>, vector<16x16xf32> -> vector<16x16xf32>
    %cst_180 = arith.constant dense<0xFF800000> : vector<16xf32>
    %215 = vector.multi_reduction <maximumf>, %214, %cst_180 [1] : vector<16x16xf32> to vector<16xf32>
    %216 = vector.shape_cast %215 : vector<16xf32> to vector<16x1xf32>
    %217 = vector.broadcast %216 : vector<16x1xf32> to vector<16x16xf32>
    %218 = arith.subf %214, %217 : vector<16x16xf32>
    %219 = math.exp %218 : vector<16x16xf32>
    %cst_181 = arith.constant dense<0.000000e+00> : vector<16xf32>
    %220 = vector.multi_reduction <add>, %219, %cst_181 [1] : vector<16x16xf32> to vector<16xf32>
    %221 = vector.shape_cast %220 : vector<16xf32> to vector<16x1xf32>
    %222 = tpu.reciprocal %221 {approx = true} : vector<16x1xf32> -> vector<16x1xf32>
    %223 = arith.truncf %219 : vector<16x16xf32> to vector<16x16xbf16>
    %224 = arith.truncf %211 : vector<16x8xf32> to vector<16x8xbf16>
    %cst_182 = arith.constant dense<0.000000e+00> : vector<16x8xf32>
    %225 = tpu.matmul %223, %224, %cst_182 {dimension_numbers = #tpu.dot_dimension_numbers<[1], [0], [0], [1], [0, 0, 1, 1], [], []>} : vector<16x16xbf16>, vector<16x8xbf16>, vector<16x8xf32> -> vector<16x8xf32>
    %226 = vector.broadcast %222 : vector<16x1xf32> to vector<16x8xf32>
    %227 = arith.mulf %225, %226 : vector<16x8xf32>
    %228 = vector.extract_strided_slice %192 {offsets = [16, 0], sizes = [16, 8], strides = [1, 1]} : vector<32x8xf32> to vector<16x8xf32>
    %229 = vector.extract_strided_slice %200 {offsets = [16, 0], sizes = [16, 8], strides = [1, 1]} : vector<32x8xf32> to vector<16x8xf32>
    %230 = vector.extract_strided_slice %208 {offsets = [16, 0], sizes = [16, 8], strides = [1, 1]} : vector<32x8xf32> to vector<16x8xf32>
    %231 = arith.truncf %228 : vector<16x8xf32> to vector<16x8xbf16>
    %232 = arith.truncf %229 : vector<16x8xf32> to vector<16x8xbf16>
    %cst_183 = arith.constant dense<0.000000e+00> : vector<16x16xf32>
    %233 = tpu.matmul %231, %232, %cst_183 {dimension_numbers = #tpu.dot_dimension_numbers<[1], [1], [0], [0], [0, 0, 1, 0], [], []>} : vector<16x8xbf16>, vector<16x8xbf16>, vector<16x16xf32> -> vector<16x16xf32>
    %cst_184 = arith.constant dense<0xFF800000> : vector<16xf32>
    %234 = vector.multi_reduction <maximumf>, %233, %cst_184 [1] : vector<16x16xf32> to vector<16xf32>
    %235 = vector.shape_cast %234 : vector<16xf32> to vector<16x1xf32>
    %236 = vector.broadcast %235 : vector<16x1xf32> to vector<16x16xf32>
    %237 = arith.subf %233, %236 : vector<16x16xf32>
    %238 = math.exp %237 : vector<16x16xf32>
    %cst_185 = arith.constant dense<0.000000e+00> : vector<16xf32>
    %239 = vector.multi_reduction <add>, %238, %cst_185 [1] : vector<16x16xf32> to vector<16xf32>
    %240 = vector.shape_cast %239 : vector<16xf32> to vector<16x1xf32>
    %241 = tpu.reciprocal %240 {approx = true} : vector<16x1xf32> -> vector<16x1xf32>
    %242 = arith.truncf %238 : vector<16x16xf32> to vector<16x16xbf16>
    %243 = arith.truncf %230 : vector<16x8xf32> to vector<16x8xbf16>
    %cst_186 = arith.constant dense<0.000000e+00> : vector<16x8xf32>
    %244 = tpu.matmul %242, %243, %cst_186 {dimension_numbers = #tpu.dot_dimension_numbers<[1], [0], [0], [1], [0, 0, 1, 1], [], []>} : vector<16x16xbf16>, vector<16x8xbf16>, vector<16x8xf32> -> vector<16x8xf32>
    %245 = vector.broadcast %241 : vector<16x1xf32> to vector<16x8xf32>
    %246 = arith.mulf %244, %245 : vector<16x8xf32>
    %247 = tpu.concatenate %227, %246 in 0 : vector<16x8xf32>, vector<16x8xf32> -> vector<32x8xf32>
    %c0_187 = arith.constant 0 : index
    %c1_188 = arith.constant 1 : index
    %c0_189 = arith.constant 0 : index
    %c0_190 = arith.constant 0 : index
    %248 = vector.load %arg15[%c0_187, %c1_188, %c0_189, %c0_190] : memref<2x4x8x32xbf16, #tpu.memory_space<vmem>>, vector<1x1x8x32xbf16>
    %249 = vector.shape_cast %248 : vector<1x1x8x32xbf16> to vector<8x32xbf16>
    %250 = arith.truncf %247 : vector<32x8xf32> to vector<32x8xbf16>
    %cst_191 = arith.constant dense<0.000000e+00> : vector<32x32xf32>
    %251 = tpu.matmul %250, %249, %cst_191 {dimension_numbers = #tpu.dot_dimension_numbers<[1], [0], [0], [1], [0, 0, 1, 1], [], []>} : vector<32x8xbf16>, vector<8x32xbf16>, vector<32x32xf32> -> vector<32x32xf32>
    %252 = arith.addf %182, %251 : vector<32x32xf32>
    %c0_192 = arith.constant 0 : index
    %c2_193 = arith.constant 2 : index
    %c0_194 = arith.constant 0 : index
    %c0_195 = arith.constant 0 : index
    %253 = vector.load %arg9[%c0_192, %c2_193, %c0_194, %c0_195] : memref<2x4x32x8xbf16, #tpu.memory_space<vmem>>, vector<1x1x32x8xbf16>
    %254 = vector.shape_cast %253 : vector<1x1x32x8xbf16> to vector<32x8xbf16>
    %255 = arith.truncf %109 : vector<32x32xf32> to vector<32x32xbf16>
    %cst_196 = arith.constant dense<0.000000e+00> : vector<32x8xf32>
    %256 = tpu.matmul %255, %254, %cst_196 {dimension_numbers = #tpu.dot_dimension_numbers<[1], [0], [0], [1], [0, 0, 1, 1], [], []>} : vector<32x32xbf16>, vector<32x8xbf16>, vector<32x8xf32> -> vector<32x8xf32>
    %c0_197 = arith.constant 0 : index
    %c2_198 = arith.constant 2 : index
    %c0_199 = arith.constant 0 : index
    %c0_200 = arith.constant 0 : index
    %257 = vector.load %arg12[%c0_197, %c2_198, %c0_199, %c0_200] : memref<2x4x1x8xf32, #tpu.memory_space<vmem>>, vector<1x1x1x8xf32>
    %258 = vector.shape_cast %257 : vector<1x1x1x8xf32> to vector<1x8xf32>
    %259 = vector.broadcast %258 : vector<1x8xf32> to vector<32x8xf32>
    %260 = arith.addf %256, %259 : vector<32x8xf32>
    %cst_201 = arith.constant 0.353553385 : f32
    %261 = vector.broadcast %cst_201 : f32 to vector<32x8xf32>
    %262 = arith.mulf %260, %261 : vector<32x8xf32>
    %c0_202 = arith.constant 0 : index
    %c2_203 = arith.constant 2 : index
    %c0_204 = arith.constant 0 : index
    %c0_205 = arith.constant 0 : index
    %263 = vector.load %arg10[%c0_202, %c2_203, %c0_204, %c0_205] : memref<2x4x32x8xbf16, #tpu.memory_space<vmem>>, vector<1x1x32x8xbf16>
    %264 = vector.shape_cast %263 : vector<1x1x32x8xbf16> to vector<32x8xbf16>
    %265 = arith.truncf %109 : vector<32x32xf32> to vector<32x32xbf16>
    %cst_206 = arith.constant dense<0.000000e+00> : vector<32x8xf32>
    %266 = tpu.matmul %265, %264, %cst_206 {dimension_numbers = #tpu.dot_dimension_numbers<[1], [0], [0], [1], [0, 0, 1, 1], [], []>} : vector<32x32xbf16>, vector<32x8xbf16>, vector<32x8xf32> -> vector<32x8xf32>
    %c0_207 = arith.constant 0 : index
    %c2_208 = arith.constant 2 : index
    %c0_209 = arith.constant 0 : index
    %c0_210 = arith.constant 0 : index
    %267 = vector.load %arg13[%c0_207, %c2_208, %c0_209, %c0_210] : memref<2x4x1x8xf32, #tpu.memory_space<vmem>>, vector<1x1x1x8xf32>
    %268 = vector.shape_cast %267 : vector<1x1x1x8xf32> to vector<1x8xf32>
    %269 = vector.broadcast %268 : vector<1x8xf32> to vector<32x8xf32>
    %270 = arith.addf %266, %269 : vector<32x8xf32>
    %c0_211 = arith.constant 0 : index
    %c2_212 = arith.constant 2 : index
    %c0_213 = arith.constant 0 : index
    %c0_214 = arith.constant 0 : index
    %271 = vector.load %arg11[%c0_211, %c2_212, %c0_213, %c0_214] : memref<2x4x32x8xbf16, #tpu.memory_space<vmem>>, vector<1x1x32x8xbf16>
    %272 = vector.shape_cast %271 : vector<1x1x32x8xbf16> to vector<32x8xbf16>
    %273 = arith.truncf %109 : vector<32x32xf32> to vector<32x32xbf16>
    %cst_215 = arith.constant dense<0.000000e+00> : vector<32x8xf32>
    %274 = tpu.matmul %273, %272, %cst_215 {dimension_numbers = #tpu.dot_dimension_numbers<[1], [0], [0], [1], [0, 0, 1, 1], [], []>} : vector<32x32xbf16>, vector<32x8xbf16>, vector<32x8xf32> -> vector<32x8xf32>
    %c0_216 = arith.constant 0 : index
    %c2_217 = arith.constant 2 : index
    %c0_218 = arith.constant 0 : index
    %c0_219 = arith.constant 0 : index
    %275 = vector.load %arg14[%c0_216, %c2_217, %c0_218, %c0_219] : memref<2x4x1x8xf32, #tpu.memory_space<vmem>>, vector<1x1x1x8xf32>
    %276 = vector.shape_cast %275 : vector<1x1x1x8xf32> to vector<1x8xf32>
    %277 = vector.broadcast %276 : vector<1x8xf32> to vector<32x8xf32>
    %278 = arith.addf %274, %277 : vector<32x8xf32>
    %279 = vector.extract_strided_slice %262 {offsets = [0, 0], sizes = [16, 8], strides = [1, 1]} : vector<32x8xf32> to vector<16x8xf32>
    %280 = vector.extract_strided_slice %270 {offsets = [0, 0], sizes = [16, 8], strides = [1, 1]} : vector<32x8xf32> to vector<16x8xf32>
    %281 = vector.extract_strided_slice %278 {offsets = [0, 0], sizes = [16, 8], strides = [1, 1]} : vector<32x8xf32> to vector<16x8xf32>
    %282 = arith.truncf %279 : vector<16x8xf32> to vector<16x8xbf16>
    %283 = arith.truncf %280 : vector<16x8xf32> to vector<16x8xbf16>
    %cst_220 = arith.constant dense<0.000000e+00> : vector<16x16xf32>
    %284 = tpu.matmul %282, %283, %cst_220 {dimension_numbers = #tpu.dot_dimension_numbers<[1], [1], [0], [0], [0, 0, 1, 0], [], []>} : vector<16x8xbf16>, vector<16x8xbf16>, vector<16x16xf32> -> vector<16x16xf32>
    %cst_221 = arith.constant dense<0xFF800000> : vector<16xf32>
    %285 = vector.multi_reduction <maximumf>, %284, %cst_221 [1] : vector<16x16xf32> to vector<16xf32>
    %286 = vector.shape_cast %285 : vector<16xf32> to vector<16x1xf32>
    %287 = vector.broadcast %286 : vector<16x1xf32> to vector<16x16xf32>
    %288 = arith.subf %284, %287 : vector<16x16xf32>
    %289 = math.exp %288 : vector<16x16xf32>
    %cst_222 = arith.constant dense<0.000000e+00> : vector<16xf32>
    %290 = vector.multi_reduction <add>, %289, %cst_222 [1] : vector<16x16xf32> to vector<16xf32>
    %291 = vector.shape_cast %290 : vector<16xf32> to vector<16x1xf32>
    %292 = tpu.reciprocal %291 {approx = true} : vector<16x1xf32> -> vector<16x1xf32>
    %293 = arith.truncf %289 : vector<16x16xf32> to vector<16x16xbf16>
    %294 = arith.truncf %281 : vector<16x8xf32> to vector<16x8xbf16>
    %cst_223 = arith.constant dense<0.000000e+00> : vector<16x8xf32>
    %295 = tpu.matmul %293, %294, %cst_223 {dimension_numbers = #tpu.dot_dimension_numbers<[1], [0], [0], [1], [0, 0, 1, 1], [], []>} : vector<16x16xbf16>, vector<16x8xbf16>, vector<16x8xf32> -> vector<16x8xf32>
    %296 = vector.broadcast %292 : vector<16x1xf32> to vector<16x8xf32>
    %297 = arith.mulf %295, %296 : vector<16x8xf32>
    %298 = vector.extract_strided_slice %262 {offsets = [16, 0], sizes = [16, 8], strides = [1, 1]} : vector<32x8xf32> to vector<16x8xf32>
    %299 = vector.extract_strided_slice %270 {offsets = [16, 0], sizes = [16, 8], strides = [1, 1]} : vector<32x8xf32> to vector<16x8xf32>
    %300 = vector.extract_strided_slice %278 {offsets = [16, 0], sizes = [16, 8], strides = [1, 1]} : vector<32x8xf32> to vector<16x8xf32>
    %301 = arith.truncf %298 : vector<16x8xf32> to vector<16x8xbf16>
    %302 = arith.truncf %299 : vector<16x8xf32> to vector<16x8xbf16>
    %cst_224 = arith.constant dense<0.000000e+00> : vector<16x16xf32>
    %303 = tpu.matmul %301, %302, %cst_224 {dimension_numbers = #tpu.dot_dimension_numbers<[1], [1], [0], [0], [0, 0, 1, 0], [], []>} : vector<16x8xbf16>, vector<16x8xbf16>, vector<16x16xf32> -> vector<16x16xf32>
    %cst_225 = arith.constant dense<0xFF800000> : vector<16xf32>
    %304 = vector.multi_reduction <maximumf>, %303, %cst_225 [1] : vector<16x16xf32> to vector<16xf32>
    %305 = vector.shape_cast %304 : vector<16xf32> to vector<16x1xf32>
    %306 = vector.broadcast %305 : vector<16x1xf32> to vector<16x16xf32>
    %307 = arith.subf %303, %306 : vector<16x16xf32>
    %308 = math.exp %307 : vector<16x16xf32>
    %cst_226 = arith.constant dense<0.000000e+00> : vector<16xf32>
    %309 = vector.multi_reduction <add>, %308, %cst_226 [1] : vector<16x16xf32> to vector<16xf32>
    %310 = vector.shape_cast %309 : vector<16xf32> to vector<16x1xf32>
    %311 = tpu.reciprocal %310 {approx = true} : vector<16x1xf32> -> vector<16x1xf32>
    %312 = arith.truncf %308 : vector<16x16xf32> to vector<16x16xbf16>
    %313 = arith.truncf %300 : vector<16x8xf32> to vector<16x8xbf16>
    %cst_227 = arith.constant dense<0.000000e+00> : vector<16x8xf32>
    %314 = tpu.matmul %312, %313, %cst_227 {dimension_numbers = #tpu.dot_dimension_numbers<[1], [0], [0], [1], [0, 0, 1, 1], [], []>} : vector<16x16xbf16>, vector<16x8xbf16>, vector<16x8xf32> -> vector<16x8xf32>
    %315 = vector.broadcast %311 : vector<16x1xf32> to vector<16x8xf32>
    %316 = arith.mulf %314, %315 : vector<16x8xf32>
    %317 = tpu.concatenate %297, %316 in 0 : vector<16x8xf32>, vector<16x8xf32> -> vector<32x8xf32>
    %c0_228 = arith.constant 0 : index
    %c2_229 = arith.constant 2 : index
    %c0_230 = arith.constant 0 : index
    %c0_231 = arith.constant 0 : index
    %318 = vector.load %arg15[%c0_228, %c2_229, %c0_230, %c0_231] : memref<2x4x8x32xbf16, #tpu.memory_space<vmem>>, vector<1x1x8x32xbf16>
    %319 = vector.shape_cast %318 : vector<1x1x8x32xbf16> to vector<8x32xbf16>
    %320 = arith.truncf %317 : vector<32x8xf32> to vector<32x8xbf16>
    %cst_232 = arith.constant dense<0.000000e+00> : vector<32x32xf32>
    %321 = tpu.matmul %320, %319, %cst_232 {dimension_numbers = #tpu.dot_dimension_numbers<[1], [0], [0], [1], [0, 0, 1, 1], [], []>} : vector<32x8xbf16>, vector<8x32xbf16>, vector<32x32xf32> -> vector<32x32xf32>
    %322 = arith.addf %252, %321 : vector<32x32xf32>
    %c0_233 = arith.constant 0 : index
    %c3 = arith.constant 3 : index
    %c0_234 = arith.constant 0 : index
    %c0_235 = arith.constant 0 : index
    %323 = vector.load %arg9[%c0_233, %c3, %c0_234, %c0_235] : memref<2x4x32x8xbf16, #tpu.memory_space<vmem>>, vector<1x1x32x8xbf16>
    %324 = vector.shape_cast %323 : vector<1x1x32x8xbf16> to vector<32x8xbf16>
    %325 = arith.truncf %109 : vector<32x32xf32> to vector<32x32xbf16>
    %cst_236 = arith.constant dense<0.000000e+00> : vector<32x8xf32>
    %326 = tpu.matmul %325, %324, %cst_236 {dimension_numbers = #tpu.dot_dimension_numbers<[1], [0], [0], [1], [0, 0, 1, 1], [], []>} : vector<32x32xbf16>, vector<32x8xbf16>, vector<32x8xf32> -> vector<32x8xf32>
    %c0_237 = arith.constant 0 : index
    %c3_238 = arith.constant 3 : index
    %c0_239 = arith.constant 0 : index
    %c0_240 = arith.constant 0 : index
    %327 = vector.load %arg12[%c0_237, %c3_238, %c0_239, %c0_240] : memref<2x4x1x8xf32, #tpu.memory_space<vmem>>, vector<1x1x1x8xf32>
    %328 = vector.shape_cast %327 : vector<1x1x1x8xf32> to vector<1x8xf32>
    %329 = vector.broadcast %328 : vector<1x8xf32> to vector<32x8xf32>
    %330 = arith.addf %326, %329 : vector<32x8xf32>
    %cst_241 = arith.constant 0.353553385 : f32
    %331 = vector.broadcast %cst_241 : f32 to vector<32x8xf32>
    %332 = arith.mulf %330, %331 : vector<32x8xf32>
    %c0_242 = arith.constant 0 : index
    %c3_243 = arith.constant 3 : index
    %c0_244 = arith.constant 0 : index
    %c0_245 = arith.constant 0 : index
    %333 = vector.load %arg10[%c0_242, %c3_243, %c0_244, %c0_245] : memref<2x4x32x8xbf16, #tpu.memory_space<vmem>>, vector<1x1x32x8xbf16>
    %334 = vector.shape_cast %333 : vector<1x1x32x8xbf16> to vector<32x8xbf16>
    %335 = arith.truncf %109 : vector<32x32xf32> to vector<32x32xbf16>
    %cst_246 = arith.constant dense<0.000000e+00> : vector<32x8xf32>
    %336 = tpu.matmul %335, %334, %cst_246 {dimension_numbers = #tpu.dot_dimension_numbers<[1], [0], [0], [1], [0, 0, 1, 1], [], []>} : vector<32x32xbf16>, vector<32x8xbf16>, vector<32x8xf32> -> vector<32x8xf32>
    %c0_247 = arith.constant 0 : index
    %c3_248 = arith.constant 3 : index
    %c0_249 = arith.constant 0 : index
    %c0_250 = arith.constant 0 : index
    %337 = vector.load %arg13[%c0_247, %c3_248, %c0_249, %c0_250] : memref<2x4x1x8xf32, #tpu.memory_space<vmem>>, vector<1x1x1x8xf32>
    %338 = vector.shape_cast %337 : vector<1x1x1x8xf32> to vector<1x8xf32>
    %339 = vector.broadcast %338 : vector<1x8xf32> to vector<32x8xf32>
    %340 = arith.addf %336, %339 : vector<32x8xf32>
    %c0_251 = arith.constant 0 : index
    %c3_252 = arith.constant 3 : index
    %c0_253 = arith.constant 0 : index
    %c0_254 = arith.constant 0 : index
    %341 = vector.load %arg11[%c0_251, %c3_252, %c0_253, %c0_254] : memref<2x4x32x8xbf16, #tpu.memory_space<vmem>>, vector<1x1x32x8xbf16>
    %342 = vector.shape_cast %341 : vector<1x1x32x8xbf16> to vector<32x8xbf16>
    %343 = arith.truncf %109 : vector<32x32xf32> to vector<32x32xbf16>
    %cst_255 = arith.constant dense<0.000000e+00> : vector<32x8xf32>
    %344 = tpu.matmul %343, %342, %cst_255 {dimension_numbers = #tpu.dot_dimension_numbers<[1], [0], [0], [1], [0, 0, 1, 1], [], []>} : vector<32x32xbf16>, vector<32x8xbf16>, vector<32x8xf32> -> vector<32x8xf32>
    %c0_256 = arith.constant 0 : index
    %c3_257 = arith.constant 3 : index
    %c0_258 = arith.constant 0 : index
    %c0_259 = arith.constant 0 : index
    %345 = vector.load %arg14[%c0_256, %c3_257, %c0_258, %c0_259] : memref<2x4x1x8xf32, #tpu.memory_space<vmem>>, vector<1x1x1x8xf32>
    %346 = vector.shape_cast %345 : vector<1x1x1x8xf32> to vector<1x8xf32>
    %347 = vector.broadcast %346 : vector<1x8xf32> to vector<32x8xf32>
    %348 = arith.addf %344, %347 : vector<32x8xf32>
    %349 = vector.extract_strided_slice %332 {offsets = [0, 0], sizes = [16, 8], strides = [1, 1]} : vector<32x8xf32> to vector<16x8xf32>
    %350 = vector.extract_strided_slice %340 {offsets = [0, 0], sizes = [16, 8], strides = [1, 1]} : vector<32x8xf32> to vector<16x8xf32>
    %351 = vector.extract_strided_slice %348 {offsets = [0, 0], sizes = [16, 8], strides = [1, 1]} : vector<32x8xf32> to vector<16x8xf32>
    %352 = arith.truncf %349 : vector<16x8xf32> to vector<16x8xbf16>
    %353 = arith.truncf %350 : vector<16x8xf32> to vector<16x8xbf16>
    %cst_260 = arith.constant dense<0.000000e+00> : vector<16x16xf32>
    %354 = tpu.matmul %352, %353, %cst_260 {dimension_numbers = #tpu.dot_dimension_numbers<[1], [1], [0], [0], [0, 0, 1, 0], [], []>} : vector<16x8xbf16>, vector<16x8xbf16>, vector<16x16xf32> -> vector<16x16xf32>
    %cst_261 = arith.constant dense<0xFF800000> : vector<16xf32>
    %355 = vector.multi_reduction <maximumf>, %354, %cst_261 [1] : vector<16x16xf32> to vector<16xf32>
    %356 = vector.shape_cast %355 : vector<16xf32> to vector<16x1xf32>
    %357 = vector.broadcast %356 : vector<16x1xf32> to vector<16x16xf32>
    %358 = arith.subf %354, %357 : vector<16x16xf32>
    %359 = math.exp %358 : vector<16x16xf32>
    %cst_262 = arith.constant dense<0.000000e+00> : vector<16xf32>
    %360 = vector.multi_reduction <add>, %359, %cst_262 [1] : vector<16x16xf32> to vector<16xf32>
    %361 = vector.shape_cast %360 : vector<16xf32> to vector<16x1xf32>
    %362 = tpu.reciprocal %361 {approx = true} : vector<16x1xf32> -> vector<16x1xf32>
    %363 = arith.truncf %359 : vector<16x16xf32> to vector<16x16xbf16>
    %364 = arith.truncf %351 : vector<16x8xf32> to vector<16x8xbf16>
    %cst_263 = arith.constant dense<0.000000e+00> : vector<16x8xf32>
    %365 = tpu.matmul %363, %364, %cst_263 {dimension_numbers = #tpu.dot_dimension_numbers<[1], [0], [0], [1], [0, 0, 1, 1], [], []>} : vector<16x16xbf16>, vector<16x8xbf16>, vector<16x8xf32> -> vector<16x8xf32>
    %366 = vector.broadcast %362 : vector<16x1xf32> to vector<16x8xf32>
    %367 = arith.mulf %365, %366 : vector<16x8xf32>
    %368 = vector.extract_strided_slice %332 {offsets = [16, 0], sizes = [16, 8], strides = [1, 1]} : vector<32x8xf32> to vector<16x8xf32>
    %369 = vector.extract_strided_slice %340 {offsets = [16, 0], sizes = [16, 8], strides = [1, 1]} : vector<32x8xf32> to vector<16x8xf32>
    %370 = vector.extract_strided_slice %348 {offsets = [16, 0], sizes = [16, 8], strides = [1, 1]} : vector<32x8xf32> to vector<16x8xf32>
    %371 = arith.truncf %368 : vector<16x8xf32> to vector<16x8xbf16>
    %372 = arith.truncf %369 : vector<16x8xf32> to vector<16x8xbf16>
    %cst_264 = arith.constant dense<0.000000e+00> : vector<16x16xf32>
    %373 = tpu.matmul %371, %372, %cst_264 {dimension_numbers = #tpu.dot_dimension_numbers<[1], [1], [0], [0], [0, 0, 1, 0], [], []>} : vector<16x8xbf16>, vector<16x8xbf16>, vector<16x16xf32> -> vector<16x16xf32>
    %cst_265 = arith.constant dense<0xFF800000> : vector<16xf32>
    %374 = vector.multi_reduction <maximumf>, %373, %cst_265 [1] : vector<16x16xf32> to vector<16xf32>
    %375 = vector.shape_cast %374 : vector<16xf32> to vector<16x1xf32>
    %376 = vector.broadcast %375 : vector<16x1xf32> to vector<16x16xf32>
    %377 = arith.subf %373, %376 : vector<16x16xf32>
    %378 = math.exp %377 : vector<16x16xf32>
    %cst_266 = arith.constant dense<0.000000e+00> : vector<16xf32>
    %379 = vector.multi_reduction <add>, %378, %cst_266 [1] : vector<16x16xf32> to vector<16xf32>
    %380 = vector.shape_cast %379 : vector<16xf32> to vector<16x1xf32>
    %381 = tpu.reciprocal %380 {approx = true} : vector<16x1xf32> -> vector<16x1xf32>
    %382 = arith.truncf %378 : vector<16x16xf32> to vector<16x16xbf16>
    %383 = arith.truncf %370 : vector<16x8xf32> to vector<16x8xbf16>
    %cst_267 = arith.constant dense<0.000000e+00> : vector<16x8xf32>
    %384 = tpu.matmul %382, %383, %cst_267 {dimension_numbers = #tpu.dot_dimension_numbers<[1], [0], [0], [1], [0, 0, 1, 1], [], []>} : vector<16x16xbf16>, vector<16x8xbf16>, vector<16x8xf32> -> vector<16x8xf32>
    %385 = vector.broadcast %381 : vector<16x1xf32> to vector<16x8xf32>
    %386 = arith.mulf %384, %385 : vector<16x8xf32>
    %387 = tpu.concatenate %367, %386 in 0 : vector<16x8xf32>, vector<16x8xf32> -> vector<32x8xf32>
    %c0_268 = arith.constant 0 : index
    %c3_269 = arith.constant 3 : index
    %c0_270 = arith.constant 0 : index
    %c0_271 = arith.constant 0 : index
    %388 = vector.load %arg15[%c0_268, %c3_269, %c0_270, %c0_271] : memref<2x4x8x32xbf16, #tpu.memory_space<vmem>>, vector<1x1x8x32xbf16>
    %389 = vector.shape_cast %388 : vector<1x1x8x32xbf16> to vector<8x32xbf16>
    %390 = arith.truncf %387 : vector<32x8xf32> to vector<32x8xbf16>
    %cst_272 = arith.constant dense<0.000000e+00> : vector<32x32xf32>
    %391 = tpu.matmul %390, %389, %cst_272 {dimension_numbers = #tpu.dot_dimension_numbers<[1], [0], [0], [1], [0, 0, 1, 1], [], []>} : vector<32x8xbf16>, vector<8x32xbf16>, vector<32x32xf32> -> vector<32x32xf32>
    %392 = arith.addf %322, %391 : vector<32x32xf32>
    %393 = arith.addf %109, %392 : vector<32x32xf32>
    %c0_273 = arith.constant 0 : index
    %c0_274 = arith.constant 0 : index
    %c0_275 = arith.constant 0 : index
    %394 = vector.load %arg17[%c0_273, %c0_274, %c0_275] : memref<2x1x32xf32, #tpu.memory_space<vmem>>, vector<1x1x32xf32>
    %395 = vector.shape_cast %394 : vector<1x1x32xf32> to vector<1x32xf32>
    %c0_276 = arith.constant 0 : index
    %c0_277 = arith.constant 0 : index
    %c0_278 = arith.constant 0 : index
    %396 = vector.load %arg18[%c0_276, %c0_277, %c0_278] : memref<2x1x32xf32, #tpu.memory_space<vmem>>, vector<1x1x32xf32>
    %397 = vector.shape_cast %396 : vector<1x1x32xf32> to vector<1x32xf32>
    %cst_279 = arith.constant dense<0.000000e+00> : vector<32xf32>
    %398 = vector.multi_reduction <add>, %393, %cst_279 [1] : vector<32x32xf32> to vector<32xf32>
    %399 = vector.shape_cast %398 : vector<32xf32> to vector<32x1xf32>
    %cst_280 = arith.constant 3.200000e+01 : f32
    %400 = vector.broadcast %cst_280 : f32 to vector<32x1xf32>
    %401 = arith.divf %399, %400 : vector<32x1xf32>
    %402 = vector.broadcast %401 : vector<32x1xf32> to vector<32x32xf32>
    %403 = arith.subf %393, %402 : vector<32x32xf32>
    %404 = arith.mulf %403, %403 : vector<32x32xf32>
    %cst_281 = arith.constant dense<0.000000e+00> : vector<32xf32>
    %405 = vector.multi_reduction <add>, %404, %cst_281 [1] : vector<32x32xf32> to vector<32xf32>
    %406 = vector.shape_cast %405 : vector<32xf32> to vector<32x1xf32>
    %cst_282 = arith.constant 3.200000e+01 : f32
    %407 = vector.broadcast %cst_282 : f32 to vector<32x1xf32>
    %408 = arith.divf %406, %407 : vector<32x1xf32>
    %cst_283 = arith.constant 9.99999974E-6 : f32
    %409 = vector.broadcast %cst_283 : f32 to vector<32x1xf32>
    %410 = arith.addf %408, %409 : vector<32x1xf32>
    %411 = math.rsqrt %410 : vector<32x1xf32>
    %412 = vector.broadcast %411 : vector<32x1xf32> to vector<32x32xf32>
    %413 = arith.mulf %403, %412 : vector<32x32xf32>
    %414 = vector.broadcast %395 : vector<1x32xf32> to vector<32x32xf32>
    %415 = arith.mulf %413, %414 : vector<32x32xf32>
    %416 = vector.broadcast %397 : vector<1x32xf32> to vector<32x32xf32>
    %417 = arith.addf %415, %416 : vector<32x32xf32>
    %c0_284 = arith.constant 0 : index
    %c0_285 = arith.constant 0 : index
    %c0_286 = arith.constant 0 : index
    %418 = vector.load %arg19[%c0_284, %c0_285, %c0_286] : memref<2x32x2048xbf16, #tpu.memory_space<vmem>>, vector<1x32x2048xbf16>
    %419 = vector.shape_cast %418 : vector<1x32x2048xbf16> to vector<32x2048xbf16>
    %420 = arith.truncf %417 : vector<32x32xf32> to vector<32x32xbf16>
    %cst_287 = arith.constant dense<0.000000e+00> : vector<32x2048xf32>
    %421 = tpu.matmul %420, %419, %cst_287 {dimension_numbers = #tpu.dot_dimension_numbers<[1], [0], [0], [1], [0, 0, 1, 1], [], []>} : vector<32x32xbf16>, vector<32x2048xbf16>, vector<32x2048xf32> -> vector<32x2048xf32>
    %c0_288 = arith.constant 0 : index
    %c0_289 = arith.constant 0 : index
    %c0_290 = arith.constant 0 : index
    %422 = vector.load %arg20[%c0_288, %c0_289, %c0_290] : memref<2x1x2048xf32, #tpu.memory_space<vmem>>, vector<1x1x2048xf32>
    %423 = vector.shape_cast %422 : vector<1x1x2048xf32> to vector<1x2048xf32>
    %424 = vector.broadcast %423 : vector<1x2048xf32> to vector<32x2048xf32>
    %425 = arith.addf %421, %424 : vector<32x2048xf32>
    %cst_291 = arith.constant 0.000000e+00 : f32
    %426 = vector.broadcast %cst_291 : f32 to vector<32x2048xf32>
    %427 = arith.maximumf %425, %426 : vector<32x2048xf32>
    %c0_292 = arith.constant 0 : index
    %c0_293 = arith.constant 0 : index
    %c0_294 = arith.constant 0 : index
    %428 = vector.load %arg21[%c0_292, %c0_293, %c0_294] : memref<2x2048x32xbf16, #tpu.memory_space<vmem>>, vector<1x2048x32xbf16>
    %429 = vector.shape_cast %428 : vector<1x2048x32xbf16> to vector<2048x32xbf16>
    %430 = arith.truncf %427 : vector<32x2048xf32> to vector<32x2048xbf16>
    %cst_295 = arith.constant dense<0.000000e+00> : vector<32x32xf32>
    %431 = tpu.matmul %430, %429, %cst_295 {dimension_numbers = #tpu.dot_dimension_numbers<[1], [0], [0], [1], [0, 0, 1, 1], [], []>} : vector<32x2048xbf16>, vector<2048x32xbf16>, vector<32x32xf32> -> vector<32x32xf32>
    %c0_296 = arith.constant 0 : index
    %c0_297 = arith.constant 0 : index
    %c0_298 = arith.constant 0 : index
    %432 = vector.load %arg22[%c0_296, %c0_297, %c0_298] : memref<2x1x32xf32, #tpu.memory_space<vmem>>, vector<1x1x32xf32>
    %433 = vector.shape_cast %432 : vector<1x1x32xf32> to vector<1x32xf32>
    %434 = vector.broadcast %433 : vector<1x32xf32> to vector<32x32xf32>
    %435 = arith.addf %431, %434 : vector<32x32xf32>
    %436 = arith.addf %417, %435 : vector<32x32xf32>
    %c0_299 = arith.constant 0 : index
    %c0_300 = arith.constant 0 : index
    %c0_301 = arith.constant 0 : index
    %437 = vector.load %arg23[%c0_299, %c0_300, %c0_301] : memref<2x1x32xf32, #tpu.memory_space<vmem>>, vector<1x1x32xf32>
    %438 = vector.shape_cast %437 : vector<1x1x32xf32> to vector<1x32xf32>
    %c0_302 = arith.constant 0 : index
    %c0_303 = arith.constant 0 : index
    %c0_304 = arith.constant 0 : index
    %439 = vector.load %arg24[%c0_302, %c0_303, %c0_304] : memref<2x1x32xf32, #tpu.memory_space<vmem>>, vector<1x1x32xf32>
    %440 = vector.shape_cast %439 : vector<1x1x32xf32> to vector<1x32xf32>
    %cst_305 = arith.constant dense<0.000000e+00> : vector<32xf32>
    %441 = vector.multi_reduction <add>, %436, %cst_305 [1] : vector<32x32xf32> to vector<32xf32>
    %442 = vector.shape_cast %441 : vector<32xf32> to vector<32x1xf32>
    %cst_306 = arith.constant 3.200000e+01 : f32
    %443 = vector.broadcast %cst_306 : f32 to vector<32x1xf32>
    %444 = arith.divf %442, %443 : vector<32x1xf32>
    %445 = vector.broadcast %444 : vector<32x1xf32> to vector<32x32xf32>
    %446 = arith.subf %436, %445 : vector<32x32xf32>
    %447 = arith.mulf %446, %446 : vector<32x32xf32>
    %cst_307 = arith.constant dense<0.000000e+00> : vector<32xf32>
    %448 = vector.multi_reduction <add>, %447, %cst_307 [1] : vector<32x32xf32> to vector<32xf32>
    %449 = vector.shape_cast %448 : vector<32xf32> to vector<32x1xf32>
    %cst_308 = arith.constant 3.200000e+01 : f32
    %450 = vector.broadcast %cst_308 : f32 to vector<32x1xf32>
    %451 = arith.divf %449, %450 : vector<32x1xf32>
    %cst_309 = arith.constant 9.99999974E-6 : f32
    %452 = vector.broadcast %cst_309 : f32 to vector<32x1xf32>
    %453 = arith.addf %451, %452 : vector<32x1xf32>
    %454 = math.rsqrt %453 : vector<32x1xf32>
    %455 = vector.broadcast %454 : vector<32x1xf32> to vector<32x32xf32>
    %456 = arith.mulf %446, %455 : vector<32x32xf32>
    %457 = vector.broadcast %438 : vector<1x32xf32> to vector<32x32xf32>
    %458 = arith.mulf %456, %457 : vector<32x32xf32>
    %459 = vector.broadcast %440 : vector<1x32xf32> to vector<32x32xf32>
    %460 = arith.addf %458, %459 : vector<32x32xf32>
    %c1_310 = arith.constant 1 : index
    %c0_311 = arith.constant 0 : index
    %c0_312 = arith.constant 0 : index
    %461 = vector.load %arg16[%c1_310, %c0_311, %c0_312] : memref<2x1x32xf32, #tpu.memory_space<vmem>>, vector<1x1x32xf32>
    %462 = vector.shape_cast %461 : vector<1x1x32xf32> to vector<1x32xf32>
    %c1_313 = arith.constant 1 : index
    %c0_314 = arith.constant 0 : index
    %c0_315 = arith.constant 0 : index
    %c0_316 = arith.constant 0 : index
    %463 = vector.load %arg9[%c1_313, %c0_314, %c0_315, %c0_316] : memref<2x4x32x8xbf16, #tpu.memory_space<vmem>>, vector<1x1x32x8xbf16>
    %464 = vector.shape_cast %463 : vector<1x1x32x8xbf16> to vector<32x8xbf16>
    %465 = arith.truncf %460 : vector<32x32xf32> to vector<32x32xbf16>
    %cst_317 = arith.constant dense<0.000000e+00> : vector<32x8xf32>
    %466 = tpu.matmul %465, %464, %cst_317 {dimension_numbers = #tpu.dot_dimension_numbers<[1], [0], [0], [1], [0, 0, 1, 1], [], []>} : vector<32x32xbf16>, vector<32x8xbf16>, vector<32x8xf32> -> vector<32x8xf32>
    %c1_318 = arith.constant 1 : index
    %c0_319 = arith.constant 0 : index
    %c0_320 = arith.constant 0 : index
    %c0_321 = arith.constant 0 : index
    %467 = vector.load %arg12[%c1_318, %c0_319, %c0_320, %c0_321] : memref<2x4x1x8xf32, #tpu.memory_space<vmem>>, vector<1x1x1x8xf32>
    %468 = vector.shape_cast %467 : vector<1x1x1x8xf32> to vector<1x8xf32>
    %469 = vector.broadcast %468 : vector<1x8xf32> to vector<32x8xf32>
    %470 = arith.addf %466, %469 : vector<32x8xf32>
    %cst_322 = arith.constant 0.353553385 : f32
    %471 = vector.broadcast %cst_322 : f32 to vector<32x8xf32>
    %472 = arith.mulf %470, %471 : vector<32x8xf32>
    %c1_323 = arith.constant 1 : index
    %c0_324 = arith.constant 0 : index
    %c0_325 = arith.constant 0 : index
    %c0_326 = arith.constant 0 : index
    %473 = vector.load %arg10[%c1_323, %c0_324, %c0_325, %c0_326] : memref<2x4x32x8xbf16, #tpu.memory_space<vmem>>, vector<1x1x32x8xbf16>
    %474 = vector.shape_cast %473 : vector<1x1x32x8xbf16> to vector<32x8xbf16>
    %475 = arith.truncf %460 : vector<32x32xf32> to vector<32x32xbf16>
    %cst_327 = arith.constant dense<0.000000e+00> : vector<32x8xf32>
    %476 = tpu.matmul %475, %474, %cst_327 {dimension_numbers = #tpu.dot_dimension_numbers<[1], [0], [0], [1], [0, 0, 1, 1], [], []>} : vector<32x32xbf16>, vector<32x8xbf16>, vector<32x8xf32> -> vector<32x8xf32>
    %c1_328 = arith.constant 1 : index
    %c0_329 = arith.constant 0 : index
    %c0_330 = arith.constant 0 : index
    %c0_331 = arith.constant 0 : index
    %477 = vector.load %arg13[%c1_328, %c0_329, %c0_330, %c0_331] : memref<2x4x1x8xf32, #tpu.memory_space<vmem>>, vector<1x1x1x8xf32>
    %478 = vector.shape_cast %477 : vector<1x1x1x8xf32> to vector<1x8xf32>
    %479 = vector.broadcast %478 : vector<1x8xf32> to vector<32x8xf32>
    %480 = arith.addf %476, %479 : vector<32x8xf32>
    %c1_332 = arith.constant 1 : index
    %c0_333 = arith.constant 0 : index
    %c0_334 = arith.constant 0 : index
    %c0_335 = arith.constant 0 : index
    %481 = vector.load %arg11[%c1_332, %c0_333, %c0_334, %c0_335] : memref<2x4x32x8xbf16, #tpu.memory_space<vmem>>, vector<1x1x32x8xbf16>
    %482 = vector.shape_cast %481 : vector<1x1x32x8xbf16> to vector<32x8xbf16>
    %483 = arith.truncf %460 : vector<32x32xf32> to vector<32x32xbf16>
    %cst_336 = arith.constant dense<0.000000e+00> : vector<32x8xf32>
    %484 = tpu.matmul %483, %482, %cst_336 {dimension_numbers = #tpu.dot_dimension_numbers<[1], [0], [0], [1], [0, 0, 1, 1], [], []>} : vector<32x32xbf16>, vector<32x8xbf16>, vector<32x8xf32> -> vector<32x8xf32>
    %c1_337 = arith.constant 1 : index
    %c0_338 = arith.constant 0 : index
    %c0_339 = arith.constant 0 : index
    %c0_340 = arith.constant 0 : index
    %485 = vector.load %arg14[%c1_337, %c0_338, %c0_339, %c0_340] : memref<2x4x1x8xf32, #tpu.memory_space<vmem>>, vector<1x1x1x8xf32>
    %486 = vector.shape_cast %485 : vector<1x1x1x8xf32> to vector<1x8xf32>
    %487 = vector.broadcast %486 : vector<1x8xf32> to vector<32x8xf32>
    %488 = arith.addf %484, %487 : vector<32x8xf32>
    %489 = vector.extract_strided_slice %472 {offsets = [0, 0], sizes = [16, 8], strides = [1, 1]} : vector<32x8xf32> to vector<16x8xf32>
    %490 = vector.extract_strided_slice %480 {offsets = [0, 0], sizes = [16, 8], strides = [1, 1]} : vector<32x8xf32> to vector<16x8xf32>
    %491 = vector.extract_strided_slice %488 {offsets = [0, 0], sizes = [16, 8], strides = [1, 1]} : vector<32x8xf32> to vector<16x8xf32>
    %492 = arith.truncf %489 : vector<16x8xf32> to vector<16x8xbf16>
    %493 = arith.truncf %490 : vector<16x8xf32> to vector<16x8xbf16>
    %cst_341 = arith.constant dense<0.000000e+00> : vector<16x16xf32>
    %494 = tpu.matmul %492, %493, %cst_341 {dimension_numbers = #tpu.dot_dimension_numbers<[1], [1], [0], [0], [0, 0, 1, 0], [], []>} : vector<16x8xbf16>, vector<16x8xbf16>, vector<16x16xf32> -> vector<16x16xf32>
    %cst_342 = arith.constant dense<0xFF800000> : vector<16xf32>
    %495 = vector.multi_reduction <maximumf>, %494, %cst_342 [1] : vector<16x16xf32> to vector<16xf32>
    %496 = vector.shape_cast %495 : vector<16xf32> to vector<16x1xf32>
    %497 = vector.broadcast %496 : vector<16x1xf32> to vector<16x16xf32>
    %498 = arith.subf %494, %497 : vector<16x16xf32>
    %499 = math.exp %498 : vector<16x16xf32>
    %cst_343 = arith.constant dense<0.000000e+00> : vector<16xf32>
    %500 = vector.multi_reduction <add>, %499, %cst_343 [1] : vector<16x16xf32> to vector<16xf32>
    %501 = vector.shape_cast %500 : vector<16xf32> to vector<16x1xf32>
    %502 = tpu.reciprocal %501 {approx = true} : vector<16x1xf32> -> vector<16x1xf32>
    %503 = arith.truncf %499 : vector<16x16xf32> to vector<16x16xbf16>
    %504 = arith.truncf %491 : vector<16x8xf32> to vector<16x8xbf16>
    %cst_344 = arith.constant dense<0.000000e+00> : vector<16x8xf32>
    %505 = tpu.matmul %503, %504, %cst_344 {dimension_numbers = #tpu.dot_dimension_numbers<[1], [0], [0], [1], [0, 0, 1, 1], [], []>} : vector<16x16xbf16>, vector<16x8xbf16>, vector<16x8xf32> -> vector<16x8xf32>
    %506 = vector.broadcast %502 : vector<16x1xf32> to vector<16x8xf32>
    %507 = arith.mulf %505, %506 : vector<16x8xf32>
    %508 = vector.extract_strided_slice %472 {offsets = [16, 0], sizes = [16, 8], strides = [1, 1]} : vector<32x8xf32> to vector<16x8xf32>
    %509 = vector.extract_strided_slice %480 {offsets = [16, 0], sizes = [16, 8], strides = [1, 1]} : vector<32x8xf32> to vector<16x8xf32>
    %510 = vector.extract_strided_slice %488 {offsets = [16, 0], sizes = [16, 8], strides = [1, 1]} : vector<32x8xf32> to vector<16x8xf32>
    %511 = arith.truncf %508 : vector<16x8xf32> to vector<16x8xbf16>
    %512 = arith.truncf %509 : vector<16x8xf32> to vector<16x8xbf16>
    %cst_345 = arith.constant dense<0.000000e+00> : vector<16x16xf32>
    %513 = tpu.matmul %511, %512, %cst_345 {dimension_numbers = #tpu.dot_dimension_numbers<[1], [1], [0], [0], [0, 0, 1, 0], [], []>} : vector<16x8xbf16>, vector<16x8xbf16>, vector<16x16xf32> -> vector<16x16xf32>
    %cst_346 = arith.constant dense<0xFF800000> : vector<16xf32>
    %514 = vector.multi_reduction <maximumf>, %513, %cst_346 [1] : vector<16x16xf32> to vector<16xf32>
    %515 = vector.shape_cast %514 : vector<16xf32> to vector<16x1xf32>
    %516 = vector.broadcast %515 : vector<16x1xf32> to vector<16x16xf32>
    %517 = arith.subf %513, %516 : vector<16x16xf32>
    %518 = math.exp %517 : vector<16x16xf32>
    %cst_347 = arith.constant dense<0.000000e+00> : vector<16xf32>
    %519 = vector.multi_reduction <add>, %518, %cst_347 [1] : vector<16x16xf32> to vector<16xf32>
    %520 = vector.shape_cast %519 : vector<16xf32> to vector<16x1xf32>
    %521 = tpu.reciprocal %520 {approx = true} : vector<16x1xf32> -> vector<16x1xf32>
    %522 = arith.truncf %518 : vector<16x16xf32> to vector<16x16xbf16>
    %523 = arith.truncf %510 : vector<16x8xf32> to vector<16x8xbf16>
    %cst_348 = arith.constant dense<0.000000e+00> : vector<16x8xf32>
    %524 = tpu.matmul %522, %523, %cst_348 {dimension_numbers = #tpu.dot_dimension_numbers<[1], [0], [0], [1], [0, 0, 1, 1], [], []>} : vector<16x16xbf16>, vector<16x8xbf16>, vector<16x8xf32> -> vector<16x8xf32>
    %525 = vector.broadcast %521 : vector<16x1xf32> to vector<16x8xf32>
    %526 = arith.mulf %524, %525 : vector<16x8xf32>
    %527 = tpu.concatenate %507, %526 in 0 : vector<16x8xf32>, vector<16x8xf32> -> vector<32x8xf32>
    %c1_349 = arith.constant 1 : index
    %c0_350 = arith.constant 0 : index
    %c0_351 = arith.constant 0 : index
    %c0_352 = arith.constant 0 : index
    %528 = vector.load %arg15[%c1_349, %c0_350, %c0_351, %c0_352] : memref<2x4x8x32xbf16, #tpu.memory_space<vmem>>, vector<1x1x8x32xbf16>
    %529 = vector.shape_cast %528 : vector<1x1x8x32xbf16> to vector<8x32xbf16>
    %530 = arith.truncf %527 : vector<32x8xf32> to vector<32x8xbf16>
    %cst_353 = arith.constant dense<0.000000e+00> : vector<32x32xf32>
    %531 = tpu.matmul %530, %529, %cst_353 {dimension_numbers = #tpu.dot_dimension_numbers<[1], [0], [0], [1], [0, 0, 1, 1], [], []>} : vector<32x8xbf16>, vector<8x32xbf16>, vector<32x32xf32> -> vector<32x32xf32>
    %532 = vector.broadcast %462 : vector<1x32xf32> to vector<32x32xf32>
    %533 = arith.addf %532, %531 : vector<32x32xf32>
    %c1_354 = arith.constant 1 : index
    %c1_355 = arith.constant 1 : index
    %c0_356 = arith.constant 0 : index
    %c0_357 = arith.constant 0 : index
    %534 = vector.load %arg9[%c1_354, %c1_355, %c0_356, %c0_357] : memref<2x4x32x8xbf16, #tpu.memory_space<vmem>>, vector<1x1x32x8xbf16>
    %535 = vector.shape_cast %534 : vector<1x1x32x8xbf16> to vector<32x8xbf16>
    %536 = arith.truncf %460 : vector<32x32xf32> to vector<32x32xbf16>
    %cst_358 = arith.constant dense<0.000000e+00> : vector<32x8xf32>
    %537 = tpu.matmul %536, %535, %cst_358 {dimension_numbers = #tpu.dot_dimension_numbers<[1], [0], [0], [1], [0, 0, 1, 1], [], []>} : vector<32x32xbf16>, vector<32x8xbf16>, vector<32x8xf32> -> vector<32x8xf32>
    %c1_359 = arith.constant 1 : index
    %c1_360 = arith.constant 1 : index
    %c0_361 = arith.constant 0 : index
    %c0_362 = arith.constant 0 : index
    %538 = vector.load %arg12[%c1_359, %c1_360, %c0_361, %c0_362] : memref<2x4x1x8xf32, #tpu.memory_space<vmem>>, vector<1x1x1x8xf32>
    %539 = vector.shape_cast %538 : vector<1x1x1x8xf32> to vector<1x8xf32>
    %540 = vector.broadcast %539 : vector<1x8xf32> to vector<32x8xf32>
    %541 = arith.addf %537, %540 : vector<32x8xf32>
    %cst_363 = arith.constant 0.353553385 : f32
    %542 = vector.broadcast %cst_363 : f32 to vector<32x8xf32>
    %543 = arith.mulf %541, %542 : vector<32x8xf32>
    %c1_364 = arith.constant 1 : index
    %c1_365 = arith.constant 1 : index
    %c0_366 = arith.constant 0 : index
    %c0_367 = arith.constant 0 : index
    %544 = vector.load %arg10[%c1_364, %c1_365, %c0_366, %c0_367] : memref<2x4x32x8xbf16, #tpu.memory_space<vmem>>, vector<1x1x32x8xbf16>
    %545 = vector.shape_cast %544 : vector<1x1x32x8xbf16> to vector<32x8xbf16>
    %546 = arith.truncf %460 : vector<32x32xf32> to vector<32x32xbf16>
    %cst_368 = arith.constant dense<0.000000e+00> : vector<32x8xf32>
    %547 = tpu.matmul %546, %545, %cst_368 {dimension_numbers = #tpu.dot_dimension_numbers<[1], [0], [0], [1], [0, 0, 1, 1], [], []>} : vector<32x32xbf16>, vector<32x8xbf16>, vector<32x8xf32> -> vector<32x8xf32>
    %c1_369 = arith.constant 1 : index
    %c1_370 = arith.constant 1 : index
    %c0_371 = arith.constant 0 : index
    %c0_372 = arith.constant 0 : index
    %548 = vector.load %arg13[%c1_369, %c1_370, %c0_371, %c0_372] : memref<2x4x1x8xf32, #tpu.memory_space<vmem>>, vector<1x1x1x8xf32>
    %549 = vector.shape_cast %548 : vector<1x1x1x8xf32> to vector<1x8xf32>
    %550 = vector.broadcast %549 : vector<1x8xf32> to vector<32x8xf32>
    %551 = arith.addf %547, %550 : vector<32x8xf32>
    %c1_373 = arith.constant 1 : index
    %c1_374 = arith.constant 1 : index
    %c0_375 = arith.constant 0 : index
    %c0_376 = arith.constant 0 : index
    %552 = vector.load %arg11[%c1_373, %c1_374, %c0_375, %c0_376] : memref<2x4x32x8xbf16, #tpu.memory_space<vmem>>, vector<1x1x32x8xbf16>
    %553 = vector.shape_cast %552 : vector<1x1x32x8xbf16> to vector<32x8xbf16>
    %554 = arith.truncf %460 : vector<32x32xf32> to vector<32x32xbf16>
    %cst_377 = arith.constant dense<0.000000e+00> : vector<32x8xf32>
    %555 = tpu.matmul %554, %553, %cst_377 {dimension_numbers = #tpu.dot_dimension_numbers<[1], [0], [0], [1], [0, 0, 1, 1], [], []>} : vector<32x32xbf16>, vector<32x8xbf16>, vector<32x8xf32> -> vector<32x8xf32>
    %c1_378 = arith.constant 1 : index
    %c1_379 = arith.constant 1 : index
    %c0_380 = arith.constant 0 : index
    %c0_381 = arith.constant 0 : index
    %556 = vector.load %arg14[%c1_378, %c1_379, %c0_380, %c0_381] : memref<2x4x1x8xf32, #tpu.memory_space<vmem>>, vector<1x1x1x8xf32>
    %557 = vector.shape_cast %556 : vector<1x1x1x8xf32> to vector<1x8xf32>
    %558 = vector.broadcast %557 : vector<1x8xf32> to vector<32x8xf32>
    %559 = arith.addf %555, %558 : vector<32x8xf32>
    %560 = vector.extract_strided_slice %543 {offsets = [0, 0], sizes = [16, 8], strides = [1, 1]} : vector<32x8xf32> to vector<16x8xf32>
    %561 = vector.extract_strided_slice %551 {offsets = [0, 0], sizes = [16, 8], strides = [1, 1]} : vector<32x8xf32> to vector<16x8xf32>
    %562 = vector.extract_strided_slice %559 {offsets = [0, 0], sizes = [16, 8], strides = [1, 1]} : vector<32x8xf32> to vector<16x8xf32>
    %563 = arith.truncf %560 : vector<16x8xf32> to vector<16x8xbf16>
    %564 = arith.truncf %561 : vector<16x8xf32> to vector<16x8xbf16>
    %cst_382 = arith.constant dense<0.000000e+00> : vector<16x16xf32>
    %565 = tpu.matmul %563, %564, %cst_382 {dimension_numbers = #tpu.dot_dimension_numbers<[1], [1], [0], [0], [0, 0, 1, 0], [], []>} : vector<16x8xbf16>, vector<16x8xbf16>, vector<16x16xf32> -> vector<16x16xf32>
    %cst_383 = arith.constant dense<0xFF800000> : vector<16xf32>
    %566 = vector.multi_reduction <maximumf>, %565, %cst_383 [1] : vector<16x16xf32> to vector<16xf32>
    %567 = vector.shape_cast %566 : vector<16xf32> to vector<16x1xf32>
    %568 = vector.broadcast %567 : vector<16x1xf32> to vector<16x16xf32>
    %569 = arith.subf %565, %568 : vector<16x16xf32>
    %570 = math.exp %569 : vector<16x16xf32>
    %cst_384 = arith.constant dense<0.000000e+00> : vector<16xf32>
    %571 = vector.multi_reduction <add>, %570, %cst_384 [1] : vector<16x16xf32> to vector<16xf32>
    %572 = vector.shape_cast %571 : vector<16xf32> to vector<16x1xf32>
    %573 = tpu.reciprocal %572 {approx = true} : vector<16x1xf32> -> vector<16x1xf32>
    %574 = arith.truncf %570 : vector<16x16xf32> to vector<16x16xbf16>
    %575 = arith.truncf %562 : vector<16x8xf32> to vector<16x8xbf16>
    %cst_385 = arith.constant dense<0.000000e+00> : vector<16x8xf32>
    %576 = tpu.matmul %574, %575, %cst_385 {dimension_numbers = #tpu.dot_dimension_numbers<[1], [0], [0], [1], [0, 0, 1, 1], [], []>} : vector<16x16xbf16>, vector<16x8xbf16>, vector<16x8xf32> -> vector<16x8xf32>
    %577 = vector.broadcast %573 : vector<16x1xf32> to vector<16x8xf32>
    %578 = arith.mulf %576, %577 : vector<16x8xf32>
    %579 = vector.extract_strided_slice %543 {offsets = [16, 0], sizes = [16, 8], strides = [1, 1]} : vector<32x8xf32> to vector<16x8xf32>
    %580 = vector.extract_strided_slice %551 {offsets = [16, 0], sizes = [16, 8], strides = [1, 1]} : vector<32x8xf32> to vector<16x8xf32>
    %581 = vector.extract_strided_slice %559 {offsets = [16, 0], sizes = [16, 8], strides = [1, 1]} : vector<32x8xf32> to vector<16x8xf32>
    %582 = arith.truncf %579 : vector<16x8xf32> to vector<16x8xbf16>
    %583 = arith.truncf %580 : vector<16x8xf32> to vector<16x8xbf16>
    %cst_386 = arith.constant dense<0.000000e+00> : vector<16x16xf32>
    %584 = tpu.matmul %582, %583, %cst_386 {dimension_numbers = #tpu.dot_dimension_numbers<[1], [1], [0], [0], [0, 0, 1, 0], [], []>} : vector<16x8xbf16>, vector<16x8xbf16>, vector<16x16xf32> -> vector<16x16xf32>
    %cst_387 = arith.constant dense<0xFF800000> : vector<16xf32>
    %585 = vector.multi_reduction <maximumf>, %584, %cst_387 [1] : vector<16x16xf32> to vector<16xf32>
    %586 = vector.shape_cast %585 : vector<16xf32> to vector<16x1xf32>
    %587 = vector.broadcast %586 : vector<16x1xf32> to vector<16x16xf32>
    %588 = arith.subf %584, %587 : vector<16x16xf32>
    %589 = math.exp %588 : vector<16x16xf32>
    %cst_388 = arith.constant dense<0.000000e+00> : vector<16xf32>
    %590 = vector.multi_reduction <add>, %589, %cst_388 [1] : vector<16x16xf32> to vector<16xf32>
    %591 = vector.shape_cast %590 : vector<16xf32> to vector<16x1xf32>
    %592 = tpu.reciprocal %591 {approx = true} : vector<16x1xf32> -> vector<16x1xf32>
    %593 = arith.truncf %589 : vector<16x16xf32> to vector<16x16xbf16>
    %594 = arith.truncf %581 : vector<16x8xf32> to vector<16x8xbf16>
    %cst_389 = arith.constant dense<0.000000e+00> : vector<16x8xf32>
    %595 = tpu.matmul %593, %594, %cst_389 {dimension_numbers = #tpu.dot_dimension_numbers<[1], [0], [0], [1], [0, 0, 1, 1], [], []>} : vector<16x16xbf16>, vector<16x8xbf16>, vector<16x8xf32> -> vector<16x8xf32>
    %596 = vector.broadcast %592 : vector<16x1xf32> to vector<16x8xf32>
    %597 = arith.mulf %595, %596 : vector<16x8xf32>
    %598 = tpu.concatenate %578, %597 in 0 : vector<16x8xf32>, vector<16x8xf32> -> vector<32x8xf32>
    %c1_390 = arith.constant 1 : index
    %c1_391 = arith.constant 1 : index
    %c0_392 = arith.constant 0 : index
    %c0_393 = arith.constant 0 : index
    %599 = vector.load %arg15[%c1_390, %c1_391, %c0_392, %c0_393] : memref<2x4x8x32xbf16, #tpu.memory_space<vmem>>, vector<1x1x8x32xbf16>
    %600 = vector.shape_cast %599 : vector<1x1x8x32xbf16> to vector<8x32xbf16>
    %601 = arith.truncf %598 : vector<32x8xf32> to vector<32x8xbf16>
    %cst_394 = arith.constant dense<0.000000e+00> : vector<32x32xf32>
    %602 = tpu.matmul %601, %600, %cst_394 {dimension_numbers = #tpu.dot_dimension_numbers<[1], [0], [0], [1], [0, 0, 1, 1], [], []>} : vector<32x8xbf16>, vector<8x32xbf16>, vector<32x32xf32> -> vector<32x32xf32>
    %603 = arith.addf %533, %602 : vector<32x32xf32>
    %c1_395 = arith.constant 1 : index
    %c2_396 = arith.constant 2 : index
    %c0_397 = arith.constant 0 : index
    %c0_398 = arith.constant 0 : index
    %604 = vector.load %arg9[%c1_395, %c2_396, %c0_397, %c0_398] : memref<2x4x32x8xbf16, #tpu.memory_space<vmem>>, vector<1x1x32x8xbf16>
    %605 = vector.shape_cast %604 : vector<1x1x32x8xbf16> to vector<32x8xbf16>
    %606 = arith.truncf %460 : vector<32x32xf32> to vector<32x32xbf16>
    %cst_399 = arith.constant dense<0.000000e+00> : vector<32x8xf32>
    %607 = tpu.matmul %606, %605, %cst_399 {dimension_numbers = #tpu.dot_dimension_numbers<[1], [0], [0], [1], [0, 0, 1, 1], [], []>} : vector<32x32xbf16>, vector<32x8xbf16>, vector<32x8xf32> -> vector<32x8xf32>
    %c1_400 = arith.constant 1 : index
    %c2_401 = arith.constant 2 : index
    %c0_402 = arith.constant 0 : index
    %c0_403 = arith.constant 0 : index
    %608 = vector.load %arg12[%c1_400, %c2_401, %c0_402, %c0_403] : memref<2x4x1x8xf32, #tpu.memory_space<vmem>>, vector<1x1x1x8xf32>
    %609 = vector.shape_cast %608 : vector<1x1x1x8xf32> to vector<1x8xf32>
    %610 = vector.broadcast %609 : vector<1x8xf32> to vector<32x8xf32>
    %611 = arith.addf %607, %610 : vector<32x8xf32>
    %cst_404 = arith.constant 0.353553385 : f32
    %612 = vector.broadcast %cst_404 : f32 to vector<32x8xf32>
    %613 = arith.mulf %611, %612 : vector<32x8xf32>
    %c1_405 = arith.constant 1 : index
    %c2_406 = arith.constant 2 : index
    %c0_407 = arith.constant 0 : index
    %c0_408 = arith.constant 0 : index
    %614 = vector.load %arg10[%c1_405, %c2_406, %c0_407, %c0_408] : memref<2x4x32x8xbf16, #tpu.memory_space<vmem>>, vector<1x1x32x8xbf16>
    %615 = vector.shape_cast %614 : vector<1x1x32x8xbf16> to vector<32x8xbf16>
    %616 = arith.truncf %460 : vector<32x32xf32> to vector<32x32xbf16>
    %cst_409 = arith.constant dense<0.000000e+00> : vector<32x8xf32>
    %617 = tpu.matmul %616, %615, %cst_409 {dimension_numbers = #tpu.dot_dimension_numbers<[1], [0], [0], [1], [0, 0, 1, 1], [], []>} : vector<32x32xbf16>, vector<32x8xbf16>, vector<32x8xf32> -> vector<32x8xf32>
    %c1_410 = arith.constant 1 : index
    %c2_411 = arith.constant 2 : index
    %c0_412 = arith.constant 0 : index
    %c0_413 = arith.constant 0 : index
    %618 = vector.load %arg13[%c1_410, %c2_411, %c0_412, %c0_413] : memref<2x4x1x8xf32, #tpu.memory_space<vmem>>, vector<1x1x1x8xf32>
    %619 = vector.shape_cast %618 : vector<1x1x1x8xf32> to vector<1x8xf32>
    %620 = vector.broadcast %619 : vector<1x8xf32> to vector<32x8xf32>
    %621 = arith.addf %617, %620 : vector<32x8xf32>
    %c1_414 = arith.constant 1 : index
    %c2_415 = arith.constant 2 : index
    %c0_416 = arith.constant 0 : index
    %c0_417 = arith.constant 0 : index
    %622 = vector.load %arg11[%c1_414, %c2_415, %c0_416, %c0_417] : memref<2x4x32x8xbf16, #tpu.memory_space<vmem>>, vector<1x1x32x8xbf16>
    %623 = vector.shape_cast %622 : vector<1x1x32x8xbf16> to vector<32x8xbf16>
    %624 = arith.truncf %460 : vector<32x32xf32> to vector<32x32xbf16>
    %cst_418 = arith.constant dense<0.000000e+00> : vector<32x8xf32>
    %625 = tpu.matmul %624, %623, %cst_418 {dimension_numbers = #tpu.dot_dimension_numbers<[1], [0], [0], [1], [0, 0, 1, 1], [], []>} : vector<32x32xbf16>, vector<32x8xbf16>, vector<32x8xf32> -> vector<32x8xf32>
    %c1_419 = arith.constant 1 : index
    %c2_420 = arith.constant 2 : index
    %c0_421 = arith.constant 0 : index
    %c0_422 = arith.constant 0 : index
    %626 = vector.load %arg14[%c1_419, %c2_420, %c0_421, %c0_422] : memref<2x4x1x8xf32, #tpu.memory_space<vmem>>, vector<1x1x1x8xf32>
    %627 = vector.shape_cast %626 : vector<1x1x1x8xf32> to vector<1x8xf32>
    %628 = vector.broadcast %627 : vector<1x8xf32> to vector<32x8xf32>
    %629 = arith.addf %625, %628 : vector<32x8xf32>
    %630 = vector.extract_strided_slice %613 {offsets = [0, 0], sizes = [16, 8], strides = [1, 1]} : vector<32x8xf32> to vector<16x8xf32>
    %631 = vector.extract_strided_slice %621 {offsets = [0, 0], sizes = [16, 8], strides = [1, 1]} : vector<32x8xf32> to vector<16x8xf32>
    %632 = vector.extract_strided_slice %629 {offsets = [0, 0], sizes = [16, 8], strides = [1, 1]} : vector<32x8xf32> to vector<16x8xf32>
    %633 = arith.truncf %630 : vector<16x8xf32> to vector<16x8xbf16>
    %634 = arith.truncf %631 : vector<16x8xf32> to vector<16x8xbf16>
    %cst_423 = arith.constant dense<0.000000e+00> : vector<16x16xf32>
    %635 = tpu.matmul %633, %634, %cst_423 {dimension_numbers = #tpu.dot_dimension_numbers<[1], [1], [0], [0], [0, 0, 1, 0], [], []>} : vector<16x8xbf16>, vector<16x8xbf16>, vector<16x16xf32> -> vector<16x16xf32>
    %cst_424 = arith.constant dense<0xFF800000> : vector<16xf32>
    %636 = vector.multi_reduction <maximumf>, %635, %cst_424 [1] : vector<16x16xf32> to vector<16xf32>
    %637 = vector.shape_cast %636 : vector<16xf32> to vector<16x1xf32>
    %638 = vector.broadcast %637 : vector<16x1xf32> to vector<16x16xf32>
    %639 = arith.subf %635, %638 : vector<16x16xf32>
    %640 = math.exp %639 : vector<16x16xf32>
    %cst_425 = arith.constant dense<0.000000e+00> : vector<16xf32>
    %641 = vector.multi_reduction <add>, %640, %cst_425 [1] : vector<16x16xf32> to vector<16xf32>
    %642 = vector.shape_cast %641 : vector<16xf32> to vector<16x1xf32>
    %643 = tpu.reciprocal %642 {approx = true} : vector<16x1xf32> -> vector<16x1xf32>
    %644 = arith.truncf %640 : vector<16x16xf32> to vector<16x16xbf16>
    %645 = arith.truncf %632 : vector<16x8xf32> to vector<16x8xbf16>
    %cst_426 = arith.constant dense<0.000000e+00> : vector<16x8xf32>
    %646 = tpu.matmul %644, %645, %cst_426 {dimension_numbers = #tpu.dot_dimension_numbers<[1], [0], [0], [1], [0, 0, 1, 1], [], []>} : vector<16x16xbf16>, vector<16x8xbf16>, vector<16x8xf32> -> vector<16x8xf32>
    %647 = vector.broadcast %643 : vector<16x1xf32> to vector<16x8xf32>
    %648 = arith.mulf %646, %647 : vector<16x8xf32>
    %649 = vector.extract_strided_slice %613 {offsets = [16, 0], sizes = [16, 8], strides = [1, 1]} : vector<32x8xf32> to vector<16x8xf32>
    %650 = vector.extract_strided_slice %621 {offsets = [16, 0], sizes = [16, 8], strides = [1, 1]} : vector<32x8xf32> to vector<16x8xf32>
    %651 = vector.extract_strided_slice %629 {offsets = [16, 0], sizes = [16, 8], strides = [1, 1]} : vector<32x8xf32> to vector<16x8xf32>
    %652 = arith.truncf %649 : vector<16x8xf32> to vector<16x8xbf16>
    %653 = arith.truncf %650 : vector<16x8xf32> to vector<16x8xbf16>
    %cst_427 = arith.constant dense<0.000000e+00> : vector<16x16xf32>
    %654 = tpu.matmul %652, %653, %cst_427 {dimension_numbers = #tpu.dot_dimension_numbers<[1], [1], [0], [0], [0, 0, 1, 0], [], []>} : vector<16x8xbf16>, vector<16x8xbf16>, vector<16x16xf32> -> vector<16x16xf32>
    %cst_428 = arith.constant dense<0xFF800000> : vector<16xf32>
    %655 = vector.multi_reduction <maximumf>, %654, %cst_428 [1] : vector<16x16xf32> to vector<16xf32>
    %656 = vector.shape_cast %655 : vector<16xf32> to vector<16x1xf32>
    %657 = vector.broadcast %656 : vector<16x1xf32> to vector<16x16xf32>
    %658 = arith.subf %654, %657 : vector<16x16xf32>
    %659 = math.exp %658 : vector<16x16xf32>
    %cst_429 = arith.constant dense<0.000000e+00> : vector<16xf32>
    %660 = vector.multi_reduction <add>, %659, %cst_429 [1] : vector<16x16xf32> to vector<16xf32>
    %661 = vector.shape_cast %660 : vector<16xf32> to vector<16x1xf32>
    %662 = tpu.reciprocal %661 {approx = true} : vector<16x1xf32> -> vector<16x1xf32>
    %663 = arith.truncf %659 : vector<16x16xf32> to vector<16x16xbf16>
    %664 = arith.truncf %651 : vector<16x8xf32> to vector<16x8xbf16>
    %cst_430 = arith.constant dense<0.000000e+00> : vector<16x8xf32>
    %665 = tpu.matmul %663, %664, %cst_430 {dimension_numbers = #tpu.dot_dimension_numbers<[1], [0], [0], [1], [0, 0, 1, 1], [], []>} : vector<16x16xbf16>, vector<16x8xbf16>, vector<16x8xf32> -> vector<16x8xf32>
    %666 = vector.broadcast %662 : vector<16x1xf32> to vector<16x8xf32>
    %667 = arith.mulf %665, %666 : vector<16x8xf32>
    %668 = tpu.concatenate %648, %667 in 0 : vector<16x8xf32>, vector<16x8xf32> -> vector<32x8xf32>
    %c1_431 = arith.constant 1 : index
    %c2_432 = arith.constant 2 : index
    %c0_433 = arith.constant 0 : index
    %c0_434 = arith.constant 0 : index
    %669 = vector.load %arg15[%c1_431, %c2_432, %c0_433, %c0_434] : memref<2x4x8x32xbf16, #tpu.memory_space<vmem>>, vector<1x1x8x32xbf16>
    %670 = vector.shape_cast %669 : vector<1x1x8x32xbf16> to vector<8x32xbf16>
    %671 = arith.truncf %668 : vector<32x8xf32> to vector<32x8xbf16>
    %cst_435 = arith.constant dense<0.000000e+00> : vector<32x32xf32>
    %672 = tpu.matmul %671, %670, %cst_435 {dimension_numbers = #tpu.dot_dimension_numbers<[1], [0], [0], [1], [0, 0, 1, 1], [], []>} : vector<32x8xbf16>, vector<8x32xbf16>, vector<32x32xf32> -> vector<32x32xf32>
    %673 = arith.addf %603, %672 : vector<32x32xf32>
    %c1_436 = arith.constant 1 : index
    %c3_437 = arith.constant 3 : index
    %c0_438 = arith.constant 0 : index
    %c0_439 = arith.constant 0 : index
    %674 = vector.load %arg9[%c1_436, %c3_437, %c0_438, %c0_439] : memref<2x4x32x8xbf16, #tpu.memory_space<vmem>>, vector<1x1x32x8xbf16>
    %675 = vector.shape_cast %674 : vector<1x1x32x8xbf16> to vector<32x8xbf16>
    %676 = arith.truncf %460 : vector<32x32xf32> to vector<32x32xbf16>
    %cst_440 = arith.constant dense<0.000000e+00> : vector<32x8xf32>
    %677 = tpu.matmul %676, %675, %cst_440 {dimension_numbers = #tpu.dot_dimension_numbers<[1], [0], [0], [1], [0, 0, 1, 1], [], []>} : vector<32x32xbf16>, vector<32x8xbf16>, vector<32x8xf32> -> vector<32x8xf32>
    %c1_441 = arith.constant 1 : index
    %c3_442 = arith.constant 3 : index
    %c0_443 = arith.constant 0 : index
    %c0_444 = arith.constant 0 : index
    %678 = vector.load %arg12[%c1_441, %c3_442, %c0_443, %c0_444] : memref<2x4x1x8xf32, #tpu.memory_space<vmem>>, vector<1x1x1x8xf32>
    %679 = vector.shape_cast %678 : vector<1x1x1x8xf32> to vector<1x8xf32>
    %680 = vector.broadcast %679 : vector<1x8xf32> to vector<32x8xf32>
    %681 = arith.addf %677, %680 : vector<32x8xf32>
    %cst_445 = arith.constant 0.353553385 : f32
    %682 = vector.broadcast %cst_445 : f32 to vector<32x8xf32>
    %683 = arith.mulf %681, %682 : vector<32x8xf32>
    %c1_446 = arith.constant 1 : index
    %c3_447 = arith.constant 3 : index
    %c0_448 = arith.constant 0 : index
    %c0_449 = arith.constant 0 : index
    %684 = vector.load %arg10[%c1_446, %c3_447, %c0_448, %c0_449] : memref<2x4x32x8xbf16, #tpu.memory_space<vmem>>, vector<1x1x32x8xbf16>
    %685 = vector.shape_cast %684 : vector<1x1x32x8xbf16> to vector<32x8xbf16>
    %686 = arith.truncf %460 : vector<32x32xf32> to vector<32x32xbf16>
    %cst_450 = arith.constant dense<0.000000e+00> : vector<32x8xf32>
    %687 = tpu.matmul %686, %685, %cst_450 {dimension_numbers = #tpu.dot_dimension_numbers<[1], [0], [0], [1], [0, 0, 1, 1], [], []>} : vector<32x32xbf16>, vector<32x8xbf16>, vector<32x8xf32> -> vector<32x8xf32>
    %c1_451 = arith.constant 1 : index
    %c3_452 = arith.constant 3 : index
    %c0_453 = arith.constant 0 : index
    %c0_454 = arith.constant 0 : index
    %688 = vector.load %arg13[%c1_451, %c3_452, %c0_453, %c0_454] : memref<2x4x1x8xf32, #tpu.memory_space<vmem>>, vector<1x1x1x8xf32>
    %689 = vector.shape_cast %688 : vector<1x1x1x8xf32> to vector<1x8xf32>
    %690 = vector.broadcast %689 : vector<1x8xf32> to vector<32x8xf32>
    %691 = arith.addf %687, %690 : vector<32x8xf32>
    %c1_455 = arith.constant 1 : index
    %c3_456 = arith.constant 3 : index
    %c0_457 = arith.constant 0 : index
    %c0_458 = arith.constant 0 : index
    %692 = vector.load %arg11[%c1_455, %c3_456, %c0_457, %c0_458] : memref<2x4x32x8xbf16, #tpu.memory_space<vmem>>, vector<1x1x32x8xbf16>
    %693 = vector.shape_cast %692 : vector<1x1x32x8xbf16> to vector<32x8xbf16>
    %694 = arith.truncf %460 : vector<32x32xf32> to vector<32x32xbf16>
    %cst_459 = arith.constant dense<0.000000e+00> : vector<32x8xf32>
    %695 = tpu.matmul %694, %693, %cst_459 {dimension_numbers = #tpu.dot_dimension_numbers<[1], [0], [0], [1], [0, 0, 1, 1], [], []>} : vector<32x32xbf16>, vector<32x8xbf16>, vector<32x8xf32> -> vector<32x8xf32>
    %c1_460 = arith.constant 1 : index
    %c3_461 = arith.constant 3 : index
    %c0_462 = arith.constant 0 : index
    %c0_463 = arith.constant 0 : index
    %696 = vector.load %arg14[%c1_460, %c3_461, %c0_462, %c0_463] : memref<2x4x1x8xf32, #tpu.memory_space<vmem>>, vector<1x1x1x8xf32>
    %697 = vector.shape_cast %696 : vector<1x1x1x8xf32> to vector<1x8xf32>
    %698 = vector.broadcast %697 : vector<1x8xf32> to vector<32x8xf32>
    %699 = arith.addf %695, %698 : vector<32x8xf32>
    %700 = vector.extract_strided_slice %683 {offsets = [0, 0], sizes = [16, 8], strides = [1, 1]} : vector<32x8xf32> to vector<16x8xf32>
    %701 = vector.extract_strided_slice %691 {offsets = [0, 0], sizes = [16, 8], strides = [1, 1]} : vector<32x8xf32> to vector<16x8xf32>
    %702 = vector.extract_strided_slice %699 {offsets = [0, 0], sizes = [16, 8], strides = [1, 1]} : vector<32x8xf32> to vector<16x8xf32>
    %703 = arith.truncf %700 : vector<16x8xf32> to vector<16x8xbf16>
    %704 = arith.truncf %701 : vector<16x8xf32> to vector<16x8xbf16>
    %cst_464 = arith.constant dense<0.000000e+00> : vector<16x16xf32>
    %705 = tpu.matmul %703, %704, %cst_464 {dimension_numbers = #tpu.dot_dimension_numbers<[1], [1], [0], [0], [0, 0, 1, 0], [], []>} : vector<16x8xbf16>, vector<16x8xbf16>, vector<16x16xf32> -> vector<16x16xf32>
    %cst_465 = arith.constant dense<0xFF800000> : vector<16xf32>
    %706 = vector.multi_reduction <maximumf>, %705, %cst_465 [1] : vector<16x16xf32> to vector<16xf32>
    %707 = vector.shape_cast %706 : vector<16xf32> to vector<16x1xf32>
    %708 = vector.broadcast %707 : vector<16x1xf32> to vector<16x16xf32>
    %709 = arith.subf %705, %708 : vector<16x16xf32>
    %710 = math.exp %709 : vector<16x16xf32>
    %cst_466 = arith.constant dense<0.000000e+00> : vector<16xf32>
    %711 = vector.multi_reduction <add>, %710, %cst_466 [1] : vector<16x16xf32> to vector<16xf32>
    %712 = vector.shape_cast %711 : vector<16xf32> to vector<16x1xf32>
    %713 = tpu.reciprocal %712 {approx = true} : vector<16x1xf32> -> vector<16x1xf32>
    %714 = arith.truncf %710 : vector<16x16xf32> to vector<16x16xbf16>
    %715 = arith.truncf %702 : vector<16x8xf32> to vector<16x8xbf16>
    %cst_467 = arith.constant dense<0.000000e+00> : vector<16x8xf32>
    %716 = tpu.matmul %714, %715, %cst_467 {dimension_numbers = #tpu.dot_dimension_numbers<[1], [0], [0], [1], [0, 0, 1, 1], [], []>} : vector<16x16xbf16>, vector<16x8xbf16>, vector<16x8xf32> -> vector<16x8xf32>
    %717 = vector.broadcast %713 : vector<16x1xf32> to vector<16x8xf32>
    %718 = arith.mulf %716, %717 : vector<16x8xf32>
    %719 = vector.extract_strided_slice %683 {offsets = [16, 0], sizes = [16, 8], strides = [1, 1]} : vector<32x8xf32> to vector<16x8xf32>
    %720 = vector.extract_strided_slice %691 {offsets = [16, 0], sizes = [16, 8], strides = [1, 1]} : vector<32x8xf32> to vector<16x8xf32>
    %721 = vector.extract_strided_slice %699 {offsets = [16, 0], sizes = [16, 8], strides = [1, 1]} : vector<32x8xf32> to vector<16x8xf32>
    %722 = arith.truncf %719 : vector<16x8xf32> to vector<16x8xbf16>
    %723 = arith.truncf %720 : vector<16x8xf32> to vector<16x8xbf16>
    %cst_468 = arith.constant dense<0.000000e+00> : vector<16x16xf32>
    %724 = tpu.matmul %722, %723, %cst_468 {dimension_numbers = #tpu.dot_dimension_numbers<[1], [1], [0], [0], [0, 0, 1, 0], [], []>} : vector<16x8xbf16>, vector<16x8xbf16>, vector<16x16xf32> -> vector<16x16xf32>
    %cst_469 = arith.constant dense<0xFF800000> : vector<16xf32>
    %725 = vector.multi_reduction <maximumf>, %724, %cst_469 [1] : vector<16x16xf32> to vector<16xf32>
    %726 = vector.shape_cast %725 : vector<16xf32> to vector<16x1xf32>
    %727 = vector.broadcast %726 : vector<16x1xf32> to vector<16x16xf32>
    %728 = arith.subf %724, %727 : vector<16x16xf32>
    %729 = math.exp %728 : vector<16x16xf32>
    %cst_470 = arith.constant dense<0.000000e+00> : vector<16xf32>
    %730 = vector.multi_reduction <add>, %729, %cst_470 [1] : vector<16x16xf32> to vector<16xf32>
    %731 = vector.shape_cast %730 : vector<16xf32> to vector<16x1xf32>
    %732 = tpu.reciprocal %731 {approx = true} : vector<16x1xf32> -> vector<16x1xf32>
    %733 = arith.truncf %729 : vector<16x16xf32> to vector<16x16xbf16>
    %734 = arith.truncf %721 : vector<16x8xf32> to vector<16x8xbf16>
    %cst_471 = arith.constant dense<0.000000e+00> : vector<16x8xf32>
    %735 = tpu.matmul %733, %734, %cst_471 {dimension_numbers = #tpu.dot_dimension_numbers<[1], [0], [0], [1], [0, 0, 1, 1], [], []>} : vector<16x16xbf16>, vector<16x8xbf16>, vector<16x8xf32> -> vector<16x8xf32>
    %736 = vector.broadcast %732 : vector<16x1xf32> to vector<16x8xf32>
    %737 = arith.mulf %735, %736 : vector<16x8xf32>
    %738 = tpu.concatenate %718, %737 in 0 : vector<16x8xf32>, vector<16x8xf32> -> vector<32x8xf32>
    %c1_472 = arith.constant 1 : index
    %c3_473 = arith.constant 3 : index
    %c0_474 = arith.constant 0 : index
    %c0_475 = arith.constant 0 : index
    %739 = vector.load %arg15[%c1_472, %c3_473, %c0_474, %c0_475] : memref<2x4x8x32xbf16, #tpu.memory_space<vmem>>, vector<1x1x8x32xbf16>
    %740 = vector.shape_cast %739 : vector<1x1x8x32xbf16> to vector<8x32xbf16>
    %741 = arith.truncf %738 : vector<32x8xf32> to vector<32x8xbf16>
    %cst_476 = arith.constant dense<0.000000e+00> : vector<32x32xf32>
    %742 = tpu.matmul %741, %740, %cst_476 {dimension_numbers = #tpu.dot_dimension_numbers<[1], [0], [0], [1], [0, 0, 1, 1], [], []>} : vector<32x8xbf16>, vector<8x32xbf16>, vector<32x32xf32> -> vector<32x32xf32>
    %743 = arith.addf %673, %742 : vector<32x32xf32>
    %744 = arith.addf %460, %743 : vector<32x32xf32>
    %c1_477 = arith.constant 1 : index
    %c0_478 = arith.constant 0 : index
    %c0_479 = arith.constant 0 : index
    %745 = vector.load %arg17[%c1_477, %c0_478, %c0_479] : memref<2x1x32xf32, #tpu.memory_space<vmem>>, vector<1x1x32xf32>
    %746 = vector.shape_cast %745 : vector<1x1x32xf32> to vector<1x32xf32>
    %c1_480 = arith.constant 1 : index
    %c0_481 = arith.constant 0 : index
    %c0_482 = arith.constant 0 : index
    %747 = vector.load %arg18[%c1_480, %c0_481, %c0_482] : memref<2x1x32xf32, #tpu.memory_space<vmem>>, vector<1x1x32xf32>
    %748 = vector.shape_cast %747 : vector<1x1x32xf32> to vector<1x32xf32>
    %cst_483 = arith.constant dense<0.000000e+00> : vector<32xf32>
    %749 = vector.multi_reduction <add>, %744, %cst_483 [1] : vector<32x32xf32> to vector<32xf32>
    %750 = vector.shape_cast %749 : vector<32xf32> to vector<32x1xf32>
    %cst_484 = arith.constant 3.200000e+01 : f32
    %751 = vector.broadcast %cst_484 : f32 to vector<32x1xf32>
    %752 = arith.divf %750, %751 : vector<32x1xf32>
    %753 = vector.broadcast %752 : vector<32x1xf32> to vector<32x32xf32>
    %754 = arith.subf %744, %753 : vector<32x32xf32>
    %755 = arith.mulf %754, %754 : vector<32x32xf32>
    %cst_485 = arith.constant dense<0.000000e+00> : vector<32xf32>
    %756 = vector.multi_reduction <add>, %755, %cst_485 [1] : vector<32x32xf32> to vector<32xf32>
    %757 = vector.shape_cast %756 : vector<32xf32> to vector<32x1xf32>
    %cst_486 = arith.constant 3.200000e+01 : f32
    %758 = vector.broadcast %cst_486 : f32 to vector<32x1xf32>
    %759 = arith.divf %757, %758 : vector<32x1xf32>
    %cst_487 = arith.constant 9.99999974E-6 : f32
    %760 = vector.broadcast %cst_487 : f32 to vector<32x1xf32>
    %761 = arith.addf %759, %760 : vector<32x1xf32>
    %762 = math.rsqrt %761 : vector<32x1xf32>
    %763 = vector.broadcast %762 : vector<32x1xf32> to vector<32x32xf32>
    %764 = arith.mulf %754, %763 : vector<32x32xf32>
    %765 = vector.broadcast %746 : vector<1x32xf32> to vector<32x32xf32>
    %766 = arith.mulf %764, %765 : vector<32x32xf32>
    %767 = vector.broadcast %748 : vector<1x32xf32> to vector<32x32xf32>
    %768 = arith.addf %766, %767 : vector<32x32xf32>
    %c1_488 = arith.constant 1 : index
    %c0_489 = arith.constant 0 : index
    %c0_490 = arith.constant 0 : index
    %769 = vector.load %arg19[%c1_488, %c0_489, %c0_490] : memref<2x32x2048xbf16, #tpu.memory_space<vmem>>, vector<1x32x2048xbf16>
    %770 = vector.shape_cast %769 : vector<1x32x2048xbf16> to vector<32x2048xbf16>
    %771 = arith.truncf %768 : vector<32x32xf32> to vector<32x32xbf16>
    %cst_491 = arith.constant dense<0.000000e+00> : vector<32x2048xf32>
    %772 = tpu.matmul %771, %770, %cst_491 {dimension_numbers = #tpu.dot_dimension_numbers<[1], [0], [0], [1], [0, 0, 1, 1], [], []>} : vector<32x32xbf16>, vector<32x2048xbf16>, vector<32x2048xf32> -> vector<32x2048xf32>
    %c1_492 = arith.constant 1 : index
    %c0_493 = arith.constant 0 : index
    %c0_494 = arith.constant 0 : index
    %773 = vector.load %arg20[%c1_492, %c0_493, %c0_494] : memref<2x1x2048xf32, #tpu.memory_space<vmem>>, vector<1x1x2048xf32>
    %774 = vector.shape_cast %773 : vector<1x1x2048xf32> to vector<1x2048xf32>
    %775 = vector.broadcast %774 : vector<1x2048xf32> to vector<32x2048xf32>
    %776 = arith.addf %772, %775 : vector<32x2048xf32>
    %cst_495 = arith.constant 0.000000e+00 : f32
    %777 = vector.broadcast %cst_495 : f32 to vector<32x2048xf32>
    %778 = arith.maximumf %776, %777 : vector<32x2048xf32>
    %c1_496 = arith.constant 1 : index
    %c0_497 = arith.constant 0 : index
    %c0_498 = arith.constant 0 : index
    %779 = vector.load %arg21[%c1_496, %c0_497, %c0_498] : memref<2x2048x32xbf16, #tpu.memory_space<vmem>>, vector<1x2048x32xbf16>
    %780 = vector.shape_cast %779 : vector<1x2048x32xbf16> to vector<2048x32xbf16>
    %781 = arith.truncf %778 : vector<32x2048xf32> to vector<32x2048xbf16>
    %cst_499 = arith.constant dense<0.000000e+00> : vector<32x32xf32>
    %782 = tpu.matmul %781, %780, %cst_499 {dimension_numbers = #tpu.dot_dimension_numbers<[1], [0], [0], [1], [0, 0, 1, 1], [], []>} : vector<32x2048xbf16>, vector<2048x32xbf16>, vector<32x32xf32> -> vector<32x32xf32>
    %c1_500 = arith.constant 1 : index
    %c0_501 = arith.constant 0 : index
    %c0_502 = arith.constant 0 : index
    %783 = vector.load %arg22[%c1_500, %c0_501, %c0_502] : memref<2x1x32xf32, #tpu.memory_space<vmem>>, vector<1x1x32xf32>
    %784 = vector.shape_cast %783 : vector<1x1x32xf32> to vector<1x32xf32>
    %785 = vector.broadcast %784 : vector<1x32xf32> to vector<32x32xf32>
    %786 = arith.addf %782, %785 : vector<32x32xf32>
    %787 = arith.addf %768, %786 : vector<32x32xf32>
    %c1_503 = arith.constant 1 : index
    %c0_504 = arith.constant 0 : index
    %c0_505 = arith.constant 0 : index
    %788 = vector.load %arg23[%c1_503, %c0_504, %c0_505] : memref<2x1x32xf32, #tpu.memory_space<vmem>>, vector<1x1x32xf32>
    %789 = vector.shape_cast %788 : vector<1x1x32xf32> to vector<1x32xf32>
    %c1_506 = arith.constant 1 : index
    %c0_507 = arith.constant 0 : index
    %c0_508 = arith.constant 0 : index
    %790 = vector.load %arg24[%c1_506, %c0_507, %c0_508] : memref<2x1x32xf32, #tpu.memory_space<vmem>>, vector<1x1x32xf32>
    %791 = vector.shape_cast %790 : vector<1x1x32xf32> to vector<1x32xf32>
    %cst_509 = arith.constant dense<0.000000e+00> : vector<32xf32>
    %792 = vector.multi_reduction <add>, %787, %cst_509 [1] : vector<32x32xf32> to vector<32xf32>
    %793 = vector.shape_cast %792 : vector<32xf32> to vector<32x1xf32>
    %cst_510 = arith.constant 3.200000e+01 : f32
    %794 = vector.broadcast %cst_510 : f32 to vector<32x1xf32>
    %795 = arith.divf %793, %794 : vector<32x1xf32>
    %796 = vector.broadcast %795 : vector<32x1xf32> to vector<32x32xf32>
    %797 = arith.subf %787, %796 : vector<32x32xf32>
    %798 = arith.mulf %797, %797 : vector<32x32xf32>
    %cst_511 = arith.constant dense<0.000000e+00> : vector<32xf32>
    %799 = vector.multi_reduction <add>, %798, %cst_511 [1] : vector<32x32xf32> to vector<32xf32>
    %800 = vector.shape_cast %799 : vector<32xf32> to vector<32x1xf32>
    %cst_512 = arith.constant 3.200000e+01 : f32
    %801 = vector.broadcast %cst_512 : f32 to vector<32x1xf32>
    %802 = arith.divf %800, %801 : vector<32x1xf32>
    %cst_513 = arith.constant 9.99999974E-6 : f32
    %803 = vector.broadcast %cst_513 : f32 to vector<32x1xf32>
    %804 = arith.addf %802, %803 : vector<32x1xf32>
    %805 = math.rsqrt %804 : vector<32x1xf32>
    %806 = vector.broadcast %805 : vector<32x1xf32> to vector<32x32xf32>
    %807 = arith.mulf %797, %806 : vector<32x32xf32>
    %808 = vector.broadcast %789 : vector<1x32xf32> to vector<32x32xf32>
    %809 = arith.mulf %807, %808 : vector<32x32xf32>
    %810 = vector.broadcast %791 : vector<1x32xf32> to vector<32x32xf32>
    %811 = arith.addf %809, %810 : vector<32x32xf32>
    %812 = vector.extract_strided_slice %811 {offsets = [15, 0], sizes = [1, 32], strides = [1, 1]} : vector<32x32xf32> to vector<1x32xf32>
    %813 = vector.extract_strided_slice %811 {offsets = [31, 0], sizes = [1, 32], strides = [1, 1]} : vector<32x32xf32> to vector<1x32xf32>
    %814 = tpu.concatenate %812, %813 in 0 : vector<1x32xf32>, vector<1x32xf32> -> vector<2x32xf32>
    %c0_514 = arith.constant 0 : index
    %c0_515 = arith.constant 0 : index
    %815 = vector.load %arg25[%c0_514, %c0_515] : memref<32x1xbf16, #tpu.memory_space<vmem>>, vector<32x1xbf16>
    %816 = arith.truncf %814 : vector<2x32xf32> to vector<2x32xbf16>
    %cst_516 = arith.constant dense<0.000000e+00> : vector<2x1xf32>
    %817 = tpu.matmul %816, %815, %cst_516 {dimension_numbers = #tpu.dot_dimension_numbers<[1], [0], [0], [1], [0, 0, 1, 1], [], []>} : vector<2x32xbf16>, vector<32x1xbf16>, vector<2x1xf32> -> vector<2x1xf32>
    %c0_517 = arith.constant 0 : index
    %c0_518 = arith.constant 0 : index
    %818 = vector.load %arg26[%c0_517, %c0_518] : memref<1x1xf32, #tpu.memory_space<vmem>>, vector<1x1xf32>
    %819 = vector.broadcast %818 : vector<1x1xf32> to vector<2x1xf32>
    %820 = arith.addf %817, %819 : vector<2x1xf32>
    %c0_519 = arith.constant 0 : index
    %c0_520 = arith.constant 0 : index
    %821 = vector.load %arg27[%c0_519, %c0_520] : memref<2x1xf32, #tpu.memory_space<vmem>>, vector<2x1xf32>
    tpu.vector_store %arg27[%c0_519, %c0_520], %820 {strides = array<i32>} : memref<2x1xf32, #tpu.memory_space<vmem>>, vector<2x1xf32>,
    return
  }
  func.func @transform_0(%arg0: i32) -> (i32, i32, i32) {
    %c0_i32 = arith.constant 0 : i32
    %c0_i32_0 = arith.constant 0 : i32
    %c0_i32_1 = arith.constant 0 : i32
    %c0_i32_2 = arith.constant 0 : i32
    return %c0_i32, %c0_i32_0, %c0_i32_1 : i32, i32, i32
  }
  func.func @transform_1(%arg0: i32) -> (i32, i32, i32) {
    %c0_i32 = arith.constant 0 : i32
    %c0_i32_0 = arith.constant 0 : i32
    %c0_i32_1 = arith.constant 0 : i32
    %c0_i32_2 = arith.constant 0 : i32
    return %c0_i32, %c0_i32_0, %c0_i32_1 : i32, i32, i32
  }
  func.func @transform_2(%arg0: i32) -> (i32, i32) {
    %c0_i32 = arith.constant 0 : i32
    %c0_i32_0 = arith.constant 0 : i32
    %c0_i32_1 = arith.constant 0 : i32
    return %c0_i32, %c0_i32_0 : i32, i32
  }
  func.func @transform_3(%arg0: i32) -> (i32, i32, i32) {
    %c0_i32 = arith.constant 0 : i32
    %c0_i32_0 = arith.constant 0 : i32
    %c0_i32_1 = arith.constant 0 : i32
    %c0_i32_2 = arith.constant 0 : i32
    return %c0_i32, %c0_i32_0, %c0_i32_1 : i32, i32, i32
  }
  func.func @transform_4(%arg0: i32) -> (i32, i32) {
    %c0_i32 = arith.constant 0 : i32
    %c0_i32_0 = arith.constant 0 : i32
    %c0_i32_1 = arith.constant 0 : i32
    return %c0_i32, %c0_i32_0 : i32, i32
  }
  func.func @transform_5(%arg0: i32) -> (i32, i32) {
    %c0_i32 = arith.constant 0 : i32
    %c0_i32_0 = arith.constant 0 : i32
    %c0_i32_1 = arith.constant 0 : i32
    return %c0_i32, %c0_i32_0 : i32, i32
  }
  func.func @transform_6(%arg0: i32) -> (i32, i32) {
    %c0_i32 = arith.constant 0 : i32
    %c0_i32_0 = arith.constant 0 : i32
    %c0_i32_1 = arith.constant 0 : i32
    return %c0_i32, %c0_i32_0 : i32, i32
  }
  func.func @transform_7(%arg0: i32) -> (i32, i32) {
    %c0_i32 = arith.constant 0 : i32
    %c0_i32_0 = arith.constant 0 : i32
    %c0_i32_1 = arith.constant 0 : i32
    return %c0_i32, %c0_i32_0 : i32, i32
  }
  func.func @transform_8(%arg0: i32) -> (i32, i32, i32, i32) {
    %c0_i32 = arith.constant 0 : i32
    %c0_i32_0 = arith.constant 0 : i32
    %c0_i32_1 = arith.constant 0 : i32
    %c0_i32_2 = arith.constant 0 : i32
    %c0_i32_3 = arith.constant 0 : i32
    return %c0_i32, %c0_i32_0, %c0_i32_1, %c0_i32_2 : i32, i32, i32, i32
  }
  func.func @transform_9(%arg0: i32) -> (i32, i32, i32, i32) {
    %c0_i32 = arith.constant 0 : i32
    %c0_i32_0 = arith.constant 0 : i32
    %c0_i32_1 = arith.constant 0 : i32
    %c0_i32_2 = arith.constant 0 : i32
    %c0_i32_3 = arith.constant 0 : i32
    return %c0_i32, %c0_i32_0, %c0_i32_1, %c0_i32_2 : i32, i32, i32, i32
  }
  func.func @transform_10(%arg0: i32) -> (i32, i32, i32, i32) {
    %c0_i32 = arith.constant 0 : i32
    %c0_i32_0 = arith.constant 0 : i32
    %c0_i32_1 = arith.constant 0 : i32
    %c0_i32_2 = arith.constant 0 : i32
    %c0_i32_3 = arith.constant 0 : i32
    return %c0_i32, %c0_i32_0, %c0_i32_1, %c0_i32_2 : i32, i32, i32, i32
  }
  func.func @transform_11(%arg0: i32) -> (i32, i32, i32, i32) {
    %c0_i32 = arith.constant 0 : i32
    %c0_i32_0 = arith.constant 0 : i32
    %c0_i32_1 = arith.constant 0 : i32
    %c0_i32_2 = arith.constant 0 : i32
    %c0_i32_3 = arith.constant 0 : i32
    return %c0_i32, %c0_i32_0, %c0_i32_1, %c0_i32_2 : i32, i32, i32, i32
  }
  func.func @transform_12(%arg0: i32) -> (i32, i32, i32, i32) {
    %c0_i32 = arith.constant 0 : i32
    %c0_i32_0 = arith.constant 0 : i32
    %c0_i32_1 = arith.constant 0 : i32
    %c0_i32_2 = arith.constant 0 : i32
    %c0_i32_3 = arith.constant 0 : i32
    return %c0_i32, %c0_i32_0, %c0_i32_1, %c0_i32_2 : i32, i32, i32, i32
  }
  func.func @transform_13(%arg0: i32) -> (i32, i32, i32, i32) {
    %c0_i32 = arith.constant 0 : i32
    %c0_i32_0 = arith.constant 0 : i32
    %c0_i32_1 = arith.constant 0 : i32
    %c0_i32_2 = arith.constant 0 : i32
    %c0_i32_3 = arith.constant 0 : i32
    return %c0_i32, %c0_i32_0, %c0_i32_1, %c0_i32_2 : i32, i32, i32, i32
  }
  func.func @transform_14(%arg0: i32) -> (i32, i32, i32, i32) {
    %c0_i32 = arith.constant 0 : i32
    %c0_i32_0 = arith.constant 0 : i32
    %c0_i32_1 = arith.constant 0 : i32
    %c0_i32_2 = arith.constant 0 : i32
    %c0_i32_3 = arith.constant 0 : i32
    return %c0_i32, %c0_i32_0, %c0_i32_1, %c0_i32_2 : i32, i32, i32, i32
  }
  func.func @transform_15(%arg0: i32) -> (i32, i32, i32) {
    %c0_i32 = arith.constant 0 : i32
    %c0_i32_0 = arith.constant 0 : i32
    %c0_i32_1 = arith.constant 0 : i32
    %c0_i32_2 = arith.constant 0 : i32
    return %c0_i32, %c0_i32_0, %c0_i32_1 : i32, i32, i32
  }
  func.func @transform_16(%arg0: i32) -> (i32, i32, i32) {
    %c0_i32 = arith.constant 0 : i32
    %c0_i32_0 = arith.constant 0 : i32
    %c0_i32_1 = arith.constant 0 : i32
    %c0_i32_2 = arith.constant 0 : i32
    return %c0_i32, %c0_i32_0, %c0_i32_1 : i32, i32, i32
  }
  func.func @transform_17(%arg0: i32) -> (i32, i32, i32) {
    %c0_i32 = arith.constant 0 : i32
    %c0_i32_0 = arith.constant 0 : i32
    %c0_i32_1 = arith.constant 0 : i32
    %c0_i32_2 = arith.constant 0 : i32
    return %c0_i32, %c0_i32_0, %c0_i32_1 : i32, i32, i32
  }
  func.func @transform_18(%arg0: i32) -> (i32, i32, i32) {
    %c0_i32 = arith.constant 0 : i32
    %c0_i32_0 = arith.constant 0 : i32
    %c0_i32_1 = arith.constant 0 : i32
    %c0_i32_2 = arith.constant 0 : i32
    return %c0_i32, %c0_i32_0, %c0_i32_1 : i32, i32, i32
  }
  func.func @transform_19(%arg0: i32) -> (i32, i32, i32) {
    %c0_i32 = arith.constant 0 : i32
    %c0_i32_0 = arith.constant 0 : i32
    %c0_i32_1 = arith.constant 0 : i32
    %c0_i32_2 = arith.constant 0 : i32
    return %c0_i32, %c0_i32_0, %c0_i32_1 : i32, i32, i32
  }
  func.func @transform_20(%arg0: i32) -> (i32, i32, i32) {
    %c0_i32 = arith.constant 0 : i32
    %c0_i32_0 = arith.constant 0 : i32
    %c0_i32_1 = arith.constant 0 : i32
    %c0_i32_2 = arith.constant 0 : i32
    return %c0_i32, %c0_i32_0, %c0_i32_1 : i32, i32, i32
  }
  func.func @transform_21(%arg0: i32) -> (i32, i32, i32) {
    %c0_i32 = arith.constant 0 : i32
    %c0_i32_0 = arith.constant 0 : i32
    %c0_i32_1 = arith.constant 0 : i32
    %c0_i32_2 = arith.constant 0 : i32
    return %c0_i32, %c0_i32_0, %c0_i32_1 : i32, i32, i32
  }
  func.func @transform_22(%arg0: i32) -> (i32, i32, i32) {
    %c0_i32 = arith.constant 0 : i32
    %c0_i32_0 = arith.constant 0 : i32
    %c0_i32_1 = arith.constant 0 : i32
    %c0_i32_2 = arith.constant 0 : i32
    return %c0_i32, %c0_i32_0, %c0_i32_1 : i32, i32, i32
  }
  func.func @transform_23(%arg0: i32) -> (i32, i32, i32) {
    %c0_i32 = arith.constant 0 : i32
    %c0_i32_0 = arith.constant 0 : i32
    %c0_i32_1 = arith.constant 0 : i32
    %c0_i32_2 = arith.constant 0 : i32
    return %c0_i32, %c0_i32_0, %c0_i32_1 : i32, i32, i32
  }
  func.func @transform_24(%arg0: i32) -> (i32, i32) {
    %c0_i32 = arith.constant 0 : i32
    %c0_i32_0 = arith.constant 0 : i32
    %c0_i32_1 = arith.constant 0 : i32
    return %c0_i32, %c0_i32_0 : i32, i32
  }
  func.func @transform_25(%arg0: i32) -> (i32, i32) {
    %c0_i32 = arith.constant 0 : i32
    %c0_i32_0 = arith.constant 0 : i32
    %c0_i32_1 = arith.constant 0 : i32
    return %c0_i32, %c0_i32_0 : i32, i32
  }
  func.func @transform_26(%arg0: i32) -> (i32, i32) {
    %c0_i32 = arith.constant 0 : i32
    %c0_i32_0 = arith.constant 0 : i32
    %c0_i32_1 = arith.constant 0 : i32
    return %c0_i32, %c0_i32_0 : i32, i32
  }
}

</mosaic_0001>

<llo_original>
// kernel: ctts_forward.1
$region0: #{ctts_forward.1}
  #allocation0 [shape = 'u32[]', space=smem, size = 0x4, offset = 0x4, fixed_abs, tag = 'smem constant byte address 0x4 - core index']
  #allocation1 [shape = 'u32[72,128]{1,0:T(1,128)}', space=vmem, size = 0x9000, scoped, tag = 'internal scratch']
  #allocation2 [shape = 'f32[18,4]{1,0:T(8,128)}', space=vmem, size = 0x3000, scoped, tag = 'scratch operand']
  #allocation3 [shape = 'f32[18,32]{1,0:T(8,128)}', space=vmem, size = 0x3000, scoped, tag = 'scratch operand']
  #allocation4 [shape = 'f32[1,1]{1,0:T(1,128)S(1)}', space=vmem, size = 0x200, scoped, tag = 'scoped memory for ctts_forward.1']
  %s0 = inlined_call_operand.vmem [shape: f32[2,16,4], index: 0, kind: input, shape index: {}]
  %s1 = inlined_call_operand.vmem [shape: bf16[3,4,32], index: 1, kind: input, shape index: {}]
  %s2 = inlined_call_operand.vmem [shape: f32[1,32], index: 2, kind: input, shape index: {}]
  %s3 = inlined_call_operand.vmem [shape: bf16[3,32,32], index: 3, kind: input, shape index: {}]
  %s4 = inlined_call_operand.vmem [shape: f32[1,32], index: 4, kind: input, shape index: {}]
  %s5 = inlined_call_operand.vmem [shape: bf16[32,32], index: 5, kind: input, shape index: {}]
  %s6 = inlined_call_operand.vmem [shape: f32[1,32], index: 6, kind: input, shape index: {}]
  %s7 = inlined_call_operand.vmem [shape: f32[16,32], index: 7, kind: input, shape index: {}]
  %s8 = inlined_call_operand.vmem [shape: bf16[2,4,32,8], index: 8, kind: input, shape index: {}]
  %s9 = inlined_call_operand.vmem [shape: bf16[2,4,32,8], index: 9, kind: input, shape index: {}]
  %s10 = inlined_call_operand.vmem [shape: bf16[2,4,32,8], index: 10, kind: input, shape index: {}]
  %s11 = inlined_call_operand.vmem [shape: f32[2,4,1,8], index: 11, kind: input, shape index: {}]
  %s12 = inlined_call_operand.vmem [shape: f32[2,4,1,8], index: 12, kind: input, shape index: {}]
  %s13 = inlined_call_operand.vmem [shape: f32[2,4,1,8], index: 13, kind: input, shape index: {}]
  %s14 = inlined_call_operand.vmem [shape: bf16[2,4,8,32], index: 14, kind: input, shape index: {}]
  %s15 = inlined_call_operand.vmem [shape: f32[2,1,32], index: 15, kind: input, shape index: {}]
  %s16 = inlined_call_operand.vmem [shape: f32[2,1,32], index: 16, kind: input, shape index: {}]
  %s17 = inlined_call_operand.vmem [shape: f32[2,1,32], index: 17, kind: input, shape index: {}]
  %s18 = inlined_call_operand.vmem [shape: bf16[2,32,2048], index: 18, kind: input, shape index: {}]
  %s19 = inlined_call_operand.vmem [shape: f32[2,1,2048], index: 19, kind: input, shape index: {}]
  %s20 = inlined_call_operand.vmem [shape: bf16[2,2048,32], index: 20, kind: input, shape index: {}]
  %s21 = inlined_call_operand.vmem [shape: f32[2,1,32], index: 21, kind: input, shape index: {}]
  %s22 = inlined_call_operand.vmem [shape: f32[2,1,32], index: 22, kind: input, shape index: {}]
  %s23 = inlined_call_operand.vmem [shape: f32[2,1,32], index: 23, kind: input, shape index: {}]
  %s24 = inlined_call_operand.vmem [shape: bf16[32,1], index: 24, kind: input, shape index: {}]
  %s25 = inlined_call_operand.<no memory space> [shape: f32[1,1], index: 25, kind: input, shape index: {}]
  %s26 = inlined_call_operand.vmem [shape: f32[2,1], index: 26, kind: output, shape index: {}]
  %s27 = sld [smem:[#allocation0]]
  $region114: #{ctts_forward.1} parent=0
    _
  %s29 = ssub.s32 1, %s27
  %s30 = scalar_select 0, %s29, %s27
  %v31 = vstv %s25
  %32 = vst [vmem:[#allocation4] sm:$0x1] %v31
  // Predicated region
  $region2: #{ctts_forward.1} parent=0 // pred_check
    _
  $region3: #{ctts_forward.1} parent=0 // pred_check_branch
    %34 = sbr.rel (0) target = $region5
  $region4: #{ctts_forward.1} parent=0 // pred_region
    _
  $region5: #{ctts_forward.1} parent=0 // pred_fallthru
    _
  // Predicated region
  $region6: #{ctts_forward.1} parent=0 // pred_check
    _
  $region7: #{ctts_forward.1} parent=0 // pred_check_branch
    %36 = sbr.rel (0) target = $region9
  $region8: #{ctts_forward.1} parent=0 // pred_region
    _
  $region9: #{ctts_forward.1} parent=0 // pred_fallthru
    _
  // Predicated region
  $region10: #{ctts_forward.1} parent=0 // pred_check
    _
  $region11: #{ctts_forward.1} parent=0 // pred_check_branch
    %38 = sbr.rel (0) target = $region13
  $region12: #{ctts_forward.1} parent=0 // pred_region
    _
  $region13: #{ctts_forward.1} parent=0 // pred_fallthru
    _
  // Predicated region
  $region14: #{ctts_forward.1} parent=0 // pred_check
    _
  $region15: #{ctts_forward.1} parent=0 // pred_check_branch
    %40 = sbr.rel (0) target = $region17
  $region16: #{ctts_forward.1} parent=0 // pred_region
    _
  $region17: #{ctts_forward.1} parent=0 // pred_fallthru
    _
  // Predicated region
  $region18: #{ctts_forward.1} parent=0 // pred_check
    _
  $region19: #{ctts_forward.1} parent=0 // pred_check_branch
    %42 = sbr.rel (0) target = $region21
  $region20: #{ctts_forward.1} parent=0 // pred_region
    _
  $region21: #{ctts_forward.1} parent=0 // pred_fallthru
    _
  // Predicated region
  $region22: #{ctts_forward.1} parent=0 // pred_check
    _
  $region23: #{ctts_forward.1} parent=0 // pred_check_branch
    %44 = sbr.rel (0) target = $region25
  $region24: #{ctts_forward.1} parent=0 // pred_region
    _
  $region25: #{ctts_forward.1} parent=0 // pred_fallthru
    _
  // Predicated region
  $region26: #{ctts_forward.1} parent=0 // pred_check
    _
  $region27: #{ctts_forward.1} parent=0 // pred_check_branch
    %46 = sbr.rel (0) target = $region29
  $region28: #{ctts_forward.1} parent=0 // pred_region
    _
  $region29: #{ctts_forward.1} parent=0 // pred_fallthru
    _
  // Predicated region
  $region30: #{ctts_forward.1} parent=0 // pred_check
    _
  $region31: #{ctts_forward.1} parent=0 // pred_check_branch
    %48 = sbr.rel (0) target = $region33
  $region32: #{ctts_forward.1} parent=0 // pred_region
    _
  $region33: #{ctts_forward.1} parent=0 // pred_fallthru
    _
  // Predicated region
  $region34: #{ctts_forward.1} parent=0 // pred_check
    _
  $region35: #{ctts_forward.1} parent=0 // pred_check_branch
    %50 = sbr.rel (0) target = $region37
  $region36: #{ctts_forward.1} parent=0 // pred_region
    _
  $region37: #{ctts_forward.1} parent=0 // pred_fallthru
    _
  // Predicated region
  $region38: #{ctts_forward.1} parent=0 // pred_check
    _
  $region39: #{ctts_forward.1} parent=0 // pred_check_branch
    %52 = sbr.rel (0) target = $region41
  $region40: #{ctts_forward.1} parent=0 // pred_region
    _
  $region41: #{ctts_forward.1} parent=0 // pred_fallthru
    _
  // Predicated region
  $region42: #{ctts_forward.1} parent=0 // pred_check
    _
  $region43: #{ctts_forward.1} parent=0 // pred_check_branch
    %54 = sbr.rel (0) target = $region45
  $region44: #{ctts_forward.1} parent=0 // pred_region
    _
  $region45: #{ctts_forward.1} parent=0 // pred_fallthru
    _
  // Predicated region
  $region46: #{ctts_forward.1} parent=0 // pred_check
    _
  $region47: #{ctts_forward.1} parent=0 // pred_check_branch
    %56 = sbr.rel (0) target = $region49
  $region48: #{ctts_forward.1} parent=0 // pred_region
    _
  $region49: #{ctts_forward.1} parent=0 // pred_fallthru
    _
  // Predicated region
  $region50: #{ctts_forward.1} parent=0 // pred_check
    _
  $region51: #{ctts_forward.1} parent=0 // pred_check_branch
    %58 = sbr.rel (0) target = $region53
  $region52: #{ctts_forward.1} parent=0 // pred_region
    _
  $region53: #{ctts_forward.1} parent=0 // pred_fallthru
    _
  // Predicated region
  $region54: #{ctts_forward.1} parent=0 // pred_check
    _
  $region55: #{ctts_forward.1} parent=0 // pred_check_branch
    %60 = sbr.rel (0) target = $region57
  $region56: #{ctts_forward.1} parent=0 // pred_region
    _
  $region57: #{ctts_forward.1} parent=0 // pred_fallthru
    _
  // Predicated region
  $region58: #{ctts_forward.1} parent=0 // pred_check
    _
  $region59: #{ctts_forward.1} parent=0 // pred_check_branch
    %62 = sbr.rel (0) target = $region61
  $region60: #{ctts_forward.1} parent=0 // pred_region
    _
  $region61: #{ctts_forward.1} parent=0 // pred_fallthru
    _
  // Predicated region
  $region62: #{ctts_forward.1} parent=0 // pred_check
    _
  $region63: #{ctts_forward.1} parent=0 // pred_check_branch
    %64 = sbr.rel (0) target = $region65
  $region64: #{ctts_forward.1} parent=0 // pred_region
    _
  $region65: #{ctts_forward.1} parent=0 // pred_fallthru
    _
  // Predicated region
  $region66: #{ctts_forward.1} parent=0 // pred_check
    _
  $region67: #{ctts_forward.1} parent=0 // pred_check_branch
    %66 = sbr.rel (0) target = $region69
  $region68: #{ctts_forward.1} parent=0 // pred_region
    _
  $region69: #{ctts_forward.1} parent=0 // pred_fallthru
    _
  // Predicated region
  $region70: #{ctts_forward.1} parent=0 // pred_check
    _
  $region71: #{ctts_forward.1} parent=0 // pred_check_branch
    %68 = sbr.rel (0) target = $region73
  $region72: #{ctts_forward.1} parent=0 // pred_region
    _
  $region73: #{ctts_forward.1} parent=0 // pred_fallthru
    _
  // Predicated region
  $region74: #{ctts_forward.1} parent=0 // pred_check
    _
  $region75: #{ctts_forward.1} parent=0 // pred_check_branch
    %70 = sbr.rel (0) target = $region77
  $region76: #{ctts_forward.1} parent=0 // pred_region
    _
  $region77: #{ctts_forward.1} parent=0 // pred_fallthru
    _
  // Predicated region
  $region78: #{ctts_forward.1} parent=0 // pred_check
    _
  $region79: #{ctts_forward.1} parent=0 // pred_check_branch
    %72 = sbr.rel (0) target = $region81
  $region80: #{ctts_forward.1} parent=0 // pred_region
    _
  $region81: #{ctts_forward.1} parent=0 // pred_fallthru
    _
  // Predicated region
  $region82: #{ctts_forward.1} parent=0 // pred_check
    _
  $region83: #{ctts_forward.1} parent=0 // pred_check_branch
    %74 = sbr.rel (0) target = $region85
  $region84: #{ctts_forward.1} parent=0 // pred_region
    _
  $region85: #{ctts_forward.1} parent=0 // pred_fallthru
    _
  // Predicated region
  $region86: #{ctts_forward.1} parent=0 // pred_check
    _
  $region87: #{ctts_forward.1} parent=0 // pred_check_branch
    %76 = sbr.rel (0) target = $region89
  $region88: #{ctts_forward.1} parent=0 // pred_region
    _
  $region89: #{ctts_forward.1} parent=0 // pred_fallthru
    _
  // Predicated region
  $region90: #{ctts_forward.1} parent=0 // pred_check
    _
  $region91: #{ctts_forward.1} parent=0 // pred_check_branch
    %78 = sbr.rel (0) target = $region93
  $region92: #{ctts_forward.1} parent=0 // pred_region
    _
  $region93: #{ctts_forward.1} parent=0 // pred_fallthru
    _
  // Predicated region
  $region94: #{ctts_forward.1} parent=0 // pred_check
    _
  $region95: #{ctts_forward.1} parent=0 // pred_check_branch
    %80 = sbr.rel (0) target = $region97
  $region96: #{ctts_forward.1} parent=0 // pred_region
    _
  $region97: #{ctts_forward.1} parent=0 // pred_fallthru
    _
  // Predicated region
  $region98: #{ctts_forward.1} parent=0 // pred_check
    _
  $region99: #{ctts_forward.1} parent=0 // pred_check_branch
    %82 = sbr.rel (0) target = $region101
  $region100: #{ctts_forward.1} parent=0 // pred_region
    _
  $region101: #{ctts_forward.1} parent=0 // pred_fallthru
    _
  // Predicated region
  $region102: #{ctts_forward.1} parent=0 // pred_check
    _
  $region103: #{ctts_forward.1} parent=0 // pred_check_branch
    %84 = sbr.rel (0) target = $region105
  $region104: #{ctts_forward.1} parent=0 // pred_region
    _
  $region105: #{ctts_forward.1} parent=0 // pred_fallthru
    _
  %vm86 = vcmask 31744
  %87 = vst.msk [vmem:[#allocation2] sm:$0xff] %vm86, 0.0
  %88 = vst.msk [vmem:[#allocation2 + $0x8] sm:$0xff] %vm86, 0.0
  %vm89 = vcmask 25600
  %90 = vst.msk [vmem:[#allocation2 + $0x10] sm:$0x3] %vm89, 0.0
  %vm91 = vcmask 261120
  %92 = vst.msk [vmem:[#allocation3] sm:$0xff] %vm91, 0.0
  %93 = vst.msk [vmem:[#allocation3 + $0x8] sm:$0xff] %vm91, 0.0
  %vm94 = vcmask 254976
  %95 = vst.msk [vmem:[#allocation3 + $0x10] sm:$0x3] %vm94, 0.0
  %v96 = vld [vmem:[%s0] sm:$0xff]
  %v97 = vld [vmem:[%s0 + $0x8] sm:$0xff]
  %98 = vst.msk [vmem:[#allocation2 + $0x1] sm:$0xff] %vm86, %v96
  %99 = vst.msk [vmem:[#allocation2 + $0x9] sm:$0xff] %vm86, %v97
  %v100 = vld [vmem:[%s2] sm:$0x1]
  %v101 = vld [vmem:[#allocation2] sm:$0xff]
  %v102 = vld [vmem:[#allocation2 + $0x8] sm:$0xff]
  %v103 = vld [vmem:[%s1] sm:$0x3]
  %v104 = vpack.c.bf16 %v102, %v101
  %v105 = vld [vmem:[#allocation2 + $0x1] sm:$0xff]
  %v106 = vld [vmem:[#allocation2 + $0x9] sm:$0xff]
  %s107 = scalar_lea.vmem %s1, 2
  %v108 = vld [vmem:[%s107] sm:$0x3]
  %v109 = vpack.c.bf16 %v106, %v105
  %v111 = vsel %vm86, %v109, 0
  %vm113 = vcmask 1041408
  %v115 = vsel %vm113, %v108, 0
  %117 = vmatpush.bf16.msra.mxu0 0
  %118 = vmatpush.bf16.msra.mxu0 0
  %119 = vmatpush.bf16.msra.mxu0 0
  %120 = vmatpush.bf16.msra.mxu0 0
  %121 = vmatpush.bf16.msra.mxu0 0
  %122 = vmatpush.bf16.msra.mxu0 0
  %123 = vmatpush.bf16.msra.mxu0 0
  %124 = vmatpush.bf16.msra.mxu0 %v115
  %125 = vmatmul.bf16.gmra.mxu0 %v111
  %v126 = vpop.f32.mrf.mxu0
  %v127 = vadd.f32 0.0, %v126
  %v128 = vpop.f32.mrf.mxu0
  %v129 = vadd.f32 0.0, %v128
  %130 = vdwg.mxu0
  %v132 = vsel %vm86, %v104, 0
  %v135 = vsel %vm113, %v103, 0
  %137 = vmatpush.bf16.msra.mxu0 0
  %138 = vmatpush.bf16.msra.mxu0 0
  %139 = vmatpush.bf16.msra.mxu0 0
  %140 = vmatpush.bf16.msra.mxu0 0
  %141 = vmatpush.bf16.msra.mxu0 0
  %142 = vmatpush.bf16.msra.mxu0 0
  %143 = vmatpush.bf16.msra.mxu0 0
  %144 = vmatpush.bf16.msra.mxu0 %v135
  %145 = vmatmul.bf16.gmra.mxu0 %v132
  %v146 = vpop.f32.mrf.mxu0
  %v147 = vadd.f32 %v127, %v146
  %v148 = vpop.f32.mrf.mxu0
  %v149 = vadd.f32 %v129, %v148
  %150 = vdwg.mxu0
  %v151 = vld [vmem:[#allocation2 + $0x2] sm:$0xff]
  %v152 = vld [vmem:[#allocation2 + $0xa] sm:$0xff]
  %s153 = scalar_lea.vmem %s1, 4
  %v154 = vld [vmem:[%s153] sm:$0x3]
  %v155 = vpack.c.bf16 %v152, %v151
  %v157 = vsel %vm86, %v155, 0
  %v160 = vsel %vm113, %v154, 0
  %162 = vmatpush.bf16.msra.mxu0 0
  %163 = vmatpush.bf16.msra.mxu0 0
  %164 = vmatpush.bf16.msra.mxu0 0
  %165 = vmatpush.bf16.msra.mxu0 0
  %166 = vmatpush.bf16.msra.mxu0 0
  %167 = vmatpush.bf16.msra.mxu0 0
  %168 = vmatpush.bf16.msra.mxu0 0
  %169 = vmatpush.bf16.msra.mxu0 %v160
  %170 = vmatmul.bf16.gmra.mxu0 %v157
  %v171 = vpop.f32.mrf.mxu0
  %v172 = vadd.f32 0.0, %v171
  %v173 = vpop.f32.mrf.mxu0
  %v174 = vadd.f32 0.0, %v173
  %175 = vdwg.mxu0
  %v176 = vadd.f32 %v147, %v172
  %v177 = vadd.f32 %v149, %v174
  %v179 = vperm.slane %v100, 0
  %v181 = vadd.f32 %v176, %v179
  %v182 = vadd.f32 %v177, %v179
  %v183 = vmax.f32 %v181, 0.0
  %v184 = vmax.f32 %v182, 0.0
  %185 = vst.msk [vmem:[#allocation3 + $0x1] sm:$0xff] %vm91, %v183
  %186 = vst.msk [vmem:[#allocation3 + $0x9] sm:$0xff] %vm91, %v184
  %v187 = vld [vmem:[%s4] sm:$0x1]
  %v188 = vld [vmem:[#allocation3] sm:$0xff]
  %v189 = vld [vmem:[#allocation3 + $0x8] sm:$0xff]
  %v190 = vld [vmem:[%s3] sm:$0xf]
  %v191 = vld [vmem:[%s3 + $0x4] sm:$0xf]
  %v192 = vld [vmem:[%s3 + $0x8] sm:$0xf]
  %v193 = vld [vmem:[%s3 + $0xc] sm:$0xf]
  %v194 = vpack.c.bf16 %v189, %v188
  %v195 = vld [vmem:[#allocation3 + $0x1] sm:$0xff]
  %v196 = vld [vmem:[#allocation3 + $0x9] sm:$0xff]
  %s197 = scalar_lea.vmem %s3, 16
  %v198 = vld [vmem:[%s197] sm:$0xf]
  %v199 = vld [vmem:[%s197 + $0x4] sm:$0xf]
  %v200 = vld [vmem:[%s197 + $0x8] sm:$0xf]
  %v201 = vld [vmem:[%s197 + $0xc] sm:$0xf]
  %v202 = vpack.c.bf16 %v196, %v195
  %v207 = vunpack.c.l.b16 %v198
  %v208 = vunpack.c.l.b16 %v199
  %v209 = vunpack.c.l.b16 %v200
  %v210 = vunpack.c.l.b16 %v201
  %v211 = vpack.c.b16 %v208, %v207
  %v212 = vpack.c.b16 %v210, %v209
  %v216 = vsel %vm91, %v202, 0
  %218 = vmatpush.bf16.msra.mxu0 0
  %219 = vmatpush.bf16.msra.mxu0 0
  %220 = vmatpush.bf16.msra.mxu0 0
  %221 = vmatpush.bf16.msra.mxu0 0
  %222 = vmatpush.bf16.msra.mxu0 0
  %223 = vmatpush.bf16.msra.mxu0 0
  %224 = vmatpush.bf16.msra.mxu0 %v212
  %225 = vmatpush.bf16.msra.mxu0 %v211
  %226 = vmatmul.bf16.gmra.mxu0 %v216
  %v227 = vpop.f32.mrf.mxu0
  %v228 = vadd.f32 0.0, %v227
  %v229 = vpop.f32.mrf.mxu0
  %v230 = vadd.f32 0.0, %v229
  %231 = vdwg.mxu0
  %v236 = vunpack.c.l.b16 %v190
  %v237 = vunpack.c.l.b16 %v191
  %v238 = vunpack.c.l.b16 %v192
  %v239 = vunpack.c.l.b16 %v193
  %v240 = vpack.c.b16 %v237, %v236
  %v241 = vpack.c.b16 %v239, %v238
  %v245 = vsel %vm91, %v194, 0
  %247 = vmatpush.bf16.msra.mxu0 0
  %248 = vmatpush.bf16.msra.mxu0 0
  %249 = vmatpush.bf16.msra.mxu0 0
  %250 = vmatpush.bf16.msra.mxu0 0
  %251 = vmatpush.bf16.msra.mxu0 0
  %252 = vmatpush.bf16.msra.mxu0 0
  %253 = vmatpush.bf16.msra.mxu0 %v241
  %254 = vmatpush.bf16.msra.mxu0 %v240
  %255 = vmatmul.bf16.gmra.mxu0 %v245
  %v256 = vpop.f32.mrf.mxu0
  %v257 = vadd.f32 %v228, %v256
  %v258 = vpop.f32.mrf.mxu0
  %v259 = vadd.f32 %v230, %v258
  %260 = vdwg.mxu0
  %v261 = vld [vmem:[#allocation3 + $0x2] sm:$0xff]
  %v262 = vld [vmem:[#allocation3 + $0xa] sm:$0xff]
  %s263 = scalar_lea.vmem %s3, 32
  %v264 = vld [vmem:[%s263] sm:$0xf]
  %v265 = vld [vmem:[%s263 + $0x4] sm:$0xf]
  %v266 = vld [vmem:[%s263 + $0x8] sm:$0xf]
  %v267 = vld [vmem:[%s263 + $0xc] sm:$0xf]
  %v268 = vpack.c.bf16 %v262, %v261
  %v273 = vunpack.c.l.b16 %v264
  %v274 = vunpack.c.l.b16 %v265
  %v275 = vunpack.c.l.b16 %v266
  %v276 = vunpack.c.l.b16 %v267
  %v277 = vpack.c.b16 %v274, %v273
  %v278 = vpack.c.b16 %v276, %v275
  %v282 = vsel %vm91, %v268, 0
  %284 = vmatpush.bf16.msra.mxu0 0
  %285 = vmatpush.bf16.msra.mxu0 0
  %286 = vmatpush.bf16.msra.mxu0 0
  %287 = vmatpush.bf16.msra.mxu0 0
  %288 = vmatpush.bf16.msra.mxu0 0
  %289 = vmatpush.bf16.msra.mxu0 0
  %290 = vmatpush.bf16.msra.mxu0 %v278
  %291 = vmatpush.bf16.msra.mxu0 %v277
  %292 = vmatmul.bf16.gmra.mxu0 %v282
  %v293 = vpop.f32.mrf.mxu0
  %v294 = vadd.f32 0.0, %v293
  %v295 = vpop.f32.mrf.mxu0
  %v296 = vadd.f32 0.0, %v295
  %297 = vdwg.mxu0
  %v298 = vadd.f32 %v257, %v294
  %v299 = vadd.f32 %v259, %v296
  %v301 = vperm.slane %v187, 0
  %v303 = vadd.f32 %v298, %v301
  %v304 = vadd.f32 %v299, %v301
  %v305 = vmax.f32 %v303, 0.0
  %v306 = vmax.f32 %v304, 0.0
  %s307 = scalar_lea.vmem %s0, 16
  %v308 = vld [vmem:[%s307] sm:$0xff]
  %v309 = vld [vmem:[%s307 + $0x8] sm:$0xff]
  %310 = vst.msk [vmem:[#allocation2 + $0x1] sm:$0xff] %vm86, %v308
  %311 = vst.msk [vmem:[#allocation2 + $0x9] sm:$0xff] %vm86, %v309
  %v312 = vld [vmem:[%s2] sm:$0x1]
  %v313 = vld [vmem:[#allocation2] sm:$0xff]
  %v314 = vld [vmem:[#allocation2 + $0x8] sm:$0xff]
  %v315 = vld [vmem:[%s1] sm:$0x3]
  %v316 = vpack.c.bf16 %v314, %v313
  %v317 = vld [vmem:[#allocation2 + $0x1] sm:$0xff]
  %v318 = vld [vmem:[#allocation2 + $0x9] sm:$0xff]
  %v319 = vld [vmem:[%s107] sm:$0x3]
  %v320 = vpack.c.bf16 %v318, %v317
  %v322 = vsel %vm86, %v320, 0
  %v325 = vsel %vm113, %v319, 0
  %327 = vmatpush.bf16.msra.mxu0 0
  %328 = vmatpush.bf16.msra.mxu0 0
  %329 = vmatpush.bf16.msra.mxu0 0
  %330 = vmatpush.bf16.msra.mxu0 0
  %331 = vmatpush.bf16.msra.mxu0 0
  %332 = vmatpush.bf16.msra.mxu0 0
  %333 = vmatpush.bf16.msra.mxu0 0
  %334 = vmatpush.bf16.msra.mxu0 %v325
  %335 = vmatmul.bf16.gmra.mxu0 %v322
  %v336 = vpop.f32.mrf.mxu0
  %v337 = vadd.f32 0.0, %v336
  %v338 = vpop.f32.mrf.mxu0
  %v339 = vadd.f32 0.0, %v338
  %340 = vdwg.mxu0
  %v342 = vsel %vm86, %v316, 0
  %v345 = vsel %vm113, %v315, 0
  %347 = vmatpush.bf16.msra.mxu0 0
  %348 = vmatpush.bf16.msra.mxu0 0
  %349 = vmatpush.bf16.msra.mxu0 0
  %350 = vmatpush.bf16.msra.mxu0 0
  %351 = vmatpush.bf16.msra.mxu0 0
  %352 = vmatpush.bf16.msra.mxu0 0
  %353 = vmatpush.bf16.msra.mxu0 0
  %354 = vmatpush.bf16.msra.mxu0 %v345
  %355 = vmatmul.bf16.gmra.mxu0 %v342
  %v356 = vpop.f32.mrf.mxu0
  %v357 = vadd.f32 %v337, %v356
  %v358 = vpop.f32.mrf.mxu0
  %v359 = vadd.f32 %v339, %v358
  %360 = vdwg.mxu0
  %v361 = vld [vmem:[#allocation2 + $0x2] sm:$0xff]
  %v362 = vld [vmem:[#allocation2 + $0xa] sm:$0xff]
  %v363 = vld [vmem:[%s153] sm:$0x3]
  %v364 = vpack.c.bf16 %v362, %v361
  %v366 = vsel %vm86, %v364, 0
  %v369 = vsel %vm113, %v363, 0
  %371 = vmatpush.bf16.msra.mxu0 0
  %372 = vmatpush.bf16.msra.mxu0 0
  %373 = vmatpush.bf16.msra.mxu0 0
  %374 = vmatpush.bf16.msra.mxu0 0
  %375 = vmatpush.bf16.msra.mxu0 0
  %376 = vmatpush.bf16.msra.mxu0 0
  %377 = vmatpush.bf16.msra.mxu0 0
  %378 = vmatpush.bf16.msra.mxu0 %v369
  %379 = vmatmul.bf16.gmra.mxu0 %v366
  %v380 = vpop.f32.mrf.mxu0
  %v381 = vadd.f32 0.0, %v380
  %v382 = vpop.f32.mrf.mxu0
  %v383 = vadd.f32 0.0, %v382
  %384 = vdwg.mxu0
  %v385 = vadd.f32 %v357, %v381
  %v386 = vadd.f32 %v359, %v383
  %v388 = vperm.slane %v312, 0
  %v390 = vadd.f32 %v385, %v388
  %v391 = vadd.f32 %v386, %v388
  %v392 = vmax.f32 %v390, 0.0
  %v393 = vmax.f32 %v391, 0.0
  %394 = vst.msk [vmem:[#allocation3 + $0x1] sm:$0xff] %vm91, %v392
  %395 = vst.msk [vmem:[#allocation3 + $0x9] sm:$0xff] %vm91, %v393
  %v396 = vld [vmem:[%s4] sm:$0x1]
  %v397 = vld [vmem:[#allocation3] sm:$0xff]
  %v398 = vld [vmem:[#allocation3 + $0x8] sm:$0xff]
  %v399 = vld [vmem:[%s3] sm:$0xf]
  %v400 = vld [vmem:[%s3 + $0x4] sm:$0xf]
  %v401 = vld [vmem:[%s3 + $0x8] sm:$0xf]
  %v402 = vld [vmem:[%s3 + $0xc] sm:$0xf]
  %v403 = vpack.c.bf16 %v398, %v397
  %v404 = vld [vmem:[#allocation3 + $0x1] sm:$0xff]
  %v405 = vld [vmem:[#allocation3 + $0x9] sm:$0xff]
  %v406 = vld [vmem:[%s197] sm:$0xf]
  %v407 = vld [vmem:[%s197 + $0x4] sm:$0xf]
  %v408 = vld [vmem:[%s197 + $0x8] sm:$0xf]
  %v409 = vld [vmem:[%s197 + $0xc] sm:$0xf]
  %v410 = vpack.c.bf16 %v405, %v404
  %v415 = vunpack.c.l.b16 %v406
  %v416 = vunpack.c.l.b16 %v407
  %v417 = vunpack.c.l.b16 %v408
  %v418 = vunpack.c.l.b16 %v409
  %v419 = vpack.c.b16 %v416, %v415
  %v420 = vpack.c.b16 %v418, %v417
  %v424 = vsel %vm91, %v410, 0
  %426 = vmatpush.bf16.msra.mxu0 0
  %427 = vmatpush.bf16.msra.mxu0 0
  %428 = vmatpush.bf16.msra.mxu0 0
  %429 = vmatpush.bf16.msra.mxu0 0
  %430 = vmatpush.bf16.msra.mxu0 0
  %431 = vmatpush.bf16.msra.mxu0 0
  %432 = vmatpush.bf16.msra.mxu0 %v420
  %433 = vmatpush.bf16.msra.mxu0 %v419
  %434 = vmatmul.bf16.gmra.mxu0 %v424
  %v435 = vpop.f32.mrf.mxu0
  %v436 = vadd.f32 0.0, %v435
  %v437 = vpop.f32.mrf.mxu0
  %v438 = vadd.f32 0.0, %v437
  %439 = vdwg.mxu0
  %v444 = vunpack.c.l.b16 %v399
  %v445 = vunpack.c.l.b16 %v400
  %v446 = vunpack.c.l.b16 %v401
  %v447 = vunpack.c.l.b16 %v402
  %v448 = vpack.c.b16 %v445, %v444
  %v449 = vpack.c.b16 %v447, %v446
  %v453 = vsel %vm91, %v403, 0
  %455 = vmatpush.bf16.msra.mxu0 0
  %456 = vmatpush.bf16.msra.mxu0 0
  %457 = vmatpush.bf16.msra.mxu0 0
  %458 = vmatpush.bf16.msra.mxu0 0
  %459 = vmatpush.bf16.msra.mxu0 0
  %460 = vmatpush.bf16.msra.mxu0 0
  %461 = vmatpush.bf16.msra.mxu0 %v449
  %462 = vmatpush.bf16.msra.mxu0 %v448
  %463 = vmatmul.bf16.gmra.mxu0 %v453
  %v464 = vpop.f32.mrf.mxu0
  %v465 = vadd.f32 %v436, %v464
  %v466 = vpop.f32.mrf.mxu0
  %v467 = vadd.f32 %v438, %v466
  %468 = vdwg.mxu0
  %v469 = vld [vmem:[#allocation3 + $0x2] sm:$0xff]
  %v470 = vld [vmem:[#allocation3 + $0xa] sm:$0xff]
  %v471 = vld [vmem:[%s263] sm:$0xf]
  %v472 = vld [vmem:[%s263 + $0x4] sm:$0xf]
  %v473 = vld [vmem:[%s263 + $0x8] sm:$0xf]
  %v474 = vld [vmem:[%s263 + $0xc] sm:$0xf]
  %v475 = vpack.c.bf16 %v470, %v469
  %v480 = vunpack.c.l.b16 %v471
  %v481 = vunpack.c.l.b16 %v472
  %v482 = vunpack.c.l.b16 %v473
  %v483 = vunpack.c.l.b16 %v474
  %v484 = vpack.c.b16 %v481, %v480
  %v485 = vpack.c.b16 %v483, %v482
  %v489 = vsel %vm91, %v475, 0
  %491 = vmatpush.bf16.msra.mxu0 0
  %492 = vmatpush.bf16.msra.mxu0 0
  %493 = vmatpush.bf16.msra.mxu0 0
  %494 = vmatpush.bf16.msra.mxu0 0
  %495 = vmatpush.bf16.msra.mxu0 0
  %496 = vmatpush.bf16.msra.mxu0 0
  %497 = vmatpush.bf16.msra.mxu0 %v485
  %498 = vmatpush.bf16.msra.mxu0 %v484
  %499 = vmatmul.bf16.gmra.mxu0 %v489
  %v500 = vpop.f32.mrf.mxu0
  %v501 = vadd.f32 0.0, %v500
  %v502 = vpop.f32.mrf.mxu0
  %v503 = vadd.f32 0.0, %v502
  %504 = vdwg.mxu0
  %v505 = vadd.f32 %v465, %v501
  %v506 = vadd.f32 %v467, %v503
  %v508 = vperm.slane %v396, 0
  %v510 = vadd.f32 %v505, %v508
  %v511 = vadd.f32 %v506, %v508
  %v512 = vmax.f32 %v510, 0.0
  %v513 = vmax.f32 %v511, 0.0
  %v514 = vld [vmem:[%s7] sm:$0xff]
  %v515 = vld [vmem:[%s7 + $0x8] sm:$0xff]
  %v516 = vld [vmem:[%s5] sm:$0xf]
  %v517 = vld [vmem:[%s5 + $0x4] sm:$0xf]
  %v518 = vld [vmem:[%s5 + $0x8] sm:$0xf]
  %v519 = vld [vmem:[%s5 + $0xc] sm:$0xf]
  %v520 = vpack.c.bf16 %v306, %v305
  %v521 = vpack.c.bf16 %v513, %v512
  %v522 = vld [vmem:[%s6] sm:$0x1]
  %v524 = vperm.slane %v522, 0
  %v530 = vunpack.c.l.b16 %v516
  %v531 = vunpack.c.l.b16 %v517
  %v532 = vunpack.c.l.b16 %v518
  %v533 = vunpack.c.l.b16 %v519
  %v534 = vpack.c.b16 %v531, %v530
  %v535 = vpack.c.b16 %v533, %v532
  %v539 = vsel %vm91, %v520, 0
  %v542 = vsel %vm91, %v521, 0
  %544 = vmatpush.bf16.msra.mxu0 0
  %545 = vmatpush.bf16.msra.mxu0 0
  %546 = vmatpush.bf16.msra.mxu0 0
  %547 = vmatpush.bf16.msra.mxu0 0
  %548 = vmatpush.bf16.msra.mxu0 0
  %549 = vmatpush.bf16.msra.mxu0 0
  %550 = vmatpush.bf16.msra.mxu0 %v535
  %551 = vmatpush.bf16.msra.mxu0 %v534
  %552 = vmatmul.bf16.gmra.mxu0 %v539
  %v553 = vpop.f32.mrf.mxu0
  %v554 = vadd.f32 %v524, %v553
  %v555 = vpop.f32.mrf.mxu0
  %v556 = vadd.f32 %v524, %v555
  %557 = vmatmul.bf16.gmra.mxu0 %v542
  %v558 = vpop.f32.mrf.mxu0
  %v559 = vadd.f32 %v524, %v558
  %v560 = vpop.f32.mrf.mxu0
  %v561 = vadd.f32 %v524, %v560
  %562 = vdwg.mxu0
  %v563 = vadd.f32 %v554, %v514
  %v564 = vadd.f32 %v556, %v515
  %v565 = vadd.f32 %v559, %v514
  %v566 = vadd.f32 %v561, %v515
  %v567 = vld [vmem:[%s15] sm:$0x1]
  %v568 = vld [vmem:[%s8] sm:$0xf]
  %v569 = vld [vmem:[%s8 + $0x4] sm:$0xf]
  %v570 = vld [vmem:[%s8 + $0x8] sm:$0xf]
  %v571 = vld [vmem:[%s8 + $0xc] sm:$0xf]
  %v572 = vpack.c.bf16 %v564, %v563
  %v573 = vpack.c.bf16 %v566, %v565
  %v574 = vld [vmem:[%s11] sm:$0x1]
  %v576 = vperm.slane %v574, 0
  %v582 = vunpack.c.l.b16 %v568
  %v583 = vunpack.c.l.b16 %v569
  %v584 = vunpack.c.l.b16 %v570
  %v585 = vunpack.c.l.b16 %v571
  %v586 = vpack.c.b16 %v583, %v582
  %v587 = vpack.c.b16 %v585, %v584
  %v591 = vsel %vm91, %v572, 0
  %v594 = vsel %vm91, %v573, 0
  %596 = vmatpush.bf16.msra.mxu0 0
  %597 = vmatpush.bf16.msra.mxu0 0
  %598 = vmatpush.bf16.msra.mxu0 0
  %599 = vmatpush.bf16.msra.mxu0 0
  %600 = vmatpush.bf16.msra.mxu0 0
  %601 = vmatpush.bf16.msra.mxu0 0
  %602 = vmatpush.bf16.msra.mxu0 %v587
  %603 = vmatpush.bf16.msra.mxu0 %v586
  %604 = vmatmul.bf16.gmra.mxu0 %v591
  %v605 = vpop.f32.mrf.mxu0
  %v606 = vadd.f32 %v576, %v605
  %v607 = vpop.f32.mrf.mxu0
  %v608 = vadd.f32 %v576, %v607
  %609 = vmatmul.bf16.gmra.mxu0 %v594
  %v610 = vpop.f32.mrf.mxu0
  %v611 = vadd.f32 %v576, %v610
  %v612 = vpop.f32.mrf.mxu0
  %v613 = vadd.f32 %v576, %v612
  %614 = vdwg.mxu0
  %v615 = vmul.f32 %v606, 0.35355338
  %v616 = vmul.f32 %v608, 0.35355338
  %v617 = vmul.f32 %v611, 0.35355338
  %v618 = vmul.f32 %v613, 0.35355338
  %v619 = vld [vmem:[%s9] sm:$0xf]
  %v620 = vld [vmem:[%s9 + $0x4] sm:$0xf]
  %v621 = vld [vmem:[%s9 + $0x8] sm:$0xf]
  %v622 = vld [vmem:[%s9 + $0xc] sm:$0xf]
  %v623 = vld [vmem:[%s12] sm:$0x1]
  %v625 = vperm.slane %v623, 0
  %v631 = vunpack.c.l.b16 %v619
  %v632 = vunpack.c.l.b16 %v620
  %v633 = vunpack.c.l.b16 %v621
  %v634 = vunpack.c.l.b16 %v622
  %v635 = vpack.c.b16 %v632, %v631
  %v636 = vpack.c.b16 %v634, %v633
  %639 = vmatpush.bf16.msra.mxu0 0
  %640 = vmatpush.bf16.msra.mxu0 0
  %641 = vmatpush.bf16.msra.mxu0 0
  %642 = vmatpush.bf16.msra.mxu0 0
  %643 = vmatpush.bf16.msra.mxu0 0
  %644 = vmatpush.bf16.msra.mxu0 0
  %645 = vmatpush.bf16.msra.mxu0 %v636
  %646 = vmatpush.bf16.msra.mxu0 %v635
  %647 = vmatmul.bf16.gmra.mxu0 %v591
  %v648 = vpop.f32.mrf.mxu0
  %v649 = vadd.f32 %v625, %v648
  %v650 = vpop.f32.mrf.mxu0
  %v651 = vadd.f32 %v625, %v650
  %652 = vmatmul.bf16.gmra.mxu0 %v594
  %v653 = vpop.f32.mrf.mxu0
  %v654 = vadd.f32 %v625, %v653
  %v655 = vpop.f32.mrf.mxu0
  %v656 = vadd.f32 %v625, %v655
  %657 = vdwg.mxu0
  %v658 = vld [vmem:[%s10] sm:$0xf]
  %v659 = vld [vmem:[%s10 + $0x4] sm:$0xf]
  %v660 = vld [vmem:[%s10 + $0x8] sm:$0xf]
  %v661 = vld [vmem:[%s10 + $0xc] sm:$0xf]
  %v662 = vld [vmem:[%s13] sm:$0x1]
  %v664 = vperm.slane %v662, 0
  %v670 = vunpack.c.l.b16 %v658
  %v671 = vunpack.c.l.b16 %v659
  %v672 = vunpack.c.l.b16 %v660
  %v673 = vunpack.c.l.b16 %v661
  %v674 = vpack.c.b16 %v671, %v670
  %v675 = vpack.c.b16 %v673, %v672
  %678 = vmatpush.bf16.msra.mxu0 0
  %679 = vmatpush.bf16.msra.mxu0 0
  %680 = vmatpush.bf16.msra.mxu0 0
  %681 = vmatpush.bf16.msra.mxu0 0
  %682 = vmatpush.bf16.msra.mxu0 0
  %683 = vmatpush.bf16.msra.mxu0 0
  %684 = vmatpush.bf16.msra.mxu0 %v675
  %685 = vmatpush.bf16.msra.mxu0 %v674
  %686 = vmatmul.bf16.gmra.mxu0 %v591
  %v687 = vpop.f32.mrf.mxu0
  %v688 = vadd.f32 %v664, %v687
  %v689 = vpop.f32.mrf.mxu0
  %v690 = vadd.f32 %v664, %v689
  %691 = vmatmul.bf16.gmra.mxu0 %v594
  %v692 = vpop.f32.mrf.mxu0
  %v693 = vadd.f32 %v664, %v692
  %v694 = vpop.f32.mrf.mxu0
  %v695 = vadd.f32 %v664, %v694
  %696 = vdwg.mxu0
  %v697 = vpack.c.bf16 %v616, %v615
  %v698 = vpack.c.bf16 %v651, %v649
  %vm699 = vcmask 64512
  %v701 = vsel %vm699, %v697, 0
  %v704 = vsel %vm699, %v698, 0
  %706 = vmatpush.bf16.xpose.msra.mxu0 0
  %707 = vmatpush.bf16.xpose.msra.mxu0 0
  %708 = vmatpush.bf16.xpose.msra.mxu0 0
  %709 = vmatpush.bf16.xpose.msra.mxu0 0
  %710 = vmatpush.bf16.xpose.msra.mxu0 0
  %711 = vmatpush.bf16.xpose.msra.mxu0 0
  %712 = vmatpush.bf16.xpose.msra.mxu0 0
  %713 = vmatpush.bf16.xpose.msra.mxu0 %v704
  %714 = vmatmul.bf16.gmra.mxu0 %v701
  %v715 = vpop.f32.mrf.mxu0
  %v716 = vadd.f32 0.0, %v715
  %v717 = vpop.f32.mrf.mxu0
  %v718 = vadd.f32 0.0, %v717
  %719 = vdwg.mxu0
  %vm720 = vcmask 130048
  %v721 = vsel %vm720, %v716, -inf
  %722 = vmax.xlane.f32.xlu0 %v721
  %v723 = vpop.xlane.xlu0 %722
  %v724 = vsel %vm720, %v718, -inf
  %725 = vmax.xlane.f32.xlu0 %v724
  %v726 = vpop.xlane.xlu0 %725
  %v727 = vsub.f32 %v716, %v723
  %v728 = vsub.f32 %v718, %v726
  %v729 = vmul.f32 %v727, 1.442695
  %v730 = vpow.pop %v729
  %v731 = vmul.f32 %v728, 1.442695
  %v732 = vpow.pop %v731
  %v733 = vsel %vm720, %v730, 0.0
  %734 = vadd.xlane.f32.xlu0 %v733
  %v735 = vpop.xlane.xlu0 %734
  %v736 = vsel %vm720, %v732, 0.0
  %737 = vadd.xlane.f32.xlu0 %v736
  %v738 = vpop.xlane.xlu0 %737
  %v739 = vrcp.pop %v735
  %v740 = vrcp.pop %v738
  %v741 = vpack.c.bf16 %v732, %v730
  %v742 = vpack.c.bf16 %v690, %v688
  %v744 = vsel %vm720, %v741, 0
  %746 = vmatpush.bf16.msra.mxu0 0
  %747 = vmatpush.bf16.msra.mxu0 0
  %748 = vmatpush.bf16.msra.mxu0 0
  %749 = vmatpush.bf16.msra.mxu0 0
  %750 = vmatpush.bf16.msra.mxu0 0
  %751 = vmatpush.bf16.msra.mxu0 0
  %752 = vmatpush.bf16.msra.mxu0 0
  %753 = vmatpush.bf16.msra.mxu0 %v742
  %754 = vmatmul.bf16.gmra.mxu0 %v744
  %v755 = vpop.f32.mrf.mxu0
  %v756 = vadd.f32 0.0, %v755
  %v757 = vpop.f32.mrf.mxu0
  %v758 = vadd.f32 0.0, %v757
  %759 = vdwg.mxu0
  %v760 = vmul.f32 %v756, %v739
  %v761 = vmul.f32 %v758, %v740
  %v762 = vpack.c.bf16 %v618, %v617
  %v763 = vpack.c.bf16 %v656, %v654
  %v765 = vsel %vm699, %v762, 0
  %v768 = vsel %vm699, %v763, 0
  %770 = vmatpush.bf16.xpose.msra.mxu0 0
  %771 = vmatpush.bf16.xpose.msra.mxu0 0
  %772 = vmatpush.bf16.xpose.msra.mxu0 0
  %773 = vmatpush.bf16.xpose.msra.mxu0 0
  %774 = vmatpush.bf16.xpose.msra.mxu0 0
  %775 = vmatpush.bf16.xpose.msra.mxu0 0
  %776 = vmatpush.bf16.xpose.msra.mxu0 0
  %777 = vmatpush.bf16.xpose.msra.mxu0 %v768
  %778 = vmatmul.bf16.gmra.mxu0 %v765
  %v779 = vpop.f32.mrf.mxu0
  %v780 = vadd.f32 0.0, %v779
  %v781 = vpop.f32.mrf.mxu0
  %v782 = vadd.f32 0.0, %v781
  %783 = vdwg.mxu0
  %v784 = vsel %vm720, %v780, -inf
  %785 = vmax.xlane.f32.xlu0 %v784
  %v786 = vpop.xlane.xlu0 %785
  %v787 = vsel %vm720, %v782, -inf
  %788 = vmax.xlane.f32.xlu0 %v787
  %v789 = vpop.xlane.xlu0 %788
  %v790 = vsub.f32 %v780, %v786
  %v791 = vsub.f32 %v782, %v789
  %v792 = vmul.f32 %v790, 1.442695
  %v793 = vpow.pop %v792
  %v794 = vmul.f32 %v791, 1.442695
  %v795 = vpow.pop %v794
  %v796 = vsel %vm720, %v793, 0.0
  %797 = vadd.xlane.f32.xlu0 %v796
  %v798 = vpop.xlane.xlu0 %797
  %v799 = vsel %vm720, %v795, 0.0
  %800 = vadd.xlane.f32.xlu0 %v799
  %v801 = vpop.xlane.xlu0 %800
  %v802 = vrcp.pop %v798
  %v803 = vrcp.pop %v801
  %v804 = vpack.c.bf16 %v795, %v793
  %v805 = vpack.c.bf16 %v695, %v693
  %v807 = vsel %vm720, %v804, 0
  %809 = vmatpush.bf16.msra.mxu0 0
  %810 = vmatpush.bf16.msra.mxu0 0
  %811 = vmatpush.bf16.msra.mxu0 0
  %812 = vmatpush.bf16.msra.mxu0 0
  %813 = vmatpush.bf16.msra.mxu0 0
  %814 = vmatpush.bf16.msra.mxu0 0
  %815 = vmatpush.bf16.msra.mxu0 0
  %816 = vmatpush.bf16.msra.mxu0 %v805
  %817 = vmatmul.bf16.gmra.mxu0 %v807
  %v818 = vpop.f32.mrf.mxu0
  %v819 = vadd.f32 0.0, %v818
  %v820 = vpop.f32.mrf.mxu0
  %v821 = vadd.f32 0.0, %v820
  %822 = vdwg.mxu0
  %v823 = vmul.f32 %v819, %v802
  %v824 = vmul.f32 %v821, %v803
  %v825 = vld [vmem:[%s14] sm:$0xf]
  %v826 = vpack.c.bf16 %v761, %v760
  %v827 = vpack.c.bf16 %v824, %v823
  %v829 = vsel %vm699, %v826, 0
  %v832 = vsel %vm699, %v827, 0
  %vm834 = vcmask 1043456
  %v836 = vsel %vm834, %v825, 0
  %838 = vmatpush.bf16.msra.mxu0 0
  %839 = vmatpush.bf16.msra.mxu0 0
  %840 = vmatpush.bf16.msra.mxu0 0
  %841 = vmatpush.bf16.msra.mxu0 0
  %842 = vmatpush.bf16.msra.mxu0 0
  %843 = vmatpush.bf16.msra.mxu0 0
  %844 = vmatpush.bf16.msra.mxu0 0
  %845 = vmatpush.bf16.msra.mxu0 %v836
  %846 = vmatmul.bf16.gmra.mxu0 %v829
  %v847 = vpop.f32.mrf.mxu0
  %v848 = vadd.f32 0.0, %v847
  %v849 = vpop.f32.mrf.mxu0
  %v850 = vadd.f32 0.0, %v849
  %851 = vmatmul.bf16.gmra.mxu0 %v832
  %v852 = vpop.f32.mrf.mxu0
  %v853 = vadd.f32 0.0, %v852
  %v854 = vpop.f32.mrf.mxu0
  %v855 = vadd.f32 0.0, %v854
  %856 = vdwg.mxu0
  %v858 = vperm.slane %v567, 0
  %v860 = vadd.f32 %v858, %v848
  %v861 = vadd.f32 %v858, %v850
  %v862 = vadd.f32 %v858, %v853
  %v863 = vadd.f32 %v858, %v855
  %s864 = scalar_lea.vmem %s8, 16
  %v865 = vld [vmem:[%s864] sm:$0xf]
  %v866 = vld [vmem:[%s864 + $0x4] sm:$0xf]
  %v867 = vld [vmem:[%s864 + $0x8] sm:$0xf]
  %v868 = vld [vmem:[%s864 + $0xc] sm:$0xf]
  %s869 = scalar_lea.vmem %s11, 1
  %v870 = vld [vmem:[%s869] sm:$0x1]
  %v872 = vperm.slane %v870, 0
  %v878 = vunpack.c.l.b16 %v865
  %v879 = vunpack.c.l.b16 %v866
  %v880 = vunpack.c.l.b16 %v867
  %v881 = vunpack.c.l.b16 %v868
  %v882 = vpack.c.b16 %v879, %v878
  %v883 = vpack.c.b16 %v881, %v880
  %886 = vmatpush.bf16.msra.mxu0 0
  %887 = vmatpush.bf16.msra.mxu0 0
  %888 = vmatpush.bf16.msra.mxu0 0
  %889 = vmatpush.bf16.msra.mxu0 0
  %890 = vmatpush.bf16.msra.mxu0 0
  %891 = vmatpush.bf16.msra.mxu0 0
  %892 = vmatpush.bf16.msra.mxu0 %v883
  %893 = vmatpush.bf16.msra.mxu0 %v882
  %894 = vmatmul.bf16.gmra.mxu0 %v591
  %v895 = vpop.f32.mrf.mxu0
  %v896 = vadd.f32 %v872, %v895
  %v897 = vpop.f32.mrf.mxu0
  %v898 = vadd.f32 %v872, %v897
  %899 = vmatmul.bf16.gmra.mxu0 %v594
  %v900 = vpop.f32.mrf.mxu0
  %v901 = vadd.f32 %v872, %v900
  %v902 = vpop.f32.mrf.mxu0
  %v903 = vadd.f32 %v872, %v902
  %904 = vdwg.mxu0
  %v905 = vmul.f32 %v896, 0.35355338
  %v906 = vmul.f32 %v898, 0.35355338
  %v907 = vmul.f32 %v901, 0.35355338
  %v908 = vmul.f32 %v903, 0.35355338
  %s909 = scalar_lea.vmem %s9, 16
  %v910 = vld [vmem:[%s909] sm:$0xf]
  %v911 = vld [vmem:[%s909 + $0x4] sm:$0xf]
  %v912 = vld [vmem:[%s909 + $0x8] sm:$0xf]
  %v913 = vld [vmem:[%s909 + $0xc] sm:$0xf]
  %s914 = scalar_lea.vmem %s12, 1
  %v915 = vld [vmem:[%s914] sm:$0x1]
  %v917 = vperm.slane %v915, 0
  %v923 = vunpack.c.l.b16 %v910
  %v924 = vunpack.c.l.b16 %v911
  %v925 = vunpack.c.l.b16 %v912
  %v926 = vunpack.c.l.b16 %v913
  %v927 = vpack.c.b16 %v924, %v923
  %v928 = vpack.c.b16 %v926, %v925
  %931 = vmatpush.bf16.msra.mxu0 0
  %932 = vmatpush.bf16.msra.mxu0 0
  %933 = vmatpush.bf16.msra.mxu0 0
  %934 = vmatpush.bf16.msra.mxu0 0
  %935 = vmatpush.bf16.msra.mxu0 0
  %936 = vmatpush.bf16.msra.mxu0 0
  %937 = vmatpush.bf16.msra.mxu0 %v928
  %938 = vmatpush.bf16.msra.mxu0 %v927
  %939 = vmatmul.bf16.gmra.mxu0 %v591
  %v940 = vpop.f32.mrf.mxu0
  %v941 = vadd.f32 %v917, %v940
  %v942 = vpop.f32.mrf.mxu0
  %v943 = vadd.f32 %v917, %v942
  %944 = vmatmul.bf16.gmra.mxu0 %v594
  %v945 = vpop.f32.mrf.mxu0
  %v946 = vadd.f32 %v917, %v945
  %v947 = vpop.f32.mrf.mxu0
  %v948 = vadd.f32 %v917, %v947
  %949 = vdwg.mxu0
  %s950 = scalar_lea.vmem %s10, 16
  %v951 = vld [vmem:[%s950] sm:$0xf]
  %v952 = vld [vmem:[%s950 + $0x4] sm:$0xf]
  %v953 = vld [vmem:[%s950 + $0x8] sm:$0xf]
  %v954 = vld [vmem:[%s950 + $0xc] sm:$0xf]
  %s955 = scalar_lea.vmem %s13, 1
  %v956 = vld [vmem:[%s955] sm:$0x1]
  %v958 = vperm.slane %v956, 0
  %v964 = vunpack.c.l.b16 %v951
  %v965 = vunpack.c.l.b16 %v952
  %v966 = vunpack.c.l.b16 %v953
  %v967 = vunpack.c.l.b16 %v954
  %v968 = vpack.c.b16 %v965, %v964
  %v969 = vpack.c.b16 %v967, %v966
  %972 = vmatpush.bf16.msra.mxu0 0
  %973 = vmatpush.bf16.msra.mxu0 0
  %974 = vmatpush.bf16.msra.mxu0 0
  %975 = vmatpush.bf16.msra.mxu0 0
  %976 = vmatpush.bf16.msra.mxu0 0
  %977 = vmatpush.bf16.msra.mxu0 0
  %978 = vmatpush.bf16.msra.mxu0 %v969
  %979 = vmatpush.bf16.msra.mxu0 %v968
  %980 = vmatmul.bf16.gmra.mxu0 %v591
  %v981 = vpop.f32.mrf.mxu0
  %v982 = vadd.f32 %v958, %v981
  %v983 = vpop.f32.mrf.mxu0
  %v984 = vadd.f32 %v958, %v983
  %985 = vmatmul.bf16.gmra.mxu0 %v594
  %v986 = vpop.f32.mrf.mxu0
  %v987 = vadd.f32 %v958, %v986
  %v988 = vpop.f32.mrf.mxu0
  %v989 = vadd.f32 %v958, %v988
  %990 = vdwg.mxu0
  %v991 = vpack.c.bf16 %v906, %v905
  %v992 = vpack.c.bf16 %v943, %v941
  %v994 = vsel %vm699, %v991, 0
  %v997 = vsel %vm699, %v992, 0
  %999 = vmatpush.bf16.xpose.msra.mxu0 0
  %1000 = vmatpush.bf16.xpose.msra.mxu0 0
  %1001 = vmatpush.bf16.xpose.msra.mxu0 0
  %1002 = vmatpush.bf16.xpose.msra.mxu0 0
  %1003 = vmatpush.bf16.xpose.msra.mxu0 0
  %1004 = vmatpush.bf16.xpose.msra.mxu0 0
  %1005 = vmatpush.bf16.xpose.msra.mxu0 0
  %1006 = vmatpush.bf16.xpose.msra.mxu0 %v997
  %1007 = vmatmul.bf16.gmra.mxu0 %v994
  %v1008 = vpop.f32.mrf.mxu0
  %v1009 = vadd.f32 0.0, %v1008
  %v1010 = vpop.f32.mrf.mxu0
  %v1011 = vadd.f32 0.0, %v1010
  %1012 = vdwg.mxu0
  %v1013 = vsel %vm720, %v1009, -inf
  %1014 = vmax.xlane.f32.xlu0 %v1013
  %v1015 = vpop.xlane.xlu0 %1014
  %v1016 = vsel %vm720, %v1011, -inf
  %1017 = vmax.xlane.f32.xlu0 %v1016
  %v1018 = vpop.xlane.xlu0 %1017
  %v1019 = vsub.f32 %v1009, %v1015
  %v1020 = vsub.f32 %v1011, %v1018
  %v1021 = vmul.f32 %v1019, 1.442695
  %v1022 = vpow.pop %v1021
  %v1023 = vmul.f32 %v1020, 1.442695
  %v1024 = vpow.pop %v1023
  %v1025 = vsel %vm720, %v1022, 0.0
  %1026 = vadd.xlane.f32.xlu0 %v1025
  %v1027 = vpop.xlane.xlu0 %1026
  %v1028 = vsel %vm720, %v1024, 0.0
  %1029 = vadd.xlane.f32.xlu0 %v1028
  %v1030 = vpop.xlane.xlu0 %1029
  %v1031 = vrcp.pop %v1027
  %v1032 = vrcp.pop %v1030
  %v1033 = vpack.c.bf16 %v1024, %v1022
  %v1034 = vpack.c.bf16 %v984, %v982
  %v1036 = vsel %vm720, %v1033, 0
  %1038 = vmatpush.bf16.msra.mxu0 0
  %1039 = vmatpush.bf16.msra.mxu0 0
  %1040 = vmatpush.bf16.msra.mxu0 0
  %1041 = vmatpush.bf16.msra.mxu0 0
  %1042 = vmatpush.bf16.msra.mxu0 0
  %1043 = vmatpush.bf16.msra.mxu0 0
  %1044 = vmatpush.bf16.msra.mxu0 0
  %1045 = vmatpush.bf16.msra.mxu0 %v1034
  %1046 = vmatmul.bf16.gmra.mxu0 %v1036
  %v1047 = vpop.f32.mrf.mxu0
  %v1048 = vadd.f32 0.0, %v1047
  %v1049 = vpop.f32.mrf.mxu0
  %v1050 = vadd.f32 0.0, %v1049
  %1051 = vdwg.mxu0
  %v1052 = vmul.f32 %v1048, %v1031
  %v1053 = vmul.f32 %v1050, %v1032
  %v1054 = vpack.c.bf16 %v908, %v907
  %v1055 = vpack.c.bf16 %v948, %v946
  %v1057 = vsel %vm699, %v1054, 0
  %v1060 = vsel %vm699, %v1055, 0
  %1062 = vmatpush.bf16.xpose.msra.mxu0 0
  %1063 = vmatpush.bf16.xpose.msra.mxu0 0
  %1064 = vmatpush.bf16.xpose.msra.mxu0 0
  %1065 = vmatpush.bf16.xpose.msra.mxu0 0
  %1066 = vmatpush.bf16.xpose.msra.mxu0 0
  %1067 = vmatpush.bf16.xpose.msra.mxu0 0
  %1068 = vmatpush.bf16.xpose.msra.mxu0 0
  %1069 = vmatpush.bf16.xpose.msra.mxu0 %v1060
  %1070 = vmatmul.bf16.gmra.mxu0 %v1057
  %v1071 = vpop.f32.mrf.mxu0
  %v1072 = vadd.f32 0.0, %v1071
  %v1073 = vpop.f32.mrf.mxu0
  %v1074 = vadd.f32 0.0, %v1073
  %1075 = vdwg.mxu0
  %v1076 = vsel %vm720, %v1072, -inf
  %1077 = vmax.xlane.f32.xlu0 %v1076
  %v1078 = vpop.xlane.xlu0 %1077
  %v1079 = vsel %vm720, %v1074, -inf
  %1080 = vmax.xlane.f32.xlu0 %v1079
  %v1081 = vpop.xlane.xlu0 %1080
  %v1082 = vsub.f32 %v1072, %v1078
  %v1083 = vsub.f32 %v1074, %v1081
  %v1084 = vmul.f32 %v1082, 1.442695
  %v1085 = vpow.pop %v1084
  %v1086 = vmul.f32 %v1083, 1.442695
  %v1087 = vpow.pop %v1086
  %v1088 = vsel %vm720, %v1085, 0.0
  %1089 = vadd.xlane.f32.xlu0 %v1088
  %v1090 = vpop.xlane.xlu0 %1089
  %v1091 = vsel %vm720, %v1087, 0.0
  %1092 = vadd.xlane.f32.xlu0 %v1091
  %v1093 = vpop.xlane.xlu0 %1092
  %v1094 = vrcp.pop %v1090
  %v1095 = vrcp.pop %v1093
  %v1096 = vpack.c.bf16 %v1087, %v1085
  %v1097 = vpack.c.bf16 %v989, %v987
  %v1099 = vsel %vm720, %v1096, 0
  %1101 = vmatpush.bf16.msra.mxu0 0
  %1102 = vmatpush.bf16.msra.mxu0 0
  %1103 = vmatpush.bf16.msra.mxu0 0
  %1104 = vmatpush.bf16.msra.mxu0 0
  %1105 = vmatpush.bf16.msra.mxu0 0
  %1106 = vmatpush.bf16.msra.mxu0 0
  %1107 = vmatpush.bf16.msra.mxu0 0
  %1108 = vmatpush.bf16.msra.mxu0 %v1097
  %1109 = vmatmul.bf16.gmra.mxu0 %v1099
  %v1110 = vpop.f32.mrf.mxu0
  %v1111 = vadd.f32 0.0, %v1110
  %v1112 = vpop.f32.mrf.mxu0
  %v1113 = vadd.f32 0.0, %v1112
  %1114 = vdwg.mxu0
  %v1115 = vmul.f32 %v1111, %v1094
  %v1116 = vmul.f32 %v1113, %v1095
  %s1117 = scalar_lea.vmem %s14, 4
  %v1118 = vld [vmem:[%s1117] sm:$0xf]
  %v1119 = vpack.c.bf16 %v1053, %v1052
  %v1120 = vpack.c.bf16 %v1116, %v1115
  %v1122 = vsel %vm699, %v1119, 0
  %v1125 = vsel %vm699, %v1120, 0
  %v1128 = vsel %vm834, %v1118, 0
  %1130 = vmatpush.bf16.msra.mxu0 0
  %1131 = vmatpush.bf16.msra.mxu0 0
  %1132 = vmatpush.bf16.msra.mxu0 0
  %1133 = vmatpush.bf16.msra.mxu0 0
  %1134 = vmatpush.bf16.msra.mxu0 0
  %1135 = vmatpush.bf16.msra.mxu0 0
  %1136 = vmatpush.bf16.msra.mxu0 0
  %1137 = vmatpush.bf16.msra.mxu0 %v1128
  %1138 = vmatmul.bf16.gmra.mxu0 %v1122
  %v1139 = vpop.f32.mrf.mxu0
  %v1140 = vadd.f32 0.0, %v1139
  %v1141 = vpop.f32.mrf.mxu0
  %v1142 = vadd.f32 0.0, %v1141
  %1143 = vmatmul.bf16.gmra.mxu0 %v1125
  %v1144 = vpop.f32.mrf.mxu0
  %v1145 = vadd.f32 0.0, %v1144
  %v1146 = vpop.f32.mrf.mxu0
  %v1147 = vadd.f32 0.0, %v1146
  %1148 = vdwg.mxu0
  %v1149 = vadd.f32 %v860, %v1140
  %v1150 = vadd.f32 %v861, %v1142
  %v1151 = vadd.f32 %v862, %v1145
  %v1152 = vadd.f32 %v863, %v1147
  %s1153 = scalar_lea.vmem %s8, 32
  %v1154 = vld [vmem:[%s1153] sm:$0xf]
  %v1155 = vld [vmem:[%s1153 + $0x4] sm:$0xf]
  %v1156 = vld [vmem:[%s1153 + $0x8] sm:$0xf]
  %v1157 = vld [vmem:[%s1153 + $0xc] sm:$0xf]
  %s1158 = scalar_lea.vmem %s11, 2
  %v1159 = vld [vmem:[%s1158] sm:$0x1]
  %v1161 = vperm.slane %v1159, 0
  %v1167 = vunpack.c.l.b16 %v1154
  %v1168 = vunpack.c.l.b16 %v1155
  %v1169 = vunpack.c.l.b16 %v1156
  %v1170 = vunpack.c.l.b16 %v1157
  %v1171 = vpack.c.b16 %v1168, %v1167
  %v1172 = vpack.c.b16 %v1170, %v1169
  %1175 = vmatpush.bf16.msra.mxu0 0
  %1176 = vmatpush.bf16.msra.mxu0 0
  %1177 = vmatpush.bf16.msra.mxu0 0
  %1178 = vmatpush.bf16.msra.mxu0 0
  %1179 = vmatpush.bf16.msra.mxu0 0
  %1180 = vmatpush.bf16.msra.mxu0 0
  %1181 = vmatpush.bf16.msra.mxu0 %v1172
  %1182 = vmatpush.bf16.msra.mxu0 %v1171
  %1183 = vmatmul.bf16.gmra.mxu0 %v591
  %v1184 = vpop.f32.mrf.mxu0
  %v1185 = vadd.f32 %v1161, %v1184
  %v1186 = vpop.f32.mrf.mxu0
  %v1187 = vadd.f32 %v1161, %v1186
  %1188 = vmatmul.bf16.gmra.mxu0 %v594
  %v1189 = vpop.f32.mrf.mxu0
  %v1190 = vadd.f32 %v1161, %v1189
  %v1191 = vpop.f32.mrf.mxu0
  %v1192 = vadd.f32 %v1161, %v1191
  %1193 = vdwg.mxu0
  %v1194 = vmul.f32 %v1185, 0.35355338
  %v1195 = vmul.f32 %v1187, 0.35355338
  %v1196 = vmul.f32 %v1190, 0.35355338
  %v1197 = vmul.f32 %v1192, 0.35355338
  %s1198 = scalar_lea.vmem %s9, 32
  %v1199 = vld [vmem:[%s1198] sm:$0xf]
  %v1200 = vld [vmem:[%s1198 + $0x4] sm:$0xf]
  %v1201 = vld [vmem:[%s1198 + $0x8] sm:$0xf]
  %v1202 = vld [vmem:[%s1198 + $0xc] sm:$0xf]
  %s1203 = scalar_lea.vmem %s12, 2
  %v1204 = vld [vmem:[%s1203] sm:$0x1]
  %v1206 = vperm.slane %v1204, 0
  %v1212 = vunpack.c.l.b16 %v1199
  %v1213 = vunpack.c.l.b16 %v1200
  %v1214 = vunpack.c.l.b16 %v1201
  %v1215 = vunpack.c.l.b16 %v1202
  %v1216 = vpack.c.b16 %v1213, %v1212
  %v1217 = vpack.c.b16 %v1215, %v1214
  %1220 = vmatpush.bf16.msra.mxu0 0
  %1221 = vmatpush.bf16.msra.mxu0 0
  %1222 = vmatpush.bf16.msra.mxu0 0
  %1223 = vmatpush.bf16.msra.mxu0 0
  %1224 = vmatpush.bf16.msra.mxu0 0
  %1225 = vmatpush.bf16.msra.mxu0 0
  %1226 = vmatpush.bf16.msra.mxu0 %v1217
  %1227 = vmatpush.bf16.msra.mxu0 %v1216
  %1228 = vmatmul.bf16.gmra.mxu0 %v591
  %v1229 = vpop.f32.mrf.mxu0
  %v1230 = vadd.f32 %v1206, %v1229
  %v1231 = vpop.f32.mrf.mxu0
  %v1232 = vadd.f32 %v1206, %v1231
  %1233 = vmatmul.bf16.gmra.mxu0 %v594
  %v1234 = vpop.f32.mrf.mxu0
  %v1235 = vadd.f32 %v1206, %v1234
  %v1236 = vpop.f32.mrf.mxu0
  %v1237 = vadd.f32 %v1206, %v1236
  %1238 = vdwg.mxu0
  %s1239 = scalar_lea.vmem %s10, 32
  %v1240 = vld [vmem:[%s1239] sm:$0xf]
  %v1241 = vld [vmem:[%s1239 + $0x4] sm:$0xf]
  %v1242 = vld [vmem:[%s1239 + $0x8] sm:$0xf]
  %v1243 = vld [vmem:[%s1239 + $0xc] sm:$0xf]
  %s1244 = scalar_lea.vmem %s13, 2
  %v1245 = vld [vmem:[%s1244] sm:$0x1]
  %v1247 = vperm.slane %v1245, 0
  %v1253 = vunpack.c.l.b16 %v1240
  %v1254 = vunpack.c.l.b16 %v1241
  %v1255 = vunpack.c.l.b16 %v1242
  %v1256 = vunpack.c.l.b16 %v1243
  %v1257 = vpack.c.b16 %v1254, %v1253
  %v1258 = vpack.c.b16 %v1256, %v1255
  %1261 = vmatpush.bf16.msra.mxu0 0
  %1262 = vmatpush.bf16.msra.mxu0 0
  %1263 = vmatpush.bf16.msra.mxu0 0
  %1264 = vmatpush.bf16.msra.mxu0 0
  %1265 = vmatpush.bf16.msra.mxu0 0
  %1266 = vmatpush.bf16.msra.mxu0 0
  %1267 = vmatpush.bf16.msra.mxu0 %v1258
  %1268 = vmatpush.bf16.msra.mxu0 %v1257
  %1269 = vmatmul.bf16.gmra.mxu0 %v591
  %v1270 = vpop.f32.mrf.mxu0
  %v1271 = vadd.f32 %v1247, %v1270
  %v1272 = vpop.f32.mrf.mxu0
  %v1273 = vadd.f32 %v1247, %v1272
  %1274 = vmatmul.bf16.gmra.mxu0 %v594
  %v1275 = vpop.f32.mrf.mxu0
  %v1276 = vadd.f32 %v1247, %v1275
  %v1277 = vpop.f32.mrf.mxu0
  %v1278 = vadd.f32 %v1247, %v1277
  %1279 = vdwg.mxu0
  %v1280 = vpack.c.bf16 %v1195, %v1194
  %v1281 = vpack.c.bf16 %v1232, %v1230
  %v1283 = vsel %vm699, %v1280, 0
  %v1286 = vsel %vm699, %v1281, 0
  %1288 = vmatpush.bf16.xpose.msra.mxu0 0
  %1289 = vmatpush.bf16.xpose.msra.mxu0 0
  %1290 = vmatpush.bf16.xpose.msra.mxu0 0
  %1291 = vmatpush.bf16.xpose.msra.mxu0 0
  %1292 = vmatpush.bf16.xpose.msra.mxu0 0
  %1293 = vmatpush.bf16.xpose.msra.mxu0 0
  %1294 = vmatpush.bf16.xpose.msra.mxu0 0
  %1295 = vmatpush.bf16.xpose.msra.mxu0 %v1286
  %1296 = vmatmul.bf16.gmra.mxu0 %v1283
  %v1297 = vpop.f32.mrf.mxu0
  %v1298 = vadd.f32 0.0, %v1297
  %v1299 = vpop.f32.mrf.mxu0
  %v1300 = vadd.f32 0.0, %v1299
  %1301 = vdwg.mxu0
  %v1302 = vsel %vm720, %v1298, -inf
  %1303 = vmax.xlane.f32.xlu0 %v1302
  %v1304 = vpop.xlane.xlu0 %1303
  %v1305 = vsel %vm720, %v1300, -inf
  %1306 = vmax.xlane.f32.xlu0 %v1305
  %v1307 = vpop.xlane.xlu0 %1306
  %v1308 = vsub.f32 %v1298, %v1304
  %v1309 = vsub.f32 %v1300, %v1307
  %v1310 = vmul.f32 %v1308, 1.442695
  %v1311 = vpow.pop %v1310
  %v1312 = vmul.f32 %v1309, 1.442695
  %v1313 = vpow.pop %v1312
  %v1314 = vsel %vm720, %v1311, 0.0
  %1315 = vadd.xlane.f32.xlu0 %v1314
  %v1316 = vpop.xlane.xlu0 %1315
  %v1317 = vsel %vm720, %v1313, 0.0
  %1318 = vadd.xlane.f32.xlu0 %v1317
  %v1319 = vpop.xlane.xlu0 %1318
  %v1320 = vrcp.pop %v1316
  %v1321 = vrcp.pop %v1319
  %v1322 = vpack.c.bf16 %v1313, %v1311
  %v1323 = vpack.c.bf16 %v1273, %v1271
  %v1325 = vsel %vm720, %v1322, 0
  %1327 = vmatpush.bf16.msra.mxu0 0
  %1328 = vmatpush.bf16.msra.mxu0 0
  %1329 = vmatpush.bf16.msra.mxu0 0
  %1330 = vmatpush.bf16.msra.mxu0 0
  %1331 = vmatpush.bf16.msra.mxu0 0
  %1332 = vmatpush.bf16.msra.mxu0 0
  %1333 = vmatpush.bf16.msra.mxu0 0
  %1334 = vmatpush.bf16.msra.mxu0 %v1323
  %1335 = vmatmul.bf16.gmra.mxu0 %v1325
  %v1336 = vpop.f32.mrf.mxu0
  %v1337 = vadd.f32 0.0, %v1336
  %v1338 = vpop.f32.mrf.mxu0
  %v1339 = vadd.f32 0.0, %v1338
  %1340 = vdwg.mxu0
  %v1341 = vmul.f32 %v1337, %v1320
  %v1342 = vmul.f32 %v1339, %v1321
  %v1343 = vpack.c.bf16 %v1197, %v1196
  %v1344 = vpack.c.bf16 %v1237, %v1235
  %v1346 = vsel %vm699, %v1343, 0
  %v1349 = vsel %vm699, %v1344, 0
  %1351 = vmatpush.bf16.xpose.msra.mxu0 0
  %1352 = vmatpush.bf16.xpose.msra.mxu0 0
  %1353 = vmatpush.bf16.xpose.msra.mxu0 0
  %1354 = vmatpush.bf16.xpose.msra.mxu0 0
  %1355 = vmatpush.bf16.xpose.msra.mxu0 0
  %1356 = vmatpush.bf16.xpose.msra.mxu0 0
  %1357 = vmatpush.bf16.xpose.msra.mxu0 0
  %1358 = vmatpush.bf16.xpose.msra.mxu0 %v1349
  %1359 = vmatmul.bf16.gmra.mxu0 %v1346
  %v1360 = vpop.f32.mrf.mxu0
  %v1361 = vadd.f32 0.0, %v1360
  %v1362 = vpop.f32.mrf.mxu0
  %v1363 = vadd.f32 0.0, %v1362
  %1364 = vdwg.mxu0
  %v1365 = vsel %vm720, %v1361, -inf
  %1366 = vmax.xlane.f32.xlu0 %v1365
  %v1367 = vpop.xlane.xlu0 %1366
  %v1368 = vsel %vm720, %v1363, -inf
  %1369 = vmax.xlane.f32.xlu0 %v1368
  %v1370 = vpop.xlane.xlu0 %1369
  %v1371 = vsub.f32 %v1361, %v1367
  %v1372 = vsub.f32 %v1363, %v1370
  %v1373 = vmul.f32 %v1371, 1.442695
  %v1374 = vpow.pop %v1373
  %v1375 = vmul.f32 %v1372, 1.442695
  %v1376 = vpow.pop %v1375
  %v1377 = vsel %vm720, %v1374, 0.0
  %1378 = vadd.xlane.f32.xlu0 %v1377
  %v1379 = vpop.xlane.xlu0 %1378
  %v1380 = vsel %vm720, %v1376, 0.0
  %1381 = vadd.xlane.f32.xlu0 %v1380
  %v1382 = vpop.xlane.xlu0 %1381
  %v1383 = vrcp.pop %v1379
  %v1384 = vrcp.pop %v1382
  %v1385 = vpack.c.bf16 %v1376, %v1374
  %v1386 = vpack.c.bf16 %v1278, %v1276
  %v1388 = vsel %vm720, %v1385, 0
  %1390 = vmatpush.bf16.msra.mxu0 0
  %1391 = vmatpush.bf16.msra.mxu0 0
  %1392 = vmatpush.bf16.msra.mxu0 0
  %1393 = vmatpush.bf16.msra.mxu0 0
  %1394 = vmatpush.bf16.msra.mxu0 0
  %1395 = vmatpush.bf16.msra.mxu0 0
  %1396 = vmatpush.bf16.msra.mxu0 0
  %1397 = vmatpush.bf16.msra.mxu0 %v1386
  %1398 = vmatmul.bf16.gmra.mxu0 %v1388
  %v1399 = vpop.f32.mrf.mxu0
  %v1400 = vadd.f32 0.0, %v1399
  %v1401 = vpop.f32.mrf.mxu0
  %v1402 = vadd.f32 0.0, %v1401
  %1403 = vdwg.mxu0
  %v1404 = vmul.f32 %v1400, %v1383
  %v1405 = vmul.f32 %v1402, %v1384
  %s1406 = scalar_lea.vmem %s14, 8
  %v1407 = vld [vmem:[%s1406] sm:$0xf]
  %v1408 = vpack.c.bf16 %v1342, %v1341
  %v1409 = vpack.c.bf16 %v1405, %v1404
  %v1411 = vsel %vm699, %v1408, 0
  %v1414 = vsel %vm699, %v1409, 0
  %v1417 = vsel %vm834, %v1407, 0
  %1419 = vmatpush.bf16.msra.mxu0 0
  %1420 = vmatpush.bf16.msra.mxu0 0
  %1421 = vmatpush.bf16.msra.mxu0 0
  %1422 = vmatpush.bf16.msra.mxu0 0
  %1423 = vmatpush.bf16.msra.mxu0 0
  %1424 = vmatpush.bf16.msra.mxu0 0
  %1425 = vmatpush.bf16.msra.mxu0 0
  %1426 = vmatpush.bf16.msra.mxu0 %v1417
  %1427 = vmatmul.bf16.gmra.mxu0 %v1411
  %v1428 = vpop.f32.mrf.mxu0
  %v1429 = vadd.f32 0.0, %v1428
  %v1430 = vpop.f32.mrf.mxu0
  %v1431 = vadd.f32 0.0, %v1430
  %1432 = vmatmul.bf16.gmra.mxu0 %v1414
  %v1433 = vpop.f32.mrf.mxu0
  %v1434 = vadd.f32 0.0, %v1433
  %v1435 = vpop.f32.mrf.mxu0
  %v1436 = vadd.f32 0.0, %v1435
  %1437 = vdwg.mxu0
  %v1438 = vadd.f32 %v1149, %v1429
  %v1439 = vadd.f32 %v1150, %v1431
  %v1440 = vadd.f32 %v1151, %v1434
  %v1441 = vadd.f32 %v1152, %v1436
  %s1442 = scalar_lea.vmem %s8, 48
  %v1443 = vld [vmem:[%s1442] sm:$0xf]
  %v1444 = vld [vmem:[%s1442 + $0x4] sm:$0xf]
  %v1445 = vld [vmem:[%s1442 + $0x8] sm:$0xf]
  %v1446 = vld [vmem:[%s1442 + $0xc] sm:$0xf]
  %s1447 = scalar_lea.vmem %s11, 3
  %v1448 = vld [vmem:[%s1447] sm:$0x1]
  %v1450 = vperm.slane %v1448, 0
  %v1456 = vunpack.c.l.b16 %v1443
  %v1457 = vunpack.c.l.b16 %v1444
  %v1458 = vunpack.c.l.b16 %v1445
  %v1459 = vunpack.c.l.b16 %v1446
  %v1460 = vpack.c.b16 %v1457, %v1456
  %v1461 = vpack.c.b16 %v1459, %v1458
  %1464 = vmatpush.bf16.msra.mxu0 0
  %1465 = vmatpush.bf16.msra.mxu0 0
  %1466 = vmatpush.bf16.msra.mxu0 0
  %1467 = vmatpush.bf16.msra.mxu0 0
  %1468 = vmatpush.bf16.msra.mxu0 0
  %1469 = vmatpush.bf16.msra.mxu0 0
  %1470 = vmatpush.bf16.msra.mxu0 %v1461
  %1471 = vmatpush.bf16.msra.mxu0 %v1460
  %1472 = vmatmul.bf16.gmra.mxu0 %v591
  %v1473 = vpop.f32.mrf.mxu0
  %v1474 = vadd.f32 %v1450, %v1473
  %v1475 = vpop.f32.mrf.mxu0
  %v1476 = vadd.f32 %v1450, %v1475
  %1477 = vmatmul.bf16.gmra.mxu0 %v594
  %v1478 = vpop.f32.mrf.mxu0
  %v1479 = vadd.f32 %v1450, %v1478
  %v1480 = vpop.f32.mrf.mxu0
  %v1481 = vadd.f32 %v1450, %v1480
  %1482 = vdwg.mxu0
  %v1483 = vmul.f32 %v1474, 0.35355338
  %v1484 = vmul.f32 %v1476, 0.35355338
  %v1485 = vmul.f32 %v1479, 0.35355338
  %v1486 = vmul.f32 %v1481, 0.35355338
  %s1487 = scalar_lea.vmem %s9, 48
  %v1488 = vld [vmem:[%s1487] sm:$0xf]
  %v1489 = vld [vmem:[%s1487 + $0x4] sm:$0xf]
  %v1490 = vld [vmem:[%s1487 + $0x8] sm:$0xf]
  %v1491 = vld [vmem:[%s1487 + $0xc] sm:$0xf]
  %s1492 = scalar_lea.vmem %s12, 3
  %v1493 = vld [vmem:[%s1492] sm:$0x1]
  %v1495 = vperm.slane %v1493, 0
  %v1501 = vunpack.c.l.b16 %v1488
  %v1502 = vunpack.c.l.b16 %v1489
  %v1503 = vunpack.c.l.b16 %v1490
  %v1504 = vunpack.c.l.b16 %v1491
  %v1505 = vpack.c.b16 %v1502, %v1501
  %v1506 = vpack.c.b16 %v1504, %v1503
  %1509 = vmatpush.bf16.msra.mxu0 0
  %1510 = vmatpush.bf16.msra.mxu0 0
  %1511 = vmatpush.bf16.msra.mxu0 0
  %1512 = vmatpush.bf16.msra.mxu0 0
  %1513 = vmatpush.bf16.msra.mxu0 0
  %1514 = vmatpush.bf16.msra.mxu0 0
  %1515 = vmatpush.bf16.msra.mxu0 %v1506
  %1516 = vmatpush.bf16.msra.mxu0 %v1505
  %1517 = vmatmul.bf16.gmra.mxu0 %v591
  %v1518 = vpop.f32.mrf.mxu0
  %v1519 = vadd.f32 %v1495, %v1518
  %v1520 = vpop.f32.mrf.mxu0
  %v1521 = vadd.f32 %v1495, %v1520
  %1522 = vmatmul.bf16.gmra.mxu0 %v594
  %v1523 = vpop.f32.mrf.mxu0
  %v1524 = vadd.f32 %v1495, %v1523
  %v1525 = vpop.f32.mrf.mxu0
  %v1526 = vadd.f32 %v1495, %v1525
  %1527 = vdwg.mxu0
  %s1528 = scalar_lea.vmem %s10, 48
  %v1529 = vld [vmem:[%s1528] sm:$0xf]
  %v1530 = vld [vmem:[%s1528 + $0x4] sm:$0xf]
  %v1531 = vld [vmem:[%s1528 + $0x8] sm:$0xf]
  %v1532 = vld [vmem:[%s1528 + $0xc] sm:$0xf]
  %s1533 = scalar_lea.vmem %s13, 3
  %v1534 = vld [vmem:[%s1533] sm:$0x1]
  %v1536 = vperm.slane %v1534, 0
  %v1542 = vunpack.c.l.b16 %v1529
  %v1543 = vunpack.c.l.b16 %v1530
  %v1544 = vunpack.c.l.b16 %v1531
  %v1545 = vunpack.c.l.b16 %v1532
  %v1546 = vpack.c.b16 %v1543, %v1542
  %v1547 = vpack.c.b16 %v1545, %v1544
  %1550 = vmatpush.bf16.msra.mxu0 0
  %1551 = vmatpush.bf16.msra.mxu0 0
  %1552 = vmatpush.bf16.msra.mxu0 0
  %1553 = vmatpush.bf16.msra.mxu0 0
  %1554 = vmatpush.bf16.msra.mxu0 0
  %1555 = vmatpush.bf16.msra.mxu0 0
  %1556 = vmatpush.bf16.msra.mxu0 %v1547
  %1557 = vmatpush.bf16.msra.mxu0 %v1546
  %1558 = vmatmul.bf16.gmra.mxu0 %v591
  %v1559 = vpop.f32.mrf.mxu0
  %v1560 = vadd.f32 %v1536, %v1559
  %v1561 = vpop.f32.mrf.mxu0
  %v1562 = vadd.f32 %v1536, %v1561
  %1563 = vmatmul.bf16.gmra.mxu0 %v594
  %v1564 = vpop.f32.mrf.mxu0
  %v1565 = vadd.f32 %v1536, %v1564
  %v1566 = vpop.f32.mrf.mxu0
  %v1567 = vadd.f32 %v1536, %v1566
  %1568 = vdwg.mxu0
  %v1569 = vpack.c.bf16 %v1484, %v1483
  %v1570 = vpack.c.bf16 %v1521, %v1519
  %v1572 = vsel %vm699, %v1569, 0
  %v1575 = vsel %vm699, %v1570, 0
  %1577 = vmatpush.bf16.xpose.msra.mxu0 0
  %1578 = vmatpush.bf16.xpose.msra.mxu0 0
  %1579 = vmatpush.bf16.xpose.msra.mxu0 0
  %1580 = vmatpush.bf16.xpose.msra.mxu0 0
  %1581 = vmatpush.bf16.xpose.msra.mxu0 0
  %1582 = vmatpush.bf16.xpose.msra.mxu0 0
  %1583 = vmatpush.bf16.xpose.msra.mxu0 0
  %1584 = vmatpush.bf16.xpose.msra.mxu0 %v1575
  %1585 = vmatmul.bf16.gmra.mxu0 %v1572
  %v1586 = vpop.f32.mrf.mxu0
  %v1587 = vadd.f32 0.0, %v1586
  %v1588 = vpop.f32.mrf.mxu0
  %v1589 = vadd.f32 0.0, %v1588
  %1590 = vdwg.mxu0
  %v1591 = vsel %vm720, %v1587, -inf
  %1592 = vmax.xlane.f32.xlu0 %v1591
  %v1593 = vpop.xlane.xlu0 %1592
  %v1594 = vsel %vm720, %v1589, -inf
  %1595 = vmax.xlane.f32.xlu0 %v1594
  %v1596 = vpop.xlane.xlu0 %1595
  %v1597 = vsub.f32 %v1587, %v1593
  %v1598 = vsub.f32 %v1589, %v1596
  %v1599 = vmul.f32 %v1597, 1.442695
  %v1600 = vpow.pop %v1599
  %v1601 = vmul.f32 %v1598, 1.442695
  %v1602 = vpow.pop %v1601
  %v1603 = vsel %vm720, %v1600, 0.0
  %1604 = vadd.xlane.f32.xlu0 %v1603
  %v1605 = vpop.xlane.xlu0 %1604
  %v1606 = vsel %vm720, %v1602, 0.0
  %1607 = vadd.xlane.f32.xlu0 %v1606
  %v1608 = vpop.xlane.xlu0 %1607
  %v1609 = vrcp.pop %v1605
  %v1610 = vrcp.pop %v1608
  %v1611 = vpack.c.bf16 %v1602, %v1600
  %v1612 = vpack.c.bf16 %v1562, %v1560
  %v1614 = vsel %vm720, %v1611, 0
  %1616 = vmatpush.bf16.msra.mxu0 0
  %1617 = vmatpush.bf16.msra.mxu0 0
  %1618 = vmatpush.bf16.msra.mxu0 0
  %1619 = vmatpush.bf16.msra.mxu0 0
  %1620 = vmatpush.bf16.msra.mxu0 0
  %1621 = vmatpush.bf16.msra.mxu0 0
  %1622 = vmatpush.bf16.msra.mxu0 0
  %1623 = vmatpush.bf16.msra.mxu0 %v1612
  %1624 = vmatmul.bf16.gmra.mxu0 %v1614
  %v1625 = vpop.f32.mrf.mxu0
  %v1626 = vadd.f32 0.0, %v1625
  %v1627 = vpop.f32.mrf.mxu0
  %v1628 = vadd.f32 0.0, %v1627
  %1629 = vdwg.mxu0
  %v1630 = vmul.f32 %v1626, %v1609
  %v1631 = vmul.f32 %v1628, %v1610
  %v1632 = vpack.c.bf16 %v1486, %v1485
  %v1633 = vpack.c.bf16 %v1526, %v1524
  %v1635 = vsel %vm699, %v1632, 0
  %v1638 = vsel %vm699, %v1633, 0
  %1640 = vmatpush.bf16.xpose.msra.mxu0 0
  %1641 = vmatpush.bf16.xpose.msra.mxu0 0
  %1642 = vmatpush.bf16.xpose.msra.mxu0 0
  %1643 = vmatpush.bf16.xpose.msra.mxu0 0
  %1644 = vmatpush.bf16.xpose.msra.mxu0 0
  %1645 = vmatpush.bf16.xpose.msra.mxu0 0
  %1646 = vmatpush.bf16.xpose.msra.mxu0 0
  %1647 = vmatpush.bf16.xpose.msra.mxu0 %v1638
  %1648 = vmatmul.bf16.gmra.mxu0 %v1635
  %v1649 = vpop.f32.mrf.mxu0
  %v1650 = vadd.f32 0.0, %v1649
  %v1651 = vpop.f32.mrf.mxu0
  %v1652 = vadd.f32 0.0, %v1651
  %1653 = vdwg.mxu0
  %v1654 = vsel %vm720, %v1650, -inf
  %1655 = vmax.xlane.f32.xlu0 %v1654
  %v1656 = vpop.xlane.xlu0 %1655
  %v1657 = vsel %vm720, %v1652, -inf
  %1658 = vmax.xlane.f32.xlu0 %v1657
  %v1659 = vpop.xlane.xlu0 %1658
  %v1660 = vsub.f32 %v1650, %v1656
  %v1661 = vsub.f32 %v1652, %v1659
  %v1662 = vmul.f32 %v1660, 1.442695
  %v1663 = vpow.pop %v1662
  %v1664 = vmul.f32 %v1661, 1.442695
  %v1665 = vpow.pop %v1664
  %v1666 = vsel %vm720, %v1663, 0.0
  %1667 = vadd.xlane.f32.xlu0 %v1666
  %v1668 = vpop.xlane.xlu0 %1667
  %v1669 = vsel %vm720, %v1665, 0.0
  %1670 = vadd.xlane.f32.xlu0 %v1669
  %v1671 = vpop.xlane.xlu0 %1670
  %v1672 = vrcp.pop %v1668
  %v1673 = vrcp.pop %v1671
  %v1674 = vpack.c.bf16 %v1665, %v1663
  %v1675 = vpack.c.bf16 %v1567, %v1565
  %v1677 = vsel %vm720, %v1674, 0
  %1679 = vmatpush.bf16.msra.mxu0 0
  %1680 = vmatpush.bf16.msra.mxu0 0
  %1681 = vmatpush.bf16.msra.mxu0 0
  %1682 = vmatpush.bf16.msra.mxu0 0
  %1683 = vmatpush.bf16.msra.mxu0 0
  %1684 = vmatpush.bf16.msra.mxu0 0
  %1685 = vmatpush.bf16.msra.mxu0 0
  %1686 = vmatpush.bf16.msra.mxu0 %v1675
  %1687 = vmatmul.bf16.gmra.mxu0 %v1677
  %v1688 = vpop.f32.mrf.mxu0
  %v1689 = vadd.f32 0.0, %v1688
  %v1690 = vpop.f32.mrf.mxu0
  %v1691 = vadd.f32 0.0, %v1690
  %1692 = vdwg.mxu0
  %v1693 = vmul.f32 %v1689, %v1672
  %v1694 = vmul.f32 %v1691, %v1673
  %s1695 = scalar_lea.vmem %s14, 12
  %v1696 = vld [vmem:[%s1695] sm:$0xf]
  %v1697 = vpack.c.bf16 %v1631, %v1630
  %v1698 = vpack.c.bf16 %v1694, %v1693
  %v1700 = vsel %vm699, %v1697, 0
  %v1703 = vsel %vm699, %v1698, 0
  %v1706 = vsel %vm834, %v1696, 0
  %1708 = vmatpush.bf16.msra.mxu0 0
  %1709 = vmatpush.bf16.msra.mxu0 0
  %1710 = vmatpush.bf16.msra.mxu0 0
  %1711 = vmatpush.bf16.msra.mxu0 0
  %1712 = vmatpush.bf16.msra.mxu0 0
  %1713 = vmatpush.bf16.msra.mxu0 0
  %1714 = vmatpush.bf16.msra.mxu0 0
  %1715 = vmatpush.bf16.msra.mxu0 %v1706
  %1716 = vmatmul.bf16.gmra.mxu0 %v1700
  %v1717 = vpop.f32.mrf.mxu0
  %v1718 = vadd.f32 0.0, %v1717
  %v1719 = vpop.f32.mrf.mxu0
  %v1720 = vadd.f32 0.0, %v1719
  %1721 = vmatmul.bf16.gmra.mxu0 %v1703
  %v1722 = vpop.f32.mrf.mxu0
  %v1723 = vadd.f32 0.0, %v1722
  %v1724 = vpop.f32.mrf.mxu0
  %v1725 = vadd.f32 0.0, %v1724
  %1726 = vdwg.mxu0
  %v1727 = vadd.f32 %v1438, %v1718
  %v1728 = vadd.f32 %v1439, %v1720
  %v1729 = vadd.f32 %v1440, %v1723
  %v1730 = vadd.f32 %v1441, %v1725
  %v1731 = vadd.f32 %v563, %v1727
  %v1732 = vadd.f32 %v564, %v1728
  %v1733 = vadd.f32 %v565, %v1729
  %v1734 = vadd.f32 %v566, %v1730
  %v1735 = vld [vmem:[%s16] sm:$0x1]
  %v1736 = vld [vmem:[%s17] sm:$0x1]
  %v1737 = vsel %vm91, %v1731, 0.0
  %1738 = vadd.xlane.f32.xlu0 %v1737
  %v1739 = vpop.xlane.xlu0 %1738
  %v1740 = vsel %vm91, %v1732, 0.0
  %1741 = vadd.xlane.f32.xlu0 %v1740
  %v1742 = vpop.xlane.xlu0 %1741
  %v1743 = vsel %vm91, %v1733, 0.0
  %1744 = vadd.xlane.f32.xlu0 %v1743
  %v1745 = vpop.xlane.xlu0 %1744
  %v1746 = vsel %vm91, %v1734, 0.0
  %1747 = vadd.xlane.f32.xlu0 %v1746
  %v1748 = vpop.xlane.xlu0 %1747
  %v1749 = vrcp.pop 32.0
  %v1750 = vmul.f32 32.0, %v1749
  %v1751 = vsub.f32 1.0, %v1750
  %v1752 = vmul.f32 %v1749, %v1751
  %v1753 = vadd.f32 %v1749, %v1752
  %vm1754 = vweird.f32 %v1749
  %v1755 = vsel %vm1754, %v1749, %v1753
  %v1756 = vmul.f32 %v1739, %v1755
  %v1757 = vmul.f32 %v1742, %v1755
  %v1758 = vmul.f32 %v1745, %v1755
  %v1759 = vmul.f32 %v1748, %v1755
  %v1760 = vsub.f32 %v1731, %v1756
  %v1761 = vsub.f32 %v1732, %v1757
  %v1762 = vsub.f32 %v1733, %v1758
  %v1763 = vsub.f32 %v1734, %v1759
  %v1764 = vmul.f32 %v1760, %v1760
  %v1765 = vmul.f32 %v1761, %v1761
  %v1766 = vmul.f32 %v1762, %v1762
  %v1767 = vmul.f32 %v1763, %v1763
  %v1768 = vsel %vm91, %v1764, 0.0
  %1769 = vadd.xlane.f32.xlu0 %v1768
  %v1770 = vpop.xlane.xlu0 %1769
  %v1771 = vsel %vm91, %v1765, 0.0
  %1772 = vadd.xlane.f32.xlu0 %v1771
  %v1773 = vpop.xlane.xlu0 %1772
  %v1774 = vsel %vm91, %v1766, 0.0
  %1775 = vadd.xlane.f32.xlu0 %v1774
  %v1776 = vpop.xlane.xlu0 %1775
  %v1777 = vsel %vm91, %v1767, 0.0
  %1778 = vadd.xlane.f32.xlu0 %v1777
  %v1779 = vpop.xlane.xlu0 %1778
  %v1780 = vmul.f32 %v1770, %v1755
  %v1781 = vmul.f32 %v1773, %v1755
  %v1782 = vmul.f32 %v1776, %v1755
  %v1783 = vmul.f32 %v1779, %v1755
  %v1784 = vadd.f32 %v1780, 1e-05
  %v1785 = vadd.f32 %v1781, 1e-05
  %v1786 = vadd.f32 %v1782, 1e-05
  %v1787 = vadd.f32 %v1783, 1e-05
  %v1788 = vrsqrt.pop %v1784
  %v1789 = vmul.f32 %v1788, %v1784
  %v1790 = vmul.f32 %v1789, %v1788
  %v1791 = vmul.f32 0.5, %v1790
  %v1792 = vsub.f32 1.5, %v1791
  %v1793 = vmul.f32 %v1788, %v1792
  %vm1794 = vweird.f32 %v1784
  %vm1795 = vweird.f32 %v1788
  %vm1796 = vmor %vm1794, %vm1795
  %v1797 = vsel %vm1796, %v1788, %v1793
  %v1798 = vrsqrt.pop %v1785
  %v1799 = vmul.f32 %v1798, %v1785
  %v1800 = vmul.f32 %v1799, %v1798
  %v1801 = vmul.f32 0.5, %v1800
  %v1802 = vsub.f32 1.5, %v1801
  %v1803 = vmul.f32 %v1798, %v1802
  %vm1804 = vweird.f32 %v1785
  %vm1805 = vweird.f32 %v1798
  %vm1806 = vmor %vm1804, %vm1805
  %v1807 = vsel %vm1806, %v1798, %v1803
  %v1808 = vrsqrt.pop %v1786
  %v1809 = vmul.f32 %v1808, %v1786
  %v1810 = vmul.f32 %v1809, %v1808
  %v1811 = vmul.f32 0.5, %v1810
  %v1812 = vsub.f32 1.5, %v1811
  %v1813 = vmul.f32 %v1808, %v1812
  %vm1814 = vweird.f32 %v1786
  %vm1815 = vweird.f32 %v1808
  %vm1816 = vmor %vm1814, %vm1815
  %v1817 = vsel %vm1816, %v1808, %v1813
  %v1818 = vrsqrt.pop %v1787
  %v1819 = vmul.f32 %v1818, %v1787
  %v1820 = vmul.f32 %v1819, %v1818
  %v1821 = vmul.f32 0.5, %v1820
  %v1822 = vsub.f32 1.5, %v1821
  %v1823 = vmul.f32 %v1818, %v1822
  %vm1824 = vweird.f32 %v1787
  %vm1825 = vweird.f32 %v1818
  %vm1826 = vmor %vm1824, %vm1825
  %v1827 = vsel %vm1826, %v1818, %v1823
  %v1828 = vmul.f32 %v1760, %v1797
  %v1829 = vmul.f32 %v1761, %v1807
  %v1830 = vmul.f32 %v1762, %v1817
  %v1831 = vmul.f32 %v1763, %v1827
  %v1833 = vperm.slane %v1735, 0
  %v1835 = vmul.f32 %v1828, %v1833
  %v1836 = vmul.f32 %v1829, %v1833
  %v1837 = vmul.f32 %v1830, %v1833
  %v1838 = vmul.f32 %v1831, %v1833
  %v1840 = vperm.slane %v1736, 0
  %v1842 = vadd.f32 %v1835, %v1840
  %v1843 = vadd.f32 %v1836, %v1840
  %v1844 = vadd.f32 %v1837, %v1840
  %v1845 = vadd.f32 %v1838, %v1840
  %v1846 = vld [vmem:[%s18] sm:$0xff]
  %v1847 = vld [vmem:[%s18 + $0x8] sm:$0xff]
  %v1848 = vld [vmem:[%s18 + $0x10] sm:$0xff]
  %v1849 = vld [vmem:[%s18 + $0x18] sm:$0xff]
  %v1850 = vld [vmem:[%s18 + $0x20] sm:$0xff]
  %v1851 = vld [vmem:[%s18 + $0x28] sm:$0xff]
  %v1852 = vld [vmem:[%s18 + $0x30] sm:$0xff]
  %v1853 = vld [vmem:[%s18 + $0x38] sm:$0xff]
  %v1854 = vld [vmem:[%s18 + $0x40] sm:$0xff]
  %v1855 = vld [vmem:[%s18 + $0x48] sm:$0xff]
  %v1856 = vld [vmem:[%s18 + $0x50] sm:$0xff]
  %v1857 = vld [vmem:[%s18 + $0x58] sm:$0xff]
  %v1858 = vld [vmem:[%s18 + $0x60] sm:$0xff]
  %v1859 = vld [vmem:[%s18 + $0x68] sm:$0xff]
  %v1860 = vld [vmem:[%s18 + $0x70] sm:$0xff]
  %v1861 = vld [vmem:[%s18 + $0x78] sm:$0xff]
  %v1862 = vld [vmem:[%s18 + $0x80] sm:$0xff]
  %v1863 = vld [vmem:[%s18 + $0x88] sm:$0xff]
  %v1864 = vld [vmem:[%s18 + $0x90] sm:$0xff]
  %v1865 = vld [vmem:[%s18 + $0x98] sm:$0xff]
  %v1866 = vld [vmem:[%s18 + $0xa0] sm:$0xff]
  %v1867 = vld [vmem:[%s18 + $0xa8] sm:$0xff]
  %v1868 = vld [vmem:[%s18 + $0xb0] sm:$0xff]
  %v1869 = vld [vmem:[%s18 + $0xb8] sm:$0xff]
  %v1870 = vld [vmem:[%s18 + $0xc0] sm:$0xff]
  %v1871 = vld [vmem:[%s18 + $0xc8] sm:$0xff]
  %v1872 = vld [vmem:[%s18 + $0xd0] sm:$0xff]
  %v1873 = vld [vmem:[%s18 + $0xd8] sm:$0xff]
  %v1874 = vld [vmem:[%s18 + $0xe0] sm:$0xff]
  %v1875 = vld [vmem:[%s18 + $0xe8] sm:$0xff]
  %v1876 = vld [vmem:[%s18 + $0xf0] sm:$0xff]
  %v1877 = vld [vmem:[%s18 + $0xf8] sm:$0xff]
  %v1878 = vpack.c.bf16 %v1843, %v1842
  %v1879 = vpack.c.bf16 %v1845, %v1844
  %v1880 = vld [vmem:[%s19] sm:$0xff]
  %v1881 = vld [vmem:[%s19 + $0x8] sm:$0xff]
  %v1884 = vperm.slane %v1880, 0
  %v1885 = vperm.slane %v1880, 1
  %v1886 = vperm.slane %v1880, 2
  %v1887 = vperm.slane %v1880, 3
  %v1888 = vperm.slane %v1880, 4
  %v1889 = vperm.slane %v1880, 5
  %v1890 = vperm.slane %v1880, 6
  %v1891 = vperm.slane %v1880, 7
  %v1892 = vperm.slane %v1881, 0
  %v1893 = vperm.slane %v1881, 1
  %v1894 = vperm.slane %v1881, 2
  %v1895 = vperm.slane %v1881, 3
  %v1896 = vperm.slane %v1881, 4
  %v1897 = vperm.slane %v1881, 5
  %v1898 = vperm.slane %v1881, 6
  %v1899 = vperm.slane %v1881, 7
  %v1948 = vunpack.c.l.b16 %v1846
  %v1949 = vunpack.c.h.b16 %v1846
  %v1950 = vunpack.c.l.b16 %v1847
  %v1951 = vunpack.c.h.b16 %v1847
  %v1952 = vunpack.c.l.b16 %v1848
  %v1953 = vunpack.c.h.b16 %v1848
  %v1954 = vunpack.c.l.b16 %v1849
  %v1955 = vunpack.c.h.b16 %v1849
  %v1956 = vunpack.c.l.b16 %v1850
  %v1957 = vunpack.c.h.b16 %v1850
  %v1958 = vunpack.c.l.b16 %v1851
  %v1959 = vunpack.c.h.b16 %v1851
  %v1960 = vunpack.c.l.b16 %v1852
  %v1961 = vunpack.c.h.b16 %v1852
  %v1962 = vunpack.c.l.b16 %v1853
  %v1963 = vunpack.c.h.b16 %v1853
  %v1964 = vunpack.c.l.b16 %v1854
  %v1965 = vunpack.c.h.b16 %v1854
  %v1966 = vunpack.c.l.b16 %v1855
  %v1967 = vunpack.c.h.b16 %v1855
  %v1968 = vunpack.c.l.b16 %v1856
  %v1969 = vunpack.c.h.b16 %v1856
  %v1970 = vunpack.c.l.b16 %v1857
  %v1971 = vunpack.c.h.b16 %v1857
  %v1972 = vunpack.c.l.b16 %v1858
  %v1973 = vunpack.c.h.b16 %v1858
  %v1974 = vunpack.c.l.b16 %v1859
  %v1975 = vunpack.c.h.b16 %v1859
  %v1976 = vunpack.c.l.b16 %v1860
  %v1977 = vunpack.c.h.b16 %v1860
  %v1978 = vunpack.c.l.b16 %v1861
  %v1979 = vunpack.c.h.b16 %v1861
  %v1980 = vunpack.c.l.b16 %v1862
  %v1981 = vunpack.c.h.b16 %v1862
  %v1982 = vunpack.c.l.b16 %v1863
  %v1983 = vunpack.c.h.b16 %v1863
  %v1984 = vunpack.c.l.b16 %v1864
  %v1985 = vunpack.c.h.b16 %v1864
  %v1986 = vunpack.c.l.b16 %v1865
  %v1987 = vunpack.c.h.b16 %v1865
  %v1988 = vunpack.c.l.b16 %v1866
  %v1989 = vunpack.c.h.b16 %v1866
  %v1990 = vunpack.c.l.b16 %v1867
  %v1991 = vunpack.c.h.b16 %v1867
  %v1992 = vunpack.c.l.b16 %v1868
  %v1993 = vunpack.c.h.b16 %v1868
  %v1994 = vunpack.c.l.b16 %v1869
  %v1995 = vunpack.c.h.b16 %v1869
  %v1996 = vunpack.c.l.b16 %v1870
  %v1997 = vunpack.c.h.b16 %v1870
  %v1998 = vunpack.c.l.b16 %v1871
  %v1999 = vunpack.c.h.b16 %v1871
  %v2000 = vunpack.c.l.b16 %v1872
  %v2001 = vunpack.c.h.b16 %v1872
  %v2002 = vunpack.c.l.b16 %v1873
  %v2003 = vunpack.c.h.b16 %v1873
  %v2004 = vunpack.c.l.b16 %v1874
  %v2005 = vunpack.c.h.b16 %v1874
  %v2006 = vunpack.c.l.b16 %v1875
  %v2007 = vunpack.c.h.b16 %v1875
  %v2008 = vunpack.c.l.b16 %v1876
  %v2009 = vunpack.c.h.b16 %v1876
  %v2010 = vunpack.c.l.b16 %v1877
  %v2011 = vunpack.c.h.b16 %v1877
  %v2012 = vpack.c.b16 %v1964, %v1948
  %v2013 = vpack.c.b16 %v1965, %v1949
  %v2014 = vpack.c.b16 %v1966, %v1950
  %v2015 = vpack.c.b16 %v1967, %v1951
  %v2016 = vpack.c.b16 %v1968, %v1952
  %v2017 = vpack.c.b16 %v1969, %v1953
  %v2018 = vpack.c.b16 %v1970, %v1954
  %v2019 = vpack.c.b16 %v1971, %v1955
  %v2020 = vpack.c.b16 %v1972, %v1956
  %v2021 = vpack.c.b16 %v1973, %v1957
  %v2022 = vpack.c.b16 %v1974, %v1958
  %v2023 = vpack.c.b16 %v1975, %v1959
  %v2024 = vpack.c.b16 %v1976, %v1960
  %v2025 = vpack.c.b16 %v1977, %v1961
  %v2026 = vpack.c.b16 %v1978, %v1962
  %v2027 = vpack.c.b16 %v1979, %v1963
  %v2028 = vpack.c.b16 %v1996, %v1980
  %v2029 = vpack.c.b16 %v1997, %v1981
  %v2030 = vpack.c.b16 %v1998, %v1982
  %v2031 = vpack.c.b16 %v1999, %v1983
  %v2032 = vpack.c.b16 %v2000, %v1984
  %v2033 = vpack.c.b16 %v2001, %v1985
  %v2034 = vpack.c.b16 %v2002, %v1986
  %v2035 = vpack.c.b16 %v2003, %v1987
  %v2036 = vpack.c.b16 %v2004, %v1988
  %v2037 = vpack.c.b16 %v2005, %v1989
  %v2038 = vpack.c.b16 %v2006, %v1990
  %v2039 = vpack.c.b16 %v2007, %v1991
  %v2040 = vpack.c.b16 %v2008, %v1992
  %v2041 = vpack.c.b16 %v2009, %v1993
  %v2042 = vpack.c.b16 %v2010, %v1994
  %v2043 = vpack.c.b16 %v2011, %v1995
  %v2077 = vsel %vm91, %v1878, 0
  %v2080 = vsel %vm91, %v1879, 0
  %2082 = vmatpush.bf16.msra.mxu0 0
  %2083 = vmatpush.bf16.msra.mxu0 0
  %2084 = vmatpush.bf16.msra.mxu0 0
  %2085 = vmatpush.bf16.msra.mxu0 0
  %2086 = vmatpush.bf16.msra.mxu0 0
  %2087 = vmatpush.bf16.msra.mxu0 0
  %2088 = vmatpush.bf16.msra.mxu0 %v2028
  %2089 = vmatpush.bf16.msra.mxu0 %v2012
  %2090 = vmatmul.bf16.gmra.mxu0 %v2077
  %v2091 = vpop.f32.mrf.mxu0
  %v2092 = vadd.f32 %v1884, %v2091
  %v2093 = vpop.f32.mrf.mxu0
  %v2094 = vadd.f32 %v1884, %v2093
  %2095 = vmatmul.bf16.gmra.mxu0 %v2080
  %v2096 = vpop.f32.mrf.mxu0
  %v2097 = vadd.f32 %v1884, %v2096
  %v2098 = vpop.f32.mrf.mxu0
  %v2099 = vadd.f32 %v1884, %v2098
  %2100 = vdwg.mxu0
  %2101 = vmatpush.bf16.msra.mxu0 0
  %2102 = vmatpush.bf16.msra.mxu0 0
  %2103 = vmatpush.bf16.msra.mxu0 0
  %2104 = vmatpush.bf16.msra.mxu0 0
  %2105 = vmatpush.bf16.msra.mxu0 0
  %2106 = vmatpush.bf16.msra.mxu0 0
  %2107 = vmatpush.bf16.msra.mxu0 %v2029
  %2108 = vmatpush.bf16.msra.mxu0 %v2013
  %2109 = vmatmul.bf16.gmra.mxu0 %v2077
  %v2110 = vpop.f32.mrf.mxu0
  %v2111 = vadd.f32 %v1885, %v2110
  %v2112 = vpop.f32.mrf.mxu0
  %v2113 = vadd.f32 %v1885, %v2112
  %2114 = vmatmul.bf16.gmra.mxu0 %v2080
  %v2115 = vpop.f32.mrf.mxu0
  %v2116 = vadd.f32 %v1885, %v2115
  %v2117 = vpop.f32.mrf.mxu0
  %v2118 = vadd.f32 %v1885, %v2117
  %2119 = vdwg.mxu0
  %2120 = vmatpush.bf16.msra.mxu0 0
  %2121 = vmatpush.bf16.msra.mxu0 0
  %2122 = vmatpush.bf16.msra.mxu0 0
  %2123 = vmatpush.bf16.msra.mxu0 0
  %2124 = vmatpush.bf16.msra.mxu0 0
  %2125 = vmatpush.bf16.msra.mxu0 0
  %2126 = vmatpush.bf16.msra.mxu0 %v2030
  %2127 = vmatpush.bf16.msra.mxu0 %v2014
  %2128 = vmatmul.bf16.gmra.mxu0 %v2077
  %v2129 = vpop.f32.mrf.mxu0
  %v2130 = vadd.f32 %v1886, %v2129
  %v2131 = vpop.f32.mrf.mxu0
  %v2132 = vadd.f32 %v1886, %v2131
  %2133 = vmatmul.bf16.gmra.mxu0 %v2080
  %v2134 = vpop.f32.mrf.mxu0
  %v2135 = vadd.f32 %v1886, %v2134
  %v2136 = vpop.f32.mrf.mxu0
  %v2137 = vadd.f32 %v1886, %v2136
  %2138 = vdwg.mxu0
  %2139 = vmatpush.bf16.msra.mxu0 0
  %2140 = vmatpush.bf16.msra.mxu0 0
  %2141 = vmatpush.bf16.msra.mxu0 0
  %2142 = vmatpush.bf16.msra.mxu0 0
  %2143 = vmatpush.bf16.msra.mxu0 0
  %2144 = vmatpush.bf16.msra.mxu0 0
  %2145 = vmatpush.bf16.msra.mxu0 %v2031
  %2146 = vmatpush.bf16.msra.mxu0 %v2015
  %2147 = vmatmul.bf16.gmra.mxu0 %v2077
  %v2148 = vpop.f32.mrf.mxu0
  %v2149 = vadd.f32 %v1887, %v2148
  %v2150 = vpop.f32.mrf.mxu0
  %v2151 = vadd.f32 %v1887, %v2150
  %2152 = vmatmul.bf16.gmra.mxu0 %v2080
  %v2153 = vpop.f32.mrf.mxu0
  %v2154 = vadd.f32 %v1887, %v2153
  %v2155 = vpop.f32.mrf.mxu0
  %v2156 = vadd.f32 %v1887, %v2155
  %2157 = vdwg.mxu0
  %2158 = vmatpush.bf16.msra.mxu0 0
  %2159 = vmatpush.bf16.msra.mxu0 0
  %2160 = vmatpush.bf16.msra.mxu0 0
  %2161 = vmatpush.bf16.msra.mxu0 0
  %2162 = vmatpush.bf16.msra.mxu0 0
  %2163 = vmatpush.bf16.msra.mxu0 0
  %2164 = vmatpush.bf16.msra.mxu0 %v2032
  %2165 = vmatpush.bf16.msra.mxu0 %v2016
  %2166 = vmatmul.bf16.gmra.mxu0 %v2077
  %v2167 = vpop.f32.mrf.mxu0
  %v2168 = vadd.f32 %v1888, %v2167
  %v2169 = vpop.f32.mrf.mxu0
  %v2170 = vadd.f32 %v1888, %v2169
  %2171 = vmatmul.bf16.gmra.mxu0 %v2080
  %v2172 = vpop.f32.mrf.mxu0
  %v2173 = vadd.f32 %v1888, %v2172
  %v2174 = vpop.f32.mrf.mxu0
  %v2175 = vadd.f32 %v1888, %v2174
  %2176 = vdwg.mxu0
  %2177 = vmatpush.bf16.msra.mxu0 0
  %2178 = vmatpush.bf16.msra.mxu0 0
  %2179 = vmatpush.bf16.msra.mxu0 0
  %2180 = vmatpush.bf16.msra.mxu0 0
  %2181 = vmatpush.bf16.msra.mxu0 0
  %2182 = vmatpush.bf16.msra.mxu0 0
  %2183 = vmatpush.bf16.msra.mxu0 %v2033
  %2184 = vmatpush.bf16.msra.mxu0 %v2017
  %2185 = vmatmul.bf16.gmra.mxu0 %v2077
  %v2186 = vpop.f32.mrf.mxu0
  %v2187 = vadd.f32 %v1889, %v2186
  %v2188 = vpop.f32.mrf.mxu0
  %v2189 = vadd.f32 %v1889, %v2188
  %2190 = vmatmul.bf16.gmra.mxu0 %v2080
  %v2191 = vpop.f32.mrf.mxu0
  %v2192 = vadd.f32 %v1889, %v2191
  %v2193 = vpop.f32.mrf.mxu0
  %v2194 = vadd.f32 %v1889, %v2193
  %2195 = vdwg.mxu0
  %2196 = vmatpush.bf16.msra.mxu0 0
  %2197 = vmatpush.bf16.msra.mxu0 0
  %2198 = vmatpush.bf16.msra.mxu0 0
  %2199 = vmatpush.bf16.msra.mxu0 0
  %2200 = vmatpush.bf16.msra.mxu0 0
  %2201 = vmatpush.bf16.msra.mxu0 0
  %2202 = vmatpush.bf16.msra.mxu0 %v2034
  %2203 = vmatpush.bf16.msra.mxu0 %v2018
  %2204 = vmatmul.bf16.gmra.mxu0 %v2077
  %v2205 = vpop.f32.mrf.mxu0
  %v2206 = vadd.f32 %v1890, %v2205
  %v2207 = vpop.f32.mrf.mxu0
  %v2208 = vadd.f32 %v1890, %v2207
  %2209 = vmatmul.bf16.gmra.mxu0 %v2080
  %v2210 = vpop.f32.mrf.mxu0
  %v2211 = vadd.f32 %v1890, %v2210
  %v2212 = vpop.f32.mrf.mxu0
  %v2213 = vadd.f32 %v1890, %v2212
  %2214 = vdwg.mxu0
  %2215 = vmatpush.bf16.msra.mxu0 0
  %2216 = vmatpush.bf16.msra.mxu0 0
  %2217 = vmatpush.bf16.msra.mxu0 0
  %2218 = vmatpush.bf16.msra.mxu0 0
  %2219 = vmatpush.bf16.msra.mxu0 0
  %2220 = vmatpush.bf16.msra.mxu0 0
  %2221 = vmatpush.bf16.msra.mxu0 %v2035
  %2222 = vmatpush.bf16.msra.mxu0 %v2019
  %2223 = vmatmul.bf16.gmra.mxu0 %v2077
  %v2224 = vpop.f32.mrf.mxu0
  %v2225 = vadd.f32 %v1891, %v2224
  %v2226 = vpop.f32.mrf.mxu0
  %v2227 = vadd.f32 %v1891, %v2226
  %2228 = vmatmul.bf16.gmra.mxu0 %v2080
  %v2229 = vpop.f32.mrf.mxu0
  %v2230 = vadd.f32 %v1891, %v2229
  %v2231 = vpop.f32.mrf.mxu0
  %v2232 = vadd.f32 %v1891, %v2231
  %2233 = vdwg.mxu0
  %2234 = vmatpush.bf16.msra.mxu0 0
  %2235 = vmatpush.bf16.msra.mxu0 0
  %2236 = vmatpush.bf16.msra.mxu0 0
  %2237 = vmatpush.bf16.msra.mxu0 0
  %2238 = vmatpush.bf16.msra.mxu0 0
  %2239 = vmatpush.bf16.msra.mxu0 0
  %2240 = vmatpush.bf16.msra.mxu0 %v2036
  %2241 = vmatpush.bf16.msra.mxu0 %v2020
  %2242 = vmatmul.bf16.gmra.mxu0 %v2077
  %v2243 = vpop.f32.mrf.mxu0
  %v2244 = vadd.f32 %v1892, %v2243
  %v2245 = vpop.f32.mrf.mxu0
  %v2246 = vadd.f32 %v1892, %v2245
  %2247 = vmatmul.bf16.gmra.mxu0 %v2080
  %v2248 = vpop.f32.mrf.mxu0
  %v2249 = vadd.f32 %v1892, %v2248
  %v2250 = vpop.f32.mrf.mxu0
  %v2251 = vadd.f32 %v1892, %v2250
  %2252 = vdwg.mxu0
  %2253 = vmatpush.bf16.msra.mxu0 0
  %2254 = vmatpush.bf16.msra.mxu0 0
  %2255 = vmatpush.bf16.msra.mxu0 0
  %2256 = vmatpush.bf16.msra.mxu0 0
  %2257 = vmatpush.bf16.msra.mxu0 0
  %2258 = vmatpush.bf16.msra.mxu0 0
  %2259 = vmatpush.bf16.msra.mxu0 %v2037
  %2260 = vmatpush.bf16.msra.mxu0 %v2021
  %2261 = vmatmul.bf16.gmra.mxu0 %v2077
  %v2262 = vpop.f32.mrf.mxu0
  %v2263 = vadd.f32 %v1893, %v2262
  %v2264 = vpop.f32.mrf.mxu0
  %v2265 = vadd.f32 %v1893, %v2264
  %2266 = vmatmul.bf16.gmra.mxu0 %v2080
  %v2267 = vpop.f32.mrf.mxu0
  %v2268 = vadd.f32 %v1893, %v2267
  %v2269 = vpop.f32.mrf.mxu0
  %v2270 = vadd.f32 %v1893, %v2269
  %2271 = vdwg.mxu0
  %2272 = vmatpush.bf16.msra.mxu0 0
  %2273 = vmatpush.bf16.msra.mxu0 0
  %2274 = vmatpush.bf16.msra.mxu0 0
  %2275 = vmatpush.bf16.msra.mxu0 0
  %2276 = vmatpush.bf16.msra.mxu0 0
  %2277 = vmatpush.bf16.msra.mxu0 0
  %2278 = vmatpush.bf16.msra.mxu0 %v2038
  %2279 = vmatpush.bf16.msra.mxu0 %v2022
  %2280 = vmatmul.bf16.gmra.mxu0 %v2077
  %v2281 = vpop.f32.mrf.mxu0
  %v2282 = vadd.f32 %v1894, %v2281
  %v2283 = vpop.f32.mrf.mxu0
  %v2284 = vadd.f32 %v1894, %v2283
  %2285 = vmatmul.bf16.gmra.mxu0 %v2080
  %v2286 = vpop.f32.mrf.mxu0
  %v2287 = vadd.f32 %v1894, %v2286
  %v2288 = vpop.f32.mrf.mxu0
  %v2289 = vadd.f32 %v1894, %v2288
  %2290 = vdwg.mxu0
  %2291 = vmatpush.bf16.msra.mxu0 0
  %2292 = vmatpush.bf16.msra.mxu0 0
  %2293 = vmatpush.bf16.msra.mxu0 0
  %2294 = vmatpush.bf16.msra.mxu0 0
  %2295 = vmatpush.bf16.msra.mxu0 0
  %2296 = vmatpush.bf16.msra.mxu0 0
  %2297 = vmatpush.bf16.msra.mxu0 %v2039
  %2298 = vmatpush.bf16.msra.mxu0 %v2023
  %2299 = vmatmul.bf16.gmra.mxu0 %v2077
  %v2300 = vpop.f32.mrf.mxu0
  %v2301 = vadd.f32 %v1895, %v2300
  %v2302 = vpop.f32.mrf.mxu0
  %v2303 = vadd.f32 %v1895, %v2302
  %2304 = vmatmul.bf16.gmra.mxu0 %v2080
  %v2305 = vpop.f32.mrf.mxu0
  %v2306 = vadd.f32 %v1895, %v2305
  %v2307 = vpop.f32.mrf.mxu0
  %v2308 = vadd.f32 %v1895, %v2307
  %2309 = vdwg.mxu0
  %2310 = vmatpush.bf16.msra.mxu0 0
  %2311 = vmatpush.bf16.msra.mxu0 0
  %2312 = vmatpush.bf16.msra.mxu0 0
  %2313 = vmatpush.bf16.msra.mxu0 0
  %2314 = vmatpush.bf16.msra.mxu0 0
  %2315 = vmatpush.bf16.msra.mxu0 0
  %2316 = vmatpush.bf16.msra.mxu0 %v2040
  %2317 = vmatpush.bf16.msra.mxu0 %v2024
  %2318 = vmatmul.bf16.gmra.mxu0 %v2077
  %v2319 = vpop.f32.mrf.mxu0
  %v2320 = vadd.f32 %v1896, %v2319
  %v2321 = vpop.f32.mrf.mxu0
  %v2322 = vadd.f32 %v1896, %v2321
  %2323 = vmatmul.bf16.gmra.mxu0 %v2080
  %v2324 = vpop.f32.mrf.mxu0
  %v2325 = vadd.f32 %v1896, %v2324
  %v2326 = vpop.f32.mrf.mxu0
  %v2327 = vadd.f32 %v1896, %v2326
  %2328 = vdwg.mxu0
  %2329 = vmatpush.bf16.msra.mxu0 0
  %2330 = vmatpush.bf16.msra.mxu0 0
  %2331 = vmatpush.bf16.msra.mxu0 0
  %2332 = vmatpush.bf16.msra.mxu0 0
  %2333 = vmatpush.bf16.msra.mxu0 0
  %2334 = vmatpush.bf16.msra.mxu0 0
  %2335 = vmatpush.bf16.msra.mxu0 %v2041
  %2336 = vmatpush.bf16.msra.mxu0 %v2025
  %2337 = vmatmul.bf16.gmra.mxu0 %v2077
  %v2338 = vpop.f32.mrf.mxu0
  %v2339 = vadd.f32 %v1897, %v2338
  %v2340 = vpop.f32.mrf.mxu0
  %v2341 = vadd.f32 %v1897, %v2340
  %2342 = vmatmul.bf16.gmra.mxu0 %v2080
  %v2343 = vpop.f32.mrf.mxu0
  %v2344 = vadd.f32 %v1897, %v2343
  %v2345 = vpop.f32.mrf.mxu0
  %v2346 = vadd.f32 %v1897, %v2345
  %2347 = vdwg.mxu0
  %2348 = vmatpush.bf16.msra.mxu0 0
  %2349 = vmatpush.bf16.msra.mxu0 0
  %2350 = vmatpush.bf16.msra.mxu0 0
  %2351 = vmatpush.bf16.msra.mxu0 0
  %2352 = vmatpush.bf16.msra.mxu0 0
  %2353 = vmatpush.bf16.msra.mxu0 0
  %2354 = vmatpush.bf16.msra.mxu0 %v2042
  %2355 = vmatpush.bf16.msra.mxu0 %v2026
  %2356 = vmatmul.bf16.gmra.mxu0 %v2077
  %v2357 = vpop.f32.mrf.mxu0
  %v2358 = vadd.f32 %v1898, %v2357
  %v2359 = vpop.f32.mrf.mxu0
  %v2360 = vadd.f32 %v1898, %v2359
  %2361 = vmatmul.bf16.gmra.mxu0 %v2080
  %v2362 = vpop.f32.mrf.mxu0
  %v2363 = vadd.f32 %v1898, %v2362
  %v2364 = vpop.f32.mrf.mxu0
  %v2365 = vadd.f32 %v1898, %v2364
  %2366 = vdwg.mxu0
  %2367 = vmatpush.bf16.msra.mxu0 0
  %2368 = vmatpush.bf16.msra.mxu0 0
  %2369 = vmatpush.bf16.msra.mxu0 0
  %2370 = vmatpush.bf16.msra.mxu0 0
  %2371 = vmatpush.bf16.msra.mxu0 0
  %2372 = vmatpush.bf16.msra.mxu0 0
  %2373 = vmatpush.bf16.msra.mxu0 %v2043
  %2374 = vmatpush.bf16.msra.mxu0 %v2027
  %2375 = vmatmul.bf16.gmra.mxu0 %v2077
  %v2376 = vpop.f32.mrf.mxu0
  %v2377 = vadd.f32 %v1899, %v2376
  %v2378 = vpop.f32.mrf.mxu0
  %v2379 = vadd.f32 %v1899, %v2378
  %2380 = vmatmul.bf16.gmra.mxu0 %v2080
  %v2381 = vpop.f32.mrf.mxu0
  %v2382 = vadd.f32 %v1899, %v2381
  %v2383 = vpop.f32.mrf.mxu0
  %v2384 = vadd.f32 %v1899, %v2383
  %2385 = vdwg.mxu0
  %v2386 = vmax.f32 %v2092, 0.0
  %v2387 = vmax.f32 %v2111, 0.0
  %v2388 = vmax.f32 %v2130, 0.0
  %v2389 = vmax.f32 %v2149, 0.0
  %v2390 = vmax.f32 %v2168, 0.0
  %v2391 = vmax.f32 %v2187, 0.0
  %v2392 = vmax.f32 %v2206, 0.0
  %v2393 = vmax.f32 %v2225, 0.0
  %v2394 = vmax.f32 %v2244, 0.0
  %v2395 = vmax.f32 %v2263, 0.0
  %v2396 = vmax.f32 %v2282, 0.0
  %v2397 = vmax.f32 %v2301, 0.0
  %v2398 = vmax.f32 %v2320, 0.0
  %v2399 = vmax.f32 %v2339, 0.0
  %v2400 = vmax.f32 %v2358, 0.0
  %v2401 = vmax.f32 %v2377, 0.0
  %v2402 = vmax.f32 %v2094, 0.0
  %v2403 = vmax.f32 %v2113, 0.0
  %v2404 = vmax.f32 %v2132, 0.0
  %v2405 = vmax.f32 %v2151, 0.0
  %v2406 = vmax.f32 %v2170, 0.0
  %v2407 = vmax.f32 %v2189, 0.0
  %v2408 = vmax.f32 %v2208, 0.0
  %v2409 = vmax.f32 %v2227, 0.0
  %v2410 = vmax.f32 %v2246, 0.0
  %v2411 = vmax.f32 %v2265, 0.0
  %v2412 = vmax.f32 %v2284, 0.0
  %v2413 = vmax.f32 %v2303, 0.0
  %v2414 = vmax.f32 %v2322, 0.0
  %v2415 = vmax.f32 %v2341, 0.0
  %v2416 = vmax.f32 %v2360, 0.0
  %v2417 = vmax.f32 %v2379, 0.0
  %v2418 = vmax.f32 %v2097, 0.0
  %v2419 = vmax.f32 %v2116, 0.0
  %v2420 = vmax.f32 %v2135, 0.0
  %v2421 = vmax.f32 %v2154, 0.0
  %v2422 = vmax.f32 %v2173, 0.0
  %v2423 = vmax.f32 %v2192, 0.0
  %v2424 = vmax.f32 %v2211, 0.0
  %v2425 = vmax.f32 %v2230, 0.0
  %v2426 = vmax.f32 %v2249, 0.0
  %v2427 = vmax.f32 %v2268, 0.0
  %v2428 = vmax.f32 %v2287, 0.0
  %v2429 = vmax.f32 %v2306, 0.0
  %v2430 = vmax.f32 %v2325, 0.0
  %v2431 = vmax.f32 %v2344, 0.0
  %v2432 = vmax.f32 %v2363, 0.0
  %v2433 = vmax.f32 %v2382, 0.0
  %v2434 = vmax.f32 %v2099, 0.0
  %v2435 = vmax.f32 %v2118, 0.0
  %v2436 = vmax.f32 %v2137, 0.0
  %v2437 = vmax.f32 %v2156, 0.0
  %v2438 = vmax.f32 %v2175, 0.0
  %v2439 = vmax.f32 %v2194, 0.0
  %v2440 = vmax.f32 %v2213, 0.0
  %v2441 = vmax.f32 %v2232, 0.0
  %v2442 = vmax.f32 %v2251, 0.0
  %v2443 = vmax.f32 %v2270, 0.0
  %v2444 = vmax.f32 %v2289, 0.0
  %v2445 = vmax.f32 %v2308, 0.0
  %v2446 = vmax.f32 %v2327, 0.0
  %v2447 = vmax.f32 %v2346, 0.0
  %v2448 = vmax.f32 %v2365, 0.0
  %v2449 = vmax.f32 %v2384, 0.0
  %v2450 = vld [vmem:[%s20] sm:$0xf]
  %v2451 = vld [vmem:[%s20 + $0x4] sm:$0xf]
  %v2452 = vld [vmem:[%s20 + $0x8] sm:$0xf]
  %v2453 = vld [vmem:[%s20 + $0xc] sm:$0xf]
  %v2454 = vld [vmem:[%s20 + $0x10] sm:$0xf]
  %v2455 = vld [vmem:[%s20 + $0x14] sm:$0xf]
  %v2456 = vld [vmem:[%s20 + $0x18] sm:$0xf]
  %v2457 = vld [vmem:[%s20 + $0x1c] sm:$0xf]
  %v2458 = vld [vmem:[%s20 + $0x20] sm:$0xf]
  %v2459 = vld [vmem:[%s20 + $0x24] sm:$0xf]
  %v2460 = vld [vmem:[%s20 + $0x28] sm:$0xf]
  %v2461 = vld [vmem:[%s20 + $0x2c] sm:$0xf]
  %v2462 = vld [vmem:[%s20 + $0x30] sm:$0xf]
  %v2463 = vld [vmem:[%s20 + $0x34] sm:$0xf]
  %v2464 = vld [vmem:[%s20 + $0x38] sm:$0xf]
  %v2465 = vld [vmem:[%s20 + $0x3c] sm:$0xf]
  %v2466 = vld [vmem:[%s20 + $0x40] sm:$0xf]
  %v2467 = vld [vmem:[%s20 + $0x44] sm:$0xf]
  %v2468 = vld [vmem:[%s20 + $0x48] sm:$0xf]
  %v2469 = vld [vmem:[%s20 + $0x4c] sm:$0xf]
  %v2470 = vld [vmem:[%s20 + $0x50] sm:$0xf]
  %v2471 = vld [vmem:[%s20 + $0x54] sm:$0xf]
  %v2472 = vld [vmem:[%s20 + $0x58] sm:$0xf]
  %v2473 = vld [vmem:[%s20 + $0x5c] sm:$0xf]
  %v2474 = vld [vmem:[%s20 + $0x60] sm:$0xf]
  %v2475 = vld [vmem:[%s20 + $0x64] sm:$0xf]
  %v2476 = vld [vmem:[%s20 + $0x68] sm:$0xf]
  %v2477 = vld [vmem:[%s20 + $0x6c] sm:$0xf]
  %v2478 = vld [vmem:[%s20 + $0x70] sm:$0xf]
  %v2479 = vld [vmem:[%s20 + $0x74] sm:$0xf]
  %v2480 = vld [vmem:[%s20 + $0x78] sm:$0xf]
  %v2481 = vld [vmem:[%s20 + $0x7c] sm:$0xf]
  %v2482 = vld [vmem:[%s20 + $0x80] sm:$0xf]
  %v2483 = vld [vmem:[%s20 + $0x84] sm:$0xf]
  %v2484 = vld [vmem:[%s20 + $0x88] sm:$0xf]
  %v2485 = vld [vmem:[%s20 + $0x8c] sm:$0xf]
  %v2486 = vld [vmem:[%s20 + $0x90] sm:$0xf]
  %v2487 = vld [vmem:[%s20 + $0x94] sm:$0xf]
  %v2488 = vld [vmem:[%s20 + $0x98] sm:$0xf]
  %v2489 = vld [vmem:[%s20 + $0x9c] sm:$0xf]
  %v2490 = vld [vmem:[%s20 + $0xa0] sm:$0xf]
  %v2491 = vld [vmem:[%s20 + $0xa4] sm:$0xf]
  %v2492 = vld [vmem:[%s20 + $0xa8] sm:$0xf]
  %v2493 = vld [vmem:[%s20 + $0xac] sm:$0xf]
  %v2494 = vld [vmem:[%s20 + $0xb0] sm:$0xf]
  %v2495 = vld [vmem:[%s20 + $0xb4] sm:$0xf]
  %v2496 = vld [vmem:[%s20 + $0xb8] sm:$0xf]
  %v2497 = vld [vmem:[%s20 + $0xbc] sm:$0xf]
  %v2498 = vld [vmem:[%s20 + $0xc0] sm:$0xf]
  %v2499 = vld [vmem:[%s20 + $0xc4] sm:$0xf]
  %v2500 = vld [vmem:[%s20 + $0xc8] sm:$0xf]
  %v2501 = vld [vmem:[%s20 + $0xcc] sm:$0xf]
  %v2502 = vld [vmem:[%s20 + $0xd0] sm:$0xf]
  %v2503 = vld [vmem:[%s20 + $0xd4] sm:$0xf]
  %v2504 = vld [vmem:[%s20 + $0xd8] sm:$0xf]
  %v2505 = vld [vmem:[%s20 + $0xdc] sm:$0xf]
  %v2506 = vld [vmem:[%s20 + $0xe0] sm:$0xf]
  %v2507 = vld [vmem:[%s20 + $0xe4] sm:$0xf]
  %v2508 = vld [vmem:[%s20 + $0xe8] sm:$0xf]
  %v2509 = vld [vmem:[%s20 + $0xec] sm:$0xf]
  %v2510 = vld [vmem:[%s20 + $0xf0] sm:$0xf]
  %v2511 = vld [vmem:[%s20 + $0xf4] sm:$0xf]
  %v2512 = vld [vmem:[%s20 + $0xf8] sm:$0xf]
  %v2513 = vld [vmem:[%s20 + $0xfc] sm:$0xf]
  %v2514 = vld [vmem:[%s20 + $0x100] sm:$0xf]
  %v2515 = vld [vmem:[%s20 + $0x104] sm:$0xf]
  %v2516 = vld [vmem:[%s20 + $0x108] sm:$0xf]
  %v2517 = vld [vmem:[%s20 + $0x10c] sm:$0xf]
  %v2518 = vld [vmem:[%s20 + $0x110] sm:$0xf]
  %v2519 = vld [vmem:[%s20 + $0x114] sm:$0xf]
  %v2520 = vld [vmem:[%s20 + $0x118] sm:$0xf]
  %v2521 = vld [vmem:[%s20 + $0x11c] sm:$0xf]
  %v2522 = vld [vmem:[%s20 + $0x120] sm:$0xf]
  %v2523 = vld [vmem:[%s20 + $0x124] sm:$0xf]
  %v2524 = vld [vmem:[%s20 + $0x128] sm:$0xf]
  %v2525 = vld [vmem:[%s20 + $0x12c] sm:$0xf]
  %v2526 = vld [vmem:[%s20 + $0x130] sm:$0xf]
  %v2527 = vld [vmem:[%s20 + $0x134] sm:$0xf]
  %v2528 = vld [vmem:[%s20 + $0x138] sm:$0xf]
  %v2529 = vld [vmem:[%s20 + $0x13c] sm:$0xf]
  %v2530 = vld [vmem:[%s20 + $0x140] sm:$0xf]
  %v2531 = vld [vmem:[%s20 + $0x144] sm:$0xf]
  %v2532 = vld [vmem:[%s20 + $0x148] sm:$0xf]
  %v2533 = vld [vmem:[%s20 + $0x14c] sm:$0xf]
  %v2534 = vld [vmem:[%s20 + $0x150] sm:$0xf]
  %v2535 = vld [vmem:[%s20 + $0x154] sm:$0xf]
  %v2536 = vld [vmem:[%s20 + $0x158] sm:$0xf]
  %v2537 = vld [vmem:[%s20 + $0x15c] sm:$0xf]
  %v2538 = vld [vmem:[%s20 + $0x160] sm:$0xf]
  %v2539 = vld [vmem:[%s20 + $0x164] sm:$0xf]
  %v2540 = vld [vmem:[%s20 + $0x168] sm:$0xf]
  %v2541 = vld [vmem:[%s20 + $0x16c] sm:$0xf]
  %v2542 = vld [vmem:[%s20 + $0x170] sm:$0xf]
  %v2543 = vld [vmem:[%s20 + $0x174] sm:$0xf]
  %v2544 = vld [vmem:[%s20 + $0x178] sm:$0xf]
  %v2545 = vld [vmem:[%s20 + $0x17c] sm:$0xf]
  %v2546 = vld [vmem:[%s20 + $0x180] sm:$0xf]
  %v2547 = vld [vmem:[%s20 + $0x184] sm:$0xf]
  %v2548 = vld [vmem:[%s20 + $0x188] sm:$0xf]
  %v2549 = vld [vmem:[%s20 + $0x18c] sm:$0xf]
  %v2550 = vld [vmem:[%s20 + $0x190] sm:$0xf]
  %v2551 = vld [vmem:[%s20 + $0x194] sm:$0xf]
  %v2552 = vld [vmem:[%s20 + $0x198] sm:$0xf]
  %v2553 = vld [vmem:[%s20 + $0x19c] sm:$0xf]
  %v2554 = vld [vmem:[%s20 + $0x1a0] sm:$0xf]
  %v2555 = vld [vmem:[%s20 + $0x1a4] sm:$0xf]
  %v2556 = vld [vmem:[%s20 + $0x1a8] sm:$0xf]
  %v2557 = vld [vmem:[%s20 + $0x1ac] sm:$0xf]
  %v2558 = vld [vmem:[%s20 + $0x1b0] sm:$0xf]
  %v2559 = vld [vmem:[%s20 + $0x1b4] sm:$0xf]
  %v2560 = vld [vmem:[%s20 + $0x1b8] sm:$0xf]
  %v2561 = vld [vmem:[%s20 + $0x1bc] sm:$0xf]
  %v2562 = vld [vmem:[%s20 + $0x1c0] sm:$0xf]
  %v2563 = vld [vmem:[%s20 + $0x1c4] sm:$0xf]
  %v2564 = vld [vmem:[%s20 + $0x1c8] sm:$0xf]
  %v2565 = vld [vmem:[%s20 + $0x1cc] sm:$0xf]
  %v2566 = vld [vmem:[%s20 + $0x1d0] sm:$0xf]
  %v2567 = vld [vmem:[%s20 + $0x1d4] sm:$0xf]
  %v2568 = vld [vmem:[%s20 + $0x1d8] sm:$0xf]
  %v2569 = vld [vmem:[%s20 + $0x1dc] sm:$0xf]
  %v2570 = vld [vmem:[%s20 + $0x1e0] sm:$0xf]
  %v2571 = vld [vmem:[%s20 + $0x1e4] sm:$0xf]
  %v2572 = vld [vmem:[%s20 + $0x1e8] sm:$0xf]
  %v2573 = vld [vmem:[%s20 + $0x1ec] sm:$0xf]
  %v2574 = vld [vmem:[%s20 + $0x1f0] sm:$0xf]
  %v2575 = vld [vmem:[%s20 + $0x1f4] sm:$0xf]
  %v2576 = vld [vmem:[%s20 + $0x1f8] sm:$0xf]
  %v2577 = vld [vmem:[%s20 + $0x1fc] sm:$0xf]
  %v2578 = vld [vmem:[%s20 + $0x200] sm:$0xf]
  %v2579 = vld [vmem:[%s20 + $0x204] sm:$0xf]
  %v2580 = vld [vmem:[%s20 + $0x208] sm:$0xf]
  %v2581 = vld [vmem:[%s20 + $0x20c] sm:$0xf]
  %v2582 = vld [vmem:[%s20 + $0x210] sm:$0xf]
  %v2583 = vld [vmem:[%s20 + $0x214] sm:$0xf]
  %v2584 = vld [vmem:[%s20 + $0x218] sm:$0xf]
  %v2585 = vld [vmem:[%s20 + $0x21c] sm:$0xf]
  %v2586 = vld [vmem:[%s20 + $0x220] sm:$0xf]
  %v2587 = vld [vmem:[%s20 + $0x224] sm:$0xf]
  %v2588 = vld [vmem:[%s20 + $0x228] sm:$0xf]
  %v2589 = vld [vmem:[%s20 + $0x22c] sm:$0xf]
  %v2590 = vld [vmem:[%s20 + $0x230] sm:$0xf]
  %v2591 = vld [vmem:[%s20 + $0x234] sm:$0xf]
  %v2592 = vld [vmem:[%s20 + $0x238] sm:$0xf]
  %v2593 = vld [vmem:[%s20 + $0x23c] sm:$0xf]
  %v2594 = vld [vmem:[%s20 + $0x240] sm:$0xf]
  %v2595 = vld [vmem:[%s20 + $0x244] sm:$0xf]
  %v2596 = vld [vmem:[%s20 + $0x248] sm:$0xf]
  %v2597 = vld [vmem:[%s20 + $0x24c] sm:$0xf]
  %v2598 = vld [vmem:[%s20 + $0x250] sm:$0xf]
  %v2599 = vld [vmem:[%s20 + $0x254] sm:$0xf]
  %v2600 = vld [vmem:[%s20 + $0x258] sm:$0xf]
  %v2601 = vld [vmem:[%s20 + $0x25c] sm:$0xf]
  %v2602 = vld [vmem:[%s20 + $0x260] sm:$0xf]
  %v2603 = vld [vmem:[%s20 + $0x264] sm:$0xf]
  %v2604 = vld [vmem:[%s20 + $0x268] sm:$0xf]
  %v2605 = vld [vmem:[%s20 + $0x26c] sm:$0xf]
  %v2606 = vld [vmem:[%s20 + $0x270] sm:$0xf]
  %v2607 = vld [vmem:[%s20 + $0x274] sm:$0xf]
  %v2608 = vld [vmem:[%s20 + $0x278] sm:$0xf]
  %v2609 = vld [vmem:[%s20 + $0x27c] sm:$0xf]
  %v2610 = vld [vmem:[%s20 + $0x280] sm:$0xf]
  %v2611 = vld [vmem:[%s20 + $0x284] sm:$0xf]
  %v2612 = vld [vmem:[%s20 + $0x288] sm:$0xf]
  %v2613 = vld [vmem:[%s20 + $0x28c] sm:$0xf]
  %v2614 = vld [vmem:[%s20 + $0x290] sm:$0xf]
  %v2615 = vld [vmem:[%s20 + $0x294] sm:$0xf]
  %v2616 = vld [vmem:[%s20 + $0x298] sm:$0xf]
  %v2617 = vld [vmem:[%s20 + $0x29c] sm:$0xf]
  %v2618 = vld [vmem:[%s20 + $0x2a0] sm:$0xf]
  %v2619 = vld [vmem:[%s20 + $0x2a4] sm:$0xf]
  %v2620 = vld [vmem:[%s20 + $0x2a8] sm:$0xf]
  %v2621 = vld [vmem:[%s20 + $0x2ac] sm:$0xf]
  %v2622 = vld [vmem:[%s20 + $0x2b0] sm:$0xf]
  %v2623 = vld [vmem:[%s20 + $0x2b4] sm:$0xf]
  %v2624 = vld [vmem:[%s20 + $0x2b8] sm:$0xf]
  %v2625 = vld [vmem:[%s20 + $0x2bc] sm:$0xf]
  %v2626 = vld [vmem:[%s20 + $0x2c0] sm:$0xf]
  %v2627 = vld [vmem:[%s20 + $0x2c4] sm:$0xf]
  %v2628 = vld [vmem:[%s20 + $0x2c8] sm:$0xf]
  %v2629 = vld [vmem:[%s20 + $0x2cc] sm:$0xf]
  %v2630 = vld [vmem:[%s20 + $0x2d0] sm:$0xf]
  %v2631 = vld [vmem:[%s20 + $0x2d4] sm:$0xf]
  %v2632 = vld [vmem:[%s20 + $0x2d8] sm:$0xf]
  %v2633 = vld [vmem:[%s20 + $0x2dc] sm:$0xf]
  %v2634 = vld [vmem:[%s20 + $0x2e0] sm:$0xf]
  %v2635 = vld [vmem:[%s20 + $0x2e4] sm:$0xf]
  %v2636 = vld [vmem:[%s20 + $0x2e8] sm:$0xf]
  %v2637 = vld [vmem:[%s20 + $0x2ec] sm:$0xf]
  %v2638 = vld [vmem:[%s20 + $0x2f0] sm:$0xf]
  %v2639 = vld [vmem:[%s20 + $0x2f4] sm:$0xf]
  %v2640 = vld [vmem:[%s20 + $0x2f8] sm:$0xf]
  %v2641 = vld [vmem:[%s20 + $0x2fc] sm:$0xf]
  %v2642 = vld [vmem:[%s20 + $0x300] sm:$0xf]
  %v2643 = vld [vmem:[%s20 + $0x304] sm:$0xf]
  %v2644 = vld [vmem:[%s20 + $0x308] sm:$0xf]
  %v2645 = vld [vmem:[%s20 + $0x30c] sm:$0xf]
  %v2646 = vld [vmem:[%s20 + $0x310] sm:$0xf]
  %v2647 = vld [vmem:[%s20 + $0x314] sm:$0xf]
  %v2648 = vld [vmem:[%s20 + $0x318] sm:$0xf]
  %v2649 = vld [vmem:[%s20 + $0x31c] sm:$0xf]
  %v2650 = vld [vmem:[%s20 + $0x320] sm:$0xf]
  %v2651 = vld [vmem:[%s20 + $0x324] sm:$0xf]
  %v2652 = vld [vmem:[%s20 + $0x328] sm:$0xf]
  %v2653 = vld [vmem:[%s20 + $0x32c] sm:$0xf]
  %v2654 = vld [vmem:[%s20 + $0x330] sm:$0xf]
  %v2655 = vld [vmem:[%s20 + $0x334] sm:$0xf]
  %v2656 = vld [vmem:[%s20 + $0x338] sm:$0xf]
  %v2657 = vld [vmem:[%s20 + $0x33c] sm:$0xf]
  %v2658 = vld [vmem:[%s20 + $0x340] sm:$0xf]
  %v2659 = vld [vmem:[%s20 + $0x344] sm:$0xf]
  %v2660 = vld [vmem:[%s20 + $0x348] sm:$0xf]
  %v2661 = vld [vmem:[%s20 + $0x34c] sm:$0xf]
  %v2662 = vld [vmem:[%s20 + $0x350] sm:$0xf]
  %v2663 = vld [vmem:[%s20 + $0x354] sm:$0xf]
  %v2664 = vld [vmem:[%s20 + $0x358] sm:$0xf]
  %v2665 = vld [vmem:[%s20 + $0x35c] sm:$0xf]
  %v2666 = vld [vmem:[%s20 + $0x360] sm:$0xf]
  %v2667 = vld [vmem:[%s20 + $0x364] sm:$0xf]
  %v2668 = vld [vmem:[%s20 + $0x368] sm:$0xf]
  %v2669 = vld [vmem:[%s20 + $0x36c] sm:$0xf]
  %v2670 = vld [vmem:[%s20 + $0x370] sm:$0xf]
  %v2671 = vld [vmem:[%s20 + $0x374] sm:$0xf]
  %v2672 = vld [vmem:[%s20 + $0x378] sm:$0xf]
  %v2673 = vld [vmem:[%s20 + $0x37c] sm:$0xf]
  %v2674 = vld [vmem:[%s20 + $0x380] sm:$0xf]
  %v2675 = vld [vmem:[%s20 + $0x384] sm:$0xf]
  %v2676 = vld [vmem:[%s20 + $0x388] sm:$0xf]
  %v2677 = vld [vmem:[%s20 + $0x38c] sm:$0xf]
  %v2678 = vld [vmem:[%s20 + $0x390] sm:$0xf]
  %v2679 = vld [vmem:[%s20 + $0x394] sm:$0xf]
  %v2680 = vld [vmem:[%s20 + $0x398] sm:$0xf]
  %v2681 = vld [vmem:[%s20 + $0x39c] sm:$0xf]
  %v2682 = vld [vmem:[%s20 + $0x3a0] sm:$0xf]
  %v2683 = vld [vmem:[%s20 + $0x3a4] sm:$0xf]
  %v2684 = vld [vmem:[%s20 + $0x3a8] sm:$0xf]
  %v2685 = vld [vmem:[%s20 + $0x3ac] sm:$0xf]
  %v2686 = vld [vmem:[%s20 + $0x3b0] sm:$0xf]
  %v2687 = vld [vmem:[%s20 + $0x3b4] sm:$0xf]
  %v2688 = vld [vmem:[%s20 + $0x3b8] sm:$0xf]
  %v2689 = vld [vmem:[%s20 + $0x3bc] sm:$0xf]
  %v2690 = vld [vmem:[%s20 + $0x3c0] sm:$0xf]
  %v2691 = vld [vmem:[%s20 + $0x3c4] sm:$0xf]
  %v2692 = vld [vmem:[%s20 + $0x3c8] sm:$0xf]
  %v2693 = vld [vmem:[%s20 + $0x3cc] sm:$0xf]
  %v2694 = vld [vmem:[%s20 + $0x3d0] sm:$0xf]
  %v2695 = vld [vmem:[%s20 + $0x3d4] sm:$0xf]
  %v2696 = vld [vmem:[%s20 + $0x3d8] sm:$0xf]
  %v2697 = vld [vmem:[%s20 + $0x3dc] sm:$0xf]
  %v2698 = vld [vmem:[%s20 + $0x3e0] sm:$0xf]
  %v2699 = vld [vmem:[%s20 + $0x3e4] sm:$0xf]
  %v2700 = vld [vmem:[%s20 + $0x3e8] sm:$0xf]
  %v2701 = vld [vmem:[%s20 + $0x3ec] sm:$0xf]
  %v2702 = vld [vmem:[%s20 + $0x3f0] sm:$0xf]
  %v2703 = vld [vmem:[%s20 + $0x3f4] sm:$0xf]
  %v2704 = vld [vmem:[%s20 + $0x3f8] sm:$0xf]
  %v2705 = vld [vmem:[%s20 + $0x3fc] sm:$0xf]
  %v2706 = vpack.c.bf16 %v2402, %v2386
  %v2707 = vpack.c.bf16 %v2403, %v2387
  %v2708 = vpack.c.bf16 %v2404, %v2388
  %v2709 = vpack.c.bf16 %v2405, %v2389
  %v2710 = vpack.c.bf16 %v2406, %v2390
  %v2711 = vpack.c.bf16 %v2407, %v2391
  %v2712 = vpack.c.bf16 %v2408, %v2392
  %v2713 = vpack.c.bf16 %v2409, %v2393
  %v2714 = vpack.c.bf16 %v2410, %v2394
  %v2715 = vpack.c.bf16 %v2411, %v2395
  %v2716 = vpack.c.bf16 %v2412, %v2396
  %v2717 = vpack.c.bf16 %v2413, %v2397
  %v2718 = vpack.c.bf16 %v2414, %v2398
  %v2719 = vpack.c.bf16 %v2415, %v2399
  %v2720 = vpack.c.bf16 %v2416, %v2400
  %v2721 = vpack.c.bf16 %v2417, %v2401
  %v2722 = vpack.c.bf16 %v2434, %v2418
  %v2723 = vpack.c.bf16 %v2435, %v2419
  %v2724 = vpack.c.bf16 %v2436, %v2420
  %v2725 = vpack.c.bf16 %v2437, %v2421
  %v2726 = vpack.c.bf16 %v2438, %v2422
  %v2727 = vpack.c.bf16 %v2439, %v2423
  %v2728 = vpack.c.bf16 %v2440, %v2424
  %v2729 = vpack.c.bf16 %v2441, %v2425
  %v2730 = vpack.c.bf16 %v2442, %v2426
  %v2731 = vpack.c.bf16 %v2443, %v2427
  %v2732 = vpack.c.bf16 %v2444, %v2428
  %v2733 = vpack.c.bf16 %v2445, %v2429
  %v2734 = vpack.c.bf16 %v2446, %v2430
  %v2735 = vpack.c.bf16 %v2447, %v2431
  %v2736 = vpack.c.bf16 %v2448, %v2432
  %v2737 = vpack.c.bf16 %v2449, %v2433
  %v2738 = vld [vmem:[%s21] sm:$0x1]
  %v2740 = vperm.slane %v2738, 0
  %v2998 = vunpack.c.l.b16 %v2450
  %v2999 = vunpack.c.l.b16 %v2451
  %v3000 = vunpack.c.l.b16 %v2452
  %v3001 = vunpack.c.l.b16 %v2453
  %v3002 = vunpack.c.l.b16 %v2454
  %v3003 = vunpack.c.l.b16 %v2455
  %v3004 = vunpack.c.l.b16 %v2456
  %v3005 = vunpack.c.l.b16 %v2457
  %v3006 = vunpack.c.l.b16 %v2458
  %v3007 = vunpack.c.l.b16 %v2459
  %v3008 = vunpack.c.l.b16 %v2460
  %v3009 = vunpack.c.l.b16 %v2461
  %v3010 = vunpack.c.l.b16 %v2462
  %v3011 = vunpack.c.l.b16 %v2463
  %v3012 = vunpack.c.l.b16 %v2464
  %v3013 = vunpack.c.l.b16 %v2465
  %v3014 = vunpack.c.l.b16 %v2466
  %v3015 = vunpack.c.l.b16 %v2467
  %v3016 = vunpack.c.l.b16 %v2468
  %v3017 = vunpack.c.l.b16 %v2469
  %v3018 = vunpack.c.l.b16 %v2470
  %v3019 = vunpack.c.l.b16 %v2471
  %v3020 = vunpack.c.l.b16 %v2472
  %v3021 = vunpack.c.l.b16 %v2473
  %v3022 = vunpack.c.l.b16 %v2474
  %v3023 = vunpack.c.l.b16 %v2475
  %v3024 = vunpack.c.l.b16 %v2476
  %v3025 = vunpack.c.l.b16 %v2477
  %v3026 = vunpack.c.l.b16 %v2478
  %v3027 = vunpack.c.l.b16 %v2479
  %v3028 = vunpack.c.l.b16 %v2480
  %v3029 = vunpack.c.l.b16 %v2481
  %v3030 = vunpack.c.l.b16 %v2482
  %v3031 = vunpack.c.l.b16 %v2483
  %v3032 = vunpack.c.l.b16 %v2484
  %v3033 = vunpack.c.l.b16 %v2485
  %v3034 = vunpack.c.l.b16 %v2486
  %v3035 = vunpack.c.l.b16 %v2487
  %v3036 = vunpack.c.l.b16 %v2488
  %v3037 = vunpack.c.l.b16 %v2489
  %v3038 = vunpack.c.l.b16 %v2490
  %v3039 = vunpack.c.l.b16 %v2491
  %v3040 = vunpack.c.l.b16 %v2492
  %v3041 = vunpack.c.l.b16 %v2493
  %v3042 = vunpack.c.l.b16 %v2494
  %v3043 = vunpack.c.l.b16 %v2495
  %v3044 = vunpack.c.l.b16 %v2496
  %v3045 = vunpack.c.l.b16 %v2497
  %v3046 = vunpack.c.l.b16 %v2498
  %v3047 = vunpack.c.l.b16 %v2499
  %v3048 = vunpack.c.l.b16 %v2500
  %v3049 = vunpack.c.l.b16 %v2501
  %v3050 = vunpack.c.l.b16 %v2502
  %v3051 = vunpack.c.l.b16 %v2503
  %v3052 = vunpack.c.l.b16 %v2504
  %v3053 = vunpack.c.l.b16 %v2505
  %v3054 = vunpack.c.l.b16 %v2506
  %v3055 = vunpack.c.l.b16 %v2507
  %v3056 = vunpack.c.l.b16 %v2508
  %v3057 = vunpack.c.l.b16 %v2509
  %v3058 = vunpack.c.l.b16 %v2510
  %v3059 = vunpack.c.l.b16 %v2511
  %v3060 = vunpack.c.l.b16 %v2512
  %v3061 = vunpack.c.l.b16 %v2513
  %v3062 = vunpack.c.l.b16 %v2514
  %v3063 = vunpack.c.l.b16 %v2515
  %v3064 = vunpack.c.l.b16 %v2516
  %v3065 = vunpack.c.l.b16 %v2517
  %v3066 = vunpack.c.l.b16 %v2518
  %v3067 = vunpack.c.l.b16 %v2519
  %v3068 = vunpack.c.l.b16 %v2520
  %v3069 = vunpack.c.l.b16 %v2521
  %v3070 = vunpack.c.l.b16 %v2522
  %v3071 = vunpack.c.l.b16 %v2523
  %v3072 = vunpack.c.l.b16 %v2524
  %v3073 = vunpack.c.l.b16 %v2525
  %v3074 = vunpack.c.l.b16 %v2526
  %v3075 = vunpack.c.l.b16 %v2527
  %v3076 = vunpack.c.l.b16 %v2528
  %v3077 = vunpack.c.l.b16 %v2529
  %v3078 = vunpack.c.l.b16 %v2530
  %v3079 = vunpack.c.l.b16 %v2531
  %v3080 = vunpack.c.l.b16 %v2532
  %v3081 = vunpack.c.l.b16 %v2533
  %v3082 = vunpack.c.l.b16 %v2534
  %v3083 = vunpack.c.l.b16 %v2535
  %v3084 = vunpack.c.l.b16 %v2536
  %v3085 = vunpack.c.l.b16 %v2537
  %v3086 = vunpack.c.l.b16 %v2538
  %v3087 = vunpack.c.l.b16 %v2539
  %v3088 = vunpack.c.l.b16 %v2540
  %v3089 = vunpack.c.l.b16 %v2541
  %v3090 = vunpack.c.l.b16 %v2542
  %v3091 = vunpack.c.l.b16 %v2543
  %v3092 = vunpack.c.l.b16 %v2544
  %v3093 = vunpack.c.l.b16 %v2545
  %v3094 = vunpack.c.l.b16 %v2546
  %v3095 = vunpack.c.l.b16 %v2547
  %v3096 = vunpack.c.l.b16 %v2548
  %v3097 = vunpack.c.l.b16 %v2549
  %v3098 = vunpack.c.l.b16 %v2550
  %v3099 = vunpack.c.l.b16 %v2551
  %v3100 = vunpack.c.l.b16 %v2552
  %v3101 = vunpack.c.l.b16 %v2553
  %v3102 = vunpack.c.l.b16 %v2554
  %v3103 = vunpack.c.l.b16 %v2555
  %v3104 = vunpack.c.l.b16 %v2556
  %v3105 = vunpack.c.l.b16 %v2557
  %v3106 = vunpack.c.l.b16 %v2558
  %v3107 = vunpack.c.l.b16 %v2559
  %v3108 = vunpack.c.l.b16 %v2560
  %v3109 = vunpack.c.l.b16 %v2561
  %v3110 = vunpack.c.l.b16 %v2562
  %v3111 = vunpack.c.l.b16 %v2563
  %v3112 = vunpack.c.l.b16 %v2564
  %v3113 = vunpack.c.l.b16 %v2565
  %v3114 = vunpack.c.l.b16 %v2566
  %v3115 = vunpack.c.l.b16 %v2567
  %v3116 = vunpack.c.l.b16 %v2568
  %v3117 = vunpack.c.l.b16 %v2569
  %v3118 = vunpack.c.l.b16 %v2570
  %v3119 = vunpack.c.l.b16 %v2571
  %v3120 = vunpack.c.l.b16 %v2572
  %v3121 = vunpack.c.l.b16 %v2573
  %v3122 = vunpack.c.l.b16 %v2574
  %v3123 = vunpack.c.l.b16 %v2575
  %v3124 = vunpack.c.l.b16 %v2576
  %v3125 = vunpack.c.l.b16 %v2577
  %v3126 = vunpack.c.l.b16 %v2578
  %v3127 = vunpack.c.l.b16 %v2579
  %v3128 = vunpack.c.l.b16 %v2580
  %v3129 = vunpack.c.l.b16 %v2581
  %v3130 = vunpack.c.l.b16 %v2582
  %v3131 = vunpack.c.l.b16 %v2583
  %v3132 = vunpack.c.l.b16 %v2584
  %v3133 = vunpack.c.l.b16 %v2585
  %v3134 = vunpack.c.l.b16 %v2586
  %v3135 = vunpack.c.l.b16 %v2587
  %v3136 = vunpack.c.l.b16 %v2588
  %v3137 = vunpack.c.l.b16 %v2589
  %v3138 = vunpack.c.l.b16 %v2590
  %v3139 = vunpack.c.l.b16 %v2591
  %v3140 = vunpack.c.l.b16 %v2592
  %v3141 = vunpack.c.l.b16 %v2593
  %v3142 = vunpack.c.l.b16 %v2594
  %v3143 = vunpack.c.l.b16 %v2595
  %v3144 = vunpack.c.l.b16 %v2596
  %v3145 = vunpack.c.l.b16 %v2597
  %v3146 = vunpack.c.l.b16 %v2598
  %v3147 = vunpack.c.l.b16 %v2599
  %v3148 = vunpack.c.l.b16 %v2600
  %v3149 = vunpack.c.l.b16 %v2601
  %v3150 = vunpack.c.l.b16 %v2602
  %v3151 = vunpack.c.l.b16 %v2603
  %v3152 = vunpack.c.l.b16 %v2604
  %v3153 = vunpack.c.l.b16 %v2605
  %v3154 = vunpack.c.l.b16 %v2606
  %v3155 = vunpack.c.l.b16 %v2607
  %v3156 = vunpack.c.l.b16 %v2608
  %v3157 = vunpack.c.l.b16 %v2609
  %v3158 = vunpack.c.l.b16 %v2610
  %v3159 = vunpack.c.l.b16 %v2611
  %v3160 = vunpack.c.l.b16 %v2612
  %v3161 = vunpack.c.l.b16 %v2613
  %v3162 = vunpack.c.l.b16 %v2614
  %v3163 = vunpack.c.l.b16 %v2615
  %v3164 = vunpack.c.l.b16 %v2616
  %v3165 = vunpack.c.l.b16 %v2617
  %v3166 = vunpack.c.l.b16 %v2618
  %v3167 = vunpack.c.l.b16 %v2619
  %v3168 = vunpack.c.l.b16 %v2620
  %v3169 = vunpack.c.l.b16 %v2621
  %v3170 = vunpack.c.l.b16 %v2622
  %v3171 = vunpack.c.l.b16 %v2623
  %v3172 = vunpack.c.l.b16 %v2624
  %v3173 = vunpack.c.l.b16 %v2625
  %v3174 = vunpack.c.l.b16 %v2626
  %v3175 = vunpack.c.l.b16 %v2627
  %v3176 = vunpack.c.l.b16 %v2628
  %v3177 = vunpack.c.l.b16 %v2629
  %v3178 = vunpack.c.l.b16 %v2630
  %v3179 = vunpack.c.l.b16 %v2631
  %v3180 = vunpack.c.l.b16 %v2632
  %v3181 = vunpack.c.l.b16 %v2633
  %v3182 = vunpack.c.l.b16 %v2634
  %v3183 = vunpack.c.l.b16 %v2635
  %v3184 = vunpack.c.l.b16 %v2636
  %v3185 = vunpack.c.l.b16 %v2637
  %v3186 = vunpack.c.l.b16 %v2638
  %v3187 = vunpack.c.l.b16 %v2639
  %v3188 = vunpack.c.l.b16 %v2640
  %v3189 = vunpack.c.l.b16 %v2641
  %v3190 = vunpack.c.l.b16 %v2642
  %v3191 = vunpack.c.l.b16 %v2643
  %v3192 = vunpack.c.l.b16 %v2644
  %v3193 = vunpack.c.l.b16 %v2645
  %v3194 = vunpack.c.l.b16 %v2646
  %v3195 = vunpack.c.l.b16 %v2647
  %v3196 = vunpack.c.l.b16 %v2648
  %v3197 = vunpack.c.l.b16 %v2649
  %v3198 = vunpack.c.l.b16 %v2650
  %v3199 = vunpack.c.l.b16 %v2651
  %v3200 = vunpack.c.l.b16 %v2652
  %v3201 = vunpack.c.l.b16 %v2653
  %v3202 = vunpack.c.l.b16 %v2654
  %v3203 = vunpack.c.l.b16 %v2655
  %v3204 = vunpack.c.l.b16 %v2656
  %v3205 = vunpack.c.l.b16 %v2657
  %v3206 = vunpack.c.l.b16 %v2658
  %v3207 = vunpack.c.l.b16 %v2659
  %v3208 = vunpack.c.l.b16 %v2660
  %v3209 = vunpack.c.l.b16 %v2661
  %v3210 = vunpack.c.l.b16 %v2662
  %v3211 = vunpack.c.l.b16 %v2663
  %v3212 = vunpack.c.l.b16 %v2664
  %v3213 = vunpack.c.l.b16 %v2665
  %v3214 = vunpack.c.l.b16 %v2666
  %v3215 = vunpack.c.l.b16 %v2667
  %v3216 = vunpack.c.l.b16 %v2668
  %v3217 = vunpack.c.l.b16 %v2669
  %v3218 = vunpack.c.l.b16 %v2670
  %v3219 = vunpack.c.l.b16 %v2671
  %v3220 = vunpack.c.l.b16 %v2672
  %v3221 = vunpack.c.l.b16 %v2673
  %v3222 = vunpack.c.l.b16 %v2674
  %v3223 = vunpack.c.l.b16 %v2675
  %v3224 = vunpack.c.l.b16 %v2676
  %v3225 = vunpack.c.l.b16 %v2677
  %v3226 = vunpack.c.l.b16 %v2678
  %v3227 = vunpack.c.l.b16 %v2679
  %v3228 = vunpack.c.l.b16 %v2680
  %v3229 = vunpack.c.l.b16 %v2681
  %v3230 = vunpack.c.l.b16 %v2682
  %v3231 = vunpack.c.l.b16 %v2683
  %v3232 = vunpack.c.l.b16 %v2684
  %v3233 = vunpack.c.l.b16 %v2685
  %v3234 = vunpack.c.l.b16 %v2686
  %v3235 = vunpack.c.l.b16 %v2687
  %v3236 = vunpack.c.l.b16 %v2688
  %v3237 = vunpack.c.l.b16 %v2689
  %v3238 = vunpack.c.l.b16 %v2690
  %v3239 = vunpack.c.l.b16 %v2691
  %v3240 = vunpack.c.l.b16 %v2692
  %v3241 = vunpack.c.l.b16 %v2693
  %v3242 = vunpack.c.l.b16 %v2694
  %v3243 = vunpack.c.l.b16 %v2695
  %v3244 = vunpack.c.l.b16 %v2696
  %v3245 = vunpack.c.l.b16 %v2697
  %v3246 = vunpack.c.l.b16 %v2698
  %v3247 = vunpack.c.l.b16 %v2699
  %v3248 = vunpack.c.l.b16 %v2700
  %v3249 = vunpack.c.l.b16 %v2701
  %v3250 = vunpack.c.l.b16 %v2702
  %v3251 = vunpack.c.l.b16 %v2703
  %v3252 = vunpack.c.l.b16 %v2704
  %v3253 = vunpack.c.l.b16 %v2705
  %v3254 = vpack.c.b16 %v2999, %v2998
  %v3255 = vpack.c.b16 %v3001, %v3000
  %v3256 = vpack.c.b16 %v3003, %v3002
  %v3257 = vpack.c.b16 %v3005, %v3004
  %v3258 = vpack.c.b16 %v3007, %v3006
  %v3259 = vpack.c.b16 %v3009, %v3008
  %v3260 = vpack.c.b16 %v3011, %v3010
  %v3261 = vpack.c.b16 %v3013, %v3012
  %v3262 = vpack.c.b16 %v3015, %v3014
  %v3263 = vpack.c.b16 %v3017, %v3016
  %v3264 = vpack.c.b16 %v3019, %v3018
  %v3265 = vpack.c.b16 %v3021, %v3020
  %v3266 = vpack.c.b16 %v3023, %v3022
  %v3267 = vpack.c.b16 %v3025, %v3024
  %v3268 = vpack.c.b16 %v3027, %v3026
  %v3269 = vpack.c.b16 %v3029, %v3028
  %v3270 = vpack.c.b16 %v3031, %v3030
  %v3271 = vpack.c.b16 %v3033, %v3032
  %v3272 = vpack.c.b16 %v3035, %v3034
  %v3273 = vpack.c.b16 %v3037, %v3036
  %v3274 = vpack.c.b16 %v3039, %v3038
  %v3275 = vpack.c.b16 %v3041, %v3040
  %v3276 = vpack.c.b16 %v3043, %v3042
  %v3277 = vpack.c.b16 %v3045, %v3044
  %v3278 = vpack.c.b16 %v3047, %v3046
  %v3279 = vpack.c.b16 %v3049, %v3048
  %v3280 = vpack.c.b16 %v3051, %v3050
  %v3281 = vpack.c.b16 %v3053, %v3052
  %v3282 = vpack.c.b16 %v3055, %v3054
  %v3283 = vpack.c.b16 %v3057, %v3056
  %v3284 = vpack.c.b16 %v3059, %v3058
  %v3285 = vpack.c.b16 %v3061, %v3060
  %v3286 = vpack.c.b16 %v3063, %v3062
  %v3287 = vpack.c.b16 %v3065, %v3064
  %v3288 = vpack.c.b16 %v3067, %v3066
  %v3289 = vpack.c.b16 %v3069, %v3068
  %v3290 = vpack.c.b16 %v3071, %v3070
  %v3291 = vpack.c.b16 %v3073, %v3072
  %v3292 = vpack.c.b16 %v3075, %v3074
  %v3293 = vpack.c.b16 %v3077, %v3076
  %v3294 = vpack.c.b16 %v3079, %v3078
  %v3295 = vpack.c.b16 %v3081, %v3080
  %v3296 = vpack.c.b16 %v3083, %v3082
  %v3297 = vpack.c.b16 %v3085, %v3084
  %v3298 = vpack.c.b16 %v3087, %v3086
  %v3299 = vpack.c.b16 %v3089, %v3088
  %v3300 = vpack.c.b16 %v3091, %v3090
  %v3301 = vpack.c.b16 %v3093, %v3092
  %v3302 = vpack.c.b16 %v3095, %v3094
  %v3303 = vpack.c.b16 %v3097, %v3096
  %v3304 = vpack.c.b16 %v3099, %v3098
  %v3305 = vpack.c.b16 %v3101, %v3100
  %v3306 = vpack.c.b16 %v3103, %v3102
  %v3307 = vpack.c.b16 %v3105, %v3104
  %v3308 = vpack.c.b16 %v3107, %v3106
  %v3309 = vpack.c.b16 %v3109, %v3108
  %v3310 = vpack.c.b16 %v3111, %v3110
  %v3311 = vpack.c.b16 %v3113, %v3112
  %v3312 = vpack.c.b16 %v3115, %v3114
  %v3313 = vpack.c.b16 %v3117, %v3116
  %v3314 = vpack.c.b16 %v3119, %v3118
  %v3315 = vpack.c.b16 %v3121, %v3120
  %v3316 = vpack.c.b16 %v3123, %v3122
  %v3317 = vpack.c.b16 %v3125, %v3124
  %v3318 = vpack.c.b16 %v3127, %v3126
  %v3319 = vpack.c.b16 %v3129, %v3128
  %v3320 = vpack.c.b16 %v3131, %v3130
  %v3321 = vpack.c.b16 %v3133, %v3132
  %v3322 = vpack.c.b16 %v3135, %v3134
  %v3323 = vpack.c.b16 %v3137, %v3136
  %v3324 = vpack.c.b16 %v3139, %v3138
  %v3325 = vpack.c.b16 %v3141, %v3140
  %v3326 = vpack.c.b16 %v3143, %v3142
  %v3327 = vpack.c.b16 %v3145, %v3144
  %v3328 = vpack.c.b16 %v3147, %v3146
  %v3329 = vpack.c.b16 %v3149, %v3148
  %v3330 = vpack.c.b16 %v3151, %v3150
  %v3331 = vpack.c.b16 %v3153, %v3152
  %v3332 = vpack.c.b16 %v3155, %v3154
  %v3333 = vpack.c.b16 %v3157, %v3156
  %v3334 = vpack.c.b16 %v3159, %v3158
  %v3335 = vpack.c.b16 %v3161, %v3160
  %v3336 = vpack.c.b16 %v3163, %v3162
  %v3337 = vpack.c.b16 %v3165, %v3164
  %v3338 = vpack.c.b16 %v3167, %v3166
  %v3339 = vpack.c.b16 %v3169, %v3168
  %v3340 = vpack.c.b16 %v3171, %v3170
  %v3341 = vpack.c.b16 %v3173, %v3172
  %v3342 = vpack.c.b16 %v3175, %v3174
  %v3343 = vpack.c.b16 %v3177, %v3176
  %v3344 = vpack.c.b16 %v3179, %v3178
  %v3345 = vpack.c.b16 %v3181, %v3180
  %v3346 = vpack.c.b16 %v3183, %v3182
  %v3347 = vpack.c.b16 %v3185, %v3184
  %v3348 = vpack.c.b16 %v3187, %v3186
  %v3349 = vpack.c.b16 %v3189, %v3188
  %v3350 = vpack.c.b16 %v3191, %v3190
  %v3351 = vpack.c.b16 %v3193, %v3192
  %v3352 = vpack.c.b16 %v3195, %v3194
  %v3353 = vpack.c.b16 %v3197, %v3196
  %v3354 = vpack.c.b16 %v3199, %v3198
  %v3355 = vpack.c.b16 %v3201, %v3200
  %v3356 = vpack.c.b16 %v3203, %v3202
  %v3357 = vpack.c.b16 %v3205, %v3204
  %v3358 = vpack.c.b16 %v3207, %v3206
  %v3359 = vpack.c.b16 %v3209, %v3208
  %v3360 = vpack.c.b16 %v3211, %v3210
  %v3361 = vpack.c.b16 %v3213, %v3212
  %v3362 = vpack.c.b16 %v3215, %v3214
  %v3363 = vpack.c.b16 %v3217, %v3216
  %v3364 = vpack.c.b16 %v3219, %v3218
  %v3365 = vpack.c.b16 %v3221, %v3220
  %v3366 = vpack.c.b16 %v3223, %v3222
  %v3367 = vpack.c.b16 %v3225, %v3224
  %v3368 = vpack.c.b16 %v3227, %v3226
  %v3369 = vpack.c.b16 %v3229, %v3228
  %v3370 = vpack.c.b16 %v3231, %v3230
  %v3371 = vpack.c.b16 %v3233, %v3232
  %v3372 = vpack.c.b16 %v3235, %v3234
  %v3373 = vpack.c.b16 %v3237, %v3236
  %v3374 = vpack.c.b16 %v3239, %v3238
  %v3375 = vpack.c.b16 %v3241, %v3240
  %v3376 = vpack.c.b16 %v3243, %v3242
  %v3377 = vpack.c.b16 %v3245, %v3244
  %v3378 = vpack.c.b16 %v3247, %v3246
  %v3379 = vpack.c.b16 %v3249, %v3248
  %v3380 = vpack.c.b16 %v3251, %v3250
  %v3381 = vpack.c.b16 %v3253, %v3252
  %3510 = vmatpush.bf16.msra.mxu0 %v3261
  %3511 = vmatpush.bf16.msra.mxu0 %v3260
  %3512 = vmatpush.bf16.msra.mxu0 %v3259
  %3513 = vmatpush.bf16.msra.mxu0 %v3258
  %3514 = vmatpush.bf16.msra.mxu0 %v3257
  %3515 = vmatpush.bf16.msra.mxu0 %v3256
  %3516 = vmatpush.bf16.msra.mxu0 %v3255
  %3517 = vmatpush.bf16.msra.mxu0 %v3254
  %3518 = vmatmul.bf16.gmra.mxu0 %v2706
  %v3519 = vpop.f32.mrf.mxu0
  %v3520 = vadd.f32 %v2740, %v3519
  %v3521 = vpop.f32.mrf.mxu0
  %v3522 = vadd.f32 %v2740, %v3521
  %3523 = vmatmul.bf16.gmra.mxu0 %v2722
  %v3524 = vpop.f32.mrf.mxu0
  %v3525 = vadd.f32 %v2740, %v3524
  %v3526 = vpop.f32.mrf.mxu0
  %v3527 = vadd.f32 %v2740, %v3526
  %3528 = vdwg.mxu0
  %3529 = vmatpush.bf16.msra.mxu0 %v3269
  %3530 = vmatpush.bf16.msra.mxu0 %v3268
  %3531 = vmatpush.bf16.msra.mxu0 %v3267
  %3532 = vmatpush.bf16.msra.mxu0 %v3266
  %3533 = vmatpush.bf16.msra.mxu0 %v3265
  %3534 = vmatpush.bf16.msra.mxu0 %v3264
  %3535 = vmatpush.bf16.msra.mxu0 %v3263
  %3536 = vmatpush.bf16.msra.mxu0 %v3262
  %3537 = vmatmul.bf16.gmra.mxu0 %v2707
  %v3538 = vpop.f32.mrf.mxu0
  %v3539 = vadd.f32 %v3520, %v3538
  %v3540 = vpop.f32.mrf.mxu0
  %v3541 = vadd.f32 %v3522, %v3540
  %3542 = vmatmul.bf16.gmra.mxu0 %v2723
  %v3543 = vpop.f32.mrf.mxu0
  %v3544 = vadd.f32 %v3525, %v3543
  %v3545 = vpop.f32.mrf.mxu0
  %v3546 = vadd.f32 %v3527, %v3545
  %3547 = vdwg.mxu0
  %3548 = vmatpush.bf16.msra.mxu0 %v3277
  %3549 = vmatpush.bf16.msra.mxu0 %v3276
  %3550 = vmatpush.bf16.msra.mxu0 %v3275
  %3551 = vmatpush.bf16.msra.mxu0 %v3274
  %3552 = vmatpush.bf16.msra.mxu0 %v3273
  %3553 = vmatpush.bf16.msra.mxu0 %v3272
  %3554 = vmatpush.bf16.msra.mxu0 %v3271
  %3555 = vmatpush.bf16.msra.mxu0 %v3270
  %3556 = vmatmul.bf16.gmra.mxu0 %v2708
  %v3557 = vpop.f32.mrf.mxu0
  %v3558 = vadd.f32 %v3539, %v3557
  %v3559 = vpop.f32.mrf.mxu0
  %v3560 = vadd.f32 %v3541, %v3559
  %3561 = vmatmul.bf16.gmra.mxu0 %v2724
  %v3562 = vpop.f32.mrf.mxu0
  %v3563 = vadd.f32 %v3544, %v3562
  %v3564 = vpop.f32.mrf.mxu0
  %v3565 = vadd.f32 %v3546, %v3564
  %3566 = vdwg.mxu0
  %3567 = vmatpush.bf16.msra.mxu0 %v3285
  %3568 = vmatpush.bf16.msra.mxu0 %v3284
  %3569 = vmatpush.bf16.msra.mxu0 %v3283
  %3570 = vmatpush.bf16.msra.mxu0 %v3282
  %3571 = vmatpush.bf16.msra.mxu0 %v3281
  %3572 = vmatpush.bf16.msra.mxu0 %v3280
  %3573 = vmatpush.bf16.msra.mxu0 %v3279
  %3574 = vmatpush.bf16.msra.mxu0 %v3278
  %3575 = vmatmul.bf16.gmra.mxu0 %v2709
  %v3576 = vpop.f32.mrf.mxu0
  %v3577 = vadd.f32 %v3558, %v3576
  %v3578 = vpop.f32.mrf.mxu0
  %v3579 = vadd.f32 %v3560, %v3578
  %3580 = vmatmul.bf16.gmra.mxu0 %v2725
  %v3581 = vpop.f32.mrf.mxu0
  %v3582 = vadd.f32 %v3563, %v3581
  %v3583 = vpop.f32.mrf.mxu0
  %v3584 = vadd.f32 %v3565, %v3583
  %3585 = vdwg.mxu0
  %3586 = vmatpush.bf16.msra.mxu0 %v3293
  %3587 = vmatpush.bf16.msra.mxu0 %v3292
  %3588 = vmatpush.bf16.msra.mxu0 %v3291
  %3589 = vmatpush.bf16.msra.mxu0 %v3290
  %3590 = vmatpush.bf16.msra.mxu0 %v3289
  %3591 = vmatpush.bf16.msra.mxu0 %v3288
  %3592 = vmatpush.bf16.msra.mxu0 %v3287
  %3593 = vmatpush.bf16.msra.mxu0 %v3286
  %3594 = vmatmul.bf16.gmra.mxu0 %v2710
  %v3595 = vpop.f32.mrf.mxu0
  %v3596 = vadd.f32 %v3577, %v3595
  %v3597 = vpop.f32.mrf.mxu0
  %v3598 = vadd.f32 %v3579, %v3597
  %3599 = vmatmul.bf16.gmra.mxu0 %v2726
  %v3600 = vpop.f32.mrf.mxu0
  %v3601 = vadd.f32 %v3582, %v3600
  %v3602 = vpop.f32.mrf.mxu0
  %v3603 = vadd.f32 %v3584, %v3602
  %3604 = vdwg.mxu0
  %3605 = vmatpush.bf16.msra.mxu0 %v3301
  %3606 = vmatpush.bf16.msra.mxu0 %v3300
  %3607 = vmatpush.bf16.msra.mxu0 %v3299
  %3608 = vmatpush.bf16.msra.mxu0 %v3298
  %3609 = vmatpush.bf16.msra.mxu0 %v3297
  %3610 = vmatpush.bf16.msra.mxu0 %v3296
  %3611 = vmatpush.bf16.msra.mxu0 %v3295
  %3612 = vmatpush.bf16.msra.mxu0 %v3294
  %3613 = vmatmul.bf16.gmra.mxu0 %v2711
  %v3614 = vpop.f32.mrf.mxu0
  %v3615 = vadd.f32 %v3596, %v3614
  %v3616 = vpop.f32.mrf.mxu0
  %v3617 = vadd.f32 %v3598, %v3616
  %3618 = vmatmul.bf16.gmra.mxu0 %v2727
  %v3619 = vpop.f32.mrf.mxu0
  %v3620 = vadd.f32 %v3601, %v3619
  %v3621 = vpop.f32.mrf.mxu0
  %v3622 = vadd.f32 %v3603, %v3621
  %3623 = vdwg.mxu0
  %3624 = vmatpush.bf16.msra.mxu0 %v3309
  %3625 = vmatpush.bf16.msra.mxu0 %v3308
  %3626 = vmatpush.bf16.msra.mxu0 %v3307
  %3627 = vmatpush.bf16.msra.mxu0 %v3306
  %3628 = vmatpush.bf16.msra.mxu0 %v3305
  %3629 = vmatpush.bf16.msra.mxu0 %v3304
  %3630 = vmatpush.bf16.msra.mxu0 %v3303
  %3631 = vmatpush.bf16.msra.mxu0 %v3302
  %3632 = vmatmul.bf16.gmra.mxu0 %v2712
  %v3633 = vpop.f32.mrf.mxu0
  %v3634 = vadd.f32 %v3615, %v3633
  %v3635 = vpop.f32.mrf.mxu0
  %v3636 = vadd.f32 %v3617, %v3635
  %3637 = vmatmul.bf16.gmra.mxu0 %v2728
  %v3638 = vpop.f32.mrf.mxu0
  %v3639 = vadd.f32 %v3620, %v3638
  %v3640 = vpop.f32.mrf.mxu0
  %v3641 = vadd.f32 %v3622, %v3640
  %3642 = vdwg.mxu0
  %3643 = vmatpush.bf16.msra.mxu0 %v3317
  %3644 = vmatpush.bf16.msra.mxu0 %v3316
  %3645 = vmatpush.bf16.msra.mxu0 %v3315
  %3646 = vmatpush.bf16.msra.mxu0 %v3314
  %3647 = vmatpush.bf16.msra.mxu0 %v3313
  %3648 = vmatpush.bf16.msra.mxu0 %v3312
  %3649 = vmatpush.bf16.msra.mxu0 %v3311
  %3650 = vmatpush.bf16.msra.mxu0 %v3310
  %3651 = vmatmul.bf16.gmra.mxu0 %v2713
  %v3652 = vpop.f32.mrf.mxu0
  %v3653 = vadd.f32 %v3634, %v3652
  %v3654 = vpop.f32.mrf.mxu0
  %v3655 = vadd.f32 %v3636, %v3654
  %3656 = vmatmul.bf16.gmra.mxu0 %v2729
  %v3657 = vpop.f32.mrf.mxu0
  %v3658 = vadd.f32 %v3639, %v3657
  %v3659 = vpop.f32.mrf.mxu0
  %v3660 = vadd.f32 %v3641, %v3659
  %3661 = vdwg.mxu0
  %3662 = vmatpush.bf16.msra.mxu0 %v3325
  %3663 = vmatpush.bf16.msra.mxu0 %v3324
  %3664 = vmatpush.bf16.msra.mxu0 %v3323
  %3665 = vmatpush.bf16.msra.mxu0 %v3322
  %3666 = vmatpush.bf16.msra.mxu0 %v3321
  %3667 = vmatpush.bf16.msra.mxu0 %v3320
  %3668 = vmatpush.bf16.msra.mxu0 %v3319
  %3669 = vmatpush.bf16.msra.mxu0 %v3318
  %3670 = vmatmul.bf16.gmra.mxu0 %v2714
  %v3671 = vpop.f32.mrf.mxu0
  %v3672 = vadd.f32 %v3653, %v3671
  %v3673 = vpop.f32.mrf.mxu0
  %v3674 = vadd.f32 %v3655, %v3673
  %3675 = vmatmul.bf16.gmra.mxu0 %v2730
  %v3676 = vpop.f32.mrf.mxu0
  %v3677 = vadd.f32 %v3658, %v3676
  %v3678 = vpop.f32.mrf.mxu0
  %v3679 = vadd.f32 %v3660, %v3678
  %3680 = vdwg.mxu0
  %3681 = vmatpush.bf16.msra.mxu0 %v3333
  %3682 = vmatpush.bf16.msra.mxu0 %v3332
  %3683 = vmatpush.bf16.msra.mxu0 %v3331
  %3684 = vmatpush.bf16.msra.mxu0 %v3330
  %3685 = vmatpush.bf16.msra.mxu0 %v3329
  %3686 = vmatpush.bf16.msra.mxu0 %v3328
  %3687 = vmatpush.bf16.msra.mxu0 %v3327
  %3688 = vmatpush.bf16.msra.mxu0 %v3326
  %3689 = vmatmul.bf16.gmra.mxu0 %v2715
  %v3690 = vpop.f32.mrf.mxu0
  %v3691 = vadd.f32 %v3672, %v3690
  %v3692 = vpop.f32.mrf.mxu0
  %v3693 = vadd.f32 %v3674, %v3692
  %3694 = vmatmul.bf16.gmra.mxu0 %v2731
  %v3695 = vpop.f32.mrf.mxu0
  %v3696 = vadd.f32 %v3677, %v3695
  %v3697 = vpop.f32.mrf.mxu0
  %v3698 = vadd.f32 %v3679, %v3697
  %3699 = vdwg.mxu0
  %3700 = vmatpush.bf16.msra.mxu0 %v3341
  %3701 = vmatpush.bf16.msra.mxu0 %v3340
  %3702 = vmatpush.bf16.msra.mxu0 %v3339
  %3703 = vmatpush.bf16.msra.mxu0 %v3338
  %3704 = vmatpush.bf16.msra.mxu0 %v3337
  %3705 = vmatpush.bf16.msra.mxu0 %v3336
  %3706 = vmatpush.bf16.msra.mxu0 %v3335
  %3707 = vmatpush.bf16.msra.mxu0 %v3334
  %3708 = vmatmul.bf16.gmra.mxu0 %v2716
  %v3709 = vpop.f32.mrf.mxu0
  %v3710 = vadd.f32 %v3691, %v3709
  %v3711 = vpop.f32.mrf.mxu0
  %v3712 = vadd.f32 %v3693, %v3711
  %3713 = vmatmul.bf16.gmra.mxu0 %v2732
  %v3714 = vpop.f32.mrf.mxu0
  %v3715 = vadd.f32 %v3696, %v3714
  %v3716 = vpop.f32.mrf.mxu0
  %v3717 = vadd.f32 %v3698, %v3716
  %3718 = vdwg.mxu0
  %3719 = vmatpush.bf16.msra.mxu0 %v3349
  %3720 = vmatpush.bf16.msra.mxu0 %v3348
  %3721 = vmatpush.bf16.msra.mxu0 %v3347
  %3722 = vmatpush.bf16.msra.mxu0 %v3346
  %3723 = vmatpush.bf16.msra.mxu0 %v3345
  %3724 = vmatpush.bf16.msra.mxu0 %v3344
  %3725 = vmatpush.bf16.msra.mxu0 %v3343
  %3726 = vmatpush.bf16.msra.mxu0 %v3342
  %3727 = vmatmul.bf16.gmra.mxu0 %v2717
  %v3728 = vpop.f32.mrf.mxu0
  %v3729 = vadd.f32 %v3710, %v3728
  %v3730 = vpop.f32.mrf.mxu0
  %v3731 = vadd.f32 %v3712, %v3730
  %3732 = vmatmul.bf16.gmra.mxu0 %v2733
  %v3733 = vpop.f32.mrf.mxu0
  %v3734 = vadd.f32 %v3715, %v3733
  %v3735 = vpop.f32.mrf.mxu0
  %v3736 = vadd.f32 %v3717, %v3735
  %3737 = vdwg.mxu0
  %3738 = vmatpush.bf16.msra.mxu0 %v3357
  %3739 = vmatpush.bf16.msra.mxu0 %v3356
  %3740 = vmatpush.bf16.msra.mxu0 %v3355
  %3741 = vmatpush.bf16.msra.mxu0 %v3354
  %3742 = vmatpush.bf16.msra.mxu0 %v3353
  %3743 = vmatpush.bf16.msra.mxu0 %v3352
  %3744 = vmatpush.bf16.msra.mxu0 %v3351
  %3745 = vmatpush.bf16.msra.mxu0 %v3350
  %3746 = vmatmul.bf16.gmra.mxu0 %v2718
  %v3747 = vpop.f32.mrf.mxu0
  %v3748 = vadd.f32 %v3729, %v3747
  %v3749 = vpop.f32.mrf.mxu0
  %v3750 = vadd.f32 %v3731, %v3749
  %3751 = vmatmul.bf16.gmra.mxu0 %v2734
  %v3752 = vpop.f32.mrf.mxu0
  %v3753 = vadd.f32 %v3734, %v3752
  %v3754 = vpop.f32.mrf.mxu0
  %v3755 = vadd.f32 %v3736, %v3754
  %3756 = vdwg.mxu0
  %3757 = vmatpush.bf16.msra.mxu0 %v3365
  %3758 = vmatpush.bf16.msra.mxu0 %v3364
  %3759 = vmatpush.bf16.msra.mxu0 %v3363
  %3760 = vmatpush.bf16.msra.mxu0 %v3362
  %3761 = vmatpush.bf16.msra.mxu0 %v3361
  %3762 = vmatpush.bf16.msra.mxu0 %v3360
  %3763 = vmatpush.bf16.msra.mxu0 %v3359
  %3764 = vmatpush.bf16.msra.mxu0 %v3358
  %3765 = vmatmul.bf16.gmra.mxu0 %v2719
  %v3766 = vpop.f32.mrf.mxu0
  %v3767 = vadd.f32 %v3748, %v3766
  %v3768 = vpop.f32.mrf.mxu0
  %v3769 = vadd.f32 %v3750, %v3768
  %3770 = vmatmul.bf16.gmra.mxu0 %v2735
  %v3771 = vpop.f32.mrf.mxu0
  %v3772 = vadd.f32 %v3753, %v3771
  %v3773 = vpop.f32.mrf.mxu0
  %v3774 = vadd.f32 %v3755, %v3773
  %3775 = vdwg.mxu0
  %3776 = vmatpush.bf16.msra.mxu0 %v3373
  %3777 = vmatpush.bf16.msra.mxu0 %v3372
  %3778 = vmatpush.bf16.msra.mxu0 %v3371
  %3779 = vmatpush.bf16.msra.mxu0 %v3370
  %3780 = vmatpush.bf16.msra.mxu0 %v3369
  %3781 = vmatpush.bf16.msra.mxu0 %v3368
  %3782 = vmatpush.bf16.msra.mxu0 %v3367
  %3783 = vmatpush.bf16.msra.mxu0 %v3366
  %3784 = vmatmul.bf16.gmra.mxu0 %v2720
  %v3785 = vpop.f32.mrf.mxu0
  %v3786 = vadd.f32 %v3767, %v3785
  %v3787 = vpop.f32.mrf.mxu0
  %v3788 = vadd.f32 %v3769, %v3787
  %3789 = vmatmul.bf16.gmra.mxu0 %v2736
  %v3790 = vpop.f32.mrf.mxu0
  %v3791 = vadd.f32 %v3772, %v3790
  %v3792 = vpop.f32.mrf.mxu0
  %v3793 = vadd.f32 %v3774, %v3792
  %3794 = vdwg.mxu0
  %3795 = vmatpush.bf16.msra.mxu0 %v3381
  %3796 = vmatpush.bf16.msra.mxu0 %v3380
  %3797 = vmatpush.bf16.msra.mxu0 %v3379
  %3798 = vmatpush.bf16.msra.mxu0 %v3378
  %3799 = vmatpush.bf16.msra.mxu0 %v3377
  %3800 = vmatpush.bf16.msra.mxu0 %v3376
  %3801 = vmatpush.bf16.msra.mxu0 %v3375
  %3802 = vmatpush.bf16.msra.mxu0 %v3374
  %3803 = vmatmul.bf16.gmra.mxu0 %v2721
  %v3804 = vpop.f32.mrf.mxu0
  %v3805 = vadd.f32 %v3786, %v3804
  %v3806 = vpop.f32.mrf.mxu0
  %v3807 = vadd.f32 %v3788, %v3806
  %3808 = vmatmul.bf16.gmra.mxu0 %v2737
  %v3809 = vpop.f32.mrf.mxu0
  %v3810 = vadd.f32 %v3791, %v3809
  %v3811 = vpop.f32.mrf.mxu0
  %v3812 = vadd.f32 %v3793, %v3811
  %3813 = vdwg.mxu0
  %v3814 = vadd.f32 %v1842, %v3805
  %v3815 = vadd.f32 %v1843, %v3807
  %v3816 = vadd.f32 %v1844, %v3810
  %v3817 = vadd.f32 %v1845, %v3812
  %v3818 = vld [vmem:[%s22] sm:$0x1]
  %v3819 = vld [vmem:[%s23] sm:$0x1]
  %v3820 = vsel %vm91, %v3814, 0.0
  %3821 = vadd.xlane.f32.xlu0 %v3820
  %v3822 = vpop.xlane.xlu0 %3821
  %v3823 = vsel %vm91, %v3815, 0.0
  %3824 = vadd.xlane.f32.xlu0 %v3823
  %v3825 = vpop.xlane.xlu0 %3824
  %v3826 = vsel %vm91, %v3816, 0.0
  %3827 = vadd.xlane.f32.xlu0 %v3826
  %v3828 = vpop.xlane.xlu0 %3827
  %v3829 = vsel %vm91, %v3817, 0.0
  %3830 = vadd.xlane.f32.xlu0 %v3829
  %v3831 = vpop.xlane.xlu0 %3830
  %v3832 = vmul.f32 %v3822, %v1755
  %v3833 = vmul.f32 %v3825, %v1755
  %v3834 = vmul.f32 %v3828, %v1755
  %v3835 = vmul.f32 %v3831, %v1755
  %v3836 = vsub.f32 %v3814, %v3832
  %v3837 = vsub.f32 %v3815, %v3833
  %v3838 = vsub.f32 %v3816, %v3834
  %v3839 = vsub.f32 %v3817, %v3835
  %v3840 = vmul.f32 %v3836, %v3836
  %v3841 = vmul.f32 %v3837, %v3837
  %v3842 = vmul.f32 %v3838, %v3838
  %v3843 = vmul.f32 %v3839, %v3839
  %v3844 = vsel %vm91, %v3840, 0.0
  %3845 = vadd.xlane.f32.xlu0 %v3844
  %v3846 = vpop.xlane.xlu0 %3845
  %v3847 = vsel %vm91, %v3841, 0.0
  %3848 = vadd.xlane.f32.xlu0 %v3847
  %v3849 = vpop.xlane.xlu0 %3848
  %v3850 = vsel %vm91, %v3842, 0.0
  %3851 = vadd.xlane.f32.xlu0 %v3850
  %v3852 = vpop.xlane.xlu0 %3851
  %v3853 = vsel %vm91, %v3843, 0.0
  %3854 = vadd.xlane.f32.xlu0 %v3853
  %v3855 = vpop.xlane.xlu0 %3854
  %v3856 = vmul.f32 %v3846, %v1755
  %v3857 = vmul.f32 %v3849, %v1755
  %v3858 = vmul.f32 %v3852, %v1755
  %v3859 = vmul.f32 %v3855, %v1755
  %v3860 = vadd.f32 %v3856, 1e-05
  %v3861 = vadd.f32 %v3857, 1e-05
  %v3862 = vadd.f32 %v3858, 1e-05
  %v3863 = vadd.f32 %v3859, 1e-05
  %v3864 = vrsqrt.pop %v3860
  %v3865 = vmul.f32 %v3864, %v3860
  %v3866 = vmul.f32 %v3865, %v3864
  %v3867 = vmul.f32 0.5, %v3866
  %v3868 = vsub.f32 1.5, %v3867
  %v3869 = vmul.f32 %v3864, %v3868
  %vm3870 = vweird.f32 %v3860
  %vm3871 = vweird.f32 %v3864
  %vm3872 = vmor %vm3870, %vm3871
  %v3873 = vsel %vm3872, %v3864, %v3869
  %v3874 = vrsqrt.pop %v3861
  %v3875 = vmul.f32 %v3874, %v3861
  %v3876 = vmul.f32 %v3875, %v3874
  %v3877 = vmul.f32 0.5, %v3876
  %v3878 = vsub.f32 1.5, %v3877
  %v3879 = vmul.f32 %v3874, %v3878
  %vm3880 = vweird.f32 %v3861
  %vm3881 = vweird.f32 %v3874
  %vm3882 = vmor %vm3880, %vm3881
  %v3883 = vsel %vm3882, %v3874, %v3879
  %v3884 = vrsqrt.pop %v3862
  %v3885 = vmul.f32 %v3884, %v3862
  %v3886 = vmul.f32 %v3885, %v3884
  %v3887 = vmul.f32 0.5, %v3886
  %v3888 = vsub.f32 1.5, %v3887
  %v3889 = vmul.f32 %v3884, %v3888
  %vm3890 = vweird.f32 %v3862
  %vm3891 = vweird.f32 %v3884
  %vm3892 = vmor %vm3890, %vm3891
  %v3893 = vsel %vm3892, %v3884, %v3889
  %v3894 = vrsqrt.pop %v3863
  %v3895 = vmul.f32 %v3894, %v3863
  %v3896 = vmul.f32 %v3895, %v3894
  %v3897 = vmul.f32 0.5, %v3896
  %v3898 = vsub.f32 1.5, %v3897
  %v3899 = vmul.f32 %v3894, %v3898
  %vm3900 = vweird.f32 %v3863
  %vm3901 = vweird.f32 %v3894
  %vm3902 = vmor %vm3900, %vm3901
  %v3903 = vsel %vm3902, %v3894, %v3899
  %v3904 = vmul.f32 %v3836, %v3873
  %v3905 = vmul.f32 %v3837, %v3883
  %v3906 = vmul.f32 %v3838, %v3893
  %v3907 = vmul.f32 %v3839, %v3903
  %v3909 = vperm.slane %v3818, 0
  %v3911 = vmul.f32 %v3904, %v3909
  %v3912 = vmul.f32 %v3905, %v3909
  %v3913 = vmul.f32 %v3906, %v3909
  %v3914 = vmul.f32 %v3907, %v3909
  %v3916 = vperm.slane %v3819, 0
  %v3918 = vadd.f32 %v3911, %v3916
  %v3919 = vadd.f32 %v3912, %v3916
  %v3920 = vadd.f32 %v3913, %v3916
  %v3921 = vadd.f32 %v3914, %v3916
  %s3922 = scalar_lea.vmem %s15, 1
  %v3923 = vld [vmem:[%s3922] sm:$0x1]
  %s3924 = scalar_lea.vmem %s8, 64
  %v3925 = vld [vmem:[%s3924] sm:$0xf]
  %v3926 = vld [vmem:[%s3924 + $0x4] sm:$0xf]
  %v3927 = vld [vmem:[%s3924 + $0x8] sm:$0xf]
  %v3928 = vld [vmem:[%s3924 + $0xc] sm:$0xf]
  %v3929 = vpack.c.bf16 %v3919, %v3918
  %v3930 = vpack.c.bf16 %v3921, %v3920
  %s3931 = scalar_lea.vmem %s11, 4
  %v3932 = vld [vmem:[%s3931] sm:$0x1]
  %v3934 = vperm.slane %v3932, 0
  %v3940 = vunpack.c.l.b16 %v3925
  %v3941 = vunpack.c.l.b16 %v3926
  %v3942 = vunpack.c.l.b16 %v3927
  %v3943 = vunpack.c.l.b16 %v3928
  %v3944 = vpack.c.b16 %v3941, %v3940
  %v3945 = vpack.c.b16 %v3943, %v3942
  %v3949 = vsel %vm91, %v3929, 0
  %v3952 = vsel %vm91, %v3930, 0
  %3954 = vmatpush.bf16.msra.mxu0 0
  %3955 = vmatpush.bf16.msra.mxu0 0
  %3956 = vmatpush.bf16.msra.mxu0 0
  %3957 = vmatpush.bf16.msra.mxu0 0
  %3958 = vmatpush.bf16.msra.mxu0 0
  %3959 = vmatpush.bf16.msra.mxu0 0
  %3960 = vmatpush.bf16.msra.mxu0 %v3945
  %3961 = vmatpush.bf16.msra.mxu0 %v3944
  %3962 = vmatmul.bf16.gmra.mxu0 %v3949
  %v3963 = vpop.f32.mrf.mxu0
  %v3964 = vadd.f32 %v3934, %v3963
  %v3965 = vpop.f32.mrf.mxu0
  %v3966 = vadd.f32 %v3934, %v3965
  %3967 = vmatmul.bf16.gmra.mxu0 %v3952
  %v3968 = vpop.f32.mrf.mxu0
  %v3969 = vadd.f32 %v3934, %v3968
  %v3970 = vpop.f32.mrf.mxu0
  %v3971 = vadd.f32 %v3934, %v3970
  %3972 = vdwg.mxu0
  %v3973 = vmul.f32 %v3964, 0.35355338
  %v3974 = vmul.f32 %v3966, 0.35355338
  %v3975 = vmul.f32 %v3969, 0.35355338
  %v3976 = vmul.f32 %v3971, 0.35355338
  %s3977 = scalar_lea.vmem %s9, 64
  %v3978 = vld [vmem:[%s3977] sm:$0xf]
  %v3979 = vld [vmem:[%s3977 + $0x4] sm:$0xf]
  %v3980 = vld [vmem:[%s3977 + $0x8] sm:$0xf]
  %v3981 = vld [vmem:[%s3977 + $0xc] sm:$0xf]
  %s3982 = scalar_lea.vmem %s12, 4
  %v3983 = vld [vmem:[%s3982] sm:$0x1]
  %v3985 = vperm.slane %v3983, 0
  %v3991 = vunpack.c.l.b16 %v3978
  %v3992 = vunpack.c.l.b16 %v3979
  %v3993 = vunpack.c.l.b16 %v3980
  %v3994 = vunpack.c.l.b16 %v3981
  %v3995 = vpack.c.b16 %v3992, %v3991
  %v3996 = vpack.c.b16 %v3994, %v3993
  %3999 = vmatpush.bf16.msra.mxu0 0
  %4000 = vmatpush.bf16.msra.mxu0 0
  %4001 = vmatpush.bf16.msra.mxu0 0
  %4002 = vmatpush.bf16.msra.mxu0 0
  %4003 = vmatpush.bf16.msra.mxu0 0
  %4004 = vmatpush.bf16.msra.mxu0 0
  %4005 = vmatpush.bf16.msra.mxu0 %v3996
  %4006 = vmatpush.bf16.msra.mxu0 %v3995
  %4007 = vmatmul.bf16.gmra.mxu0 %v3949
  %v4008 = vpop.f32.mrf.mxu0
  %v4009 = vadd.f32 %v3985, %v4008
  %v4010 = vpop.f32.mrf.mxu0
  %v4011 = vadd.f32 %v3985, %v4010
  %4012 = vmatmul.bf16.gmra.mxu0 %v3952
  %v4013 = vpop.f32.mrf.mxu0
  %v4014 = vadd.f32 %v3985, %v4013
  %v4015 = vpop.f32.mrf.mxu0
  %v4016 = vadd.f32 %v3985, %v4015
  %4017 = vdwg.mxu0
  %s4018 = scalar_lea.vmem %s10, 64
  %v4019 = vld [vmem:[%s4018] sm:$0xf]
  %v4020 = vld [vmem:[%s4018 + $0x4] sm:$0xf]
  %v4021 = vld [vmem:[%s4018 + $0x8] sm:$0xf]
  %v4022 = vld [vmem:[%s4018 + $0xc] sm:$0xf]
  %s4023 = scalar_lea.vmem %s13, 4
  %v4024 = vld [vmem:[%s4023] sm:$0x1]
  %v4026 = vperm.slane %v4024, 0
  %v4032 = vunpack.c.l.b16 %v4019
  %v4033 = vunpack.c.l.b16 %v4020
  %v4034 = vunpack.c.l.b16 %v4021
  %v4035 = vunpack.c.l.b16 %v4022
  %v4036 = vpack.c.b16 %v4033, %v4032
  %v4037 = vpack.c.b16 %v4035, %v4034
  %4040 = vmatpush.bf16.msra.mxu0 0
  %4041 = vmatpush.bf16.msra.mxu0 0
  %4042 = vmatpush.bf16.msra.mxu0 0
  %4043 = vmatpush.bf16.msra.mxu0 0
  %4044 = vmatpush.bf16.msra.mxu0 0
  %4045 = vmatpush.bf16.msra.mxu0 0
  %4046 = vmatpush.bf16.msra.mxu0 %v4037
  %4047 = vmatpush.bf16.msra.mxu0 %v4036
  %4048 = vmatmul.bf16.gmra.mxu0 %v3949
  %v4049 = vpop.f32.mrf.mxu0
  %v4050 = vadd.f32 %v4026, %v4049
  %v4051 = vpop.f32.mrf.mxu0
  %v4052 = vadd.f32 %v4026, %v4051
  %4053 = vmatmul.bf16.gmra.mxu0 %v3952
  %v4054 = vpop.f32.mrf.mxu0
  %v4055 = vadd.f32 %v4026, %v4054
  %v4056 = vpop.f32.mrf.mxu0
  %v4057 = vadd.f32 %v4026, %v4056
  %4058 = vdwg.mxu0
  %v4059 = vpack.c.bf16 %v3974, %v3973
  %v4060 = vpack.c.bf16 %v4011, %v4009
  %v4062 = vsel %vm699, %v4059, 0
  %v4065 = vsel %vm699, %v4060, 0
  %4067 = vmatpush.bf16.xpose.msra.mxu0 0
  %4068 = vmatpush.bf16.xpose.msra.mxu0 0
  %4069 = vmatpush.bf16.xpose.msra.mxu0 0
  %4070 = vmatpush.bf16.xpose.msra.mxu0 0
  %4071 = vmatpush.bf16.xpose.msra.mxu0 0
  %4072 = vmatpush.bf16.xpose.msra.mxu0 0
  %4073 = vmatpush.bf16.xpose.msra.mxu0 0
  %4074 = vmatpush.bf16.xpose.msra.mxu0 %v4065
  %4075 = vmatmul.bf16.gmra.mxu0 %v4062
  %v4076 = vpop.f32.mrf.mxu0
  %v4077 = vadd.f32 0.0, %v4076
  %v4078 = vpop.f32.mrf.mxu0
  %v4079 = vadd.f32 0.0, %v4078
  %4080 = vdwg.mxu0
  %v4081 = vsel %vm720, %v4077, -inf
  %4082 = vmax.xlane.f32.xlu0 %v4081
  %v4083 = vpop.xlane.xlu0 %4082
  %v4084 = vsel %vm720, %v4079, -inf
  %4085 = vmax.xlane.f32.xlu0 %v4084
  %v4086 = vpop.xlane.xlu0 %4085
  %v4087 = vsub.f32 %v4077, %v4083
  %v4088 = vsub.f32 %v4079, %v4086
  %v4089 = vmul.f32 %v4087, 1.442695
  %v4090 = vpow.pop %v4089
  %v4091 = vmul.f32 %v4088, 1.442695
  %v4092 = vpow.pop %v4091
  %v4093 = vsel %vm720, %v4090, 0.0
  %4094 = vadd.xlane.f32.xlu0 %v4093
  %v4095 = vpop.xlane.xlu0 %4094
  %v4096 = vsel %vm720, %v4092, 0.0
  %4097 = vadd.xlane.f32.xlu0 %v4096
  %v4098 = vpop.xlane.xlu0 %4097
  %v4099 = vrcp.pop %v4095
  %v4100 = vrcp.pop %v4098
  %v4101 = vpack.c.bf16 %v4092, %v4090
  %v4102 = vpack.c.bf16 %v4052, %v4050
  %v4104 = vsel %vm720, %v4101, 0
  %4106 = vmatpush.bf16.msra.mxu0 0
  %4107 = vmatpush.bf16.msra.mxu0 0
  %4108 = vmatpush.bf16.msra.mxu0 0
  %4109 = vmatpush.bf16.msra.mxu0 0
  %4110 = vmatpush.bf16.msra.mxu0 0
  %4111 = vmatpush.bf16.msra.mxu0 0
  %4112 = vmatpush.bf16.msra.mxu0 0
  %4113 = vmatpush.bf16.msra.mxu0 %v4102
  %4114 = vmatmul.bf16.gmra.mxu0 %v4104
  %v4115 = vpop.f32.mrf.mxu0
  %v4116 = vadd.f32 0.0, %v4115
  %v4117 = vpop.f32.mrf.mxu0
  %v4118 = vadd.f32 0.0, %v4117
  %4119 = vdwg.mxu0
  %v4120 = vmul.f32 %v4116, %v4099
  %v4121 = vmul.f32 %v4118, %v4100
  %v4122 = vpack.c.bf16 %v3976, %v3975
  %v4123 = vpack.c.bf16 %v4016, %v4014
  %v4125 = vsel %vm699, %v4122, 0
  %v4128 = vsel %vm699, %v4123, 0
  %4130 = vmatpush.bf16.xpose.msra.mxu0 0
  %4131 = vmatpush.bf16.xpose.msra.mxu0 0
  %4132 = vmatpush.bf16.xpose.msra.mxu0 0
  %4133 = vmatpush.bf16.xpose.msra.mxu0 0
  %4134 = vmatpush.bf16.xpose.msra.mxu0 0
  %4135 = vmatpush.bf16.xpose.msra.mxu0 0
  %4136 = vmatpush.bf16.xpose.msra.mxu0 0
  %4137 = vmatpush.bf16.xpose.msra.mxu0 %v4128
  %4138 = vmatmul.bf16.gmra.mxu0 %v4125
  %v4139 = vpop.f32.mrf.mxu0
  %v4140 = vadd.f32 0.0, %v4139
  %v4141 = vpop.f32.mrf.mxu0
  %v4142 = vadd.f32 0.0, %v4141
  %4143 = vdwg.mxu0
  %v4144 = vsel %vm720, %v4140, -inf
  %4145 = vmax.xlane.f32.xlu0 %v4144
  %v4146 = vpop.xlane.xlu0 %4145
  %v4147 = vsel %vm720, %v4142, -inf
  %4148 = vmax.xlane.f32.xlu0 %v4147
  %v4149 = vpop.xlane.xlu0 %4148
  %v4150 = vsub.f32 %v4140, %v4146
  %v4151 = vsub.f32 %v4142, %v4149
  %v4152 = vmul.f32 %v4150, 1.442695
  %v4153 = vpow.pop %v4152
  %v4154 = vmul.f32 %v4151, 1.442695
  %v4155 = vpow.pop %v4154
  %v4156 = vsel %vm720, %v4153, 0.0
  %4157 = vadd.xlane.f32.xlu0 %v4156
  %v4158 = vpop.xlane.xlu0 %4157
  %v4159 = vsel %vm720, %v4155, 0.0
  %4160 = vadd.xlane.f32.xlu0 %v4159
  %v4161 = vpop.xlane.xlu0 %4160
  %v4162 = vrcp.pop %v4158
  %v4163 = vrcp.pop %v4161
  %v4164 = vpack.c.bf16 %v4155, %v4153
  %v4165 = vpack.c.bf16 %v4057, %v4055
  %v4167 = vsel %vm720, %v4164, 0
  %4169 = vmatpush.bf16.msra.mxu0 0
  %4170 = vmatpush.bf16.msra.mxu0 0
  %4171 = vmatpush.bf16.msra.mxu0 0
  %4172 = vmatpush.bf16.msra.mxu0 0
  %4173 = vmatpush.bf16.msra.mxu0 0
  %4174 = vmatpush.bf16.msra.mxu0 0
  %4175 = vmatpush.bf16.msra.mxu0 0
  %4176 = vmatpush.bf16.msra.mxu0 %v4165
  %4177 = vmatmul.bf16.gmra.mxu0 %v4167
  %v4178 = vpop.f32.mrf.mxu0
  %v4179 = vadd.f32 0.0, %v4178
  %v4180 = vpop.f32.mrf.mxu0
  %v4181 = vadd.f32 0.0, %v4180
  %4182 = vdwg.mxu0
  %v4183 = vmul.f32 %v4179, %v4162
  %v4184 = vmul.f32 %v4181, %v4163
  %s4185 = scalar_lea.vmem %s14, 16
  %v4186 = vld [vmem:[%s4185] sm:$0xf]
  %v4187 = vpack.c.bf16 %v4121, %v4120
  %v4188 = vpack.c.bf16 %v4184, %v4183
  %v4190 = vsel %vm699, %v4187, 0
  %v4193 = vsel %vm699, %v4188, 0
  %v4196 = vsel %vm834, %v4186, 0
  %4198 = vmatpush.bf16.msra.mxu0 0
  %4199 = vmatpush.bf16.msra.mxu0 0
  %4200 = vmatpush.bf16.msra.mxu0 0
  %4201 = vmatpush.bf16.msra.mxu0 0
  %4202 = vmatpush.bf16.msra.mxu0 0
  %4203 = vmatpush.bf16.msra.mxu0 0
  %4204 = vmatpush.bf16.msra.mxu0 0
  %4205 = vmatpush.bf16.msra.mxu0 %v4196
  %4206 = vmatmul.bf16.gmra.mxu0 %v4190
  %v4207 = vpop.f32.mrf.mxu0
  %v4208 = vadd.f32 0.0, %v4207
  %v4209 = vpop.f32.mrf.mxu0
  %v4210 = vadd.f32 0.0, %v4209
  %4211 = vmatmul.bf16.gmra.mxu0 %v4193
  %v4212 = vpop.f32.mrf.mxu0
  %v4213 = vadd.f32 0.0, %v4212
  %v4214 = vpop.f32.mrf.mxu0
  %v4215 = vadd.f32 0.0, %v4214
  %4216 = vdwg.mxu0
  %v4218 = vperm.slane %v3923, 0
  %v4220 = vadd.f32 %v4218, %v4208
  %v4221 = vadd.f32 %v4218, %v4210
  %v4222 = vadd.f32 %v4218, %v4213
  %v4223 = vadd.f32 %v4218, %v4215
  %s4224 = scalar_lea.vmem %s8, 80
  %v4225 = vld [vmem:[%s4224] sm:$0xf]
  %v4226 = vld [vmem:[%s4224 + $0x4] sm:$0xf]
  %v4227 = vld [vmem:[%s4224 + $0x8] sm:$0xf]
  %v4228 = vld [vmem:[%s4224 + $0xc] sm:$0xf]
  %s4229 = scalar_lea.vmem %s11, 5
  %v4230 = vld [vmem:[%s4229] sm:$0x1]
  %v4232 = vperm.slane %v4230, 0
  %v4238 = vunpack.c.l.b16 %v4225
  %v4239 = vunpack.c.l.b16 %v4226
  %v4240 = vunpack.c.l.b16 %v4227
  %v4241 = vunpack.c.l.b16 %v4228
  %v4242 = vpack.c.b16 %v4239, %v4238
  %v4243 = vpack.c.b16 %v4241, %v4240
  %4246 = vmatpush.bf16.msra.mxu0 0
  %4247 = vmatpush.bf16.msra.mxu0 0
  %4248 = vmatpush.bf16.msra.mxu0 0
  %4249 = vmatpush.bf16.msra.mxu0 0
  %4250 = vmatpush.bf16.msra.mxu0 0
  %4251 = vmatpush.bf16.msra.mxu0 0
  %4252 = vmatpush.bf16.msra.mxu0 %v4243
  %4253 = vmatpush.bf16.msra.mxu0 %v4242
  %4254 = vmatmul.bf16.gmra.mxu0 %v3949
  %v4255 = vpop.f32.mrf.mxu0
  %v4256 = vadd.f32 %v4232, %v4255
  %v4257 = vpop.f32.mrf.mxu0
  %v4258 = vadd.f32 %v4232, %v4257
  %4259 = vmatmul.bf16.gmra.mxu0 %v3952
  %v4260 = vpop.f32.mrf.mxu0
  %v4261 = vadd.f32 %v4232, %v4260
  %v4262 = vpop.f32.mrf.mxu0
  %v4263 = vadd.f32 %v4232, %v4262
  %4264 = vdwg.mxu0
  %v4265 = vmul.f32 %v4256, 0.35355338
  %v4266 = vmul.f32 %v4258, 0.35355338
  %v4267 = vmul.f32 %v4261, 0.35355338
  %v4268 = vmul.f32 %v4263, 0.35355338
  %s4269 = scalar_lea.vmem %s9, 80
  %v4270 = vld [vmem:[%s4269] sm:$0xf]
  %v4271 = vld [vmem:[%s4269 + $0x4] sm:$0xf]
  %v4272 = vld [vmem:[%s4269 + $0x8] sm:$0xf]
  %v4273 = vld [vmem:[%s4269 + $0xc] sm:$0xf]
  %s4274 = scalar_lea.vmem %s12, 5
  %v4275 = vld [vmem:[%s4274] sm:$0x1]
  %v4277 = vperm.slane %v4275, 0
  %v4283 = vunpack.c.l.b16 %v4270
  %v4284 = vunpack.c.l.b16 %v4271
  %v4285 = vunpack.c.l.b16 %v4272
  %v4286 = vunpack.c.l.b16 %v4273
  %v4287 = vpack.c.b16 %v4284, %v4283
  %v4288 = vpack.c.b16 %v4286, %v4285
  %4291 = vmatpush.bf16.msra.mxu0 0
  %4292 = vmatpush.bf16.msra.mxu0 0
  %4293 = vmatpush.bf16.msra.mxu0 0
  %4294 = vmatpush.bf16.msra.mxu0 0
  %4295 = vmatpush.bf16.msra.mxu0 0
  %4296 = vmatpush.bf16.msra.mxu0 0
  %4297 = vmatpush.bf16.msra.mxu0 %v4288
  %4298 = vmatpush.bf16.msra.mxu0 %v4287
  %4299 = vmatmul.bf16.gmra.mxu0 %v3949
  %v4300 = vpop.f32.mrf.mxu0
  %v4301 = vadd.f32 %v4277, %v4300
  %v4302 = vpop.f32.mrf.mxu0
  %v4303 = vadd.f32 %v4277, %v4302
  %4304 = vmatmul.bf16.gmra.mxu0 %v3952
  %v4305 = vpop.f32.mrf.mxu0
  %v4306 = vadd.f32 %v4277, %v4305
  %v4307 = vpop.f32.mrf.mxu0
  %v4308 = vadd.f32 %v4277, %v4307
  %4309 = vdwg.mxu0
  %s4310 = scalar_lea.vmem %s10, 80
  %v4311 = vld [vmem:[%s4310] sm:$0xf]
  %v4312 = vld [vmem:[%s4310 + $0x4] sm:$0xf]
  %v4313 = vld [vmem:[%s4310 + $0x8] sm:$0xf]
  %v4314 = vld [vmem:[%s4310 + $0xc] sm:$0xf]
  %s4315 = scalar_lea.vmem %s13, 5
  %v4316 = vld [vmem:[%s4315] sm:$0x1]
  %v4318 = vperm.slane %v4316, 0
  %v4324 = vunpack.c.l.b16 %v4311
  %v4325 = vunpack.c.l.b16 %v4312
  %v4326 = vunpack.c.l.b16 %v4313
  %v4327 = vunpack.c.l.b16 %v4314
  %v4328 = vpack.c.b16 %v4325, %v4324
  %v4329 = vpack.c.b16 %v4327, %v4326
  %4332 = vmatpush.bf16.msra.mxu0 0
  %4333 = vmatpush.bf16.msra.mxu0 0
  %4334 = vmatpush.bf16.msra.mxu0 0
  %4335 = vmatpush.bf16.msra.mxu0 0
  %4336 = vmatpush.bf16.msra.mxu0 0
  %4337 = vmatpush.bf16.msra.mxu0 0
  %4338 = vmatpush.bf16.msra.mxu0 %v4329
  %4339 = vmatpush.bf16.msra.mxu0 %v4328
  %4340 = vmatmul.bf16.gmra.mxu0 %v3949
  %v4341 = vpop.f32.mrf.mxu0
  %v4342 = vadd.f32 %v4318, %v4341
  %v4343 = vpop.f32.mrf.mxu0
  %v4344 = vadd.f32 %v4318, %v4343
  %4345 = vmatmul.bf16.gmra.mxu0 %v3952
  %v4346 = vpop.f32.mrf.mxu0
  %v4347 = vadd.f32 %v4318, %v4346
  %v4348 = vpop.f32.mrf.mxu0
  %v4349 = vadd.f32 %v4318, %v4348
  %4350 = vdwg.mxu0
  %v4351 = vpack.c.bf16 %v4266, %v4265
  %v4352 = vpack.c.bf16 %v4303, %v4301
  %v4354 = vsel %vm699, %v4351, 0
  %v4357 = vsel %vm699, %v4352, 0
  %4359 = vmatpush.bf16.xpose.msra.mxu0 0
  %4360 = vmatpush.bf16.xpose.msra.mxu0 0
  %4361 = vmatpush.bf16.xpose.msra.mxu0 0
  %4362 = vmatpush.bf16.xpose.msra.mxu0 0
  %4363 = vmatpush.bf16.xpose.msra.mxu0 0
  %4364 = vmatpush.bf16.xpose.msra.mxu0 0
  %4365 = vmatpush.bf16.xpose.msra.mxu0 0
  %4366 = vmatpush.bf16.xpose.msra.mxu0 %v4357
  %4367 = vmatmul.bf16.gmra.mxu0 %v4354
  %v4368 = vpop.f32.mrf.mxu0
  %v4369 = vadd.f32 0.0, %v4368
  %v4370 = vpop.f32.mrf.mxu0
  %v4371 = vadd.f32 0.0, %v4370
  %4372 = vdwg.mxu0
  %v4373 = vsel %vm720, %v4369, -inf
  %4374 = vmax.xlane.f32.xlu0 %v4373
  %v4375 = vpop.xlane.xlu0 %4374
  %v4376 = vsel %vm720, %v4371, -inf
  %4377 = vmax.xlane.f32.xlu0 %v4376
  %v4378 = vpop.xlane.xlu0 %4377
  %v4379 = vsub.f32 %v4369, %v4375
  %v4380 = vsub.f32 %v4371, %v4378
  %v4381 = vmul.f32 %v4379, 1.442695
  %v4382 = vpow.pop %v4381
  %v4383 = vmul.f32 %v4380, 1.442695
  %v4384 = vpow.pop %v4383
  %v4385 = vsel %vm720, %v4382, 0.0
  %4386 = vadd.xlane.f32.xlu0 %v4385
  %v4387 = vpop.xlane.xlu0 %4386
  %v4388 = vsel %vm720, %v4384, 0.0
  %4389 = vadd.xlane.f32.xlu0 %v4388
  %v4390 = vpop.xlane.xlu0 %4389
  %v4391 = vrcp.pop %v4387
  %v4392 = vrcp.pop %v4390
  %v4393 = vpack.c.bf16 %v4384, %v4382
  %v4394 = vpack.c.bf16 %v4344, %v4342
  %v4396 = vsel %vm720, %v4393, 0
  %4398 = vmatpush.bf16.msra.mxu0 0
  %4399 = vmatpush.bf16.msra.mxu0 0
  %4400 = vmatpush.bf16.msra.mxu0 0
  %4401 = vmatpush.bf16.msra.mxu0 0
  %4402 = vmatpush.bf16.msra.mxu0 0
  %4403 = vmatpush.bf16.msra.mxu0 0
  %4404 = vmatpush.bf16.msra.mxu0 0
  %4405 = vmatpush.bf16.msra.mxu0 %v4394
  %4406 = vmatmul.bf16.gmra.mxu0 %v4396
  %v4407 = vpop.f32.mrf.mxu0
  %v4408 = vadd.f32 0.0, %v4407
  %v4409 = vpop.f32.mrf.mxu0
  %v4410 = vadd.f32 0.0, %v4409
  %4411 = vdwg.mxu0
  %v4412 = vmul.f32 %v4408, %v4391
  %v4413 = vmul.f32 %v4410, %v4392
  %v4414 = vpack.c.bf16 %v4268, %v4267
  %v4415 = vpack.c.bf16 %v4308, %v4306
  %v4417 = vsel %vm699, %v4414, 0
  %v4420 = vsel %vm699, %v4415, 0
  %4422 = vmatpush.bf16.xpose.msra.mxu0 0
  %4423 = vmatpush.bf16.xpose.msra.mxu0 0
  %4424 = vmatpush.bf16.xpose.msra.mxu0 0
  %4425 = vmatpush.bf16.xpose.msra.mxu0 0
  %4426 = vmatpush.bf16.xpose.msra.mxu0 0
  %4427 = vmatpush.bf16.xpose.msra.mxu0 0
  %4428 = vmatpush.bf16.xpose.msra.mxu0 0
  %4429 = vmatpush.bf16.xpose.msra.mxu0 %v4420
  %4430 = vmatmul.bf16.gmra.mxu0 %v4417
  %v4431 = vpop.f32.mrf.mxu0
  %v4432 = vadd.f32 0.0, %v4431
  %v4433 = vpop.f32.mrf.mxu0
  %v4434 = vadd.f32 0.0, %v4433
  %4435 = vdwg.mxu0
  %v4436 = vsel %vm720, %v4432, -inf
  %4437 = vmax.xlane.f32.xlu0 %v4436
  %v4438 = vpop.xlane.xlu0 %4437
  %v4439 = vsel %vm720, %v4434, -inf
  %4440 = vmax.xlane.f32.xlu0 %v4439
  %v4441 = vpop.xlane.xlu0 %4440
  %v4442 = vsub.f32 %v4432, %v4438
  %v4443 = vsub.f32 %v4434, %v4441
  %v4444 = vmul.f32 %v4442, 1.442695
  %v4445 = vpow.pop %v4444
  %v4446 = vmul.f32 %v4443, 1.442695
  %v4447 = vpow.pop %v4446
  %v4448 = vsel %vm720, %v4445, 0.0
  %4449 = vadd.xlane.f32.xlu0 %v4448
  %v4450 = vpop.xlane.xlu0 %4449
  %v4451 = vsel %vm720, %v4447, 0.0
  %4452 = vadd.xlane.f32.xlu0 %v4451
  %v4453 = vpop.xlane.xlu0 %4452
  %v4454 = vrcp.pop %v4450
  %v4455 = vrcp.pop %v4453
  %v4456 = vpack.c.bf16 %v4447, %v4445
  %v4457 = vpack.c.bf16 %v4349, %v4347
  %v4459 = vsel %vm720, %v4456, 0
  %4461 = vmatpush.bf16.msra.mxu0 0
  %4462 = vmatpush.bf16.msra.mxu0 0
  %4463 = vmatpush.bf16.msra.mxu0 0
  %4464 = vmatpush.bf16.msra.mxu0 0
  %4465 = vmatpush.bf16.msra.mxu0 0
  %4466 = vmatpush.bf16.msra.mxu0 0
  %4467 = vmatpush.bf16.msra.mxu0 0
  %4468 = vmatpush.bf16.msra.mxu0 %v4457
  %4469 = vmatmul.bf16.gmra.mxu0 %v4459
  %v4470 = vpop.f32.mrf.mxu0
  %v4471 = vadd.f32 0.0, %v4470
  %v4472 = vpop.f32.mrf.mxu0
  %v4473 = vadd.f32 0.0, %v4472
  %4474 = vdwg.mxu0
  %v4475 = vmul.f32 %v4471, %v4454
  %v4476 = vmul.f32 %v4473, %v4455
  %s4477 = scalar_lea.vmem %s14, 20
  %v4478 = vld [vmem:[%s4477] sm:$0xf]
  %v4479 = vpack.c.bf16 %v4413, %v4412
  %v4480 = vpack.c.bf16 %v4476, %v4475
  %v4482 = vsel %vm699, %v4479, 0
  %v4485 = vsel %vm699, %v4480, 0
  %v4488 = vsel %vm834, %v4478, 0
  %4490 = vmatpush.bf16.msra.mxu0 0
  %4491 = vmatpush.bf16.msra.mxu0 0
  %4492 = vmatpush.bf16.msra.mxu0 0
  %4493 = vmatpush.bf16.msra.mxu0 0
  %4494 = vmatpush.bf16.msra.mxu0 0
  %4495 = vmatpush.bf16.msra.mxu0 0
  %4496 = vmatpush.bf16.msra.mxu0 0
  %4497 = vmatpush.bf16.msra.mxu0 %v4488
  %4498 = vmatmul.bf16.gmra.mxu0 %v4482
  %v4499 = vpop.f32.mrf.mxu0
  %v4500 = vadd.f32 0.0, %v4499
  %v4501 = vpop.f32.mrf.mxu0
  %v4502 = vadd.f32 0.0, %v4501
  %4503 = vmatmul.bf16.gmra.mxu0 %v4485
  %v4504 = vpop.f32.mrf.mxu0
  %v4505 = vadd.f32 0.0, %v4504
  %v4506 = vpop.f32.mrf.mxu0
  %v4507 = vadd.f32 0.0, %v4506
  %4508 = vdwg.mxu0
  %v4509 = vadd.f32 %v4220, %v4500
  %v4510 = vadd.f32 %v4221, %v4502
  %v4511 = vadd.f32 %v4222, %v4505
  %v4512 = vadd.f32 %v4223, %v4507
  %s4513 = scalar_lea.vmem %s8, 96
  %v4514 = vld [vmem:[%s4513] sm:$0xf]
  %v4515 = vld [vmem:[%s4513 + $0x4] sm:$0xf]
  %v4516 = vld [vmem:[%s4513 + $0x8] sm:$0xf]
  %v4517 = vld [vmem:[%s4513 + $0xc] sm:$0xf]
  %s4518 = scalar_lea.vmem %s11, 6
  %v4519 = vld [vmem:[%s4518] sm:$0x1]
  %v4521 = vperm.slane %v4519, 0
  %v4527 = vunpack.c.l.b16 %v4514
  %v4528 = vunpack.c.l.b16 %v4515
  %v4529 = vunpack.c.l.b16 %v4516
  %v4530 = vunpack.c.l.b16 %v4517
  %v4531 = vpack.c.b16 %v4528, %v4527
  %v4532 = vpack.c.b16 %v4530, %v4529
  %4535 = vmatpush.bf16.msra.mxu0 0
  %4536 = vmatpush.bf16.msra.mxu0 0
  %4537 = vmatpush.bf16.msra.mxu0 0
  %4538 = vmatpush.bf16.msra.mxu0 0
  %4539 = vmatpush.bf16.msra.mxu0 0
  %4540 = vmatpush.bf16.msra.mxu0 0
  %4541 = vmatpush.bf16.msra.mxu0 %v4532
  %4542 = vmatpush.bf16.msra.mxu0 %v4531
  %4543 = vmatmul.bf16.gmra.mxu0 %v3949
  %v4544 = vpop.f32.mrf.mxu0
  %v4545 = vadd.f32 %v4521, %v4544
  %v4546 = vpop.f32.mrf.mxu0
  %v4547 = vadd.f32 %v4521, %v4546
  %4548 = vmatmul.bf16.gmra.mxu0 %v3952
  %v4549 = vpop.f32.mrf.mxu0
  %v4550 = vadd.f32 %v4521, %v4549
  %v4551 = vpop.f32.mrf.mxu0
  %v4552 = vadd.f32 %v4521, %v4551
  %4553 = vdwg.mxu0
  %v4554 = vmul.f32 %v4545, 0.35355338
  %v4555 = vmul.f32 %v4547, 0.35355338
  %v4556 = vmul.f32 %v4550, 0.35355338
  %v4557 = vmul.f32 %v4552, 0.35355338
  %s4558 = scalar_lea.vmem %s9, 96
  %v4559 = vld [vmem:[%s4558] sm:$0xf]
  %v4560 = vld [vmem:[%s4558 + $0x4] sm:$0xf]
  %v4561 = vld [vmem:[%s4558 + $0x8] sm:$0xf]
  %v4562 = vld [vmem:[%s4558 + $0xc] sm:$0xf]
  %s4563 = scalar_lea.vmem %s12, 6
  %v4564 = vld [vmem:[%s4563] sm:$0x1]
  %v4566 = vperm.slane %v4564, 0
  %v4572 = vunpack.c.l.b16 %v4559
  %v4573 = vunpack.c.l.b16 %v4560
  %v4574 = vunpack.c.l.b16 %v4561
  %v4575 = vunpack.c.l.b16 %v4562
  %v4576 = vpack.c.b16 %v4573, %v4572
  %v4577 = vpack.c.b16 %v4575, %v4574
  %4580 = vmatpush.bf16.msra.mxu0 0
  %4581 = vmatpush.bf16.msra.mxu0 0
  %4582 = vmatpush.bf16.msra.mxu0 0
  %4583 = vmatpush.bf16.msra.mxu0 0
  %4584 = vmatpush.bf16.msra.mxu0 0
  %4585 = vmatpush.bf16.msra.mxu0 0
  %4586 = vmatpush.bf16.msra.mxu0 %v4577
  %4587 = vmatpush.bf16.msra.mxu0 %v4576
  %4588 = vmatmul.bf16.gmra.mxu0 %v3949
  %v4589 = vpop.f32.mrf.mxu0
  %v4590 = vadd.f32 %v4566, %v4589
  %v4591 = vpop.f32.mrf.mxu0
  %v4592 = vadd.f32 %v4566, %v4591
  %4593 = vmatmul.bf16.gmra.mxu0 %v3952
  %v4594 = vpop.f32.mrf.mxu0
  %v4595 = vadd.f32 %v4566, %v4594
  %v4596 = vpop.f32.mrf.mxu0
  %v4597 = vadd.f32 %v4566, %v4596
  %4598 = vdwg.mxu0
  %s4599 = scalar_lea.vmem %s10, 96
  %v4600 = vld [vmem:[%s4599] sm:$0xf]
  %v4601 = vld [vmem:[%s4599 + $0x4] sm:$0xf]
  %v4602 = vld [vmem:[%s4599 + $0x8] sm:$0xf]
  %v4603 = vld [vmem:[%s4599 + $0xc] sm:$0xf]
  %s4604 = scalar_lea.vmem %s13, 6
  %v4605 = vld [vmem:[%s4604] sm:$0x1]
  %v4607 = vperm.slane %v4605, 0
  %v4613 = vunpack.c.l.b16 %v4600
  %v4614 = vunpack.c.l.b16 %v4601
  %v4615 = vunpack.c.l.b16 %v4602
  %v4616 = vunpack.c.l.b16 %v4603
  %v4617 = vpack.c.b16 %v4614, %v4613
  %v4618 = vpack.c.b16 %v4616, %v4615
  %4621 = vmatpush.bf16.msra.mxu0 0
  %4622 = vmatpush.bf16.msra.mxu0 0
  %4623 = vmatpush.bf16.msra.mxu0 0
  %4624 = vmatpush.bf16.msra.mxu0 0
  %4625 = vmatpush.bf16.msra.mxu0 0
  %4626 = vmatpush.bf16.msra.mxu0 0
  %4627 = vmatpush.bf16.msra.mxu0 %v4618
  %4628 = vmatpush.bf16.msra.mxu0 %v4617
  %4629 = vmatmul.bf16.gmra.mxu0 %v3949
  %v4630 = vpop.f32.mrf.mxu0
  %v4631 = vadd.f32 %v4607, %v4630
  %v4632 = vpop.f32.mrf.mxu0
  %v4633 = vadd.f32 %v4607, %v4632
  %4634 = vmatmul.bf16.gmra.mxu0 %v3952
  %v4635 = vpop.f32.mrf.mxu0
  %v4636 = vadd.f32 %v4607, %v4635
  %v4637 = vpop.f32.mrf.mxu0
  %v4638 = vadd.f32 %v4607, %v4637
  %4639 = vdwg.mxu0
  %v4640 = vpack.c.bf16 %v4555, %v4554
  %v4641 = vpack.c.bf16 %v4592, %v4590
  %v4643 = vsel %vm699, %v4640, 0
  %v4646 = vsel %vm699, %v4641, 0
  %4648 = vmatpush.bf16.xpose.msra.mxu0 0
  %4649 = vmatpush.bf16.xpose.msra.mxu0 0
  %4650 = vmatpush.bf16.xpose.msra.mxu0 0
  %4651 = vmatpush.bf16.xpose.msra.mxu0 0
  %4652 = vmatpush.bf16.xpose.msra.mxu0 0
  %4653 = vmatpush.bf16.xpose.msra.mxu0 0
  %4654 = vmatpush.bf16.xpose.msra.mxu0 0
  %4655 = vmatpush.bf16.xpose.msra.mxu0 %v4646
  %4656 = vmatmul.bf16.gmra.mxu0 %v4643
  %v4657 = vpop.f32.mrf.mxu0
  %v4658 = vadd.f32 0.0, %v4657
  %v4659 = vpop.f32.mrf.mxu0
  %v4660 = vadd.f32 0.0, %v4659
  %4661 = vdwg.mxu0
  %v4662 = vsel %vm720, %v4658, -inf
  %4663 = vmax.xlane.f32.xlu0 %v4662
  %v4664 = vpop.xlane.xlu0 %4663
  %v4665 = vsel %vm720, %v4660, -inf
  %4666 = vmax.xlane.f32.xlu0 %v4665
  %v4667 = vpop.xlane.xlu0 %4666
  %v4668 = vsub.f32 %v4658, %v4664
  %v4669 = vsub.f32 %v4660, %v4667
  %v4670 = vmul.f32 %v4668, 1.442695
  %v4671 = vpow.pop %v4670
  %v4672 = vmul.f32 %v4669, 1.442695
  %v4673 = vpow.pop %v4672
  %v4674 = vsel %vm720, %v4671, 0.0
  %4675 = vadd.xlane.f32.xlu0 %v4674
  %v4676 = vpop.xlane.xlu0 %4675
  %v4677 = vsel %vm720, %v4673, 0.0
  %4678 = vadd.xlane.f32.xlu0 %v4677
  %v4679 = vpop.xlane.xlu0 %4678
  %v4680 = vrcp.pop %v4676
  %v4681 = vrcp.pop %v4679
  %v4682 = vpack.c.bf16 %v4673, %v4671
  %v4683 = vpack.c.bf16 %v4633, %v4631
  %v4685 = vsel %vm720, %v4682, 0
  %4687 = vmatpush.bf16.msra.mxu0 0
  %4688 = vmatpush.bf16.msra.mxu0 0
  %4689 = vmatpush.bf16.msra.mxu0 0
  %4690 = vmatpush.bf16.msra.mxu0 0
  %4691 = vmatpush.bf16.msra.mxu0 0
  %4692 = vmatpush.bf16.msra.mxu0 0
  %4693 = vmatpush.bf16.msra.mxu0 0
  %4694 = vmatpush.bf16.msra.mxu0 %v4683
  %4695 = vmatmul.bf16.gmra.mxu0 %v4685
  %v4696 = vpop.f32.mrf.mxu0
  %v4697 = vadd.f32 0.0, %v4696
  %v4698 = vpop.f32.mrf.mxu0
  %v4699 = vadd.f32 0.0, %v4698
  %4700 = vdwg.mxu0
  %v4701 = vmul.f32 %v4697, %v4680
  %v4702 = vmul.f32 %v4699, %v4681
  %v4703 = vpack.c.bf16 %v4557, %v4556
  %v4704 = vpack.c.bf16 %v4597, %v4595
  %v4706 = vsel %vm699, %v4703, 0
  %v4709 = vsel %vm699, %v4704, 0
  %4711 = vmatpush.bf16.xpose.msra.mxu0 0
  %4712 = vmatpush.bf16.xpose.msra.mxu0 0
  %4713 = vmatpush.bf16.xpose.msra.mxu0 0
  %4714 = vmatpush.bf16.xpose.msra.mxu0 0
  %4715 = vmatpush.bf16.xpose.msra.mxu0 0
  %4716 = vmatpush.bf16.xpose.msra.mxu0 0
  %4717 = vmatpush.bf16.xpose.msra.mxu0 0
  %4718 = vmatpush.bf16.xpose.msra.mxu0 %v4709
  %4719 = vmatmul.bf16.gmra.mxu0 %v4706
  %v4720 = vpop.f32.mrf.mxu0
  %v4721 = vadd.f32 0.0, %v4720
  %v4722 = vpop.f32.mrf.mxu0
  %v4723 = vadd.f32 0.0, %v4722
  %4724 = vdwg.mxu0
  %v4725 = vsel %vm720, %v4721, -inf
  %4726 = vmax.xlane.f32.xlu0 %v4725
  %v4727 = vpop.xlane.xlu0 %4726
  %v4728 = vsel %vm720, %v4723, -inf
  %4729 = vmax.xlane.f32.xlu0 %v4728
  %v4730 = vpop.xlane.xlu0 %4729
  %v4731 = vsub.f32 %v4721, %v4727
  %v4732 = vsub.f32 %v4723, %v4730
  %v4733 = vmul.f32 %v4731, 1.442695
  %v4734 = vpow.pop %v4733
  %v4735 = vmul.f32 %v4732, 1.442695
  %v4736 = vpow.pop %v4735
  %v4737 = vsel %vm720, %v4734, 0.0
  %4738 = vadd.xlane.f32.xlu0 %v4737
  %v4739 = vpop.xlane.xlu0 %4738
  %v4740 = vsel %vm720, %v4736, 0.0
  %4741 = vadd.xlane.f32.xlu0 %v4740
  %v4742 = vpop.xlane.xlu0 %4741
  %v4743 = vrcp.pop %v4739
  %v4744 = vrcp.pop %v4742
  %v4745 = vpack.c.bf16 %v4736, %v4734
  %v4746 = vpack.c.bf16 %v4638, %v4636
  %v4748 = vsel %vm720, %v4745, 0
  %4750 = vmatpush.bf16.msra.mxu0 0
  %4751 = vmatpush.bf16.msra.mxu0 0
  %4752 = vmatpush.bf16.msra.mxu0 0
  %4753 = vmatpush.bf16.msra.mxu0 0
  %4754 = vmatpush.bf16.msra.mxu0 0
  %4755 = vmatpush.bf16.msra.mxu0 0
  %4756 = vmatpush.bf16.msra.mxu0 0
  %4757 = vmatpush.bf16.msra.mxu0 %v4746
  %4758 = vmatmul.bf16.gmra.mxu0 %v4748
  %v4759 = vpop.f32.mrf.mxu0
  %v4760 = vadd.f32 0.0, %v4759
  %v4761 = vpop.f32.mrf.mxu0
  %v4762 = vadd.f32 0.0, %v4761
  %4763 = vdwg.mxu0
  %v4764 = vmul.f32 %v4760, %v4743
  %v4765 = vmul.f32 %v4762, %v4744
  %s4766 = scalar_lea.vmem %s14, 24
  %v4767 = vld [vmem:[%s4766] sm:$0xf]
  %v4768 = vpack.c.bf16 %v4702, %v4701
  %v4769 = vpack.c.bf16 %v4765, %v4764
  %v4771 = vsel %vm699, %v4768, 0
  %v4774 = vsel %vm699, %v4769, 0
  %v4777 = vsel %vm834, %v4767, 0
  %4779 = vmatpush.bf16.msra.mxu0 0
  %4780 = vmatpush.bf16.msra.mxu0 0
  %4781 = vmatpush.bf16.msra.mxu0 0
  %4782 = vmatpush.bf16.msra.mxu0 0
  %4783 = vmatpush.bf16.msra.mxu0 0
  %4784 = vmatpush.bf16.msra.mxu0 0
  %4785 = vmatpush.bf16.msra.mxu0 0
  %4786 = vmatpush.bf16.msra.mxu0 %v4777
  %4787 = vmatmul.bf16.gmra.mxu0 %v4771
  %v4788 = vpop.f32.mrf.mxu0
  %v4789 = vadd.f32 0.0, %v4788
  %v4790 = vpop.f32.mrf.mxu0
  %v4791 = vadd.f32 0.0, %v4790
  %4792 = vmatmul.bf16.gmra.mxu0 %v4774
  %v4793 = vpop.f32.mrf.mxu0
  %v4794 = vadd.f32 0.0, %v4793
  %v4795 = vpop.f32.mrf.mxu0
  %v4796 = vadd.f32 0.0, %v4795
  %4797 = vdwg.mxu0
  %v4798 = vadd.f32 %v4509, %v4789
  %v4799 = vadd.f32 %v4510, %v4791
  %v4800 = vadd.f32 %v4511, %v4794
  %v4801 = vadd.f32 %v4512, %v4796
  %s4802 = scalar_lea.vmem %s8, 112
  %v4803 = vld [vmem:[%s4802] sm:$0xf]
  %v4804 = vld [vmem:[%s4802 + $0x4] sm:$0xf]
  %v4805 = vld [vmem:[%s4802 + $0x8] sm:$0xf]
  %v4806 = vld [vmem:[%s4802 + $0xc] sm:$0xf]
  %s4807 = scalar_lea.vmem %s11, 7
  %v4808 = vld [vmem:[%s4807] sm:$0x1]
  %v4810 = vperm.slane %v4808, 0
  %v4816 = vunpack.c.l.b16 %v4803
  %v4817 = vunpack.c.l.b16 %v4804
  %v4818 = vunpack.c.l.b16 %v4805
  %v4819 = vunpack.c.l.b16 %v4806
  %v4820 = vpack.c.b16 %v4817, %v4816
  %v4821 = vpack.c.b16 %v4819, %v4818
  %4824 = vmatpush.bf16.msra.mxu0 0
  %4825 = vmatpush.bf16.msra.mxu0 0
  %4826 = vmatpush.bf16.msra.mxu0 0
  %4827 = vmatpush.bf16.msra.mxu0 0
  %4828 = vmatpush.bf16.msra.mxu0 0
  %4829 = vmatpush.bf16.msra.mxu0 0
  %4830 = vmatpush.bf16.msra.mxu0 %v4821
  %4831 = vmatpush.bf16.msra.mxu0 %v4820
  %4832 = vmatmul.bf16.gmra.mxu0 %v3949
  %v4833 = vpop.f32.mrf.mxu0
  %v4834 = vadd.f32 %v4810, %v4833
  %v4835 = vpop.f32.mrf.mxu0
  %v4836 = vadd.f32 %v4810, %v4835
  %4837 = vmatmul.bf16.gmra.mxu0 %v3952
  %v4838 = vpop.f32.mrf.mxu0
  %v4839 = vadd.f32 %v4810, %v4838
  %v4840 = vpop.f32.mrf.mxu0
  %v4841 = vadd.f32 %v4810, %v4840
  %4842 = vdwg.mxu0
  %v4843 = vmul.f32 %v4834, 0.35355338
  %v4844 = vmul.f32 %v4836, 0.35355338
  %v4845 = vmul.f32 %v4839, 0.35355338
  %v4846 = vmul.f32 %v4841, 0.35355338
  %s4847 = scalar_lea.vmem %s9, 112
  %v4848 = vld [vmem:[%s4847] sm:$0xf]
  %v4849 = vld [vmem:[%s4847 + $0x4] sm:$0xf]
  %v4850 = vld [vmem:[%s4847 + $0x8] sm:$0xf]
  %v4851 = vld [vmem:[%s4847 + $0xc] sm:$0xf]
  %s4852 = scalar_lea.vmem %s12, 7
  %v4853 = vld [vmem:[%s4852] sm:$0x1]
  %v4855 = vperm.slane %v4853, 0
  %v4861 = vunpack.c.l.b16 %v4848
  %v4862 = vunpack.c.l.b16 %v4849
  %v4863 = vunpack.c.l.b16 %v4850
  %v4864 = vunpack.c.l.b16 %v4851
  %v4865 = vpack.c.b16 %v4862, %v4861
  %v4866 = vpack.c.b16 %v4864, %v4863
  %4869 = vmatpush.bf16.msra.mxu0 0
  %4870 = vmatpush.bf16.msra.mxu0 0
  %4871 = vmatpush.bf16.msra.mxu0 0
  %4872 = vmatpush.bf16.msra.mxu0 0
  %4873 = vmatpush.bf16.msra.mxu0 0
  %4874 = vmatpush.bf16.msra.mxu0 0
  %4875 = vmatpush.bf16.msra.mxu0 %v4866
  %4876 = vmatpush.bf16.msra.mxu0 %v4865
  %4877 = vmatmul.bf16.gmra.mxu0 %v3949
  %v4878 = vpop.f32.mrf.mxu0
  %v4879 = vadd.f32 %v4855, %v4878
  %v4880 = vpop.f32.mrf.mxu0
  %v4881 = vadd.f32 %v4855, %v4880
  %4882 = vmatmul.bf16.gmra.mxu0 %v3952
  %v4883 = vpop.f32.mrf.mxu0
  %v4884 = vadd.f32 %v4855, %v4883
  %v4885 = vpop.f32.mrf.mxu0
  %v4886 = vadd.f32 %v4855, %v4885
  %4887 = vdwg.mxu0
  %s4888 = scalar_lea.vmem %s10, 112
  %v4889 = vld [vmem:[%s4888] sm:$0xf]
  %v4890 = vld [vmem:[%s4888 + $0x4] sm:$0xf]
  %v4891 = vld [vmem:[%s4888 + $0x8] sm:$0xf]
  %v4892 = vld [vmem:[%s4888 + $0xc] sm:$0xf]
  %s4893 = scalar_lea.vmem %s13, 7
  %v4894 = vld [vmem:[%s4893] sm:$0x1]
  %v4896 = vperm.slane %v4894, 0
  %v4902 = vunpack.c.l.b16 %v4889
  %v4903 = vunpack.c.l.b16 %v4890
  %v4904 = vunpack.c.l.b16 %v4891
  %v4905 = vunpack.c.l.b16 %v4892
  %v4906 = vpack.c.b16 %v4903, %v4902
  %v4907 = vpack.c.b16 %v4905, %v4904
  %4910 = vmatpush.bf16.msra.mxu0 0
  %4911 = vmatpush.bf16.msra.mxu0 0
  %4912 = vmatpush.bf16.msra.mxu0 0
  %4913 = vmatpush.bf16.msra.mxu0 0
  %4914 = vmatpush.bf16.msra.mxu0 0
  %4915 = vmatpush.bf16.msra.mxu0 0
  %4916 = vmatpush.bf16.msra.mxu0 %v4907
  %4917 = vmatpush.bf16.msra.mxu0 %v4906
  %4918 = vmatmul.bf16.gmra.mxu0 %v3949
  %v4919 = vpop.f32.mrf.mxu0
  %v4920 = vadd.f32 %v4896, %v4919
  %v4921 = vpop.f32.mrf.mxu0
  %v4922 = vadd.f32 %v4896, %v4921
  %4923 = vmatmul.bf16.gmra.mxu0 %v3952
  %v4924 = vpop.f32.mrf.mxu0
  %v4925 = vadd.f32 %v4896, %v4924
  %v4926 = vpop.f32.mrf.mxu0
  %v4927 = vadd.f32 %v4896, %v4926
  %4928 = vdwg.mxu0
  %v4929 = vpack.c.bf16 %v4844, %v4843
  %v4930 = vpack.c.bf16 %v4881, %v4879
  %v4932 = vsel %vm699, %v4929, 0
  %v4935 = vsel %vm699, %v4930, 0
  %4937 = vmatpush.bf16.xpose.msra.mxu0 0
  %4938 = vmatpush.bf16.xpose.msra.mxu0 0
  %4939 = vmatpush.bf16.xpose.msra.mxu0 0
  %4940 = vmatpush.bf16.xpose.msra.mxu0 0
  %4941 = vmatpush.bf16.xpose.msra.mxu0 0
  %4942 = vmatpush.bf16.xpose.msra.mxu0 0
  %4943 = vmatpush.bf16.xpose.msra.mxu0 0
  %4944 = vmatpush.bf16.xpose.msra.mxu0 %v4935
  %4945 = vmatmul.bf16.gmra.mxu0 %v4932
  %v4946 = vpop.f32.mrf.mxu0
  %v4947 = vadd.f32 0.0, %v4946
  %v4948 = vpop.f32.mrf.mxu0
  %v4949 = vadd.f32 0.0, %v4948
  %4950 = vdwg.mxu0
  %v4951 = vsel %vm720, %v4947, -inf
  %4952 = vmax.xlane.f32.xlu0 %v4951
  %v4953 = vpop.xlane.xlu0 %4952
  %v4954 = vsel %vm720, %v4949, -inf
  %4955 = vmax.xlane.f32.xlu0 %v4954
  %v4956 = vpop.xlane.xlu0 %4955
  %v4957 = vsub.f32 %v4947, %v4953
  %v4958 = vsub.f32 %v4949, %v4956
  %v4959 = vmul.f32 %v4957, 1.442695
  %v4960 = vpow.pop %v4959
  %v4961 = vmul.f32 %v4958, 1.442695
  %v4962 = vpow.pop %v4961
  %v4963 = vsel %vm720, %v4960, 0.0
  %4964 = vadd.xlane.f32.xlu0 %v4963
  %v4965 = vpop.xlane.xlu0 %4964
  %v4966 = vsel %vm720, %v4962, 0.0
  %4967 = vadd.xlane.f32.xlu0 %v4966
  %v4968 = vpop.xlane.xlu0 %4967
  %v4969 = vrcp.pop %v4965
  %v4970 = vrcp.pop %v4968
  %v4971 = vpack.c.bf16 %v4962, %v4960
  %v4972 = vpack.c.bf16 %v4922, %v4920
  %v4974 = vsel %vm720, %v4971, 0
  %4976 = vmatpush.bf16.msra.mxu0 0
  %4977 = vmatpush.bf16.msra.mxu0 0
  %4978 = vmatpush.bf16.msra.mxu0 0
  %4979 = vmatpush.bf16.msra.mxu0 0
  %4980 = vmatpush.bf16.msra.mxu0 0
  %4981 = vmatpush.bf16.msra.mxu0 0
  %4982 = vmatpush.bf16.msra.mxu0 0
  %4983 = vmatpush.bf16.msra.mxu0 %v4972
  %4984 = vmatmul.bf16.gmra.mxu0 %v4974
  %v4985 = vpop.f32.mrf.mxu0
  %v4986 = vadd.f32 0.0, %v4985
  %v4987 = vpop.f32.mrf.mxu0
  %v4988 = vadd.f32 0.0, %v4987
  %4989 = vdwg.mxu0
  %v4990 = vmul.f32 %v4986, %v4969
  %v4991 = vmul.f32 %v4988, %v4970
  %v4992 = vpack.c.bf16 %v4846, %v4845
  %v4993 = vpack.c.bf16 %v4886, %v4884
  %v4995 = vsel %vm699, %v4992, 0
  %v4998 = vsel %vm699, %v4993, 0
  %5000 = vmatpush.bf16.xpose.msra.mxu0 0
  %5001 = vmatpush.bf16.xpose.msra.mxu0 0
  %5002 = vmatpush.bf16.xpose.msra.mxu0 0
  %5003 = vmatpush.bf16.xpose.msra.mxu0 0
  %5004 = vmatpush.bf16.xpose.msra.mxu0 0
  %5005 = vmatpush.bf16.xpose.msra.mxu0 0
  %5006 = vmatpush.bf16.xpose.msra.mxu0 0
  %5007 = vmatpush.bf16.xpose.msra.mxu0 %v4998
  %5008 = vmatmul.bf16.gmra.mxu0 %v4995
  %v5009 = vpop.f32.mrf.mxu0
  %v5010 = vadd.f32 0.0, %v5009
  %v5011 = vpop.f32.mrf.mxu0
  %v5012 = vadd.f32 0.0, %v5011
  %5013 = vdwg.mxu0
  %v5014 = vsel %vm720, %v5010, -inf
  %5015 = vmax.xlane.f32.xlu0 %v5014
  %v5016 = vpop.xlane.xlu0 %5015
  %v5017 = vsel %vm720, %v5012, -inf
  %5018 = vmax.xlane.f32.xlu0 %v5017
  %v5019 = vpop.xlane.xlu0 %5018
  %v5020 = vsub.f32 %v5010, %v5016
  %v5021 = vsub.f32 %v5012, %v5019
  %v5022 = vmul.f32 %v5020, 1.442695
  %v5023 = vpow.pop %v5022
  %v5024 = vmul.f32 %v5021, 1.442695
  %v5025 = vpow.pop %v5024
  %v5026 = vsel %vm720, %v5023, 0.0
  %5027 = vadd.xlane.f32.xlu0 %v5026
  %v5028 = vpop.xlane.xlu0 %5027
  %v5029 = vsel %vm720, %v5025, 0.0
  %5030 = vadd.xlane.f32.xlu0 %v5029
  %v5031 = vpop.xlane.xlu0 %5030
  %v5032 = vrcp.pop %v5028
  %v5033 = vrcp.pop %v5031
  %v5034 = vpack.c.bf16 %v5025, %v5023
  %v5035 = vpack.c.bf16 %v4927, %v4925
  %v5037 = vsel %vm720, %v5034, 0
  %5039 = vmatpush.bf16.msra.mxu0 0
  %5040 = vmatpush.bf16.msra.mxu0 0
  %5041 = vmatpush.bf16.msra.mxu0 0
  %5042 = vmatpush.bf16.msra.mxu0 0
  %5043 = vmatpush.bf16.msra.mxu0 0
  %5044 = vmatpush.bf16.msra.mxu0 0
  %5045 = vmatpush.bf16.msra.mxu0 0
  %5046 = vmatpush.bf16.msra.mxu0 %v5035
  %5047 = vmatmul.bf16.gmra.mxu0 %v5037
  %v5048 = vpop.f32.mrf.mxu0
  %v5049 = vadd.f32 0.0, %v5048
  %v5050 = vpop.f32.mrf.mxu0
  %v5051 = vadd.f32 0.0, %v5050
  %5052 = vdwg.mxu0
  %v5053 = vmul.f32 %v5049, %v5032
  %v5054 = vmul.f32 %v5051, %v5033
  %s5055 = scalar_lea.vmem %s14, 28
  %v5056 = vld [vmem:[%s5055] sm:$0xf]
  %v5057 = vpack.c.bf16 %v4991, %v4990
  %v5058 = vpack.c.bf16 %v5054, %v5053
  %v5060 = vsel %vm699, %v5057, 0
  %v5063 = vsel %vm699, %v5058, 0
  %v5066 = vsel %vm834, %v5056, 0
  %5068 = vmatpush.bf16.msra.mxu0 0
  %5069 = vmatpush.bf16.msra.mxu0 0
  %5070 = vmatpush.bf16.msra.mxu0 0
  %5071 = vmatpush.bf16.msra.mxu0 0
  %5072 = vmatpush.bf16.msra.mxu0 0
  %5073 = vmatpush.bf16.msra.mxu0 0
  %5074 = vmatpush.bf16.msra.mxu0 0
  %5075 = vmatpush.bf16.msra.mxu0 %v5066
  %5076 = vmatmul.bf16.gmra.mxu0 %v5060
  %v5077 = vpop.f32.mrf.mxu0
  %v5078 = vadd.f32 0.0, %v5077
  %v5079 = vpop.f32.mrf.mxu0
  %v5080 = vadd.f32 0.0, %v5079
  %5081 = vmatmul.bf16.gmra.mxu0 %v5063
  %v5082 = vpop.f32.mrf.mxu0
  %v5083 = vadd.f32 0.0, %v5082
  %v5084 = vpop.f32.mrf.mxu0
  %v5085 = vadd.f32 0.0, %v5084
  %5086 = vdwg.mxu0
  %v5087 = vadd.f32 %v4798, %v5078
  %v5088 = vadd.f32 %v4799, %v5080
  %v5089 = vadd.f32 %v4800, %v5083
  %v5090 = vadd.f32 %v4801, %v5085
  %v5091 = vadd.f32 %v3918, %v5087
  %v5092 = vadd.f32 %v3919, %v5088
  %v5093 = vadd.f32 %v3920, %v5089
  %v5094 = vadd.f32 %v3921, %v5090
  %s5095 = scalar_lea.vmem %s16, 1
  %v5096 = vld [vmem:[%s5095] sm:$0x1]
  %s5097 = scalar_lea.vmem %s17, 1
  %v5098 = vld [vmem:[%s5097] sm:$0x1]
  %v5099 = vsel %vm91, %v5091, 0.0
  %5100 = vadd.xlane.f32.xlu0 %v5099
  %v5101 = vpop.xlane.xlu0 %5100
  %v5102 = vsel %vm91, %v5092, 0.0
  %5103 = vadd.xlane.f32.xlu0 %v5102
  %v5104 = vpop.xlane.xlu0 %5103
  %v5105 = vsel %vm91, %v5093, 0.0
  %5106 = vadd.xlane.f32.xlu0 %v5105
  %v5107 = vpop.xlane.xlu0 %5106
  %v5108 = vsel %vm91, %v5094, 0.0
  %5109 = vadd.xlane.f32.xlu0 %v5108
  %v5110 = vpop.xlane.xlu0 %5109
  %v5111 = vmul.f32 %v5101, %v1755
  %v5112 = vmul.f32 %v5104, %v1755
  %v5113 = vmul.f32 %v5107, %v1755
  %v5114 = vmul.f32 %v5110, %v1755
  %v5115 = vsub.f32 %v5091, %v5111
  %v5116 = vsub.f32 %v5092, %v5112
  %v5117 = vsub.f32 %v5093, %v5113
  %v5118 = vsub.f32 %v5094, %v5114
  %v5119 = vmul.f32 %v5115, %v5115
  %v5120 = vmul.f32 %v5116, %v5116
  %v5121 = vmul.f32 %v5117, %v5117
  %v5122 = vmul.f32 %v5118, %v5118
  %v5123 = vsel %vm91, %v5119, 0.0
  %5124 = vadd.xlane.f32.xlu0 %v5123
  %v5125 = vpop.xlane.xlu0 %5124
  %v5126 = vsel %vm91, %v5120, 0.0
  %5127 = vadd.xlane.f32.xlu0 %v5126
  %v5128 = vpop.xlane.xlu0 %5127
  %v5129 = vsel %vm91, %v5121, 0.0
  %5130 = vadd.xlane.f32.xlu0 %v5129
  %v5131 = vpop.xlane.xlu0 %5130
  %v5132 = vsel %vm91, %v5122, 0.0
  %5133 = vadd.xlane.f32.xlu0 %v5132
  %v5134 = vpop.xlane.xlu0 %5133
  %v5135 = vmul.f32 %v5125, %v1755
  %v5136 = vmul.f32 %v5128, %v1755
  %v5137 = vmul.f32 %v5131, %v1755
  %v5138 = vmul.f32 %v5134, %v1755
  %v5139 = vadd.f32 %v5135, 1e-05
  %v5140 = vadd.f32 %v5136, 1e-05
  %v5141 = vadd.f32 %v5137, 1e-05
  %v5142 = vadd.f32 %v5138, 1e-05
  %v5143 = vrsqrt.pop %v5139
  %v5144 = vmul.f32 %v5143, %v5139
  %v5145 = vmul.f32 %v5144, %v5143
  %v5146 = vmul.f32 0.5, %v5145
  %v5147 = vsub.f32 1.5, %v5146
  %v5148 = vmul.f32 %v5143, %v5147
  %vm5149 = vweird.f32 %v5139
  %vm5150 = vweird.f32 %v5143
  %vm5151 = vmor %vm5149, %vm5150
  %v5152 = vsel %vm5151, %v5143, %v5148
  %v5153 = vrsqrt.pop %v5140
  %v5154 = vmul.f32 %v5153, %v5140
  %v5155 = vmul.f32 %v5154, %v5153
  %v5156 = vmul.f32 0.5, %v5155
  %v5157 = vsub.f32 1.5, %v5156
  %v5158 = vmul.f32 %v5153, %v5157
  %vm5159 = vweird.f32 %v5140
  %vm5160 = vweird.f32 %v5153
  %vm5161 = vmor %vm5159, %vm5160
  %v5162 = vsel %vm5161, %v5153, %v5158
  %v5163 = vrsqrt.pop %v5141
  %v5164 = vmul.f32 %v5163, %v5141
  %v5165 = vmul.f32 %v5164, %v5163
  %v5166 = vmul.f32 0.5, %v5165
  %v5167 = vsub.f32 1.5, %v5166
  %v5168 = vmul.f32 %v5163, %v5167
  %vm5169 = vweird.f32 %v5141
  %vm5170 = vweird.f32 %v5163
  %vm5171 = vmor %vm5169, %vm5170
  %v5172 = vsel %vm5171, %v5163, %v5168
  %v5173 = vrsqrt.pop %v5142
  %v5174 = vmul.f32 %v5173, %v5142
  %v5175 = vmul.f32 %v5174, %v5173
  %v5176 = vmul.f32 0.5, %v5175
  %v5177 = vsub.f32 1.5, %v5176
  %v5178 = vmul.f32 %v5173, %v5177
  %vm5179 = vweird.f32 %v5142
  %vm5180 = vweird.f32 %v5173
  %vm5181 = vmor %vm5179, %vm5180
  %v5182 = vsel %vm5181, %v5173, %v5178
  %v5183 = vmul.f32 %v5115, %v5152
  %v5184 = vmul.f32 %v5116, %v5162
  %v5185 = vmul.f32 %v5117, %v5172
  %v5186 = vmul.f32 %v5118, %v5182
  %v5188 = vperm.slane %v5096, 0
  %v5190 = vmul.f32 %v5183, %v5188
  %v5191 = vmul.f32 %v5184, %v5188
  %v5192 = vmul.f32 %v5185, %v5188
  %v5193 = vmul.f32 %v5186, %v5188
  %v5195 = vperm.slane %v5098, 0
  %v5197 = vadd.f32 %v5190, %v5195
  %v5198 = vadd.f32 %v5191, %v5195
  %v5199 = vadd.f32 %v5192, %v5195
  %v5200 = vadd.f32 %v5193, %v5195
  %s5201 = scalar_lea.vmem %s18, 256
  %v5202 = vld [vmem:[%s5201] sm:$0xff]
  %v5203 = vld [vmem:[%s5201 + $0x8] sm:$0xff]
  %v5204 = vld [vmem:[%s5201 + $0x10] sm:$0xff]
  %v5205 = vld [vmem:[%s5201 + $0x18] sm:$0xff]
  %v5206 = vld [vmem:[%s5201 + $0x20] sm:$0xff]
  %v5207 = vld [vmem:[%s5201 + $0x28] sm:$0xff]
  %v5208 = vld [vmem:[%s5201 + $0x30] sm:$0xff]
  %v5209 = vld [vmem:[%s5201 + $0x38] sm:$0xff]
  %v5210 = vld [vmem:[%s5201 + $0x40] sm:$0xff]
  %v5211 = vld [vmem:[%s5201 + $0x48] sm:$0xff]
  %v5212 = vld [vmem:[%s5201 + $0x50] sm:$0xff]
  %v5213 = vld [vmem:[%s5201 + $0x58] sm:$0xff]
  %v5214 = vld [vmem:[%s5201 + $0x60] sm:$0xff]
  %v5215 = vld [vmem:[%s5201 + $0x68] sm:$0xff]
  %v5216 = vld [vmem:[%s5201 + $0x70] sm:$0xff]
  %v5217 = vld [vmem:[%s5201 + $0x78] sm:$0xff]
  %v5218 = vld [vmem:[%s5201 + $0x80] sm:$0xff]
  %v5219 = vld [vmem:[%s5201 + $0x88] sm:$0xff]
  %v5220 = vld [vmem:[%s5201 + $0x90] sm:$0xff]
  %v5221 = vld [vmem:[%s5201 + $0x98] sm:$0xff]
  %v5222 = vld [vmem:[%s5201 + $0xa0] sm:$0xff]
  %v5223 = vld [vmem:[%s5201 + $0xa8] sm:$0xff]
  %v5224 = vld [vmem:[%s5201 + $0xb0] sm:$0xff]
  %v5225 = vld [vmem:[%s5201 + $0xb8] sm:$0xff]
  %v5226 = vld [vmem:[%s5201 + $0xc0] sm:$0xff]
  %v5227 = vld [vmem:[%s5201 + $0xc8] sm:$0xff]
  %v5228 = vld [vmem:[%s5201 + $0xd0] sm:$0xff]
  %v5229 = vld [vmem:[%s5201 + $0xd8] sm:$0xff]
  %v5230 = vld [vmem:[%s5201 + $0xe0] sm:$0xff]
  %v5231 = vld [vmem:[%s5201 + $0xe8] sm:$0xff]
  %v5232 = vld [vmem:[%s5201 + $0xf0] sm:$0xff]
  %v5233 = vld [vmem:[%s5201 + $0xf8] sm:$0xff]
  %v5234 = vpack.c.bf16 %v5198, %v5197
  %v5235 = vpack.c.bf16 %v5200, %v5199
  %s5236 = scalar_lea.vmem %s19, 16
  %v5237 = vld [vmem:[%s5236] sm:$0xff]
  %v5238 = vld [vmem:[%s5236 + $0x8] sm:$0xff]
  %v5241 = vperm.slane %v5237, 0
  %v5242 = vperm.slane %v5237, 1
  %v5243 = vperm.slane %v5237, 2
  %v5244 = vperm.slane %v5237, 3
  %v5245 = vperm.slane %v5237, 4
  %v5246 = vperm.slane %v5237, 5
  %v5247 = vperm.slane %v5237, 6
  %v5248 = vperm.slane %v5237, 7
  %v5249 = vperm.slane %v5238, 0
  %v5250 = vperm.slane %v5238, 1
  %v5251 = vperm.slane %v5238, 2
  %v5252 = vperm.slane %v5238, 3
  %v5253 = vperm.slane %v5238, 4
  %v5254 = vperm.slane %v5238, 5
  %v5255 = vperm.slane %v5238, 6
  %v5256 = vperm.slane %v5238, 7
  %v5305 = vunpack.c.l.b16 %v5202
  %v5306 = vunpack.c.h.b16 %v5202
  %v5307 = vunpack.c.l.b16 %v5203
  %v5308 = vunpack.c.h.b16 %v5203
  %v5309 = vunpack.c.l.b16 %v5204
  %v5310 = vunpack.c.h.b16 %v5204
  %v5311 = vunpack.c.l.b16 %v5205
  %v5312 = vunpack.c.h.b16 %v5205
  %v5313 = vunpack.c.l.b16 %v5206
  %v5314 = vunpack.c.h.b16 %v5206
  %v5315 = vunpack.c.l.b16 %v5207
  %v5316 = vunpack.c.h.b16 %v5207
  %v5317 = vunpack.c.l.b16 %v5208
  %v5318 = vunpack.c.h.b16 %v5208
  %v5319 = vunpack.c.l.b16 %v5209
  %v5320 = vunpack.c.h.b16 %v5209
  %v5321 = vunpack.c.l.b16 %v5210
  %v5322 = vunpack.c.h.b16 %v5210
  %v5323 = vunpack.c.l.b16 %v5211
  %v5324 = vunpack.c.h.b16 %v5211
  %v5325 = vunpack.c.l.b16 %v5212
  %v5326 = vunpack.c.h.b16 %v5212
  %v5327 = vunpack.c.l.b16 %v5213
  %v5328 = vunpack.c.h.b16 %v5213
  %v5329 = vunpack.c.l.b16 %v5214
  %v5330 = vunpack.c.h.b16 %v5214
  %v5331 = vunpack.c.l.b16 %v5215
  %v5332 = vunpack.c.h.b16 %v5215
  %v5333 = vunpack.c.l.b16 %v5216
  %v5334 = vunpack.c.h.b16 %v5216
  %v5335 = vunpack.c.l.b16 %v5217
  %v5336 = vunpack.c.h.b16 %v5217
  %v5337 = vunpack.c.l.b16 %v5218
  %v5338 = vunpack.c.h.b16 %v5218
  %v5339 = vunpack.c.l.b16 %v5219
  %v5340 = vunpack.c.h.b16 %v5219
  %v5341 = vunpack.c.l.b16 %v5220
  %v5342 = vunpack.c.h.b16 %v5220
  %v5343 = vunpack.c.l.b16 %v5221
  %v5344 = vunpack.c.h.b16 %v5221
  %v5345 = vunpack.c.l.b16 %v5222
  %v5346 = vunpack.c.h.b16 %v5222
  %v5347 = vunpack.c.l.b16 %v5223
  %v5348 = vunpack.c.h.b16 %v5223
  %v5349 = vunpack.c.l.b16 %v5224
  %v5350 = vunpack.c.h.b16 %v5224
  %v5351 = vunpack.c.l.b16 %v5225
  %v5352 = vunpack.c.h.b16 %v5225
  %v5353 = vunpack.c.l.b16 %v5226
  %v5354 = vunpack.c.h.b16 %v5226
  %v5355 = vunpack.c.l.b16 %v5227
  %v5356 = vunpack.c.h.b16 %v5227
  %v5357 = vunpack.c.l.b16 %v5228
  %v5358 = vunpack.c.h.b16 %v5228
  %v5359 = vunpack.c.l.b16 %v5229
  %v5360 = vunpack.c.h.b16 %v5229
  %v5361 = vunpack.c.l.b16 %v5230
  %v5362 = vunpack.c.h.b16 %v5230
  %v5363 = vunpack.c.l.b16 %v5231
  %v5364 = vunpack.c.h.b16 %v5231
  %v5365 = vunpack.c.l.b16 %v5232
  %v5366 = vunpack.c.h.b16 %v5232
  %v5367 = vunpack.c.l.b16 %v5233
  %v5368 = vunpack.c.h.b16 %v5233
  %v5369 = vpack.c.b16 %v5321, %v5305
  %v5370 = vpack.c.b16 %v5322, %v5306
  %v5371 = vpack.c.b16 %v5323, %v5307
  %v5372 = vpack.c.b16 %v5324, %v5308
  %v5373 = vpack.c.b16 %v5325, %v5309
  %v5374 = vpack.c.b16 %v5326, %v5310
  %v5375 = vpack.c.b16 %v5327, %v5311
  %v5376 = vpack.c.b16 %v5328, %v5312
  %v5377 = vpack.c.b16 %v5329, %v5313
  %v5378 = vpack.c.b16 %v5330, %v5314
  %v5379 = vpack.c.b16 %v5331, %v5315
  %v5380 = vpack.c.b16 %v5332, %v5316
  %v5381 = vpack.c.b16 %v5333, %v5317
  %v5382 = vpack.c.b16 %v5334, %v5318
  %v5383 = vpack.c.b16 %v5335, %v5319
  %v5384 = vpack.c.b16 %v5336, %v5320
  %v5385 = vpack.c.b16 %v5353, %v5337
  %v5386 = vpack.c.b16 %v5354, %v5338
  %v5387 = vpack.c.b16 %v5355, %v5339
  %v5388 = vpack.c.b16 %v5356, %v5340
  %v5389 = vpack.c.b16 %v5357, %v5341
  %v5390 = vpack.c.b16 %v5358, %v5342
  %v5391 = vpack.c.b16 %v5359, %v5343
  %v5392 = vpack.c.b16 %v5360, %v5344
  %v5393 = vpack.c.b16 %v5361, %v5345
  %v5394 = vpack.c.b16 %v5362, %v5346
  %v5395 = vpack.c.b16 %v5363, %v5347
  %v5396 = vpack.c.b16 %v5364, %v5348
  %v5397 = vpack.c.b16 %v5365, %v5349
  %v5398 = vpack.c.b16 %v5366, %v5350
  %v5399 = vpack.c.b16 %v5367, %v5351
  %v5400 = vpack.c.b16 %v5368, %v5352
  %v5434 = vsel %vm91, %v5234, 0
  %v5437 = vsel %vm91, %v5235, 0
  %5439 = vmatpush.bf16.msra.mxu0 0
  %5440 = vmatpush.bf16.msra.mxu0 0
  %5441 = vmatpush.bf16.msra.mxu0 0
  %5442 = vmatpush.bf16.msra.mxu0 0
  %5443 = vmatpush.bf16.msra.mxu0 0
  %5444 = vmatpush.bf16.msra.mxu0 0
  %5445 = vmatpush.bf16.msra.mxu0 %v5385
  %5446 = vmatpush.bf16.msra.mxu0 %v5369
  %5447 = vmatmul.bf16.gmra.mxu0 %v5434
  %v5448 = vpop.f32.mrf.mxu0
  %v5449 = vadd.f32 %v5241, %v5448
  %v5450 = vpop.f32.mrf.mxu0
  %v5451 = vadd.f32 %v5241, %v5450
  %5452 = vmatmul.bf16.gmra.mxu0 %v5437
  %v5453 = vpop.f32.mrf.mxu0
  %v5454 = vadd.f32 %v5241, %v5453
  %v5455 = vpop.f32.mrf.mxu0
  %v5456 = vadd.f32 %v5241, %v5455
  %5457 = vdwg.mxu0
  %5458 = vmatpush.bf16.msra.mxu0 0
  %5459 = vmatpush.bf16.msra.mxu0 0
  %5460 = vmatpush.bf16.msra.mxu0 0
  %5461 = vmatpush.bf16.msra.mxu0 0
  %5462 = vmatpush.bf16.msra.mxu0 0
  %5463 = vmatpush.bf16.msra.mxu0 0
  %5464 = vmatpush.bf16.msra.mxu0 %v5386
  %5465 = vmatpush.bf16.msra.mxu0 %v5370
  %5466 = vmatmul.bf16.gmra.mxu0 %v5434
  %v5467 = vpop.f32.mrf.mxu0
  %v5468 = vadd.f32 %v5242, %v5467
  %v5469 = vpop.f32.mrf.mxu0
  %v5470 = vadd.f32 %v5242, %v5469
  %5471 = vmatmul.bf16.gmra.mxu0 %v5437
  %v5472 = vpop.f32.mrf.mxu0
  %v5473 = vadd.f32 %v5242, %v5472
  %v5474 = vpop.f32.mrf.mxu0
  %v5475 = vadd.f32 %v5242, %v5474
  %5476 = vdwg.mxu0
  %5477 = vmatpush.bf16.msra.mxu0 0
  %5478 = vmatpush.bf16.msra.mxu0 0
  %5479 = vmatpush.bf16.msra.mxu0 0
  %5480 = vmatpush.bf16.msra.mxu0 0
  %5481 = vmatpush.bf16.msra.mxu0 0
  %5482 = vmatpush.bf16.msra.mxu0 0
  %5483 = vmatpush.bf16.msra.mxu0 %v5387
  %5484 = vmatpush.bf16.msra.mxu0 %v5371
  %5485 = vmatmul.bf16.gmra.mxu0 %v5434
  %v5486 = vpop.f32.mrf.mxu0
  %v5487 = vadd.f32 %v5243, %v5486
  %v5488 = vpop.f32.mrf.mxu0
  %v5489 = vadd.f32 %v5243, %v5488
  %5490 = vmatmul.bf16.gmra.mxu0 %v5437
  %v5491 = vpop.f32.mrf.mxu0
  %v5492 = vadd.f32 %v5243, %v5491
  %v5493 = vpop.f32.mrf.mxu0
  %v5494 = vadd.f32 %v5243, %v5493
  %5495 = vdwg.mxu0
  %5496 = vmatpush.bf16.msra.mxu0 0
  %5497 = vmatpush.bf16.msra.mxu0 0
  %5498 = vmatpush.bf16.msra.mxu0 0
  %5499 = vmatpush.bf16.msra.mxu0 0
  %5500 = vmatpush.bf16.msra.mxu0 0
  %5501 = vmatpush.bf16.msra.mxu0 0
  %5502 = vmatpush.bf16.msra.mxu0 %v5388
  %5503 = vmatpush.bf16.msra.mxu0 %v5372
  %5504 = vmatmul.bf16.gmra.mxu0 %v5434
  %v5505 = vpop.f32.mrf.mxu0
  %v5506 = vadd.f32 %v5244, %v5505
  %v5507 = vpop.f32.mrf.mxu0
  %v5508 = vadd.f32 %v5244, %v5507
  %5509 = vmatmul.bf16.gmra.mxu0 %v5437
  %v5510 = vpop.f32.mrf.mxu0
  %v5511 = vadd.f32 %v5244, %v5510
  %v5512 = vpop.f32.mrf.mxu0
  %v5513 = vadd.f32 %v5244, %v5512
  %5514 = vdwg.mxu0
  %5515 = vmatpush.bf16.msra.mxu0 0
  %5516 = vmatpush.bf16.msra.mxu0 0
  %5517 = vmatpush.bf16.msra.mxu0 0
  %5518 = vmatpush.bf16.msra.mxu0 0
  %5519 = vmatpush.bf16.msra.mxu0 0
  %5520 = vmatpush.bf16.msra.mxu0 0
  %5521 = vmatpush.bf16.msra.mxu0 %v5389
  %5522 = vmatpush.bf16.msra.mxu0 %v5373
  %5523 = vmatmul.bf16.gmra.mxu0 %v5434
  %v5524 = vpop.f32.mrf.mxu0
  %v5525 = vadd.f32 %v5245, %v5524
  %v5526 = vpop.f32.mrf.mxu0
  %v5527 = vadd.f32 %v5245, %v5526
  %5528 = vmatmul.bf16.gmra.mxu0 %v5437
  %v5529 = vpop.f32.mrf.mxu0
  %v5530 = vadd.f32 %v5245, %v5529
  %v5531 = vpop.f32.mrf.mxu0
  %v5532 = vadd.f32 %v5245, %v5531
  %5533 = vdwg.mxu0
  %5534 = vmatpush.bf16.msra.mxu0 0
  %5535 = vmatpush.bf16.msra.mxu0 0
  %5536 = vmatpush.bf16.msra.mxu0 0
  %5537 = vmatpush.bf16.msra.mxu0 0
  %5538 = vmatpush.bf16.msra.mxu0 0
  %5539 = vmatpush.bf16.msra.mxu0 0
  %5540 = vmatpush.bf16.msra.mxu0 %v5390
  %5541 = vmatpush.bf16.msra.mxu0 %v5374
  %5542 = vmatmul.bf16.gmra.mxu0 %v5434
  %v5543 = vpop.f32.mrf.mxu0
  %v5544 = vadd.f32 %v5246, %v5543
  %v5545 = vpop.f32.mrf.mxu0
  %v5546 = vadd.f32 %v5246, %v5545
  %5547 = vmatmul.bf16.gmra.mxu0 %v5437
  %v5548 = vpop.f32.mrf.mxu0
  %v5549 = vadd.f32 %v5246, %v5548
  %v5550 = vpop.f32.mrf.mxu0
  %v5551 = vadd.f32 %v5246, %v5550
  %5552 = vdwg.mxu0
  %5553 = vmatpush.bf16.msra.mxu0 0
  %5554 = vmatpush.bf16.msra.mxu0 0
  %5555 = vmatpush.bf16.msra.mxu0 0
  %5556 = vmatpush.bf16.msra.mxu0 0
  %5557 = vmatpush.bf16.msra.mxu0 0
  %5558 = vmatpush.bf16.msra.mxu0 0
  %5559 = vmatpush.bf16.msra.mxu0 %v5391
  %5560 = vmatpush.bf16.msra.mxu0 %v5375
  %5561 = vmatmul.bf16.gmra.mxu0 %v5434
  %v5562 = vpop.f32.mrf.mxu0
  %v5563 = vadd.f32 %v5247, %v5562
  %v5564 = vpop.f32.mrf.mxu0
  %v5565 = vadd.f32 %v5247, %v5564
  %5566 = vmatmul.bf16.gmra.mxu0 %v5437
  %v5567 = vpop.f32.mrf.mxu0
  %v5568 = vadd.f32 %v5247, %v5567
  %v5569 = vpop.f32.mrf.mxu0
  %v5570 = vadd.f32 %v5247, %v5569
  %5571 = vdwg.mxu0
  %5572 = vmatpush.bf16.msra.mxu0 0
  %5573 = vmatpush.bf16.msra.mxu0 0
  %5574 = vmatpush.bf16.msra.mxu0 0
  %5575 = vmatpush.bf16.msra.mxu0 0
  %5576 = vmatpush.bf16.msra.mxu0 0
  %5577 = vmatpush.bf16.msra.mxu0 0
  %5578 = vmatpush.bf16.msra.mxu0 %v5392
  %5579 = vmatpush.bf16.msra.mxu0 %v5376
  %5580 = vmatmul.bf16.gmra.mxu0 %v5434
  %v5581 = vpop.f32.mrf.mxu0
  %v5582 = vadd.f32 %v5248, %v5581
  %v5583 = vpop.f32.mrf.mxu0
  %v5584 = vadd.f32 %v5248, %v5583
  %5585 = vmatmul.bf16.gmra.mxu0 %v5437
  %v5586 = vpop.f32.mrf.mxu0
  %v5587 = vadd.f32 %v5248, %v5586
  %v5588 = vpop.f32.mrf.mxu0
  %v5589 = vadd.f32 %v5248, %v5588
  %5590 = vdwg.mxu0
  %5591 = vmatpush.bf16.msra.mxu0 0
  %5592 = vmatpush.bf16.msra.mxu0 0
  %5593 = vmatpush.bf16.msra.mxu0 0
  %5594 = vmatpush.bf16.msra.mxu0 0
  %5595 = vmatpush.bf16.msra.mxu0 0
  %5596 = vmatpush.bf16.msra.mxu0 0
  %5597 = vmatpush.bf16.msra.mxu0 %v5393
  %5598 = vmatpush.bf16.msra.mxu0 %v5377
  %5599 = vmatmul.bf16.gmra.mxu0 %v5434
  %v5600 = vpop.f32.mrf.mxu0
  %v5601 = vadd.f32 %v5249, %v5600
  %v5602 = vpop.f32.mrf.mxu0
  %v5603 = vadd.f32 %v5249, %v5602
  %5604 = vmatmul.bf16.gmra.mxu0 %v5437
  %v5605 = vpop.f32.mrf.mxu0
  %v5606 = vadd.f32 %v5249, %v5605
  %v5607 = vpop.f32.mrf.mxu0
  %v5608 = vadd.f32 %v5249, %v5607
  %5609 = vdwg.mxu0
  %5610 = vmatpush.bf16.msra.mxu0 0
  %5611 = vmatpush.bf16.msra.mxu0 0
  %5612 = vmatpush.bf16.msra.mxu0 0
  %5613 = vmatpush.bf16.msra.mxu0 0
  %5614 = vmatpush.bf16.msra.mxu0 0
  %5615 = vmatpush.bf16.msra.mxu0 0
  %5616 = vmatpush.bf16.msra.mxu0 %v5394
  %5617 = vmatpush.bf16.msra.mxu0 %v5378
  %5618 = vmatmul.bf16.gmra.mxu0 %v5434
  %v5619 = vpop.f32.mrf.mxu0
  %v5620 = vadd.f32 %v5250, %v5619
  %v5621 = vpop.f32.mrf.mxu0
  %v5622 = vadd.f32 %v5250, %v5621
  %5623 = vmatmul.bf16.gmra.mxu0 %v5437
  %v5624 = vpop.f32.mrf.mxu0
  %v5625 = vadd.f32 %v5250, %v5624
  %v5626 = vpop.f32.mrf.mxu0
  %v5627 = vadd.f32 %v5250, %v5626
  %5628 = vdwg.mxu0
  %5629 = vmatpush.bf16.msra.mxu0 0
  %5630 = vmatpush.bf16.msra.mxu0 0
  %5631 = vmatpush.bf16.msra.mxu0 0
  %5632 = vmatpush.bf16.msra.mxu0 0
  %5633 = vmatpush.bf16.msra.mxu0 0
  %5634 = vmatpush.bf16.msra.mxu0 0
  %5635 = vmatpush.bf16.msra.mxu0 %v5395
  %5636 = vmatpush.bf16.msra.mxu0 %v5379
  %5637 = vmatmul.bf16.gmra.mxu0 %v5434
  %v5638 = vpop.f32.mrf.mxu0
  %v5639 = vadd.f32 %v5251, %v5638
  %v5640 = vpop.f32.mrf.mxu0
  %v5641 = vadd.f32 %v5251, %v5640
  %5642 = vmatmul.bf16.gmra.mxu0 %v5437
  %v5643 = vpop.f32.mrf.mxu0
  %v5644 = vadd.f32 %v5251, %v5643
  %v5645 = vpop.f32.mrf.mxu0
  %v5646 = vadd.f32 %v5251, %v5645
  %5647 = vdwg.mxu0
  %5648 = vmatpush.bf16.msra.mxu0 0
  %5649 = vmatpush.bf16.msra.mxu0 0
  %5650 = vmatpush.bf16.msra.mxu0 0
  %5651 = vmatpush.bf16.msra.mxu0 0
  %5652 = vmatpush.bf16.msra.mxu0 0
  %5653 = vmatpush.bf16.msra.mxu0 0
  %5654 = vmatpush.bf16.msra.mxu0 %v5396
  %5655 = vmatpush.bf16.msra.mxu0 %v5380
  %5656 = vmatmul.bf16.gmra.mxu0 %v5434
  %v5657 = vpop.f32.mrf.mxu0
  %v5658 = vadd.f32 %v5252, %v5657
  %v5659 = vpop.f32.mrf.mxu0
  %v5660 = vadd.f32 %v5252, %v5659
  %5661 = vmatmul.bf16.gmra.mxu0 %v5437
  %v5662 = vpop.f32.mrf.mxu0
  %v5663 = vadd.f32 %v5252, %v5662
  %v5664 = vpop.f32.mrf.mxu0
  %v5665 = vadd.f32 %v5252, %v5664
  %5666 = vdwg.mxu0
  %5667 = vmatpush.bf16.msra.mxu0 0
  %5668 = vmatpush.bf16.msra.mxu0 0
  %5669 = vmatpush.bf16.msra.mxu0 0
  %5670 = vmatpush.bf16.msra.mxu0 0
  %5671 = vmatpush.bf16.msra.mxu0 0
  %5672 = vmatpush.bf16.msra.mxu0 0
  %5673 = vmatpush.bf16.msra.mxu0 %v5397
  %5674 = vmatpush.bf16.msra.mxu0 %v5381
  %5675 = vmatmul.bf16.gmra.mxu0 %v5434
  %v5676 = vpop.f32.mrf.mxu0
  %v5677 = vadd.f32 %v5253, %v5676
  %v5678 = vpop.f32.mrf.mxu0
  %v5679 = vadd.f32 %v5253, %v5678
  %5680 = vmatmul.bf16.gmra.mxu0 %v5437
  %v5681 = vpop.f32.mrf.mxu0
  %v5682 = vadd.f32 %v5253, %v5681
  %v5683 = vpop.f32.mrf.mxu0
  %v5684 = vadd.f32 %v5253, %v5683
  %5685 = vdwg.mxu0
  %5686 = vmatpush.bf16.msra.mxu0 0
  %5687 = vmatpush.bf16.msra.mxu0 0
  %5688 = vmatpush.bf16.msra.mxu0 0
  %5689 = vmatpush.bf16.msra.mxu0 0
  %5690 = vmatpush.bf16.msra.mxu0 0
  %5691 = vmatpush.bf16.msra.mxu0 0
  %5692 = vmatpush.bf16.msra.mxu0 %v5398
  %5693 = vmatpush.bf16.msra.mxu0 %v5382
  %5694 = vmatmul.bf16.gmra.mxu0 %v5434
  %v5695 = vpop.f32.mrf.mxu0
  %v5696 = vadd.f32 %v5254, %v5695
  %v5697 = vpop.f32.mrf.mxu0
  %v5698 = vadd.f32 %v5254, %v5697
  %5699 = vmatmul.bf16.gmra.mxu0 %v5437
  %v5700 = vpop.f32.mrf.mxu0
  %v5701 = vadd.f32 %v5254, %v5700
  %v5702 = vpop.f32.mrf.mxu0
  %v5703 = vadd.f32 %v5254, %v5702
  %5704 = vdwg.mxu0
  %5705 = vmatpush.bf16.msra.mxu0 0
  %5706 = vmatpush.bf16.msra.mxu0 0
  %5707 = vmatpush.bf16.msra.mxu0 0
  %5708 = vmatpush.bf16.msra.mxu0 0
  %5709 = vmatpush.bf16.msra.mxu0 0
  %5710 = vmatpush.bf16.msra.mxu0 0
  %5711 = vmatpush.bf16.msra.mxu0 %v5399
  %5712 = vmatpush.bf16.msra.mxu0 %v5383
  %5713 = vmatmul.bf16.gmra.mxu0 %v5434
  %v5714 = vpop.f32.mrf.mxu0
  %v5715 = vadd.f32 %v5255, %v5714
  %v5716 = vpop.f32.mrf.mxu0
  %v5717 = vadd.f32 %v5255, %v5716
  %5718 = vmatmul.bf16.gmra.mxu0 %v5437
  %v5719 = vpop.f32.mrf.mxu0
  %v5720 = vadd.f32 %v5255, %v5719
  %v5721 = vpop.f32.mrf.mxu0
  %v5722 = vadd.f32 %v5255, %v5721
  %5723 = vdwg.mxu0
  %5724 = vmatpush.bf16.msra.mxu0 0
  %5725 = vmatpush.bf16.msra.mxu0 0
  %5726 = vmatpush.bf16.msra.mxu0 0
  %5727 = vmatpush.bf16.msra.mxu0 0
  %5728 = vmatpush.bf16.msra.mxu0 0
  %5729 = vmatpush.bf16.msra.mxu0 0
  %5730 = vmatpush.bf16.msra.mxu0 %v5400
  %5731 = vmatpush.bf16.msra.mxu0 %v5384
  %5732 = vmatmul.bf16.gmra.mxu0 %v5434
  %v5733 = vpop.f32.mrf.mxu0
  %v5734 = vadd.f32 %v5256, %v5733
  %v5735 = vpop.f32.mrf.mxu0
  %v5736 = vadd.f32 %v5256, %v5735
  %5737 = vmatmul.bf16.gmra.mxu0 %v5437
  %v5738 = vpop.f32.mrf.mxu0
  %v5739 = vadd.f32 %v5256, %v5738
  %v5740 = vpop.f32.mrf.mxu0
  %v5741 = vadd.f32 %v5256, %v5740
  %5742 = vdwg.mxu0
  %v5743 = vmax.f32 %v5449, 0.0
  %v5744 = vmax.f32 %v5468, 0.0
  %v5745 = vmax.f32 %v5487, 0.0
  %v5746 = vmax.f32 %v5506, 0.0
  %v5747 = vmax.f32 %v5525, 0.0
  %v5748 = vmax.f32 %v5544, 0.0
  %v5749 = vmax.f32 %v5563, 0.0
  %v5750 = vmax.f32 %v5582, 0.0
  %v5751 = vmax.f32 %v5601, 0.0
  %v5752 = vmax.f32 %v5620, 0.0
  %v5753 = vmax.f32 %v5639, 0.0
  %v5754 = vmax.f32 %v5658, 0.0
  %v5755 = vmax.f32 %v5677, 0.0
  %v5756 = vmax.f32 %v5696, 0.0
  %v5757 = vmax.f32 %v5715, 0.0
  %v5758 = vmax.f32 %v5734, 0.0
  %v5759 = vmax.f32 %v5451, 0.0
  %v5760 = vmax.f32 %v5470, 0.0
  %v5761 = vmax.f32 %v5489, 0.0
  %v5762 = vmax.f32 %v5508, 0.0
  %v5763 = vmax.f32 %v5527, 0.0
  %v5764 = vmax.f32 %v5546, 0.0
  %v5765 = vmax.f32 %v5565, 0.0
  %v5766 = vmax.f32 %v5584, 0.0
  %v5767 = vmax.f32 %v5603, 0.0
  %v5768 = vmax.f32 %v5622, 0.0
  %v5769 = vmax.f32 %v5641, 0.0
  %v5770 = vmax.f32 %v5660, 0.0
  %v5771 = vmax.f32 %v5679, 0.0
  %v5772 = vmax.f32 %v5698, 0.0
  %v5773 = vmax.f32 %v5717, 0.0
  %v5774 = vmax.f32 %v5736, 0.0
  %v5775 = vmax.f32 %v5454, 0.0
  %v5776 = vmax.f32 %v5473, 0.0
  %v5777 = vmax.f32 %v5492, 0.0
  %v5778 = vmax.f32 %v5511, 0.0
  %v5779 = vmax.f32 %v5530, 0.0
  %v5780 = vmax.f32 %v5549, 0.0
  %v5781 = vmax.f32 %v5568, 0.0
  %v5782 = vmax.f32 %v5587, 0.0
  %v5783 = vmax.f32 %v5606, 0.0
  %v5784 = vmax.f32 %v5625, 0.0
  %v5785 = vmax.f32 %v5644, 0.0
  %v5786 = vmax.f32 %v5663, 0.0
  %v5787 = vmax.f32 %v5682, 0.0
  %v5788 = vmax.f32 %v5701, 0.0
  %v5789 = vmax.f32 %v5720, 0.0
  %v5790 = vmax.f32 %v5739, 0.0
  %v5791 = vmax.f32 %v5456, 0.0
  %v5792 = vmax.f32 %v5475, 0.0
  %v5793 = vmax.f32 %v5494, 0.0
  %v5794 = vmax.f32 %v5513, 0.0
  %v5795 = vmax.f32 %v5532, 0.0
  %v5796 = vmax.f32 %v5551, 0.0
  %v5797 = vmax.f32 %v5570, 0.0
  %v5798 = vmax.f32 %v5589, 0.0
  %v5799 = vmax.f32 %v5608, 0.0
  %v5800 = vmax.f32 %v5627, 0.0
  %v5801 = vmax.f32 %v5646, 0.0
  %v5802 = vmax.f32 %v5665, 0.0
  %v5803 = vmax.f32 %v5684, 0.0
  %v5804 = vmax.f32 %v5703, 0.0
  %v5805 = vmax.f32 %v5722, 0.0
  %v5806 = vmax.f32 %v5741, 0.0
  %s5807 = scalar_lea.vmem %s20, 1024
  %v5808 = vld [vmem:[%s5807] sm:$0xf]
  %v5809 = vld [vmem:[%s5807 + $0x4] sm:$0xf]
  %v5810 = vld [vmem:[%s5807 + $0x8] sm:$0xf]
  %v5811 = vld [vmem:[%s5807 + $0xc] sm:$0xf]
  %v5812 = vld [vmem:[%s5807 + $0x10] sm:$0xf]
  %v5813 = vld [vmem:[%s5807 + $0x14] sm:$0xf]
  %v5814 = vld [vmem:[%s5807 + $0x18] sm:$0xf]
  %v5815 = vld [vmem:[%s5807 + $0x1c] sm:$0xf]
  %v5816 = vld [vmem:[%s5807 + $0x20] sm:$0xf]
  %v5817 = vld [vmem:[%s5807 + $0x24] sm:$0xf]
  %v5818 = vld [vmem:[%s5807 + $0x28] sm:$0xf]
  %v5819 = vld [vmem:[%s5807 + $0x2c] sm:$0xf]
  %v5820 = vld [vmem:[%s5807 + $0x30] sm:$0xf]
  %v5821 = vld [vmem:[%s5807 + $0x34] sm:$0xf]
  %v5822 = vld [vmem:[%s5807 + $0x38] sm:$0xf]
  %v5823 = vld [vmem:[%s5807 + $0x3c] sm:$0xf]
  %v5824 = vld [vmem:[%s5807 + $0x40] sm:$0xf]
  %v5825 = vld [vmem:[%s5807 + $0x44] sm:$0xf]
  %v5826 = vld [vmem:[%s5807 + $0x48] sm:$0xf]
  %v5827 = vld [vmem:[%s5807 + $0x4c] sm:$0xf]
  %v5828 = vld [vmem:[%s5807 + $0x50] sm:$0xf]
  %v5829 = vld [vmem:[%s5807 + $0x54] sm:$0xf]
  %v5830 = vld [vmem:[%s5807 + $0x58] sm:$0xf]
  %v5831 = vld [vmem:[%s5807 + $0x5c] sm:$0xf]
  %v5832 = vld [vmem:[%s5807 + $0x60] sm:$0xf]
  %v5833 = vld [vmem:[%s5807 + $0x64] sm:$0xf]
  %v5834 = vld [vmem:[%s5807 + $0x68] sm:$0xf]
  %v5835 = vld [vmem:[%s5807 + $0x6c] sm:$0xf]
  %v5836 = vld [vmem:[%s5807 + $0x70] sm:$0xf]
  %v5837 = vld [vmem:[%s5807 + $0x74] sm:$0xf]
  %v5838 = vld [vmem:[%s5807 + $0x78] sm:$0xf]
  %v5839 = vld [vmem:[%s5807 + $0x7c] sm:$0xf]
  %v5840 = vld [vmem:[%s5807 + $0x80] sm:$0xf]
  %v5841 = vld [vmem:[%s5807 + $0x84] sm:$0xf]
  %v5842 = vld [vmem:[%s5807 + $0x88] sm:$0xf]
  %v5843 = vld [vmem:[%s5807 + $0x8c] sm:$0xf]
  %v5844 = vld [vmem:[%s5807 + $0x90] sm:$0xf]
  %v5845 = vld [vmem:[%s5807 + $0x94] sm:$0xf]
  %v5846 = vld [vmem:[%s5807 + $0x98] sm:$0xf]
  %v5847 = vld [vmem:[%s5807 + $0x9c] sm:$0xf]
  %v5848 = vld [vmem:[%s5807 + $0xa0] sm:$0xf]
  %v5849 = vld [vmem:[%s5807 + $0xa4] sm:$0xf]
  %v5850 = vld [vmem:[%s5807 + $0xa8] sm:$0xf]
  %v5851 = vld [vmem:[%s5807 + $0xac] sm:$0xf]
  %v5852 = vld [vmem:[%s5807 + $0xb0] sm:$0xf]
  %v5853 = vld [vmem:[%s5807 + $0xb4] sm:$0xf]
  %v5854 = vld [vmem:[%s5807 + $0xb8] sm:$0xf]
  %v5855 = vld [vmem:[%s5807 + $0xbc] sm:$0xf]
  %v5856 = vld [vmem:[%s5807 + $0xc0] sm:$0xf]
  %v5857 = vld [vmem:[%s5807 + $0xc4] sm:$0xf]
  %v5858 = vld [vmem:[%s5807 + $0xc8] sm:$0xf]
  %v5859 = vld [vmem:[%s5807 + $0xcc] sm:$0xf]
  %v5860 = vld [vmem:[%s5807 + $0xd0] sm:$0xf]
  %v5861 = vld [vmem:[%s5807 + $0xd4] sm:$0xf]
  %v5862 = vld [vmem:[%s5807 + $0xd8] sm:$0xf]
  %v5863 = vld [vmem:[%s5807 + $0xdc] sm:$0xf]
  %v5864 = vld [vmem:[%s5807 + $0xe0] sm:$0xf]
  %v5865 = vld [vmem:[%s5807 + $0xe4] sm:$0xf]
  %v5866 = vld [vmem:[%s5807 + $0xe8] sm:$0xf]
  %v5867 = vld [vmem:[%s5807 + $0xec] sm:$0xf]
  %v5868 = vld [vmem:[%s5807 + $0xf0] sm:$0xf]
  %v5869 = vld [vmem:[%s5807 + $0xf4] sm:$0xf]
  %v5870 = vld [vmem:[%s5807 + $0xf8] sm:$0xf]
  %v5871 = vld [vmem:[%s5807 + $0xfc] sm:$0xf]
  %v5872 = vld [vmem:[%s5807 + $0x100] sm:$0xf]
  %v5873 = vld [vmem:[%s5807 + $0x104] sm:$0xf]
  %v5874 = vld [vmem:[%s5807 + $0x108] sm:$0xf]
  %v5875 = vld [vmem:[%s5807 + $0x10c] sm:$0xf]
  %v5876 = vld [vmem:[%s5807 + $0x110] sm:$0xf]
  %v5877 = vld [vmem:[%s5807 + $0x114] sm:$0xf]
  %v5878 = vld [vmem:[%s5807 + $0x118] sm:$0xf]
  %v5879 = vld [vmem:[%s5807 + $0x11c] sm:$0xf]
  %v5880 = vld [vmem:[%s5807 + $0x120] sm:$0xf]
  %v5881 = vld [vmem:[%s5807 + $0x124] sm:$0xf]
  %v5882 = vld [vmem:[%s5807 + $0x128] sm:$0xf]
  %v5883 = vld [vmem:[%s5807 + $0x12c] sm:$0xf]
  %v5884 = vld [vmem:[%s5807 + $0x130] sm:$0xf]
  %v5885 = vld [vmem:[%s5807 + $0x134] sm:$0xf]
  %v5886 = vld [vmem:[%s5807 + $0x138] sm:$0xf]
  %v5887 = vld [vmem:[%s5807 + $0x13c] sm:$0xf]
  %v5888 = vld [vmem:[%s5807 + $0x140] sm:$0xf]
  %v5889 = vld [vmem:[%s5807 + $0x144] sm:$0xf]
  %v5890 = vld [vmem:[%s5807 + $0x148] sm:$0xf]
  %v5891 = vld [vmem:[%s5807 + $0x14c] sm:$0xf]
  %v5892 = vld [vmem:[%s5807 + $0x150] sm:$0xf]
  %v5893 = vld [vmem:[%s5807 + $0x154] sm:$0xf]
  %v5894 = vld [vmem:[%s5807 + $0x158] sm:$0xf]
  %v5895 = vld [vmem:[%s5807 + $0x15c] sm:$0xf]
  %v5896 = vld [vmem:[%s5807 + $0x160] sm:$0xf]
  %v5897 = vld [vmem:[%s5807 + $0x164] sm:$0xf]
  %v5898 = vld [vmem:[%s5807 + $0x168] sm:$0xf]
  %v5899 = vld [vmem:[%s5807 + $0x16c] sm:$0xf]
  %v5900 = vld [vmem:[%s5807 + $0x170] sm:$0xf]
  %v5901 = vld [vmem:[%s5807 + $0x174] sm:$0xf]
  %v5902 = vld [vmem:[%s5807 + $0x178] sm:$0xf]
  %v5903 = vld [vmem:[%s5807 + $0x17c] sm:$0xf]
  %v5904 = vld [vmem:[%s5807 + $0x180] sm:$0xf]
  %v5905 = vld [vmem:[%s5807 + $0x184] sm:$0xf]
  %v5906 = vld [vmem:[%s5807 + $0x188] sm:$0xf]
  %v5907 = vld [vmem:[%s5807 + $0x18c] sm:$0xf]
  %v5908 = vld [vmem:[%s5807 + $0x190] sm:$0xf]
  %v5909 = vld [vmem:[%s5807 + $0x194] sm:$0xf]
  %v5910 = vld [vmem:[%s5807 + $0x198] sm:$0xf]
  %v5911 = vld [vmem:[%s5807 + $0x19c] sm:$0xf]
  %v5912 = vld [vmem:[%s5807 + $0x1a0] sm:$0xf]
  %v5913 = vld [vmem:[%s5807 + $0x1a4] sm:$0xf]
  %v5914 = vld [vmem:[%s5807 + $0x1a8] sm:$0xf]
  %v5915 = vld [vmem:[%s5807 + $0x1ac] sm:$0xf]
  %v5916 = vld [vmem:[%s5807 + $0x1b0] sm:$0xf]
  %v5917 = vld [vmem:[%s5807 + $0x1b4] sm:$0xf]
  %v5918 = vld [vmem:[%s5807 + $0x1b8] sm:$0xf]
  %v5919 = vld [vmem:[%s5807 + $0x1bc] sm:$0xf]
  %v5920 = vld [vmem:[%s5807 + $0x1c0] sm:$0xf]
  %v5921 = vld [vmem:[%s5807 + $0x1c4] sm:$0xf]
  %v5922 = vld [vmem:[%s5807 + $0x1c8] sm:$0xf]
  %v5923 = vld [vmem:[%s5807 + $0x1cc] sm:$0xf]
  %v5924 = vld [vmem:[%s5807 + $0x1d0] sm:$0xf]
  %v5925 = vld [vmem:[%s5807 + $0x1d4] sm:$0xf]
  %v5926 = vld [vmem:[%s5807 + $0x1d8] sm:$0xf]
  %v5927 = vld [vmem:[%s5807 + $0x1dc] sm:$0xf]
  %v5928 = vld [vmem:[%s5807 + $0x1e0] sm:$0xf]
  %v5929 = vld [vmem:[%s5807 + $0x1e4] sm:$0xf]
  %v5930 = vld [vmem:[%s5807 + $0x1e8] sm:$0xf]
  %v5931 = vld [vmem:[%s5807 + $0x1ec] sm:$0xf]
  %v5932 = vld [vmem:[%s5807 + $0x1f0] sm:$0xf]
  %v5933 = vld [vmem:[%s5807 + $0x1f4] sm:$0xf]
  %v5934 = vld [vmem:[%s5807 + $0x1f8] sm:$0xf]
  %v5935 = vld [vmem:[%s5807 + $0x1fc] sm:$0xf]
  %v5936 = vld [vmem:[%s5807 + $0x200] sm:$0xf]
  %v5937 = vld [vmem:[%s5807 + $0x204] sm:$0xf]
  %v5938 = vld [vmem:[%s5807 + $0x208] sm:$0xf]
  %v5939 = vld [vmem:[%s5807 + $0x20c] sm:$0xf]
  %v5940 = vld [vmem:[%s5807 + $0x210] sm:$0xf]
  %v5941 = vld [vmem:[%s5807 + $0x214] sm:$0xf]
  %v5942 = vld [vmem:[%s5807 + $0x218] sm:$0xf]
  %v5943 = vld [vmem:[%s5807 + $0x21c] sm:$0xf]
  %v5944 = vld [vmem:[%s5807 + $0x220] sm:$0xf]
  %v5945 = vld [vmem:[%s5807 + $0x224] sm:$0xf]
  %v5946 = vld [vmem:[%s5807 + $0x228] sm:$0xf]
  %v5947 = vld [vmem:[%s5807 + $0x22c] sm:$0xf]
  %v5948 = vld [vmem:[%s5807 + $0x230] sm:$0xf]
  %v5949 = vld [vmem:[%s5807 + $0x234] sm:$0xf]
  %v5950 = vld [vmem:[%s5807 + $0x238] sm:$0xf]
  %v5951 = vld [vmem:[%s5807 + $0x23c] sm:$0xf]
  %v5952 = vld [vmem:[%s5807 + $0x240] sm:$0xf]
  %v5953 = vld [vmem:[%s5807 + $0x244] sm:$0xf]
  %v5954 = vld [vmem:[%s5807 + $0x248] sm:$0xf]
  %v5955 = vld [vmem:[%s5807 + $0x24c] sm:$0xf]
  %v5956 = vld [vmem:[%s5807 + $0x250] sm:$0xf]
  %v5957 = vld [vmem:[%s5807 + $0x254] sm:$0xf]
  %v5958 = vld [vmem:[%s5807 + $0x258] sm:$0xf]
  %v5959 = vld [vmem:[%s5807 + $0x25c] sm:$0xf]
  %v5960 = vld [vmem:[%s5807 + $0x260] sm:$0xf]
  %v5961 = vld [vmem:[%s5807 + $0x264] sm:$0xf]
  %v5962 = vld [vmem:[%s5807 + $0x268] sm:$0xf]
  %v5963 = vld [vmem:[%s5807 + $0x26c] sm:$0xf]
  %v5964 = vld [vmem:[%s5807 + $0x270] sm:$0xf]
  %v5965 = vld [vmem:[%s5807 + $0x274] sm:$0xf]
  %v5966 = vld [vmem:[%s5807 + $0x278] sm:$0xf]
  %v5967 = vld [vmem:[%s5807 + $0x27c] sm:$0xf]
  %v5968 = vld [vmem:[%s5807 + $0x280] sm:$0xf]
  %v5969 = vld [vmem:[%s5807 + $0x284] sm:$0xf]
  %v5970 = vld [vmem:[%s5807 + $0x288] sm:$0xf]
  %v5971 = vld [vmem:[%s5807 + $0x28c] sm:$0xf]
  %v5972 = vld [vmem:[%s5807 + $0x290] sm:$0xf]
  %v5973 = vld [vmem:[%s5807 + $0x294] sm:$0xf]
  %v5974 = vld [vmem:[%s5807 + $0x298] sm:$0xf]
  %v5975 = vld [vmem:[%s5807 + $0x29c] sm:$0xf]
  %v5976 = vld [vmem:[%s5807 + $0x2a0] sm:$0xf]
  %v5977 = vld [vmem:[%s5807 + $0x2a4] sm:$0xf]
  %v5978 = vld [vmem:[%s5807 + $0x2a8] sm:$0xf]
  %v5979 = vld [vmem:[%s5807 + $0x2ac] sm:$0xf]
  %v5980 = vld [vmem:[%s5807 + $0x2b0] sm:$0xf]
  %v5981 = vld [vmem:[%s5807 + $0x2b4] sm:$0xf]
  %v5982 = vld [vmem:[%s5807 + $0x2b8] sm:$0xf]
  %v5983 = vld [vmem:[%s5807 + $0x2bc] sm:$0xf]
  %v5984 = vld [vmem:[%s5807 + $0x2c0] sm:$0xf]
  %v5985 = vld [vmem:[%s5807 + $0x2c4] sm:$0xf]
  %v5986 = vld [vmem:[%s5807 + $0x2c8] sm:$0xf]
  %v5987 = vld [vmem:[%s5807 + $0x2cc] sm:$0xf]
  %v5988 = vld [vmem:[%s5807 + $0x2d0] sm:$0xf]
  %v5989 = vld [vmem:[%s5807 + $0x2d4] sm:$0xf]
  %v5990 = vld [vmem:[%s5807 + $0x2d8] sm:$0xf]
  %v5991 = vld [vmem:[%s5807 + $0x2dc] sm:$0xf]
  %v5992 = vld [vmem:[%s5807 + $0x2e0] sm:$0xf]
  %v5993 = vld [vmem:[%s5807 + $0x2e4] sm:$0xf]
  %v5994 = vld [vmem:[%s5807 + $0x2e8] sm:$0xf]
  %v5995 = vld [vmem:[%s5807 + $0x2ec] sm:$0xf]
  %v5996 = vld [vmem:[%s5807 + $0x2f0] sm:$0xf]
  %v5997 = vld [vmem:[%s5807 + $0x2f4] sm:$0xf]
  %v5998 = vld [vmem:[%s5807 + $0x2f8] sm:$0xf]
  %v5999 = vld [vmem:[%s5807 + $0x2fc] sm:$0xf]
  %v6000 = vld [vmem:[%s5807 + $0x300] sm:$0xf]
  %v6001 = vld [vmem:[%s5807 + $0x304] sm:$0xf]
  %v6002 = vld [vmem:[%s5807 + $0x308] sm:$0xf]
  %v6003 = vld [vmem:[%s5807 + $0x30c] sm:$0xf]
  %v6004 = vld [vmem:[%s5807 + $0x310] sm:$0xf]
  %v6005 = vld [vmem:[%s5807 + $0x314] sm:$0xf]
  %v6006 = vld [vmem:[%s5807 + $0x318] sm:$0xf]
  %v6007 = vld [vmem:[%s5807 + $0x31c] sm:$0xf]
  %v6008 = vld [vmem:[%s5807 + $0x320] sm:$0xf]
  %v6009 = vld [vmem:[%s5807 + $0x324] sm:$0xf]
  %v6010 = vld [vmem:[%s5807 + $0x328] sm:$0xf]
  %v6011 = vld [vmem:[%s5807 + $0x32c] sm:$0xf]
  %v6012 = vld [vmem:[%s5807 + $0x330] sm:$0xf]
  %v6013 = vld [vmem:[%s5807 + $0x334] sm:$0xf]
  %v6014 = vld [vmem:[%s5807 + $0x338] sm:$0xf]
  %v6015 = vld [vmem:[%s5807 + $0x33c] sm:$0xf]
  %v6016 = vld [vmem:[%s5807 + $0x340] sm:$0xf]
  %v6017 = vld [vmem:[%s5807 + $0x344] sm:$0xf]
  %v6018 = vld [vmem:[%s5807 + $0x348] sm:$0xf]
  %v6019 = vld [vmem:[%s5807 + $0x34c] sm:$0xf]
  %v6020 = vld [vmem:[%s5807 + $0x350] sm:$0xf]
  %v6021 = vld [vmem:[%s5807 + $0x354] sm:$0xf]
  %v6022 = vld [vmem:[%s5807 + $0x358] sm:$0xf]
  %v6023 = vld [vmem:[%s5807 + $0x35c] sm:$0xf]
  %v6024 = vld [vmem:[%s5807 + $0x360] sm:$0xf]
  %v6025 = vld [vmem:[%s5807 + $0x364] sm:$0xf]
  %v6026 = vld [vmem:[%s5807 + $0x368] sm:$0xf]
  %v6027 = vld [vmem:[%s5807 + $0x36c] sm:$0xf]
  %v6028 = vld [vmem:[%s5807 + $0x370] sm:$0xf]
  %v6029 = vld [vmem:[%s5807 + $0x374] sm:$0xf]
  %v6030 = vld [vmem:[%s5807 + $0x378] sm:$0xf]
  %v6031 = vld [vmem:[%s5807 + $0x37c] sm:$0xf]
  %v6032 = vld [vmem:[%s5807 + $0x380] sm:$0xf]
  %v6033 = vld [vmem:[%s5807 + $0x384] sm:$0xf]
  %v6034 = vld [vmem:[%s5807 + $0x388] sm:$0xf]
  %v6035 = vld [vmem:[%s5807 + $0x38c] sm:$0xf]
  %v6036 = vld [vmem:[%s5807 + $0x390] sm:$0xf]
  %v6037 = vld [vmem:[%s5807 + $0x394] sm:$0xf]
  %v6038 = vld [vmem:[%s5807 + $0x398] sm:$0xf]
  %v6039 = vld [vmem:[%s5807 + $0x39c] sm:$0xf]
  %v6040 = vld [vmem:[%s5807 + $0x3a0] sm:$0xf]
  %v6041 = vld [vmem:[%s5807 + $0x3a4] sm:$0xf]
  %v6042 = vld [vmem:[%s5807 + $0x3a8] sm:$0xf]
  %v6043 = vld [vmem:[%s5807 + $0x3ac] sm:$0xf]
  %v6044 = vld [vmem:[%s5807 + $0x3b0] sm:$0xf]
  %v6045 = vld [vmem:[%s5807 + $0x3b4] sm:$0xf]
  %v6046 = vld [vmem:[%s5807 + $0x3b8] sm:$0xf]
  %v6047 = vld [vmem:[%s5807 + $0x3bc] sm:$0xf]
  %v6048 = vld [vmem:[%s5807 + $0x3c0] sm:$0xf]
  %v6049 = vld [vmem:[%s5807 + $0x3c4] sm:$0xf]
  %v6050 = vld [vmem:[%s5807 + $0x3c8] sm:$0xf]
  %v6051 = vld [vmem:[%s5807 + $0x3cc] sm:$0xf]
  %v6052 = vld [vmem:[%s5807 + $0x3d0] sm:$0xf]
  %v6053 = vld [vmem:[%s5807 + $0x3d4] sm:$0xf]
  %v6054 = vld [vmem:[%s5807 + $0x3d8] sm:$0xf]
  %v6055 = vld [vmem:[%s5807 + $0x3dc] sm:$0xf]
  %v6056 = vld [vmem:[%s5807 + $0x3e0] sm:$0xf]
  %v6057 = vld [vmem:[%s5807 + $0x3e4] sm:$0xf]
  %v6058 = vld [vmem:[%s5807 + $0x3e8] sm:$0xf]
  %v6059 = vld [vmem:[%s5807 + $0x3ec] sm:$0xf]
  %v6060 = vld [vmem:[%s5807 + $0x3f0] sm:$0xf]
  %v6061 = vld [vmem:[%s5807 + $0x3f4] sm:$0xf]
  %v6062 = vld [vmem:[%s5807 + $0x3f8] sm:$0xf]
  %v6063 = vld [vmem:[%s5807 + $0x3fc] sm:$0xf]
  %v6064 = vpack.c.bf16 %v5759, %v5743
  %v6065 = vpack.c.bf16 %v5760, %v5744
  %v6066 = vpack.c.bf16 %v5761, %v5745
  %v6067 = vpack.c.bf16 %v5762, %v5746
  %v6068 = vpack.c.bf16 %v5763, %v5747
  %v6069 = vpack.c.bf16 %v5764, %v5748
  %v6070 = vpack.c.bf16 %v5765, %v5749
  %v6071 = vpack.c.bf16 %v5766, %v5750
  %v6072 = vpack.c.bf16 %v5767, %v5751
  %v6073 = vpack.c.bf16 %v5768, %v5752
  %v6074 = vpack.c.bf16 %v5769, %v5753
  %v6075 = vpack.c.bf16 %v5770, %v5754
  %v6076 = vpack.c.bf16 %v5771, %v5755
  %v6077 = vpack.c.bf16 %v5772, %v5756
  %v6078 = vpack.c.bf16 %v5773, %v5757
  %v6079 = vpack.c.bf16 %v5774, %v5758
  %v6080 = vpack.c.bf16 %v5791, %v5775
  %v6081 = vpack.c.bf16 %v5792, %v5776
  %v6082 = vpack.c.bf16 %v5793, %v5777
  %v6083 = vpack.c.bf16 %v5794, %v5778
  %v6084 = vpack.c.bf16 %v5795, %v5779
  %v6085 = vpack.c.bf16 %v5796, %v5780
  %v6086 = vpack.c.bf16 %v5797, %v5781
  %v6087 = vpack.c.bf16 %v5798, %v5782
  %v6088 = vpack.c.bf16 %v5799, %v5783
  %v6089 = vpack.c.bf16 %v5800, %v5784
  %v6090 = vpack.c.bf16 %v5801, %v5785
  %v6091 = vpack.c.bf16 %v5802, %v5786
  %v6092 = vpack.c.bf16 %v5803, %v5787
  %v6093 = vpack.c.bf16 %v5804, %v5788
  %v6094 = vpack.c.bf16 %v5805, %v5789
  %v6095 = vpack.c.bf16 %v5806, %v5790
  %s6096 = scalar_lea.vmem %s21, 1
  %v6097 = vld [vmem:[%s6096] sm:$0x1]
  %v6099 = vperm.slane %v6097, 0
  %v6357 = vunpack.c.l.b16 %v5808
  %v6358 = vunpack.c.l.b16 %v5809
  %v6359 = vunpack.c.l.b16 %v5810
  %v6360 = vunpack.c.l.b16 %v5811
  %v6361 = vunpack.c.l.b16 %v5812
  %v6362 = vunpack.c.l.b16 %v5813
  %v6363 = vunpack.c.l.b16 %v5814
  %v6364 = vunpack.c.l.b16 %v5815
  %v6365 = vunpack.c.l.b16 %v5816
  %v6366 = vunpack.c.l.b16 %v5817
  %v6367 = vunpack.c.l.b16 %v5818
  %v6368 = vunpack.c.l.b16 %v5819
  %v6369 = vunpack.c.l.b16 %v5820
  %v6370 = vunpack.c.l.b16 %v5821
  %v6371 = vunpack.c.l.b16 %v5822
  %v6372 = vunpack.c.l.b16 %v5823
  %v6373 = vunpack.c.l.b16 %v5824
  %v6374 = vunpack.c.l.b16 %v5825
  %v6375 = vunpack.c.l.b16 %v5826
  %v6376 = vunpack.c.l.b16 %v5827
  %v6377 = vunpack.c.l.b16 %v5828
  %v6378 = vunpack.c.l.b16 %v5829
  %v6379 = vunpack.c.l.b16 %v5830
  %v6380 = vunpack.c.l.b16 %v5831
  %v6381 = vunpack.c.l.b16 %v5832
  %v6382 = vunpack.c.l.b16 %v5833
  %v6383 = vunpack.c.l.b16 %v5834
  %v6384 = vunpack.c.l.b16 %v5835
  %v6385 = vunpack.c.l.b16 %v5836
  %v6386 = vunpack.c.l.b16 %v5837
  %v6387 = vunpack.c.l.b16 %v5838
  %v6388 = vunpack.c.l.b16 %v5839
  %v6389 = vunpack.c.l.b16 %v5840
  %v6390 = vunpack.c.l.b16 %v5841
  %v6391 = vunpack.c.l.b16 %v5842
  %v6392 = vunpack.c.l.b16 %v5843
  %v6393 = vunpack.c.l.b16 %v5844
  %v6394 = vunpack.c.l.b16 %v5845
  %v6395 = vunpack.c.l.b16 %v5846
  %v6396 = vunpack.c.l.b16 %v5847
  %v6397 = vunpack.c.l.b16 %v5848
  %v6398 = vunpack.c.l.b16 %v5849
  %v6399 = vunpack.c.l.b16 %v5850
  %v6400 = vunpack.c.l.b16 %v5851
  %v6401 = vunpack.c.l.b16 %v5852
  %v6402 = vunpack.c.l.b16 %v5853
  %v6403 = vunpack.c.l.b16 %v5854
  %v6404 = vunpack.c.l.b16 %v5855
  %v6405 = vunpack.c.l.b16 %v5856
  %v6406 = vunpack.c.l.b16 %v5857
  %v6407 = vunpack.c.l.b16 %v5858
  %v6408 = vunpack.c.l.b16 %v5859
  %v6409 = vunpack.c.l.b16 %v5860
  %v6410 = vunpack.c.l.b16 %v5861
  %v6411 = vunpack.c.l.b16 %v5862
  %v6412 = vunpack.c.l.b16 %v5863
  %v6413 = vunpack.c.l.b16 %v5864
  %v6414 = vunpack.c.l.b16 %v5865
  %v6415 = vunpack.c.l.b16 %v5866
  %v6416 = vunpack.c.l.b16 %v5867
  %v6417 = vunpack.c.l.b16 %v5868
  %v6418 = vunpack.c.l.b16 %v5869
  %v6419 = vunpack.c.l.b16 %v5870
  %v6420 = vunpack.c.l.b16 %v5871
  %v6421 = vunpack.c.l.b16 %v5872
  %v6422 = vunpack.c.l.b16 %v5873
  %v6423 = vunpack.c.l.b16 %v5874
  %v6424 = vunpack.c.l.b16 %v5875
  %v6425 = vunpack.c.l.b16 %v5876
  %v6426 = vunpack.c.l.b16 %v5877
  %v6427 = vunpack.c.l.b16 %v5878
  %v6428 = vunpack.c.l.b16 %v5879
  %v6429 = vunpack.c.l.b16 %v5880
  %v6430 = vunpack.c.l.b16 %v5881
  %v6431 = vunpack.c.l.b16 %v5882
  %v6432 = vunpack.c.l.b16 %v5883
  %v6433 = vunpack.c.l.b16 %v5884
  %v6434 = vunpack.c.l.b16 %v5885
  %v6435 = vunpack.c.l.b16 %v5886
  %v6436 = vunpack.c.l.b16 %v5887
  %v6437 = vunpack.c.l.b16 %v5888
  %v6438 = vunpack.c.l.b16 %v5889
  %v6439 = vunpack.c.l.b16 %v5890
  %v6440 = vunpack.c.l.b16 %v5891
  %v6441 = vunpack.c.l.b16 %v5892
  %v6442 = vunpack.c.l.b16 %v5893
  %v6443 = vunpack.c.l.b16 %v5894
  %v6444 = vunpack.c.l.b16 %v5895
  %v6445 = vunpack.c.l.b16 %v5896
  %v6446 = vunpack.c.l.b16 %v5897
  %v6447 = vunpack.c.l.b16 %v5898
  %v6448 = vunpack.c.l.b16 %v5899
  %v6449 = vunpack.c.l.b16 %v5900
  %v6450 = vunpack.c.l.b16 %v5901
  %v6451 = vunpack.c.l.b16 %v5902
  %v6452 = vunpack.c.l.b16 %v5903
  %v6453 = vunpack.c.l.b16 %v5904
  %v6454 = vunpack.c.l.b16 %v5905
  %v6455 = vunpack.c.l.b16 %v5906
  %v6456 = vunpack.c.l.b16 %v5907
  %v6457 = vunpack.c.l.b16 %v5908
  %v6458 = vunpack.c.l.b16 %v5909
  %v6459 = vunpack.c.l.b16 %v5910
  %v6460 = vunpack.c.l.b16 %v5911
  %v6461 = vunpack.c.l.b16 %v5912
  %v6462 = vunpack.c.l.b16 %v5913
  %v6463 = vunpack.c.l.b16 %v5914
  %v6464 = vunpack.c.l.b16 %v5915
  %v6465 = vunpack.c.l.b16 %v5916
  %v6466 = vunpack.c.l.b16 %v5917
  %v6467 = vunpack.c.l.b16 %v5918
  %v6468 = vunpack.c.l.b16 %v5919
  %v6469 = vunpack.c.l.b16 %v5920
  %v6470 = vunpack.c.l.b16 %v5921
  %v6471 = vunpack.c.l.b16 %v5922
  %v6472 = vunpack.c.l.b16 %v5923
  %v6473 = vunpack.c.l.b16 %v5924
  %v6474 = vunpack.c.l.b16 %v5925
  %v6475 = vunpack.c.l.b16 %v5926
  %v6476 = vunpack.c.l.b16 %v5927
  %v6477 = vunpack.c.l.b16 %v5928
  %v6478 = vunpack.c.l.b16 %v5929
  %v6479 = vunpack.c.l.b16 %v5930
  %v6480 = vunpack.c.l.b16 %v5931
  %v6481 = vunpack.c.l.b16 %v5932
  %v6482 = vunpack.c.l.b16 %v5933
  %v6483 = vunpack.c.l.b16 %v5934
  %v6484 = vunpack.c.l.b16 %v5935
  %v6485 = vunpack.c.l.b16 %v5936
  %v6486 = vunpack.c.l.b16 %v5937
  %v6487 = vunpack.c.l.b16 %v5938
  %v6488 = vunpack.c.l.b16 %v5939
  %v6489 = vunpack.c.l.b16 %v5940
  %v6490 = vunpack.c.l.b16 %v5941
  %v6491 = vunpack.c.l.b16 %v5942
  %v6492 = vunpack.c.l.b16 %v5943
  %v6493 = vunpack.c.l.b16 %v5944
  %v6494 = vunpack.c.l.b16 %v5945
  %v6495 = vunpack.c.l.b16 %v5946
  %v6496 = vunpack.c.l.b16 %v5947
  %v6497 = vunpack.c.l.b16 %v5948
  %v6498 = vunpack.c.l.b16 %v5949
  %v6499 = vunpack.c.l.b16 %v5950
  %v6500 = vunpack.c.l.b16 %v5951
  %v6501 = vunpack.c.l.b16 %v5952
  %v6502 = vunpack.c.l.b16 %v5953
  %v6503 = vunpack.c.l.b16 %v5954
  %v6504 = vunpack.c.l.b16 %v5955
  %v6505 = vunpack.c.l.b16 %v5956
  %v6506 = vunpack.c.l.b16 %v5957
  %v6507 = vunpack.c.l.b16 %v5958
  %v6508 = vunpack.c.l.b16 %v5959
  %v6509 = vunpack.c.l.b16 %v5960
  %v6510 = vunpack.c.l.b16 %v5961
  %v6511 = vunpack.c.l.b16 %v5962
  %v6512 = vunpack.c.l.b16 %v5963
  %v6513 = vunpack.c.l.b16 %v5964
  %v6514 = vunpack.c.l.b16 %v5965
  %v6515 = vunpack.c.l.b16 %v5966
  %v6516 = vunpack.c.l.b16 %v5967
  %v6517 = vunpack.c.l.b16 %v5968
  %v6518 = vunpack.c.l.b16 %v5969
  %v6519 = vunpack.c.l.b16 %v5970
  %v6520 = vunpack.c.l.b16 %v5971
  %v6521 = vunpack.c.l.b16 %v5972
  %v6522 = vunpack.c.l.b16 %v5973
  %v6523 = vunpack.c.l.b16 %v5974
  %v6524 = vunpack.c.l.b16 %v5975
  %v6525 = vunpack.c.l.b16 %v5976
  %v6526 = vunpack.c.l.b16 %v5977
  %v6527 = vunpack.c.l.b16 %v5978
  %v6528 = vunpack.c.l.b16 %v5979
  %v6529 = vunpack.c.l.b16 %v5980
  %v6530 = vunpack.c.l.b16 %v5981
  %v6531 = vunpack.c.l.b16 %v5982
  %v6532 = vunpack.c.l.b16 %v5983
  %v6533 = vunpack.c.l.b16 %v5984
  %v6534 = vunpack.c.l.b16 %v5985
  %v6535 = vunpack.c.l.b16 %v5986
  %v6536 = vunpack.c.l.b16 %v5987
  %v6537 = vunpack.c.l.b16 %v5988
  %v6538 = vunpack.c.l.b16 %v5989
  %v6539 = vunpack.c.l.b16 %v5990
  %v6540 = vunpack.c.l.b16 %v5991
  %v6541 = vunpack.c.l.b16 %v5992
  %v6542 = vunpack.c.l.b16 %v5993
  %v6543 = vunpack.c.l.b16 %v5994
  %v6544 = vunpack.c.l.b16 %v5995
  %v6545 = vunpack.c.l.b16 %v5996
  %v6546 = vunpack.c.l.b16 %v5997
  %v6547 = vunpack.c.l.b16 %v5998
  %v6548 = vunpack.c.l.b16 %v5999
  %v6549 = vunpack.c.l.b16 %v6000
  %v6550 = vunpack.c.l.b16 %v6001
  %v6551 = vunpack.c.l.b16 %v6002
  %v6552 = vunpack.c.l.b16 %v6003
  %v6553 = vunpack.c.l.b16 %v6004
  %v6554 = vunpack.c.l.b16 %v6005
  %v6555 = vunpack.c.l.b16 %v6006
  %v6556 = vunpack.c.l.b16 %v6007
  %v6557 = vunpack.c.l.b16 %v6008
  %v6558 = vunpack.c.l.b16 %v6009
  %v6559 = vunpack.c.l.b16 %v6010
  %v6560 = vunpack.c.l.b16 %v6011
  %v6561 = vunpack.c.l.b16 %v6012
  %v6562 = vunpack.c.l.b16 %v6013
  %v6563 = vunpack.c.l.b16 %v6014
  %v6564 = vunpack.c.l.b16 %v6015
  %v6565 = vunpack.c.l.b16 %v6016
  %v6566 = vunpack.c.l.b16 %v6017
  %v6567 = vunpack.c.l.b16 %v6018
  %v6568 = vunpack.c.l.b16 %v6019
  %v6569 = vunpack.c.l.b16 %v6020
  %v6570 = vunpack.c.l.b16 %v6021
  %v6571 = vunpack.c.l.b16 %v6022
  %v6572 = vunpack.c.l.b16 %v6023
  %v6573 = vunpack.c.l.b16 %v6024
  %v6574 = vunpack.c.l.b16 %v6025
  %v6575 = vunpack.c.l.b16 %v6026
  %v6576 = vunpack.c.l.b16 %v6027
  %v6577 = vunpack.c.l.b16 %v6028
  %v6578 = vunpack.c.l.b16 %v6029
  %v6579 = vunpack.c.l.b16 %v6030
  %v6580 = vunpack.c.l.b16 %v6031
  %v6581 = vunpack.c.l.b16 %v6032
  %v6582 = vunpack.c.l.b16 %v6033
  %v6583 = vunpack.c.l.b16 %v6034
  %v6584 = vunpack.c.l.b16 %v6035
  %v6585 = vunpack.c.l.b16 %v6036
  %v6586 = vunpack.c.l.b16 %v6037
  %v6587 = vunpack.c.l.b16 %v6038
  %v6588 = vunpack.c.l.b16 %v6039
  %v6589 = vunpack.c.l.b16 %v6040
  %v6590 = vunpack.c.l.b16 %v6041
  %v6591 = vunpack.c.l.b16 %v6042
  %v6592 = vunpack.c.l.b16 %v6043
  %v6593 = vunpack.c.l.b16 %v6044
  %v6594 = vunpack.c.l.b16 %v6045
  %v6595 = vunpack.c.l.b16 %v6046
  %v6596 = vunpack.c.l.b16 %v6047
  %v6597 = vunpack.c.l.b16 %v6048
  %v6598 = vunpack.c.l.b16 %v6049
  %v6599 = vunpack.c.l.b16 %v6050
  %v6600 = vunpack.c.l.b16 %v6051
  %v6601 = vunpack.c.l.b16 %v6052
  %v6602 = vunpack.c.l.b16 %v6053
  %v6603 = vunpack.c.l.b16 %v6054
  %v6604 = vunpack.c.l.b16 %v6055
  %v6605 = vunpack.c.l.b16 %v6056
  %v6606 = vunpack.c.l.b16 %v6057
  %v6607 = vunpack.c.l.b16 %v6058
  %v6608 = vunpack.c.l.b16 %v6059
  %v6609 = vunpack.c.l.b16 %v6060
  %v6610 = vunpack.c.l.b16 %v6061
  %v6611 = vunpack.c.l.b16 %v6062
  %v6612 = vunpack.c.l.b16 %v6063
  %v6613 = vpack.c.b16 %v6358, %v6357
  %v6614 = vpack.c.b16 %v6360, %v6359
  %v6615 = vpack.c.b16 %v6362, %v6361
  %v6616 = vpack.c.b16 %v6364, %v6363
  %v6617 = vpack.c.b16 %v6366, %v6365
  %v6618 = vpack.c.b16 %v6368, %v6367
  %v6619 = vpack.c.b16 %v6370, %v6369
  %v6620 = vpack.c.b16 %v6372, %v6371
  %v6621 = vpack.c.b16 %v6374, %v6373
  %v6622 = vpack.c.b16 %v6376, %v6375
  %v6623 = vpack.c.b16 %v6378, %v6377
  %v6624 = vpack.c.b16 %v6380, %v6379
  %v6625 = vpack.c.b16 %v6382, %v6381
  %v6626 = vpack.c.b16 %v6384, %v6383
  %v6627 = vpack.c.b16 %v6386, %v6385
  %v6628 = vpack.c.b16 %v6388, %v6387
  %v6629 = vpack.c.b16 %v6390, %v6389
  %v6630 = vpack.c.b16 %v6392, %v6391
  %v6631 = vpack.c.b16 %v6394, %v6393
  %v6632 = vpack.c.b16 %v6396, %v6395
  %v6633 = vpack.c.b16 %v6398, %v6397
  %v6634 = vpack.c.b16 %v6400, %v6399
  %v6635 = vpack.c.b16 %v6402, %v6401
  %v6636 = vpack.c.b16 %v6404, %v6403
  %v6637 = vpack.c.b16 %v6406, %v6405
  %v6638 = vpack.c.b16 %v6408, %v6407
  %v6639 = vpack.c.b16 %v6410, %v6409
  %v6640 = vpack.c.b16 %v6412, %v6411
  %v6641 = vpack.c.b16 %v6414, %v6413
  %v6642 = vpack.c.b16 %v6416, %v6415
  %v6643 = vpack.c.b16 %v6418, %v6417
  %v6644 = vpack.c.b16 %v6420, %v6419
  %v6645 = vpack.c.b16 %v6422, %v6421
  %v6646 = vpack.c.b16 %v6424, %v6423
  %v6647 = vpack.c.b16 %v6426, %v6425
  %v6648 = vpack.c.b16 %v6428, %v6427
  %v6649 = vpack.c.b16 %v6430, %v6429
  %v6650 = vpack.c.b16 %v6432, %v6431
  %v6651 = vpack.c.b16 %v6434, %v6433
  %v6652 = vpack.c.b16 %v6436, %v6435
  %v6653 = vpack.c.b16 %v6438, %v6437
  %v6654 = vpack.c.b16 %v6440, %v6439
  %v6655 = vpack.c.b16 %v6442, %v6441
  %v6656 = vpack.c.b16 %v6444, %v6443
  %v6657 = vpack.c.b16 %v6446, %v6445
  %v6658 = vpack.c.b16 %v6448, %v6447
  %v6659 = vpack.c.b16 %v6450, %v6449
  %v6660 = vpack.c.b16 %v6452, %v6451
  %v6661 = vpack.c.b16 %v6454, %v6453
  %v6662 = vpack.c.b16 %v6456, %v6455
  %v6663 = vpack.c.b16 %v6458, %v6457
  %v6664 = vpack.c.b16 %v6460, %v6459
  %v6665 = vpack.c.b16 %v6462, %v6461
  %v6666 = vpack.c.b16 %v6464, %v6463
  %v6667 = vpack.c.b16 %v6466, %v6465
  %v6668 = vpack.c.b16 %v6468, %v6467
  %v6669 = vpack.c.b16 %v6470, %v6469
  %v6670 = vpack.c.b16 %v6472, %v6471
  %v6671 = vpack.c.b16 %v6474, %v6473
  %v6672 = vpack.c.b16 %v6476, %v6475
  %v6673 = vpack.c.b16 %v6478, %v6477
  %v6674 = vpack.c.b16 %v6480, %v6479
  %v6675 = vpack.c.b16 %v6482, %v6481
  %v6676 = vpack.c.b16 %v6484, %v6483
  %v6677 = vpack.c.b16 %v6486, %v6485
  %v6678 = vpack.c.b16 %v6488, %v6487
  %v6679 = vpack.c.b16 %v6490, %v6489
  %v6680 = vpack.c.b16 %v6492, %v6491
  %v6681 = vpack.c.b16 %v6494, %v6493
  %v6682 = vpack.c.b16 %v6496, %v6495
  %v6683 = vpack.c.b16 %v6498, %v6497
  %v6684 = vpack.c.b16 %v6500, %v6499
  %v6685 = vpack.c.b16 %v6502, %v6501
  %v6686 = vpack.c.b16 %v6504, %v6503
  %v6687 = vpack.c.b16 %v6506, %v6505
  %v6688 = vpack.c.b16 %v6508, %v6507
  %v6689 = vpack.c.b16 %v6510, %v6509
  %v6690 = vpack.c.b16 %v6512, %v6511
  %v6691 = vpack.c.b16 %v6514, %v6513
  %v6692 = vpack.c.b16 %v6516, %v6515
  %v6693 = vpack.c.b16 %v6518, %v6517
  %v6694 = vpack.c.b16 %v6520, %v6519
  %v6695 = vpack.c.b16 %v6522, %v6521
  %v6696 = vpack.c.b16 %v6524, %v6523
  %v6697 = vpack.c.b16 %v6526, %v6525
  %v6698 = vpack.c.b16 %v6528, %v6527
  %v6699 = vpack.c.b16 %v6530, %v6529
  %v6700 = vpack.c.b16 %v6532, %v6531
  %v6701 = vpack.c.b16 %v6534, %v6533
  %v6702 = vpack.c.b16 %v6536, %v6535
  %v6703 = vpack.c.b16 %v6538, %v6537
  %v6704 = vpack.c.b16 %v6540, %v6539
  %v6705 = vpack.c.b16 %v6542, %v6541
  %v6706 = vpack.c.b16 %v6544, %v6543
  %v6707 = vpack.c.b16 %v6546, %v6545
  %v6708 = vpack.c.b16 %v6548, %v6547
  %v6709 = vpack.c.b16 %v6550, %v6549
  %v6710 = vpack.c.b16 %v6552, %v6551
  %v6711 = vpack.c.b16 %v6554, %v6553
  %v6712 = vpack.c.b16 %v6556, %v6555
  %v6713 = vpack.c.b16 %v6558, %v6557
  %v6714 = vpack.c.b16 %v6560, %v6559
  %v6715 = vpack.c.b16 %v6562, %v6561
  %v6716 = vpack.c.b16 %v6564, %v6563
  %v6717 = vpack.c.b16 %v6566, %v6565
  %v6718 = vpack.c.b16 %v6568, %v6567
  %v6719 = vpack.c.b16 %v6570, %v6569
  %v6720 = vpack.c.b16 %v6572, %v6571
  %v6721 = vpack.c.b16 %v6574, %v6573
  %v6722 = vpack.c.b16 %v6576, %v6575
  %v6723 = vpack.c.b16 %v6578, %v6577
  %v6724 = vpack.c.b16 %v6580, %v6579
  %v6725 = vpack.c.b16 %v6582, %v6581
  %v6726 = vpack.c.b16 %v6584, %v6583
  %v6727 = vpack.c.b16 %v6586, %v6585
  %v6728 = vpack.c.b16 %v6588, %v6587
  %v6729 = vpack.c.b16 %v6590, %v6589
  %v6730 = vpack.c.b16 %v6592, %v6591
  %v6731 = vpack.c.b16 %v6594, %v6593
  %v6732 = vpack.c.b16 %v6596, %v6595
  %v6733 = vpack.c.b16 %v6598, %v6597
  %v6734 = vpack.c.b16 %v6600, %v6599
  %v6735 = vpack.c.b16 %v6602, %v6601
  %v6736 = vpack.c.b16 %v6604, %v6603
  %v6737 = vpack.c.b16 %v6606, %v6605
  %v6738 = vpack.c.b16 %v6608, %v6607
  %v6739 = vpack.c.b16 %v6610, %v6609
  %v6740 = vpack.c.b16 %v6612, %v6611
  %6869 = vmatpush.bf16.msra.mxu0 %v6620
  %6870 = vmatpush.bf16.msra.mxu0 %v6619
  %6871 = vmatpush.bf16.msra.mxu0 %v6618
  %6872 = vmatpush.bf16.msra.mxu0 %v6617
  %6873 = vmatpush.bf16.msra.mxu0 %v6616
  %6874 = vmatpush.bf16.msra.mxu0 %v6615
  %6875 = vmatpush.bf16.msra.mxu0 %v6614
  %6876 = vmatpush.bf16.msra.mxu0 %v6613
  %6877 = vmatmul.bf16.gmra.mxu0 %v6064
  %v6878 = vpop.f32.mrf.mxu0
  %v6879 = vpop.f32.mrf.mxu0
  %v6880 = vadd.f32 %v6099, %v6879
  %6881 = vmatmul.bf16.gmra.mxu0 %v6080
  %v6882 = vpop.f32.mrf.mxu0
  %v6883 = vpop.f32.mrf.mxu0
  %v6884 = vadd.f32 %v6099, %v6883
  %6885 = vdwg.mxu0
  %6886 = vmatpush.bf16.msra.mxu0 %v6628
  %6887 = vmatpush.bf16.msra.mxu0 %v6627
  %6888 = vmatpush.bf16.msra.mxu0 %v6626
  %6889 = vmatpush.bf16.msra.mxu0 %v6625
  %6890 = vmatpush.bf16.msra.mxu0 %v6624
  %6891 = vmatpush.bf16.msra.mxu0 %v6623
  %6892 = vmatpush.bf16.msra.mxu0 %v6622
  %6893 = vmatpush.bf16.msra.mxu0 %v6621
  %6894 = vmatmul.bf16.gmra.mxu0 %v6065
  %v6895 = vpop.f32.mrf.mxu0
  %v6896 = vpop.f32.mrf.mxu0
  %v6897 = vadd.f32 %v6880, %v6896
  %6898 = vmatmul.bf16.gmra.mxu0 %v6081
  %v6899 = vpop.f32.mrf.mxu0
  %v6900 = vpop.f32.mrf.mxu0
  %v6901 = vadd.f32 %v6884, %v6900
  %6902 = vdwg.mxu0
  %6903 = vmatpush.bf16.msra.mxu0 %v6636
  %6904 = vmatpush.bf16.msra.mxu0 %v6635
  %6905 = vmatpush.bf16.msra.mxu0 %v6634
  %6906 = vmatpush.bf16.msra.mxu0 %v6633
  %6907 = vmatpush.bf16.msra.mxu0 %v6632
  %6908 = vmatpush.bf16.msra.mxu0 %v6631
  %6909 = vmatpush.bf16.msra.mxu0 %v6630
  %6910 = vmatpush.bf16.msra.mxu0 %v6629
  %6911 = vmatmul.bf16.gmra.mxu0 %v6066
  %v6912 = vpop.f32.mrf.mxu0
  %v6913 = vpop.f32.mrf.mxu0
  %v6914 = vadd.f32 %v6897, %v6913
  %6915 = vmatmul.bf16.gmra.mxu0 %v6082
  %v6916 = vpop.f32.mrf.mxu0
  %v6917 = vpop.f32.mrf.mxu0
  %v6918 = vadd.f32 %v6901, %v6917
  %6919 = vdwg.mxu0
  %6920 = vmatpush.bf16.msra.mxu0 %v6644
  %6921 = vmatpush.bf16.msra.mxu0 %v6643
  %6922 = vmatpush.bf16.msra.mxu0 %v6642
  %6923 = vmatpush.bf16.msra.mxu0 %v6641
  %6924 = vmatpush.bf16.msra.mxu0 %v6640
  %6925 = vmatpush.bf16.msra.mxu0 %v6639
  %6926 = vmatpush.bf16.msra.mxu0 %v6638
  %6927 = vmatpush.bf16.msra.mxu0 %v6637
  %6928 = vmatmul.bf16.gmra.mxu0 %v6067
  %v6929 = vpop.f32.mrf.mxu0
  %v6930 = vpop.f32.mrf.mxu0
  %v6931 = vadd.f32 %v6914, %v6930
  %6932 = vmatmul.bf16.gmra.mxu0 %v6083
  %v6933 = vpop.f32.mrf.mxu0
  %v6934 = vpop.f32.mrf.mxu0
  %v6935 = vadd.f32 %v6918, %v6934
  %6936 = vdwg.mxu0
  %6937 = vmatpush.bf16.msra.mxu0 %v6652
  %6938 = vmatpush.bf16.msra.mxu0 %v6651
  %6939 = vmatpush.bf16.msra.mxu0 %v6650
  %6940 = vmatpush.bf16.msra.mxu0 %v6649
  %6941 = vmatpush.bf16.msra.mxu0 %v6648
  %6942 = vmatpush.bf16.msra.mxu0 %v6647
  %6943 = vmatpush.bf16.msra.mxu0 %v6646
  %6944 = vmatpush.bf16.msra.mxu0 %v6645
  %6945 = vmatmul.bf16.gmra.mxu0 %v6068
  %v6946 = vpop.f32.mrf.mxu0
  %v6947 = vpop.f32.mrf.mxu0
  %v6948 = vadd.f32 %v6931, %v6947
  %6949 = vmatmul.bf16.gmra.mxu0 %v6084
  %v6950 = vpop.f32.mrf.mxu0
  %v6951 = vpop.f32.mrf.mxu0
  %v6952 = vadd.f32 %v6935, %v6951
  %6953 = vdwg.mxu0
  %6954 = vmatpush.bf16.msra.mxu0 %v6660
  %6955 = vmatpush.bf16.msra.mxu0 %v6659
  %6956 = vmatpush.bf16.msra.mxu0 %v6658
  %6957 = vmatpush.bf16.msra.mxu0 %v6657
  %6958 = vmatpush.bf16.msra.mxu0 %v6656
  %6959 = vmatpush.bf16.msra.mxu0 %v6655
  %6960 = vmatpush.bf16.msra.mxu0 %v6654
  %6961 = vmatpush.bf16.msra.mxu0 %v6653
  %6962 = vmatmul.bf16.gmra.mxu0 %v6069
  %v6963 = vpop.f32.mrf.mxu0
  %v6964 = vpop.f32.mrf.mxu0
  %v6965 = vadd.f32 %v6948, %v6964
  %6966 = vmatmul.bf16.gmra.mxu0 %v6085
  %v6967 = vpop.f32.mrf.mxu0
  %v6968 = vpop.f32.mrf.mxu0
  %v6969 = vadd.f32 %v6952, %v6968
  %6970 = vdwg.mxu0
  %6971 = vmatpush.bf16.msra.mxu0 %v6668
  %6972 = vmatpush.bf16.msra.mxu0 %v6667
  %6973 = vmatpush.bf16.msra.mxu0 %v6666
  %6974 = vmatpush.bf16.msra.mxu0 %v6665
  %6975 = vmatpush.bf16.msra.mxu0 %v6664
  %6976 = vmatpush.bf16.msra.mxu0 %v6663
  %6977 = vmatpush.bf16.msra.mxu0 %v6662
  %6978 = vmatpush.bf16.msra.mxu0 %v6661
  %6979 = vmatmul.bf16.gmra.mxu0 %v6070
  %v6980 = vpop.f32.mrf.mxu0
  %v6981 = vpop.f32.mrf.mxu0
  %v6982 = vadd.f32 %v6965, %v6981
  %6983 = vmatmul.bf16.gmra.mxu0 %v6086
  %v6984 = vpop.f32.mrf.mxu0
  %v6985 = vpop.f32.mrf.mxu0
  %v6986 = vadd.f32 %v6969, %v6985
  %6987 = vdwg.mxu0
  %6988 = vmatpush.bf16.msra.mxu0 %v6676
  %6989 = vmatpush.bf16.msra.mxu0 %v6675
  %6990 = vmatpush.bf16.msra.mxu0 %v6674
  %6991 = vmatpush.bf16.msra.mxu0 %v6673
  %6992 = vmatpush.bf16.msra.mxu0 %v6672
  %6993 = vmatpush.bf16.msra.mxu0 %v6671
  %6994 = vmatpush.bf16.msra.mxu0 %v6670
  %6995 = vmatpush.bf16.msra.mxu0 %v6669
  %6996 = vmatmul.bf16.gmra.mxu0 %v6071
  %v6997 = vpop.f32.mrf.mxu0
  %v6998 = vpop.f32.mrf.mxu0
  %v6999 = vadd.f32 %v6982, %v6998
  %7000 = vmatmul.bf16.gmra.mxu0 %v6087
  %v7001 = vpop.f32.mrf.mxu0
  %v7002 = vpop.f32.mrf.mxu0
  %v7003 = vadd.f32 %v6986, %v7002
  %7004 = vdwg.mxu0
  %7005 = vmatpush.bf16.msra.mxu0 %v6684
  %7006 = vmatpush.bf16.msra.mxu0 %v6683
  %7007 = vmatpush.bf16.msra.mxu0 %v6682
  %7008 = vmatpush.bf16.msra.mxu0 %v6681
  %7009 = vmatpush.bf16.msra.mxu0 %v6680
  %7010 = vmatpush.bf16.msra.mxu0 %v6679
  %7011 = vmatpush.bf16.msra.mxu0 %v6678
  %7012 = vmatpush.bf16.msra.mxu0 %v6677
  %7013 = vmatmul.bf16.gmra.mxu0 %v6072
  %v7014 = vpop.f32.mrf.mxu0
  %v7015 = vpop.f32.mrf.mxu0
  %v7016 = vadd.f32 %v6999, %v7015
  %7017 = vmatmul.bf16.gmra.mxu0 %v6088
  %v7018 = vpop.f32.mrf.mxu0
  %v7019 = vpop.f32.mrf.mxu0
  %v7020 = vadd.f32 %v7003, %v7019
  %7021 = vdwg.mxu0
  %7022 = vmatpush.bf16.msra.mxu0 %v6692
  %7023 = vmatpush.bf16.msra.mxu0 %v6691
  %7024 = vmatpush.bf16.msra.mxu0 %v6690
  %7025 = vmatpush.bf16.msra.mxu0 %v6689
  %7026 = vmatpush.bf16.msra.mxu0 %v6688
  %7027 = vmatpush.bf16.msra.mxu0 %v6687
  %7028 = vmatpush.bf16.msra.mxu0 %v6686
  %7029 = vmatpush.bf16.msra.mxu0 %v6685
  %7030 = vmatmul.bf16.gmra.mxu0 %v6073
  %v7031 = vpop.f32.mrf.mxu0
  %v7032 = vpop.f32.mrf.mxu0
  %v7033 = vadd.f32 %v7016, %v7032
  %7034 = vmatmul.bf16.gmra.mxu0 %v6089
  %v7035 = vpop.f32.mrf.mxu0
  %v7036 = vpop.f32.mrf.mxu0
  %v7037 = vadd.f32 %v7020, %v7036
  %7038 = vdwg.mxu0
  %7039 = vmatpush.bf16.msra.mxu0 %v6700
  %7040 = vmatpush.bf16.msra.mxu0 %v6699
  %7041 = vmatpush.bf16.msra.mxu0 %v6698
  %7042 = vmatpush.bf16.msra.mxu0 %v6697
  %7043 = vmatpush.bf16.msra.mxu0 %v6696
  %7044 = vmatpush.bf16.msra.mxu0 %v6695
  %7045 = vmatpush.bf16.msra.mxu0 %v6694
  %7046 = vmatpush.bf16.msra.mxu0 %v6693
  %7047 = vmatmul.bf16.gmra.mxu0 %v6074
  %v7048 = vpop.f32.mrf.mxu0
  %v7049 = vpop.f32.mrf.mxu0
  %v7050 = vadd.f32 %v7033, %v7049
  %7051 = vmatmul.bf16.gmra.mxu0 %v6090
  %v7052 = vpop.f32.mrf.mxu0
  %v7053 = vpop.f32.mrf.mxu0
  %v7054 = vadd.f32 %v7037, %v7053
  %7055 = vdwg.mxu0
  %7056 = vmatpush.bf16.msra.mxu0 %v6708
  %7057 = vmatpush.bf16.msra.mxu0 %v6707
  %7058 = vmatpush.bf16.msra.mxu0 %v6706
  %7059 = vmatpush.bf16.msra.mxu0 %v6705
  %7060 = vmatpush.bf16.msra.mxu0 %v6704
  %7061 = vmatpush.bf16.msra.mxu0 %v6703
  %7062 = vmatpush.bf16.msra.mxu0 %v6702
  %7063 = vmatpush.bf16.msra.mxu0 %v6701
  %7064 = vmatmul.bf16.gmra.mxu0 %v6075
  %v7065 = vpop.f32.mrf.mxu0
  %v7066 = vpop.f32.mrf.mxu0
  %v7067 = vadd.f32 %v7050, %v7066
  %7068 = vmatmul.bf16.gmra.mxu0 %v6091
  %v7069 = vpop.f32.mrf.mxu0
  %v7070 = vpop.f32.mrf.mxu0
  %v7071 = vadd.f32 %v7054, %v7070
  %7072 = vdwg.mxu0
  %7073 = vmatpush.bf16.msra.mxu0 %v6716
  %7074 = vmatpush.bf16.msra.mxu0 %v6715
  %7075 = vmatpush.bf16.msra.mxu0 %v6714
  %7076 = vmatpush.bf16.msra.mxu0 %v6713
  %7077 = vmatpush.bf16.msra.mxu0 %v6712
  %7078 = vmatpush.bf16.msra.mxu0 %v6711
  %7079 = vmatpush.bf16.msra.mxu0 %v6710
  %7080 = vmatpush.bf16.msra.mxu0 %v6709
  %7081 = vmatmul.bf16.gmra.mxu0 %v6076
  %v7082 = vpop.f32.mrf.mxu0
  %v7083 = vpop.f32.mrf.mxu0
  %v7084 = vadd.f32 %v7067, %v7083
  %7085 = vmatmul.bf16.gmra.mxu0 %v6092
  %v7086 = vpop.f32.mrf.mxu0
  %v7087 = vpop.f32.mrf.mxu0
  %v7088 = vadd.f32 %v7071, %v7087
  %7089 = vdwg.mxu0
  %7090 = vmatpush.bf16.msra.mxu0 %v6724
  %7091 = vmatpush.bf16.msra.mxu0 %v6723
  %7092 = vmatpush.bf16.msra.mxu0 %v6722
  %7093 = vmatpush.bf16.msra.mxu0 %v6721
  %7094 = vmatpush.bf16.msra.mxu0 %v6720
  %7095 = vmatpush.bf16.msra.mxu0 %v6719
  %7096 = vmatpush.bf16.msra.mxu0 %v6718
  %7097 = vmatpush.bf16.msra.mxu0 %v6717
  %7098 = vmatmul.bf16.gmra.mxu0 %v6077
  %v7099 = vpop.f32.mrf.mxu0
  %v7100 = vpop.f32.mrf.mxu0
  %v7101 = vadd.f32 %v7084, %v7100
  %7102 = vmatmul.bf16.gmra.mxu0 %v6093
  %v7103 = vpop.f32.mrf.mxu0
  %v7104 = vpop.f32.mrf.mxu0
  %v7105 = vadd.f32 %v7088, %v7104
  %7106 = vdwg.mxu0
  %7107 = vmatpush.bf16.msra.mxu0 %v6732
  %7108 = vmatpush.bf16.msra.mxu0 %v6731
  %7109 = vmatpush.bf16.msra.mxu0 %v6730
  %7110 = vmatpush.bf16.msra.mxu0 %v6729
  %7111 = vmatpush.bf16.msra.mxu0 %v6728
  %7112 = vmatpush.bf16.msra.mxu0 %v6727
  %7113 = vmatpush.bf16.msra.mxu0 %v6726
  %7114 = vmatpush.bf16.msra.mxu0 %v6725
  %7115 = vmatmul.bf16.gmra.mxu0 %v6078
  %v7116 = vpop.f32.mrf.mxu0
  %v7117 = vpop.f32.mrf.mxu0
  %v7118 = vadd.f32 %v7101, %v7117
  %7119 = vmatmul.bf16.gmra.mxu0 %v6094
  %v7120 = vpop.f32.mrf.mxu0
  %v7121 = vpop.f32.mrf.mxu0
  %v7122 = vadd.f32 %v7105, %v7121
  %7123 = vdwg.mxu0
  %7124 = vmatpush.bf16.msra.mxu0 %v6740
  %7125 = vmatpush.bf16.msra.mxu0 %v6739
  %7126 = vmatpush.bf16.msra.mxu0 %v6738
  %7127 = vmatpush.bf16.msra.mxu0 %v6737
  %7128 = vmatpush.bf16.msra.mxu0 %v6736
  %7129 = vmatpush.bf16.msra.mxu0 %v6735
  %7130 = vmatpush.bf16.msra.mxu0 %v6734
  %7131 = vmatpush.bf16.msra.mxu0 %v6733
  %7132 = vmatmul.bf16.gmra.mxu0 %v6079
  %v7133 = vpop.f32.mrf.mxu0
  %v7134 = vpop.f32.mrf.mxu0
  %v7135 = vadd.f32 %v7118, %v7134
  %7136 = vmatmul.bf16.gmra.mxu0 %v6095
  %v7137 = vpop.f32.mrf.mxu0
  %v7138 = vpop.f32.mrf.mxu0
  %v7139 = vadd.f32 %v7122, %v7138
  %7140 = vdwg.mxu0
  %v7141 = vadd.f32 %v5198, %v7135
  %v7142 = vadd.f32 %v5200, %v7139
  %s7143 = scalar_lea.vmem %s22, 1
  %v7144 = vld [vmem:[%s7143] sm:$0x1]
  %s7145 = scalar_lea.vmem %s23, 1
  %v7146 = vld [vmem:[%s7145] sm:$0x1]
  %v7147 = vsel %vm91, %v7141, 0.0
  %7148 = vadd.xlane.f32.xlu0 %v7147
  %v7149 = vpop.xlane.xlu0 %7148
  %v7150 = vsel %vm91, %v7142, 0.0
  %7151 = vadd.xlane.f32.xlu0 %v7150
  %v7152 = vpop.xlane.xlu0 %7151
  %v7153 = vmul.f32 %v7149, %v1755
  %v7154 = vmul.f32 %v7152, %v1755
  %v7155 = vsub.f32 %v7141, %v7153
  %v7156 = vsub.f32 %v7142, %v7154
  %v7157 = vmul.f32 %v7155, %v7155
  %v7158 = vmul.f32 %v7156, %v7156
  %v7159 = vsel %vm91, %v7157, 0.0
  %7160 = vadd.xlane.f32.xlu0 %v7159
  %v7161 = vpop.xlane.xlu0 %7160
  %v7162 = vsel %vm91, %v7158, 0.0
  %7163 = vadd.xlane.f32.xlu0 %v7162
  %v7164 = vpop.xlane.xlu0 %7163
  %v7165 = vmul.f32 %v7161, %v1755
  %v7166 = vmul.f32 %v7164, %v1755
  %v7167 = vadd.f32 %v7165, 1e-05
  %v7168 = vadd.f32 %v7166, 1e-05
  %v7169 = vrsqrt.pop %v7167
  %v7170 = vmul.f32 %v7169, %v7167
  %v7171 = vmul.f32 %v7170, %v7169
  %v7172 = vmul.f32 0.5, %v7171
  %v7173 = vsub.f32 1.5, %v7172
  %v7174 = vmul.f32 %v7169, %v7173
  %vm7175 = vweird.f32 %v7167
  %vm7176 = vweird.f32 %v7169
  %vm7177 = vmor %vm7175, %vm7176
  %v7178 = vsel %vm7177, %v7169, %v7174
  %v7179 = vrsqrt.pop %v7168
  %v7180 = vmul.f32 %v7179, %v7168
  %v7181 = vmul.f32 %v7180, %v7179
  %v7182 = vmul.f32 0.5, %v7181
  %v7183 = vsub.f32 1.5, %v7182
  %v7184 = vmul.f32 %v7179, %v7183
  %vm7185 = vweird.f32 %v7168
  %vm7186 = vweird.f32 %v7179
  %vm7187 = vmor %vm7185, %vm7186
  %v7188 = vsel %vm7187, %v7179, %v7184
  %v7189 = vmul.f32 %v7155, %v7178
  %v7190 = vmul.f32 %v7156, %v7188
  %v7192 = vperm.slane %v7144, 0
  %v7194 = vmul.f32 %v7189, %v7192
  %v7195 = vmul.f32 %v7190, %v7192
  %v7197 = vperm.slane %v7146, 0
  %v7199 = vadd.f32 %v7194, %v7197
  %v7200 = vadd.f32 %v7195, %v7197
  %v7202 = vrot.slane %v7199, 7
  %v7205 = vrot.slane %v7200, 6
  %vm7207 = vcmask 1040384
  %v7208 = vsel %vm7207, %v7202, %v7205
  %v7209 = vld [vmem:[%s24] sm:$0xf]
  %v7210 = vld [vmem:[%s24 + $0x4] sm:$0xf]
  %v7211 = vld [vmem:[%s24 + $0x8] sm:$0xf]
  %v7212 = vld [vmem:[%s24 + $0xc] sm:$0xf]
  %v7213 = vpack.c.bf16 %v7208, %v7208
  %v7214 = vld [vmem:[#allocation4] sm:$0x1]
  %v7216 = vperm.slane %v7214, 0
  %v7222 = vunpack.c.l.b16 %v7209
  %v7223 = vunpack.c.l.b16 %v7210
  %v7224 = vunpack.c.l.b16 %v7211
  %v7225 = vunpack.c.l.b16 %v7212
  %v7226 = vpack.c.b16 %v7223, %v7222
  %v7227 = vpack.c.b16 %v7225, %v7224
  %v7231 = vsel %vm91, %v7213, 0
  %7233 = vmatpush.bf16.msra.mxu0 0
  %7234 = vmatpush.bf16.msra.mxu0 0
  %7235 = vmatpush.bf16.msra.mxu0 0
  %7236 = vmatpush.bf16.msra.mxu0 0
  %7237 = vmatpush.bf16.msra.mxu0 0
  %7238 = vmatpush.bf16.msra.mxu0 0
  %7239 = vmatpush.bf16.msra.mxu0 %v7227
  %7240 = vmatpush.bf16.msra.mxu0 %v7226
  %7241 = vmatmul.bf16.gmra.mxu0 %v7231
  %v7242 = vpop.f32.mrf.mxu0
  %v7243 = vadd.f32 %v7216, %v7242
  %v7244 = vpop.f32.mrf.mxu0
  %7245 = vdwg.mxu0
  %vm7246 = vcmask 1024
  %7247 = vst.msk [vmem:[%s26] sm:$0x3] %vm7246, %v7243
  // Predicated region
  $region106: #{ctts_forward.1} parent=0 // pred_check
    _
  $region107: #{ctts_forward.1} parent=0 // pred_check_branch
    %7249 = sbr.rel (0) target = $region109
  $region108: #{ctts_forward.1} parent=0 // pred_region
    _
  $region109: #{ctts_forward.1} parent=0 // pred_fallthru
    _
  // Predicated region
  $region110: #{ctts_forward.1} parent=0 // pred_check
    _
  $region111: #{ctts_forward.1} parent=0 // pred_check_branch
    %7251 = sbr.rel (0) target = $region113
  $region112: #{ctts_forward.1} parent=0 // pred_region
    _
  $region113: #{ctts_forward.1} parent=0 // pred_fallthru
    _

</llo_original>
